<compile_context>
chip_gen: v7x
topology: tpu7x:2x2x1
jax: 0.10.0
libtpu: 0.0.40
codegen_flags: <defaults>
</compile_context>

<pallas_src>
import math

import jax
import jax.numpy as jnp
from jax.experimental import pallas as pl
from jax.experimental.pallas import tpu as pltpu

# ----------------------------- model hyper-parameters -----------------------------
HID_DIM = 32            # con_gcn.hid_dim
EMD_DIM = HID_DIM * 4   # self.emd_dim = hid_dim * 4
N_PTS = 17              # con_gcn.n_pts
N_LAYERS = 2            # con_gcn.num_layer (small for the demo)
N_HEAD = 4              # con_gcn.n_head
DK = HID_DIM // N_HEAD
C_IN, C_OUT = 3, 3      # con_gcn.coords_dim
K_CHEB = 2              # ChebConv(K=2): T0 == I, T1 == L

# implicit / Anderson defaults from __init__ (implicit_config is None)
IMPLICIT_ITERS = 20
ANDERSON_M = 5
ANDERSON_BETA = 1.0
ANDERSON_LAM = 1e-4
INIT_TOL = 1e-3
FINAL_TOL = 1e-5
TOL_DECAY_STEPS = 5000
_PROGRESS = min(1.0, 1.0 / TOL_DECAY_STEPS)                 # first forward call: step_count == 1
CURRENT_TOL = INIT_TOL * (1.0 - _PROGRESS) + FINAL_TOL * _PROGRESS
_SCALE = 1.0 / math.sqrt(DK)


# ----------------------------- in-kernel helpers -----------------------------
def _layer_norm(x, a, b, eps=1e-6):
    # GraFormer LayerNorm: a * (x - mean) / (std + eps) + b  (torch.std is unbiased)
    mean = jnp.mean(x, axis=-1, keepdims=True)
    var = jnp.sum((x - mean) ** 2, axis=-1, keepdims=True) / (x.shape[-1] - 1)
    return a * (x - mean) / (jnp.sqrt(var) + eps) + b


def _cheb(x, t1, w_cs, b):
    # ChebConv (K=2) restacked: one wide matmul x @ [W0 | W1], then the T1 graph matmul (T0 == I).
    cout = w_cs.shape[-1] // K_CHEB
    xw = jnp.dot(x, w_cs, preferred_element_type=jnp.float32)          # (BN, K*Cout)
    return xw[:, :cout] + jnp.dot(t1, xw[:, cout:], preferred_element_type=jnp.float32) + b


def _solve_ridge(amat, rhs):
    """Unrolled Gauss-Jordan solve of the small (m, m) SPD ridge system; rhs is (m, 1)."""
    m = amat.shape[0]
    aug = jnp.concatenate([amat, rhs], axis=1)                          # (m, m+1)
    rows = jax.lax.broadcasted_iota(jnp.int32, (m, 1), 0)
    for k in range(m):
        prow = aug[k:k + 1, :]                                          # (1, m+1)
        prow = prow / prow[:, k:k + 1]                                  # pivot is always > 0 (lam on diag)
        mult = jnp.where(rows == k, 0.0, aug[:, k:k + 1])               # (m, 1)
        aug = aug - mult * prow
        aug = jnp.where(rows == k, prow, aug)
    return aug[:, m:m + 1]                                              # (m, 1)


# ----------------------------- fused Anderson-solver kernel -----------------------------
def _anderson_kernel(z0_ref, amask_ref, tproj_ref, t1_ref, lg_ref, lnb_ref,
                     wqkv_ref, bqkv_ref, wo_ref, wg1_ref, bg1_ref, wg2_ref,
                     b4_ref, wcheb_ref, o_ref,
                     x_hist, f_hist, z_sc, done_sc):
    m = ANDERSON_M
    amask = amask_ref[...]                  # (BN, BN) additive bias: visibility + cross-batch block
    t1 = t1_ref[...]                        # (BN, BN) block-diag Chebyshev T1

    def f_iter(cur):                        # one application of the N_LAYERS stack; cur: (BN, H)
        for j in range(N_LAYERS):           # static unroll (N_LAYERS == 2)
            ln = lnb_ref[j]                 # (4, H): ln1a, ln1b, ln2a, ln2b
            b4 = b4_ref[j]                  # (4, H): b_out, b_g2, b_cheb1, b_cheb2

            # ---- sublayer 1: x + MHA(LayerNorm(x)); one wide QKV matmul, head-batched scores ----
            y = _layer_norm(cur, ln[0:1], ln[1:2])
            qkv = jnp.dot(y, wqkv_ref[j], preferred_element_type=jnp.float32) + bqkv_ref[j]  # (BN, 3H)
            q3 = jnp.stack([qkv[:, h * DK:(h + 1) * DK] for h in range(N_HEAD)], axis=0)
            k3 = jnp.stack([qkv[:, HID_DIM + h * DK:HID_DIM + (h + 1) * DK]
                            for h in range(N_HEAD)], axis=0)
            v3 = jnp.stack([qkv[:, 2 * HID_DIM + h * DK:2 * HID_DIM + (h + 1) * DK]
                            for h in range(N_HEAD)], axis=0)                                  # (h, BN, DK)
            s = jax.lax.dot_general(q3, k3, (((2,), (2,)), ((0,), (0,))),
                                    preferred_element_type=jnp.float32) * _SCALE              # (h, BN, BN)
            s = s + amask[None]
            s = s - jnp.max(s, axis=-1, keepdims=True)
            p = jnp.exp(s)
            p = p / jnp.sum(p, axis=-1, keepdims=True)       # exact division (convergence-safe)
            oh = jax.lax.dot_general(p, v3, (((2,), (1,)), ((0,), (0,))),
                                     preferred_element_type=jnp.float32)                      # (h, BN, DK)
            o_cat = jnp.concatenate([oh[h] for h in range(N_HEAD)], axis=1)                   # (BN, H)
            x1 = cur + jnp.dot(o_cat, wo_ref[j], preferred_element_type=jnp.float32) + b4[0:1]

            # ---- sublayer 2: x + GraphNet(LayerNorm(x)); block-diag L precomputed ----
            y2 = _layer_norm(x1, ln[2:3], ln[3:4])
            lg = lg_ref[j]
            g = jnp.dot(lg, y2, preferred_element_type=jnp.float32)
            g = jnp.maximum(jnp.dot(g, wg1_ref[j], preferred_element_type=jnp.float32) + bg1_ref[j], 0.0)
            g = jnp.dot(lg, g, preferred_element_type=jnp.float32)
            g = jnp.dot(g, wg2_ref[j], preferred_element_type=jnp.float32) + b4[1:2]
            x2 = x1 + g

            # ---- _ResChebGC_diff: residual + gconv2(relu(gconv1(x)) + temb_proj) ----
            wc = wcheb_ref[j]                                                                 # (2, H, 2H)
            h1 = jnp.maximum(_cheb(x2, t1, wc[0], b4[2:3]), 0.0) + tproj_ref[j]
            h2 = jnp.maximum(_cheb(h1, t1, wc[1], b4[3:4]), 0.0)
            cur = x2 + h2
        return cur

    # --- resident state init ---
    z_sc[...] = z0_ref[...]
    x_hist[...] = jnp.zeros_like(x_hist)
    f_hist[...] = jnp.zeros_like(f_hist)
    done_sc[0] = 0

    rr_m = jax.lax.broadcasted_iota(jnp.int32, (m, m), 0)
    cc_m = jax.lax.broadcasted_iota(jnp.int32, (m, m), 1)
    rr_c = jax.lax.broadcasted_iota(jnp.int32, (m, 1), 0)
    eye_m = (rr_m == cc_m).astype(jnp.float32)

    def body(i, carry):
        @pl.when(done_sc[0] == 0)           # skip everything once converged (== torch early break)
        def _():
            z = z_sc[...]
            cur = f_iter(z)
            residual = cur - z

            # circular-buffer history write (overwrites the oldest row; the Anderson math is
            # permutation-invariant and F[n-1] is always the just-computed residual)
            pos = i % m
            sel = jax.lax.broadcasted_iota(jnp.int32, (m, 1, 1), 0) == pos
            x_hist[...] = jnp.where(sel, z[None], x_hist[...])
            f_hist[...] = jnp.where(sel, residual[None], f_hist[...])
            x_all = x_hist[...]
            f_all = f_hist[...]

            n = jnp.minimum(i + 1, m)                                        # number of valid rows
            dF = [jnp.where(n > a, f_all[a] - residual, 0.0) for a in range(m)]

            # masked Gram / rhs built with pair-reductions (rows >= n contribute exact zeros)
            norm_sq = jnp.float32(0.0)
            gram = jnp.zeros((m, m), jnp.float32)
            rhs = jnp.zeros((m, 1), jnp.float32)
            for a in range(m):
                gaa = jnp.sum(dF[a] * dF[a])
                norm_sq = norm_sq + gaa
                gram = gram + gaa * ((rr_m == a) & (cc_m == a)).astype(jnp.float32)
                rhs = rhs - jnp.sum(dF[a] * residual) * (rr_c == a).astype(jnp.float32)
                for b in range(a + 1, m):
                    gab = jnp.sum(dF[a] * dF[b])
                    gram = gram + gab * (((rr_m == a) & (cc_m == b)) |
                                         ((rr_m == b) & (cc_m == a))).astype(jnp.float32)

            alpha = _solve_ridge(gram + ANDERSON_LAM * eye_m, rhs)           # (m, 1); padded rows -> 0
            # TODO(synk): torch falls back to uniform alpha when torch.linalg.solve raises; there is
            # no exception path here, and alpha/alpha.sum() can still degrade for an ill-conditioned
            # Gram exactly like the torch success path.
            alpha = alpha / jnp.sum(alpha)

            z_and = jnp.zeros_like(z)
            f_and = jnp.zeros_like(z)
            for a in range(m):
                w = alpha[a:a + 1, 0:1]                                      # (1,1) scalar weight
                z_and = z_and + w * x_all[a]
                f_and = f_and + w * f_all[a]
            z_and = z_and + ANDERSON_BETA * f_and
            z_simple = z + ANDERSON_BETA * residual

            tiny = norm_sq < 1e-20                                           # ||dF|| < 1e-10
            use_simple = jnp.logical_or(i < 1, tiny)
            z_new = jnp.where(use_simple, z_simple, z_and)
            z_sc[...] = z_new

            # convergence check (torch `continue`s past it on the tiny-dF branch when i >= 1)
            diff = z_new - z
            err_num = jnp.sqrt(jnp.sum(diff * diff))
            err_den = jnp.sqrt(jnp.sum(z * z)) + 1e-8
            converged = err_num < CURRENT_TOL * err_den
            skip = jnp.logical_and(i >= 1, tiny)
            done_sc[0] = jnp.logical_and(converged, jnp.logical_not(skip)).astype(jnp.int32)

        return carry

    jax.lax.fori_loop(0, IMPLICIT_ITERS, body, 0)
    o_ref[...] = z_sc[...]


def anderson_solve(z0, amask, tproj, t1bd, lgbd, pk):
    BN, H = z0.shape
    args = (z0, amask, tproj, t1bd, lgbd, pk["lnb"], pk["wqkv"], pk["bqkv"], pk["wo"],
            pk["wg1"], pk["bg1"], pk["wg2"], pk["b4"], pk["wcheb"])
    in_specs = [pl.BlockSpec(a.shape, lambda i, nd=a.ndim: (0,) * nd) for a in args]
    return pl.pallas_call(
        _anderson_kernel,
        out_shape=jax.ShapeDtypeStruct((BN, H), jnp.float32),
        grid=(1,),
        in_specs=in_specs,
        out_specs=pl.BlockSpec((BN, H), lambda i: (0, 0)),
        scratch_shapes=[pltpu.VMEM((ANDERSON_M, BN, H), jnp.float32),   # X history
                        pltpu.VMEM((ANDERSON_M, BN, H), jnp.float32),   # F history
                        pltpu.VMEM((BN, H), jnp.float32),               # current z
                        pltpu.SMEM((1,), jnp.int32)],                   # converged flag
        compiler_params=pltpu.CompilerParams(dimension_semantics=("arbitrary",)),
    )(*args)


# ----------------------------- plain-JAX glue (runs once, fused by XLA) -----------------------------
def get_timestep_embedding(t, dim):
    half = dim // 2
    freqs = jnp.exp(jnp.arange(half, dtype=jnp.float32) * (-math.log(10000.0) / (half - 1)))
    args = t.astype(jnp.float32)[:, None] * freqs[None, :]
    return jnp.concatenate([jnp.sin(args), jnp.cos(args)], axis=1)


def cheb_conv_dense(x, t1, w, b):
    # ChebConv K=2: x @ W0 + (L @ x) @ W1 + b  (runs once each for gconv_input / gconv_output)
    return x @ w[0] + jnp.einsum("ij,bjc->bic", t1, x) @ w[1] + b


def cheb_laplacian(adj):
    # ChebConv.get_laplacian(normalize=True): L = I - D^-1/2 A D^-1/2
    n = adj.shape[0]
    dmh = jnp.diag(jnp.sum(adj, axis=-1) ** -0.5)
    return jnp.eye(n, dtype=jnp.float32) - dmh @ adj @ dmh


def init_params(key):
    keys = iter(jax.random.split(key, 64))

    def dense(fi, fo):
        std = 0.5 * math.sqrt(2.0 / (fi + fo))
        return (jax.random.normal(next(keys), (fi, fo), jnp.float32) * std,
                jnp.zeros((1, fo), jnp.float32))

    def cheb(fi, fo):
        std = 0.5 * math.sqrt(2.0 / (fi + fo))
        return (jax.random.normal(next(keys), (K_CHEB, fi, fo), jnp.float32) * std,
                jnp.zeros((1, fo), jnp.float32))

    p = {}
    p["Win"], p["bin"] = cheb(C_IN, HID_DIM)             # gconv_input
    p["Wout"], p["bout"] = cheb(HID_DIM, C_OUT)          # gconv_output
    p["Wd0"], p["bd0"] = dense(HID_DIM, EMD_DIM)         # temb.dense[0]
    p["Wd1"], p["bd1"] = dense(EMD_DIM, EMD_DIM)         # temb.dense[1]
    p["att"], p["res"] = [], []
    for _ in range(N_LAYERS):
        a = {"ln1a": jnp.ones((1, HID_DIM), jnp.float32), "ln1b": jnp.zeros((1, HID_DIM), jnp.float32),
             "ln2a": jnp.ones((1, HID_DIM), jnp.float32), "ln2b": jnp.zeros((1, HID_DIM), jnp.float32),
             "ahat": jnp.eye(N_PTS, dtype=jnp.float32)}
        a["wq"], a["bq"] = dense(HID_DIM, HID_DIM)
        a["wk"], a["bk"] = dense(HID_DIM, HID_DIM)
        a["wv"], a["bv"] = dense(HID_DIM, HID_DIM)
        a["wo"], a["bo"] = dense(HID_DIM, HID_DIM)
        a["wg1"], a["bg1"] = dense(HID_DIM, 2 * HID_DIM)
        a["wg2"], a["bg2"] = dense(2 * HID_DIM, HID_DIM)
        p["att"].append(a)
        r = {}
        r["w1"], r["b1"] = cheb(HID_DIM, HID_DIM)
        r["w2"], r["b2"] = cheb(HID_DIM, HID_DIM)
        r["wt"], r["bt"] = dense(EMD_DIM, HID_DIM)       # temb_proj
        p["res"].append(r)
    return p


def pack_params(p, adj):
    """Repack raw parameters into kernel-friendly, lane-dense, iteration-invariant layouts (once)."""
    def cs(w):                                           # (K, Cin, Cout) -> (Cin, K*Cout)
        k, ci, co = w.shape
        return jnp.transpose(w, (1, 0, 2)).reshape(ci, k * co)

    pk = {"t1": cheb_laplacian(adj),
          "win": p["Win"], "bin": p["bin"], "wout": p["Wout"], "bout": p["bout"],
          "Wd0": p["Wd0"], "bd0": p["bd0"], "Wd1": p["Wd1"], "bd1": p["bd1"]}

    lnb, wqkv, bqkv, wo, wg1, bg1, wg2, b4, wcheb, lnorm, wt, bt = ([] for _ in range(12))
    for a, r in zip(p["att"], p["res"]):
        lnb.append(jnp.concatenate([a["ln1a"], a["ln1b"], a["ln2a"], a["ln2b"]], axis=0))   # (4, H)
        wqkv.append(jnp.concatenate([a["wq"], a["wk"], a["wv"]], axis=1))                   # (H, 3H)
        bqkv.append(jnp.concatenate([a["bq"], a["bk"], a["bv"]], axis=1))                   # (1, 3H)
        wo.append(a["wo"])                                                                  # (H, H)
        wg1.append(a["wg1"]); bg1.append(a["bg1"]); wg2.append(a["wg2"])
        b4.append(jnp.concatenate([a["bo"], a["bg2"], r["b1"], r["b2"]], axis=0))           # (4, H)
        wcheb.append(jnp.stack([cs(r["w1"]), cs(r["w2"])], axis=0))                         # (2, H, 2H)
        # hoisted GraphNet operator L = D^-1/2 A_hat D^-1/2 (iteration-invariant)
        A = a["ahat"]
        dhat = jax.lax.rsqrt(jnp.sum(A, axis=0, keepdims=True) + 1e-5)
        lnorm.append(dhat.T * A * dhat)
        wt.append(r["wt"]); bt.append(r["bt"][0])
    pk.update(lnb=jnp.stack(lnb), wqkv=jnp.stack(wqkv), bqkv=jnp.stack(bqkv), wo=jnp.stack(wo),
              wg1=jnp.stack(wg1), bg1=jnp.stack(bg1), wg2=jnp.stack(wg2),
              b4=jnp.stack(b4), wcheb=jnp.stack(wcheb), lnorm=jnp.stack(lnorm),
              wt=jnp.stack(wt), bt=jnp.stack(bt))
    return pk


def adaptive_gcn_diff_forward(pk, x, mask, t):
    """forward() with use_adaptive=True, solver='anderson' (first call: step_count=1, no warm start).
    Everything iteration-dependent runs inside ONE fused pallas_call."""
    B, N, _ = x.shape
    BN = B * N
    H = HID_DIM

    # timestep embedding head + hoisted per-layer temb_proj(SiLU(temb))  (iteration-invariant)
    temb = get_timestep_embedding(t, H)
    temb = temb @ pk["Wd0"] + pk["bd0"]
    temb = temb * jax.nn.sigmoid(temb)
    temb = temb @ pk["Wd1"] + pk["bd1"]                                       # (B, E)
    te = temb * jax.nn.sigmoid(temb)
    tproj = jnp.einsum("be,leh->lbh", te, pk["wt"]) + pk["bt"][:, None, :]    # (L, B, H)
    tproj = jnp.broadcast_to(tproj[:, :, None, :], (N_LAYERS, B, N, H)).reshape(N_LAYERS, BN, H)

    # additive attention bias: key-visibility mask + cross-batch block (batch is folded to B*N rows)
    km = mask.reshape(BN)
    same_batch = jnp.kron(jnp.eye(B, dtype=jnp.float32), jnp.ones((N, N), jnp.float32))
    amask = jnp.where((same_batch > 0) & (km[None, :] > 0), 0.0, -1e9).astype(jnp.float32)

    # block-diagonal (per-batch) graph operators for the folded layout
    eye_b = jnp.eye(B, dtype=jnp.float32)
    t1bd = jnp.kron(eye_b, pk["t1"])                                          # (BN, BN)
    lgbd = jnp.stack([jnp.kron(eye_b, pk["lnorm"][j]) for j in range(N_LAYERS)])  # (L, BN, BN)

    # gconv_input (runs once; no warm start on the first call)
    z0 = cheb_conv_dense(x, pk["t1"], pk["win"], pk["bin"]).reshape(BN, H)

    z_star = anderson_solve(z0, amask, tproj, t1bd, lgbd, pk).reshape(B, N, H)

    # gconv_output (runs once)
    return cheb_conv_dense(z_star, pk["t1"], pk["wout"], pk["bout"])


# ----------------------------- main -----------------------------
if __name__ == "__main__":
    key = jax.random.PRNGKey(0)
    k_param, k_x, k_t = jax.random.split(key, 3)

    # deterministic ring adjacency over N_PTS joints
    idx = jnp.arange(N_PTS)
    adj = jnp.zeros((N_PTS, N_PTS), jnp.float32).at[idx, (idx + 1) % N_PTS].set(1.0)
    adj = jnp.maximum(adj, adj.T)

    params = init_params(k_param)
    pk = pack_params(params, adj)

    B = 2
    x = jax.random.normal(k_x, (B, N_PTS, C_IN), jnp.float32)
    mask = jnp.ones((B, N_PTS), jnp.float32)              # all joints visible
    t = jax.random.randint(k_t, (B,), 0, 1000).astype(jnp.float32)

    forward = jax.jit(adaptive_gcn_diff_forward)
    out = jax.block_until_ready(forward(pk, x, mask, t))
    assert out.shape == (B, N_PTS, C_OUT) and out.dtype == jnp.float32
    print("KERNEL_OK")
</pallas_src>

<mosaic_0001>
module attributes {stable_mosaic.version = 11 : i64} {
  func.func @_anderson_kernel(%arg0: i32, %arg1: memref<34x32xf32, #tpu.memory_space<vmem>>, %arg2: memref<34x34xf32, #tpu.memory_space<vmem>>, %arg3: memref<2x34x32xf32, #tpu.memory_space<vmem>>, %arg4: memref<34x34xf32, #tpu.memory_space<vmem>>, %arg5: memref<2x34x34xf32, #tpu.memory_space<vmem>>, %arg6: memref<2x4x32xf32, #tpu.memory_space<vmem>>, %arg7: memref<2x32x96xf32, #tpu.memory_space<vmem>>, %arg8: memref<2x1x96xf32, #tpu.memory_space<vmem>>, %arg9: memref<2x32x32xf32, #tpu.memory_space<vmem>>, %arg10: memref<2x32x64xf32, #tpu.memory_space<vmem>>, %arg11: memref<2x1x64xf32, #tpu.memory_space<vmem>>, %arg12: memref<2x64x32xf32, #tpu.memory_space<vmem>>, %arg13: memref<2x4x32xf32, #tpu.memory_space<vmem>>, %arg14: memref<2x2x32x64xf32, #tpu.memory_space<vmem>>, %arg15: memref<34x32xf32, #tpu.memory_space<vmem>>, %arg16: memref<5x34x32xf32, #tpu.memory_space<vmem>>, %arg17: memref<5x34x32xf32, #tpu.memory_space<vmem>>, %arg18: memref<34x32xf32, #tpu.memory_space<vmem>>, %arg19: memref<1xi32, #tpu.memory_space<smem>>) attributes {dimension_semantics = [#tpu.dimension_semantics<arbitrary>], iteration_bounds = array<i64: 1>, scalar_prefetch = 0 : i64, scratch_operands = 4 : i64, tpu.core_type = #tpu.core_type<tc>, window_params = [{pipeline_mode = #tpu.pipeline_mode<synchronous>, transform_indices = @transform_0, window_bounds = array<i64: 34, 32>}, {pipeline_mode = #tpu.pipeline_mode<synchronous>, transform_indices = @transform_1, window_bounds = array<i64: 34, 34>}, {pipeline_mode = #tpu.pipeline_mode<synchronous>, transform_indices = @transform_2, window_bounds = array<i64: 2, 34, 32>}, {pipeline_mode = #tpu.pipeline_mode<synchronous>, transform_indices = @transform_3, window_bounds = array<i64: 34, 34>}, {pipeline_mode = #tpu.pipeline_mode<synchronous>, transform_indices = @transform_4, window_bounds = array<i64: 2, 34, 34>}, {pipeline_mode = #tpu.pipeline_mode<synchronous>, transform_indices = @transform_5, window_bounds = array<i64: 2, 4, 32>}, {pipeline_mode = #tpu.pipeline_mode<synchronous>, transform_indices = @transform_6, window_bounds = array<i64: 2, 32, 96>}, {pipeline_mode = #tpu.pipeline_mode<synchronous>, transform_indices = @transform_7, window_bounds = array<i64: 2, 1, 96>}, {pipeline_mode = #tpu.pipeline_mode<synchronous>, transform_indices = @transform_8, window_bounds = array<i64: 2, 32, 32>}, {pipeline_mode = #tpu.pipeline_mode<synchronous>, transform_indices = @transform_9, window_bounds = array<i64: 2, 32, 64>}, {pipeline_mode = #tpu.pipeline_mode<synchronous>, transform_indices = @transform_10, window_bounds = array<i64: 2, 1, 64>}, {pipeline_mode = #tpu.pipeline_mode<synchronous>, transform_indices = @transform_11, window_bounds = array<i64: 2, 64, 32>}, {pipeline_mode = #tpu.pipeline_mode<synchronous>, transform_indices = @transform_12, window_bounds = array<i64: 2, 4, 32>}, {pipeline_mode = #tpu.pipeline_mode<synchronous>, transform_indices = @transform_13, window_bounds = array<i64: 2, 2, 32, 64>}, {pipeline_mode = #tpu.pipeline_mode<synchronous>, transform_indices = @transform_14, window_bounds = array<i64: 34, 32>}]} {
    %c0 = arith.constant 0 : index
    %c0_0 = arith.constant 0 : index
    %0 = vector.load %arg2[%c0, %c0_0] : memref<34x34xf32, #tpu.memory_space<vmem>>, vector<34x34xf32>
    %c0_1 = arith.constant 0 : index
    %c0_2 = arith.constant 0 : index
    %1 = vector.load %arg4[%c0_1, %c0_2] : memref<34x34xf32, #tpu.memory_space<vmem>>, vector<34x34xf32>
    %c0_3 = arith.constant 0 : index
    %c0_4 = arith.constant 0 : index
    %2 = vector.load %arg1[%c0_3, %c0_4] : memref<34x32xf32, #tpu.memory_space<vmem>>, vector<34x32xf32>
    %c0_5 = arith.constant 0 : index
    %c0_6 = arith.constant 0 : index
    %3 = vector.load %arg18[%c0_5, %c0_6] : memref<34x32xf32, #tpu.memory_space<vmem>>, vector<34x32xf32>
    tpu.vector_store %arg18[%c0_5, %c0_6], %2 {strides = array<i32>} : memref<34x32xf32, #tpu.memory_space<vmem>>, vector<34x32xf32>,
    %cst = arith.constant 0.000000e+00 : f32
    %4 = vector.broadcast %cst : f32 to vector<5x34x32xf32>
    %c0_7 = arith.constant 0 : index
    %c0_8 = arith.constant 0 : index
    %c0_9 = arith.constant 0 : index
    %5 = vector.load %arg16[%c0_7, %c0_8, %c0_9] : memref<5x34x32xf32, #tpu.memory_space<vmem>>, vector<5x34x32xf32>
    tpu.vector_store %arg16[%c0_7, %c0_8, %c0_9], %4 {strides = array<i32>} : memref<5x34x32xf32, #tpu.memory_space<vmem>>, vector<5x34x32xf32>,
    %cst_10 = arith.constant 0.000000e+00 : f32
    %6 = vector.broadcast %cst_10 : f32 to vector<5x34x32xf32>
    %c0_11 = arith.constant 0 : index
    %c0_12 = arith.constant 0 : index
    %c0_13 = arith.constant 0 : index
    %7 = vector.load %arg17[%c0_11, %c0_12, %c0_13] : memref<5x34x32xf32, #tpu.memory_space<vmem>>, vector<5x34x32xf32>
    tpu.vector_store %arg17[%c0_11, %c0_12, %c0_13], %6 {strides = array<i32>} : memref<5x34x32xf32, #tpu.memory_space<vmem>>, vector<5x34x32xf32>,
    %c0_i32 = arith.constant 0 : i32
    %c0_14 = arith.constant 0 : index
    %8 = memref.load %arg19[%c0_14] : memref<1xi32, #tpu.memory_space<smem>>
    memref.store %c0_i32, %arg19[%c0_14] : memref<1xi32, #tpu.memory_space<smem>>
    %9 = tpu.iota {dimensions = array<i32: 0>} : vector<5x5xi32>
    %10 = tpu.iota {dimensions = array<i32: 1>} : vector<5x5xi32>
    %11 = tpu.iota {dimensions = array<i32: 0>} : vector<5x1xi32>
    %12 = arith.cmpi eq, %9, %10 : vector<5x5xi32>
    %13 = arith.extui %12 : vector<5x5xi1> to vector<5x5xi32>
    %14 = arith.sitofp %13 : vector<5x5xi32> to vector<5x5xf32>
    %c0_i32_15 = arith.constant 0 : i32
    %c20_i32 = arith.constant 20 : i32
    %15 = arith.addi %c0_i32_15, %c20_i32 : i32
    %c1_i32 = arith.constant 1 : i32
    scf.for %arg20 = %c0_i32_15 to %15 step %c1_i32  : i32 {
      %c0_21 = arith.constant 0 : index
      %18 = memref.load %arg19[%c0_21] : memref<1xi32, #tpu.memory_space<smem>>
      %c0_i32_22 = arith.constant 0 : i32
      %19 = arith.cmpi eq, %18, %c0_i32_22 : i32
      %20 = arith.extui %19 : i1 to i32
      %c0_i32_23 = arith.constant 0 : i32
      %21 = arith.cmpi ne, %20, %c0_i32_23 : i32
      scf.if %21 {
        %c0_24 = arith.constant 0 : index
        %c0_25 = arith.constant 0 : index
        %22 = vector.load %arg18[%c0_24, %c0_25] : memref<34x32xf32, #tpu.memory_space<vmem>>, vector<34x32xf32>
        %c0_26 = arith.constant 0 : index
        %c0_27 = arith.constant 0 : index
        %c0_28 = arith.constant 0 : index
        %23 = vector.load %arg6[%c0_26, %c0_27, %c0_28] : memref<2x4x32xf32, #tpu.memory_space<vmem>>, vector<1x4x32xf32>
        %24 = vector.shape_cast %23 : vector<1x4x32xf32> to vector<4x32xf32>
        %c0_29 = arith.constant 0 : index
        %c0_30 = arith.constant 0 : index
        %c0_31 = arith.constant 0 : index
        %25 = vector.load %arg13[%c0_29, %c0_30, %c0_31] : memref<2x4x32xf32, #tpu.memory_space<vmem>>, vector<1x4x32xf32>
        %26 = vector.shape_cast %25 : vector<1x4x32xf32> to vector<4x32xf32>
        %27 = vector.extract_strided_slice %24 {offsets = [0, 0], sizes = [1, 32], strides = [1, 1]} : vector<4x32xf32> to vector<1x32xf32>
        %28 = vector.extract_strided_slice %24 {offsets = [1, 0], sizes = [1, 32], strides = [1, 1]} : vector<4x32xf32> to vector<1x32xf32>
        %cst_32 = arith.constant dense<0.000000e+00> : vector<34xf32>
        %29 = vector.multi_reduction <add>, %22, %cst_32 [1] : vector<34x32xf32> to vector<34xf32>
        %30 = vector.shape_cast %29 : vector<34xf32> to vector<34x1xf32>
        %cst_33 = arith.constant 3.200000e+01 : f32
        %31 = vector.broadcast %cst_33 : f32 to vector<34x1xf32>
        %32 = arith.divf %30, %31 : vector<34x1xf32>
        %33 = vector.broadcast %32 : vector<34x1xf32> to vector<34x32xf32>
        %34 = arith.subf %22, %33 : vector<34x32xf32>
        %35 = arith.mulf %34, %34 : vector<34x32xf32>
        %cst_34 = arith.constant dense<0.000000e+00> : vector<34xf32>
        %36 = vector.multi_reduction <add>, %35, %cst_34 [1] : vector<34x32xf32> to vector<34xf32>
        %37 = vector.shape_cast %36 : vector<34xf32> to vector<34x1xf32>
        %cst_35 = arith.constant 3.100000e+01 : f32
        %38 = vector.broadcast %cst_35 : f32 to vector<34x1xf32>
        %39 = arith.divf %37, %38 : vector<34x1xf32>
        %40 = vector.broadcast %32 : vector<34x1xf32> to vector<34x32xf32>
        %41 = arith.subf %22, %40 : vector<34x32xf32>
        %42 = vector.broadcast %27 : vector<1x32xf32> to vector<34x32xf32>
        %43 = arith.mulf %42, %41 : vector<34x32xf32>
        %44 = math.sqrt %39 : vector<34x1xf32>
        %cst_36 = arith.constant 9.99999997E-7 : f32
        %45 = vector.broadcast %cst_36 : f32 to vector<34x1xf32>
        %46 = arith.addf %44, %45 : vector<34x1xf32>
        %47 = vector.broadcast %46 : vector<34x1xf32> to vector<34x32xf32>
        %48 = arith.divf %43, %47 : vector<34x32xf32>
        %49 = vector.broadcast %28 : vector<1x32xf32> to vector<34x32xf32>
        %50 = arith.addf %48, %49 : vector<34x32xf32>
        %c0_37 = arith.constant 0 : index
        %c0_38 = arith.constant 0 : index
        %c0_39 = arith.constant 0 : index
        %51 = vector.load %arg7[%c0_37, %c0_38, %c0_39] : memref<2x32x96xf32, #tpu.memory_space<vmem>>, vector<1x32x96xf32>
        %52 = vector.shape_cast %51 : vector<1x32x96xf32> to vector<32x96xf32>
        %cst_40 = arith.constant dense<0.000000e+00> : vector<34x96xf32>
        %53 = tpu.matmul %50, %52, %cst_40 {dimension_numbers = #tpu.dot_dimension_numbers<[1], [0], [0], [1], [0, 0, 1, 1], [], []>} : vector<34x32xf32>, vector<32x96xf32>, vector<34x96xf32> -> vector<34x96xf32>
        %c0_41 = arith.constant 0 : index
        %c0_42 = arith.constant 0 : index
        %c0_43 = arith.constant 0 : index
        %54 = vector.load %arg8[%c0_41, %c0_42, %c0_43] : memref<2x1x96xf32, #tpu.memory_space<vmem>>, vector<1x1x96xf32>
        %55 = vector.shape_cast %54 : vector<1x1x96xf32> to vector<1x96xf32>
        %56 = vector.broadcast %55 : vector<1x96xf32> to vector<34x96xf32>
        %57 = arith.addf %53, %56 : vector<34x96xf32>
        %58 = vector.extract_strided_slice %57 {offsets = [0, 0], sizes = [34, 8], strides = [1, 1]} : vector<34x96xf32> to vector<34x8xf32>
        %59 = vector.extract_strided_slice %57 {offsets = [0, 8], sizes = [34, 8], strides = [1, 1]} : vector<34x96xf32> to vector<34x8xf32>
        %60 = vector.extract_strided_slice %57 {offsets = [0, 16], sizes = [34, 8], strides = [1, 1]} : vector<34x96xf32> to vector<34x8xf32>
        %61 = vector.extract_strided_slice %57 {offsets = [0, 24], sizes = [34, 8], strides = [1, 1]} : vector<34x96xf32> to vector<34x8xf32>
        %62 = vector.shape_cast %58 : vector<34x8xf32> to vector<1x34x8xf32>
        %63 = vector.shape_cast %59 : vector<34x8xf32> to vector<1x34x8xf32>
        %64 = vector.shape_cast %60 : vector<34x8xf32> to vector<1x34x8xf32>
        %65 = vector.shape_cast %61 : vector<34x8xf32> to vector<1x34x8xf32>
        %66 = tpu.concatenate %62, %63, %64, %65 in 0 : vector<1x34x8xf32>, vector<1x34x8xf32>, vector<1x34x8xf32>, vector<1x34x8xf32> -> vector<4x34x8xf32>
        %67 = vector.extract_strided_slice %57 {offsets = [0, 32], sizes = [34, 8], strides = [1, 1]} : vector<34x96xf32> to vector<34x8xf32>
        %68 = vector.extract_strided_slice %57 {offsets = [0, 40], sizes = [34, 8], strides = [1, 1]} : vector<34x96xf32> to vector<34x8xf32>
        %69 = vector.extract_strided_slice %57 {offsets = [0, 48], sizes = [34, 8], strides = [1, 1]} : vector<34x96xf32> to vector<34x8xf32>
        %70 = vector.extract_strided_slice %57 {offsets = [0, 56], sizes = [34, 8], strides = [1, 1]} : vector<34x96xf32> to vector<34x8xf32>
        %71 = vector.shape_cast %67 : vector<34x8xf32> to vector<1x34x8xf32>
        %72 = vector.shape_cast %68 : vector<34x8xf32> to vector<1x34x8xf32>
        %73 = vector.shape_cast %69 : vector<34x8xf32> to vector<1x34x8xf32>
        %74 = vector.shape_cast %70 : vector<34x8xf32> to vector<1x34x8xf32>
        %75 = tpu.concatenate %71, %72, %73, %74 in 0 : vector<1x34x8xf32>, vector<1x34x8xf32>, vector<1x34x8xf32>, vector<1x34x8xf32> -> vector<4x34x8xf32>
        %76 = vector.extract_strided_slice %57 {offsets = [0, 64], sizes = [34, 8], strides = [1, 1]} : vector<34x96xf32> to vector<34x8xf32>
        %77 = vector.extract_strided_slice %57 {offsets = [0, 72], sizes = [34, 8], strides = [1, 1]} : vector<34x96xf32> to vector<34x8xf32>
        %78 = vector.extract_strided_slice %57 {offsets = [0, 80], sizes = [34, 8], strides = [1, 1]} : vector<34x96xf32> to vector<34x8xf32>
        %79 = vector.extract_strided_slice %57 {offsets = [0, 88], sizes = [34, 8], strides = [1, 1]} : vector<34x96xf32> to vector<34x8xf32>
        %80 = vector.shape_cast %76 : vector<34x8xf32> to vector<1x34x8xf32>
        %81 = vector.shape_cast %77 : vector<34x8xf32> to vector<1x34x8xf32>
        %82 = vector.shape_cast %78 : vector<34x8xf32> to vector<1x34x8xf32>
        %83 = vector.shape_cast %79 : vector<34x8xf32> to vector<1x34x8xf32>
        %84 = tpu.concatenate %80, %81, %82, %83 in 0 : vector<1x34x8xf32>, vector<1x34x8xf32>, vector<1x34x8xf32>, vector<1x34x8xf32> -> vector<4x34x8xf32>
        %cst_44 = arith.constant dense<0.000000e+00> : vector<4x34x34xf32>
        %85 = tpu.matmul %66, %75, %cst_44 {dimension_numbers = #tpu.dot_dimension_numbers<[2], [2], [1], [1], [0, 0, 0, 1, 1, 1], [0], [0]>} : vector<4x34x8xf32>, vector<4x34x8xf32>, vector<4x34x34xf32> -> vector<4x34x34xf32>
        %cst_45 = arith.constant 0.353553385 : f32
        %86 = vector.broadcast %cst_45 : f32 to vector<4x34x34xf32>
        %87 = arith.mulf %85, %86 : vector<4x34x34xf32>
        %88 = vector.shape_cast %0 : vector<34x34xf32> to vector<1x34x34xf32>
        %89 = vector.broadcast %88 : vector<1x34x34xf32> to vector<4x34x34xf32>
        %90 = arith.addf %87, %89 : vector<4x34x34xf32>
        %cst_46 = arith.constant dense<0xFF800000> : vector<4x34xf32>
        %91 = vector.multi_reduction <maximumf>, %90, %cst_46 [2] : vector<4x34x34xf32> to vector<4x34xf32>
        %92 = vector.shape_cast %91 : vector<4x34xf32> to vector<4x34x1xf32>
        %93 = vector.broadcast %92 : vector<4x34x1xf32> to vector<4x34x34xf32>
        %94 = arith.subf %90, %93 : vector<4x34x34xf32>
        %95 = math.exp %94 : vector<4x34x34xf32>
        %cst_47 = arith.constant dense<0.000000e+00> : vector<4x34xf32>
        %96 = vector.multi_reduction <add>, %95, %cst_47 [2] : vector<4x34x34xf32> to vector<4x34xf32>
        %97 = vector.shape_cast %96 : vector<4x34xf32> to vector<4x34x1xf32>
        %98 = vector.broadcast %97 : vector<4x34x1xf32> to vector<4x34x34xf32>
        %99 = arith.divf %95, %98 : vector<4x34x34xf32>
        %cst_48 = arith.constant dense<0.000000e+00> : vector<4x34x8xf32>
        %100 = tpu.matmul %99, %84, %cst_48 {dimension_numbers = #tpu.dot_dimension_numbers<[2], [1], [1], [2], [0, 0, 0, 1, 1, 2], [0], [0]>} : vector<4x34x34xf32>, vector<4x34x8xf32>, vector<4x34x8xf32> -> vector<4x34x8xf32>
        %101 = vector.extract_strided_slice %100 {offsets = [0, 0, 0], sizes = [1, 34, 8], strides = [1, 1, 1]} : vector<4x34x8xf32> to vector<1x34x8xf32>
        %102 = vector.shape_cast %101 : vector<1x34x8xf32> to vector<34x8xf32>
        %103 = vector.extract_strided_slice %100 {offsets = [1, 0, 0], sizes = [1, 34, 8], strides = [1, 1, 1]} : vector<4x34x8xf32> to vector<1x34x8xf32>
        %104 = vector.shape_cast %103 : vector<1x34x8xf32> to vector<34x8xf32>
        %105 = vector.extract_strided_slice %100 {offsets = [2, 0, 0], sizes = [1, 34, 8], strides = [1, 1, 1]} : vector<4x34x8xf32> to vector<1x34x8xf32>
        %106 = vector.shape_cast %105 : vector<1x34x8xf32> to vector<34x8xf32>
        %107 = vector.extract_strided_slice %100 {offsets = [3, 0, 0], sizes = [1, 34, 8], strides = [1, 1, 1]} : vector<4x34x8xf32> to vector<1x34x8xf32>
        %108 = vector.shape_cast %107 : vector<1x34x8xf32> to vector<34x8xf32>
        %109 = tpu.concatenate %102, %104, %106, %108 in 1 : vector<34x8xf32>, vector<34x8xf32>, vector<34x8xf32>, vector<34x8xf32> -> vector<34x32xf32>
        %c0_49 = arith.constant 0 : index
        %c0_50 = arith.constant 0 : index
        %c0_51 = arith.constant 0 : index
        %110 = vector.load %arg9[%c0_49, %c0_50, %c0_51] : memref<2x32x32xf32, #tpu.memory_space<vmem>>, vector<1x32x32xf32>
        %111 = vector.shape_cast %110 : vector<1x32x32xf32> to vector<32x32xf32>
        %cst_52 = arith.constant dense<0.000000e+00> : vector<34x32xf32>
        %112 = tpu.matmul %109, %111, %cst_52 {dimension_numbers = #tpu.dot_dimension_numbers<[1], [0], [0], [1], [0, 0, 1, 1], [], []>} : vector<34x32xf32>, vector<32x32xf32>, vector<34x32xf32> -> vector<34x32xf32>
        %113 = arith.addf %22, %112 : vector<34x32xf32>
        %114 = vector.extract_strided_slice %26 {offsets = [0, 0], sizes = [1, 32], strides = [1, 1]} : vector<4x32xf32> to vector<1x32xf32>
        %115 = vector.broadcast %114 : vector<1x32xf32> to vector<34x32xf32>
        %116 = arith.addf %113, %115 : vector<34x32xf32>
        %117 = vector.extract_strided_slice %24 {offsets = [2, 0], sizes = [1, 32], strides = [1, 1]} : vector<4x32xf32> to vector<1x32xf32>
        %118 = vector.extract_strided_slice %24 {offsets = [3, 0], sizes = [1, 32], strides = [1, 1]} : vector<4x32xf32> to vector<1x32xf32>
        %cst_53 = arith.constant dense<0.000000e+00> : vector<34xf32>
        %119 = vector.multi_reduction <add>, %116, %cst_53 [1] : vector<34x32xf32> to vector<34xf32>
        %120 = vector.shape_cast %119 : vector<34xf32> to vector<34x1xf32>
        %cst_54 = arith.constant 3.200000e+01 : f32
        %121 = vector.broadcast %cst_54 : f32 to vector<34x1xf32>
        %122 = arith.divf %120, %121 : vector<34x1xf32>
        %123 = vector.broadcast %122 : vector<34x1xf32> to vector<34x32xf32>
        %124 = arith.subf %116, %123 : vector<34x32xf32>
        %125 = arith.mulf %124, %124 : vector<34x32xf32>
        %cst_55 = arith.constant dense<0.000000e+00> : vector<34xf32>
        %126 = vector.multi_reduction <add>, %125, %cst_55 [1] : vector<34x32xf32> to vector<34xf32>
        %127 = vector.shape_cast %126 : vector<34xf32> to vector<34x1xf32>
        %cst_56 = arith.constant 3.100000e+01 : f32
        %128 = vector.broadcast %cst_56 : f32 to vector<34x1xf32>
        %129 = arith.divf %127, %128 : vector<34x1xf32>
        %130 = vector.broadcast %122 : vector<34x1xf32> to vector<34x32xf32>
        %131 = arith.subf %116, %130 : vector<34x32xf32>
        %132 = vector.broadcast %117 : vector<1x32xf32> to vector<34x32xf32>
        %133 = arith.mulf %132, %131 : vector<34x32xf32>
        %134 = math.sqrt %129 : vector<34x1xf32>
        %cst_57 = arith.constant 9.99999997E-7 : f32
        %135 = vector.broadcast %cst_57 : f32 to vector<34x1xf32>
        %136 = arith.addf %134, %135 : vector<34x1xf32>
        %137 = vector.broadcast %136 : vector<34x1xf32> to vector<34x32xf32>
        %138 = arith.divf %133, %137 : vector<34x32xf32>
        %139 = vector.broadcast %118 : vector<1x32xf32> to vector<34x32xf32>
        %140 = arith.addf %138, %139 : vector<34x32xf32>
        %c0_58 = arith.constant 0 : index
        %c0_59 = arith.constant 0 : index
        %c0_60 = arith.constant 0 : index
        %141 = vector.load %arg5[%c0_58, %c0_59, %c0_60] : memref<2x34x34xf32, #tpu.memory_space<vmem>>, vector<1x34x34xf32>
        %142 = vector.shape_cast %141 : vector<1x34x34xf32> to vector<34x34xf32>
        %cst_61 = arith.constant dense<0.000000e+00> : vector<34x32xf32>
        %143 = tpu.matmul %142, %140, %cst_61 {dimension_numbers = #tpu.dot_dimension_numbers<[1], [0], [0], [1], [0, 0, 1, 1], [], []>} : vector<34x34xf32>, vector<34x32xf32>, vector<34x32xf32> -> vector<34x32xf32>
        %c0_62 = arith.constant 0 : index
        %c0_63 = arith.constant 0 : index
        %c0_64 = arith.constant 0 : index
        %144 = vector.load %arg10[%c0_62, %c0_63, %c0_64] : memref<2x32x64xf32, #tpu.memory_space<vmem>>, vector<1x32x64xf32>
        %145 = vector.shape_cast %144 : vector<1x32x64xf32> to vector<32x64xf32>
        %cst_65 = arith.constant dense<0.000000e+00> : vector<34x64xf32>
        %146 = tpu.matmul %143, %145, %cst_65 {dimension_numbers = #tpu.dot_dimension_numbers<[1], [0], [0], [1], [0, 0, 1, 1], [], []>} : vector<34x32xf32>, vector<32x64xf32>, vector<34x64xf32> -> vector<34x64xf32>
        %c0_66 = arith.constant 0 : index
        %c0_67 = arith.constant 0 : index
        %c0_68 = arith.constant 0 : index
        %147 = vector.load %arg11[%c0_66, %c0_67, %c0_68] : memref<2x1x64xf32, #tpu.memory_space<vmem>>, vector<1x1x64xf32>
        %148 = vector.shape_cast %147 : vector<1x1x64xf32> to vector<1x64xf32>
        %149 = vector.broadcast %148 : vector<1x64xf32> to vector<34x64xf32>
        %150 = arith.addf %146, %149 : vector<34x64xf32>
        %cst_69 = arith.constant 0.000000e+00 : f32
        %151 = vector.broadcast %cst_69 : f32 to vector<34x64xf32>
        %152 = arith.maximumf %150, %151 : vector<34x64xf32>
        %cst_70 = arith.constant dense<0.000000e+00> : vector<34x64xf32>
        %153 = tpu.matmul %142, %152, %cst_70 {dimension_numbers = #tpu.dot_dimension_numbers<[1], [0], [0], [1], [0, 0, 1, 1], [], []>} : vector<34x34xf32>, vector<34x64xf32>, vector<34x64xf32> -> vector<34x64xf32>
        %c0_71 = arith.constant 0 : index
        %c0_72 = arith.constant 0 : index
        %c0_73 = arith.constant 0 : index
        %154 = vector.load %arg12[%c0_71, %c0_72, %c0_73] : memref<2x64x32xf32, #tpu.memory_space<vmem>>, vector<1x64x32xf32>
        %155 = vector.shape_cast %154 : vector<1x64x32xf32> to vector<64x32xf32>
        %cst_74 = arith.constant dense<0.000000e+00> : vector<34x32xf32>
        %156 = tpu.matmul %153, %155, %cst_74 {dimension_numbers = #tpu.dot_dimension_numbers<[1], [0], [0], [1], [0, 0, 1, 1], [], []>} : vector<34x64xf32>, vector<64x32xf32>, vector<34x32xf32> -> vector<34x32xf32>
        %157 = vector.extract_strided_slice %26 {offsets = [1, 0], sizes = [1, 32], strides = [1, 1]} : vector<4x32xf32> to vector<1x32xf32>
        %158 = vector.broadcast %157 : vector<1x32xf32> to vector<34x32xf32>
        %159 = arith.addf %156, %158 : vector<34x32xf32>
        %160 = arith.addf %116, %159 : vector<34x32xf32>
        %c0_75 = arith.constant 0 : index
        %c0_76 = arith.constant 0 : index
        %c0_77 = arith.constant 0 : index
        %c0_78 = arith.constant 0 : index
        %161 = vector.load %arg14[%c0_75, %c0_76, %c0_77, %c0_78] : memref<2x2x32x64xf32, #tpu.memory_space<vmem>>, vector<1x2x32x64xf32>
        %162 = vector.shape_cast %161 : vector<1x2x32x64xf32> to vector<2x32x64xf32>
        %163 = vector.extract_strided_slice %162 {offsets = [0, 0, 0], sizes = [1, 32, 64], strides = [1, 1, 1]} : vector<2x32x64xf32> to vector<1x32x64xf32>
        %164 = vector.shape_cast %163 : vector<1x32x64xf32> to vector<32x64xf32>
        %165 = vector.extract_strided_slice %26 {offsets = [2, 0], sizes = [1, 32], strides = [1, 1]} : vector<4x32xf32> to vector<1x32xf32>
        %cst_79 = arith.constant dense<0.000000e+00> : vector<34x64xf32>
        %166 = tpu.matmul %160, %164, %cst_79 {dimension_numbers = #tpu.dot_dimension_numbers<[1], [0], [0], [1], [0, 0, 1, 1], [], []>} : vector<34x32xf32>, vector<32x64xf32>, vector<34x64xf32> -> vector<34x64xf32>
        %167 = vector.extract_strided_slice %166 {offsets = [0, 0], sizes = [34, 32], strides = [1, 1]} : vector<34x64xf32> to vector<34x32xf32>
        %168 = vector.extract_strided_slice %166 {offsets = [0, 32], sizes = [34, 32], strides = [1, 1]} : vector<34x64xf32> to vector<34x32xf32>
        %cst_80 = arith.constant dense<0.000000e+00> : vector<34x32xf32>
        %169 = tpu.matmul %1, %168, %cst_80 {dimension_numbers = #tpu.dot_dimension_numbers<[1], [0], [0], [1], [0, 0, 1, 1], [], []>} : vector<34x34xf32>, vector<34x32xf32>, vector<34x32xf32> -> vector<34x32xf32>
        %170 = arith.addf %167, %169 : vector<34x32xf32>
        %171 = vector.broadcast %165 : vector<1x32xf32> to vector<34x32xf32>
        %172 = arith.addf %170, %171 : vector<34x32xf32>
        %cst_81 = arith.constant 0.000000e+00 : f32
        %173 = vector.broadcast %cst_81 : f32 to vector<34x32xf32>
        %174 = arith.maximumf %172, %173 : vector<34x32xf32>
        %c0_82 = arith.constant 0 : index
        %c0_83 = arith.constant 0 : index
        %c0_84 = arith.constant 0 : index
        %175 = vector.load %arg3[%c0_82, %c0_83, %c0_84] : memref<2x34x32xf32, #tpu.memory_space<vmem>>, vector<1x34x32xf32>
        %176 = vector.shape_cast %175 : vector<1x34x32xf32> to vector<34x32xf32>
        %177 = arith.addf %174, %176 : vector<34x32xf32>
        %178 = vector.extract_strided_slice %162 {offsets = [1, 0, 0], sizes = [1, 32, 64], strides = [1, 1, 1]} : vector<2x32x64xf32> to vector<1x32x64xf32>
        %179 = vector.shape_cast %178 : vector<1x32x64xf32> to vector<32x64xf32>
        %180 = vector.extract_strided_slice %26 {offsets = [3, 0], sizes = [1, 32], strides = [1, 1]} : vector<4x32xf32> to vector<1x32xf32>
        %cst_85 = arith.constant dense<0.000000e+00> : vector<34x64xf32>
        %181 = tpu.matmul %177, %179, %cst_85 {dimension_numbers = #tpu.dot_dimension_numbers<[1], [0], [0], [1], [0, 0, 1, 1], [], []>} : vector<34x32xf32>, vector<32x64xf32>, vector<34x64xf32> -> vector<34x64xf32>
        %182 = vector.extract_strided_slice %181 {offsets = [0, 0], sizes = [34, 32], strides = [1, 1]} : vector<34x64xf32> to vector<34x32xf32>
        %183 = vector.extract_strided_slice %181 {offsets = [0, 32], sizes = [34, 32], strides = [1, 1]} : vector<34x64xf32> to vector<34x32xf32>
        %cst_86 = arith.constant dense<0.000000e+00> : vector<34x32xf32>
        %184 = tpu.matmul %1, %183, %cst_86 {dimension_numbers = #tpu.dot_dimension_numbers<[1], [0], [0], [1], [0, 0, 1, 1], [], []>} : vector<34x34xf32>, vector<34x32xf32>, vector<34x32xf32> -> vector<34x32xf32>
        %185 = arith.addf %182, %184 : vector<34x32xf32>
        %186 = vector.broadcast %180 : vector<1x32xf32> to vector<34x32xf32>
        %187 = arith.addf %185, %186 : vector<34x32xf32>
        %cst_87 = arith.constant 0.000000e+00 : f32
        %188 = vector.broadcast %cst_87 : f32 to vector<34x32xf32>
        %189 = arith.maximumf %187, %188 : vector<34x32xf32>
        %190 = arith.addf %160, %189 : vector<34x32xf32>
        %c1 = arith.constant 1 : index
        %c0_88 = arith.constant 0 : index
        %c0_89 = arith.constant 0 : index
        %191 = vector.load %arg6[%c1, %c0_88, %c0_89] : memref<2x4x32xf32, #tpu.memory_space<vmem>>, vector<1x4x32xf32>
        %192 = vector.shape_cast %191 : vector<1x4x32xf32> to vector<4x32xf32>
        %c1_90 = arith.constant 1 : index
        %c0_91 = arith.constant 0 : index
        %c0_92 = arith.constant 0 : index
        %193 = vector.load %arg13[%c1_90, %c0_91, %c0_92] : memref<2x4x32xf32, #tpu.memory_space<vmem>>, vector<1x4x32xf32>
        %194 = vector.shape_cast %193 : vector<1x4x32xf32> to vector<4x32xf32>
        %195 = vector.extract_strided_slice %192 {offsets = [0, 0], sizes = [1, 32], strides = [1, 1]} : vector<4x32xf32> to vector<1x32xf32>
        %196 = vector.extract_strided_slice %192 {offsets = [1, 0], sizes = [1, 32], strides = [1, 1]} : vector<4x32xf32> to vector<1x32xf32>
        %cst_93 = arith.constant dense<0.000000e+00> : vector<34xf32>
        %197 = vector.multi_reduction <add>, %190, %cst_93 [1] : vector<34x32xf32> to vector<34xf32>
        %198 = vector.shape_cast %197 : vector<34xf32> to vector<34x1xf32>
        %cst_94 = arith.constant 3.200000e+01 : f32
        %199 = vector.broadcast %cst_94 : f32 to vector<34x1xf32>
        %200 = arith.divf %198, %199 : vector<34x1xf32>
        %201 = vector.broadcast %200 : vector<34x1xf32> to vector<34x32xf32>
        %202 = arith.subf %190, %201 : vector<34x32xf32>
        %203 = arith.mulf %202, %202 : vector<34x32xf32>
        %cst_95 = arith.constant dense<0.000000e+00> : vector<34xf32>
        %204 = vector.multi_reduction <add>, %203, %cst_95 [1] : vector<34x32xf32> to vector<34xf32>
        %205 = vector.shape_cast %204 : vector<34xf32> to vector<34x1xf32>
        %cst_96 = arith.constant 3.100000e+01 : f32
        %206 = vector.broadcast %cst_96 : f32 to vector<34x1xf32>
        %207 = arith.divf %205, %206 : vector<34x1xf32>
        %208 = vector.broadcast %200 : vector<34x1xf32> to vector<34x32xf32>
        %209 = arith.subf %190, %208 : vector<34x32xf32>
        %210 = vector.broadcast %195 : vector<1x32xf32> to vector<34x32xf32>
        %211 = arith.mulf %210, %209 : vector<34x32xf32>
        %212 = math.sqrt %207 : vector<34x1xf32>
        %cst_97 = arith.constant 9.99999997E-7 : f32
        %213 = vector.broadcast %cst_97 : f32 to vector<34x1xf32>
        %214 = arith.addf %212, %213 : vector<34x1xf32>
        %215 = vector.broadcast %214 : vector<34x1xf32> to vector<34x32xf32>
        %216 = arith.divf %211, %215 : vector<34x32xf32>
        %217 = vector.broadcast %196 : vector<1x32xf32> to vector<34x32xf32>
        %218 = arith.addf %216, %217 : vector<34x32xf32>
        %c1_98 = arith.constant 1 : index
        %c0_99 = arith.constant 0 : index
        %c0_100 = arith.constant 0 : index
        %219 = vector.load %arg7[%c1_98, %c0_99, %c0_100] : memref<2x32x96xf32, #tpu.memory_space<vmem>>, vector<1x32x96xf32>
        %220 = vector.shape_cast %219 : vector<1x32x96xf32> to vector<32x96xf32>
        %cst_101 = arith.constant dense<0.000000e+00> : vector<34x96xf32>
        %221 = tpu.matmul %218, %220, %cst_101 {dimension_numbers = #tpu.dot_dimension_numbers<[1], [0], [0], [1], [0, 0, 1, 1], [], []>} : vector<34x32xf32>, vector<32x96xf32>, vector<34x96xf32> -> vector<34x96xf32>
        %c1_102 = arith.constant 1 : index
        %c0_103 = arith.constant 0 : index
        %c0_104 = arith.constant 0 : index
        %222 = vector.load %arg8[%c1_102, %c0_103, %c0_104] : memref<2x1x96xf32, #tpu.memory_space<vmem>>, vector<1x1x96xf32>
        %223 = vector.shape_cast %222 : vector<1x1x96xf32> to vector<1x96xf32>
        %224 = vector.broadcast %223 : vector<1x96xf32> to vector<34x96xf32>
        %225 = arith.addf %221, %224 : vector<34x96xf32>
        %226 = vector.extract_strided_slice %225 {offsets = [0, 0], sizes = [34, 8], strides = [1, 1]} : vector<34x96xf32> to vector<34x8xf32>
        %227 = vector.extract_strided_slice %225 {offsets = [0, 8], sizes = [34, 8], strides = [1, 1]} : vector<34x96xf32> to vector<34x8xf32>
        %228 = vector.extract_strided_slice %225 {offsets = [0, 16], sizes = [34, 8], strides = [1, 1]} : vector<34x96xf32> to vector<34x8xf32>
        %229 = vector.extract_strided_slice %225 {offsets = [0, 24], sizes = [34, 8], strides = [1, 1]} : vector<34x96xf32> to vector<34x8xf32>
        %230 = vector.shape_cast %226 : vector<34x8xf32> to vector<1x34x8xf32>
        %231 = vector.shape_cast %227 : vector<34x8xf32> to vector<1x34x8xf32>
        %232 = vector.shape_cast %228 : vector<34x8xf32> to vector<1x34x8xf32>
        %233 = vector.shape_cast %229 : vector<34x8xf32> to vector<1x34x8xf32>
        %234 = tpu.concatenate %230, %231, %232, %233 in 0 : vector<1x34x8xf32>, vector<1x34x8xf32>, vector<1x34x8xf32>, vector<1x34x8xf32> -> vector<4x34x8xf32>
        %235 = vector.extract_strided_slice %225 {offsets = [0, 32], sizes = [34, 8], strides = [1, 1]} : vector<34x96xf32> to vector<34x8xf32>
        %236 = vector.extract_strided_slice %225 {offsets = [0, 40], sizes = [34, 8], strides = [1, 1]} : vector<34x96xf32> to vector<34x8xf32>
        %237 = vector.extract_strided_slice %225 {offsets = [0, 48], sizes = [34, 8], strides = [1, 1]} : vector<34x96xf32> to vector<34x8xf32>
        %238 = vector.extract_strided_slice %225 {offsets = [0, 56], sizes = [34, 8], strides = [1, 1]} : vector<34x96xf32> to vector<34x8xf32>
        %239 = vector.shape_cast %235 : vector<34x8xf32> to vector<1x34x8xf32>
        %240 = vector.shape_cast %236 : vector<34x8xf32> to vector<1x34x8xf32>
        %241 = vector.shape_cast %237 : vector<34x8xf32> to vector<1x34x8xf32>
        %242 = vector.shape_cast %238 : vector<34x8xf32> to vector<1x34x8xf32>
        %243 = tpu.concatenate %239, %240, %241, %242 in 0 : vector<1x34x8xf32>, vector<1x34x8xf32>, vector<1x34x8xf32>, vector<1x34x8xf32> -> vector<4x34x8xf32>
        %244 = vector.extract_strided_slice %225 {offsets = [0, 64], sizes = [34, 8], strides = [1, 1]} : vector<34x96xf32> to vector<34x8xf32>
        %245 = vector.extract_strided_slice %225 {offsets = [0, 72], sizes = [34, 8], strides = [1, 1]} : vector<34x96xf32> to vector<34x8xf32>
        %246 = vector.extract_strided_slice %225 {offsets = [0, 80], sizes = [34, 8], strides = [1, 1]} : vector<34x96xf32> to vector<34x8xf32>
        %247 = vector.extract_strided_slice %225 {offsets = [0, 88], sizes = [34, 8], strides = [1, 1]} : vector<34x96xf32> to vector<34x8xf32>
        %248 = vector.shape_cast %244 : vector<34x8xf32> to vector<1x34x8xf32>
        %249 = vector.shape_cast %245 : vector<34x8xf32> to vector<1x34x8xf32>
        %250 = vector.shape_cast %246 : vector<34x8xf32> to vector<1x34x8xf32>
        %251 = vector.shape_cast %247 : vector<34x8xf32> to vector<1x34x8xf32>
        %252 = tpu.concatenate %248, %249, %250, %251 in 0 : vector<1x34x8xf32>, vector<1x34x8xf32>, vector<1x34x8xf32>, vector<1x34x8xf32> -> vector<4x34x8xf32>
        %cst_105 = arith.constant dense<0.000000e+00> : vector<4x34x34xf32>
        %253 = tpu.matmul %234, %243, %cst_105 {dimension_numbers = #tpu.dot_dimension_numbers<[2], [2], [1], [1], [0, 0, 0, 1, 1, 1], [0], [0]>} : vector<4x34x8xf32>, vector<4x34x8xf32>, vector<4x34x34xf32> -> vector<4x34x34xf32>
        %cst_106 = arith.constant 0.353553385 : f32
        %254 = vector.broadcast %cst_106 : f32 to vector<4x34x34xf32>
        %255 = arith.mulf %253, %254 : vector<4x34x34xf32>
        %256 = vector.shape_cast %0 : vector<34x34xf32> to vector<1x34x34xf32>
        %257 = vector.broadcast %256 : vector<1x34x34xf32> to vector<4x34x34xf32>
        %258 = arith.addf %255, %257 : vector<4x34x34xf32>
        %cst_107 = arith.constant dense<0xFF800000> : vector<4x34xf32>
        %259 = vector.multi_reduction <maximumf>, %258, %cst_107 [2] : vector<4x34x34xf32> to vector<4x34xf32>
        %260 = vector.shape_cast %259 : vector<4x34xf32> to vector<4x34x1xf32>
        %261 = vector.broadcast %260 : vector<4x34x1xf32> to vector<4x34x34xf32>
        %262 = arith.subf %258, %261 : vector<4x34x34xf32>
        %263 = math.exp %262 : vector<4x34x34xf32>
        %cst_108 = arith.constant dense<0.000000e+00> : vector<4x34xf32>
        %264 = vector.multi_reduction <add>, %263, %cst_108 [2] : vector<4x34x34xf32> to vector<4x34xf32>
        %265 = vector.shape_cast %264 : vector<4x34xf32> to vector<4x34x1xf32>
        %266 = vector.broadcast %265 : vector<4x34x1xf32> to vector<4x34x34xf32>
        %267 = arith.divf %263, %266 : vector<4x34x34xf32>
        %cst_109 = arith.constant dense<0.000000e+00> : vector<4x34x8xf32>
        %268 = tpu.matmul %267, %252, %cst_109 {dimension_numbers = #tpu.dot_dimension_numbers<[2], [1], [1], [2], [0, 0, 0, 1, 1, 2], [0], [0]>} : vector<4x34x34xf32>, vector<4x34x8xf32>, vector<4x34x8xf32> -> vector<4x34x8xf32>
        %269 = vector.extract_strided_slice %268 {offsets = [0, 0, 0], sizes = [1, 34, 8], strides = [1, 1, 1]} : vector<4x34x8xf32> to vector<1x34x8xf32>
        %270 = vector.shape_cast %269 : vector<1x34x8xf32> to vector<34x8xf32>
        %271 = vector.extract_strided_slice %268 {offsets = [1, 0, 0], sizes = [1, 34, 8], strides = [1, 1, 1]} : vector<4x34x8xf32> to vector<1x34x8xf32>
        %272 = vector.shape_cast %271 : vector<1x34x8xf32> to vector<34x8xf32>
        %273 = vector.extract_strided_slice %268 {offsets = [2, 0, 0], sizes = [1, 34, 8], strides = [1, 1, 1]} : vector<4x34x8xf32> to vector<1x34x8xf32>
        %274 = vector.shape_cast %273 : vector<1x34x8xf32> to vector<34x8xf32>
        %275 = vector.extract_strided_slice %268 {offsets = [3, 0, 0], sizes = [1, 34, 8], strides = [1, 1, 1]} : vector<4x34x8xf32> to vector<1x34x8xf32>
        %276 = vector.shape_cast %275 : vector<1x34x8xf32> to vector<34x8xf32>
        %277 = tpu.concatenate %270, %272, %274, %276 in 1 : vector<34x8xf32>, vector<34x8xf32>, vector<34x8xf32>, vector<34x8xf32> -> vector<34x32xf32>
        %c1_110 = arith.constant 1 : index
        %c0_111 = arith.constant 0 : index
        %c0_112 = arith.constant 0 : index
        %278 = vector.load %arg9[%c1_110, %c0_111, %c0_112] : memref<2x32x32xf32, #tpu.memory_space<vmem>>, vector<1x32x32xf32>
        %279 = vector.shape_cast %278 : vector<1x32x32xf32> to vector<32x32xf32>
        %cst_113 = arith.constant dense<0.000000e+00> : vector<34x32xf32>
        %280 = tpu.matmul %277, %279, %cst_113 {dimension_numbers = #tpu.dot_dimension_numbers<[1], [0], [0], [1], [0, 0, 1, 1], [], []>} : vector<34x32xf32>, vector<32x32xf32>, vector<34x32xf32> -> vector<34x32xf32>
        %281 = arith.addf %190, %280 : vector<34x32xf32>
        %282 = vector.extract_strided_slice %194 {offsets = [0, 0], sizes = [1, 32], strides = [1, 1]} : vector<4x32xf32> to vector<1x32xf32>
        %283 = vector.broadcast %282 : vector<1x32xf32> to vector<34x32xf32>
        %284 = arith.addf %281, %283 : vector<34x32xf32>
        %285 = vector.extract_strided_slice %192 {offsets = [2, 0], sizes = [1, 32], strides = [1, 1]} : vector<4x32xf32> to vector<1x32xf32>
        %286 = vector.extract_strided_slice %192 {offsets = [3, 0], sizes = [1, 32], strides = [1, 1]} : vector<4x32xf32> to vector<1x32xf32>
        %cst_114 = arith.constant dense<0.000000e+00> : vector<34xf32>
        %287 = vector.multi_reduction <add>, %284, %cst_114 [1] : vector<34x32xf32> to vector<34xf32>
        %288 = vector.shape_cast %287 : vector<34xf32> to vector<34x1xf32>
        %cst_115 = arith.constant 3.200000e+01 : f32
        %289 = vector.broadcast %cst_115 : f32 to vector<34x1xf32>
        %290 = arith.divf %288, %289 : vector<34x1xf32>
        %291 = vector.broadcast %290 : vector<34x1xf32> to vector<34x32xf32>
        %292 = arith.subf %284, %291 : vector<34x32xf32>
        %293 = arith.mulf %292, %292 : vector<34x32xf32>
        %cst_116 = arith.constant dense<0.000000e+00> : vector<34xf32>
        %294 = vector.multi_reduction <add>, %293, %cst_116 [1] : vector<34x32xf32> to vector<34xf32>
        %295 = vector.shape_cast %294 : vector<34xf32> to vector<34x1xf32>
        %cst_117 = arith.constant 3.100000e+01 : f32
        %296 = vector.broadcast %cst_117 : f32 to vector<34x1xf32>
        %297 = arith.divf %295, %296 : vector<34x1xf32>
        %298 = vector.broadcast %290 : vector<34x1xf32> to vector<34x32xf32>
        %299 = arith.subf %284, %298 : vector<34x32xf32>
        %300 = vector.broadcast %285 : vector<1x32xf32> to vector<34x32xf32>
        %301 = arith.mulf %300, %299 : vector<34x32xf32>
        %302 = math.sqrt %297 : vector<34x1xf32>
        %cst_118 = arith.constant 9.99999997E-7 : f32
        %303 = vector.broadcast %cst_118 : f32 to vector<34x1xf32>
        %304 = arith.addf %302, %303 : vector<34x1xf32>
        %305 = vector.broadcast %304 : vector<34x1xf32> to vector<34x32xf32>
        %306 = arith.divf %301, %305 : vector<34x32xf32>
        %307 = vector.broadcast %286 : vector<1x32xf32> to vector<34x32xf32>
        %308 = arith.addf %306, %307 : vector<34x32xf32>
        %c1_119 = arith.constant 1 : index
        %c0_120 = arith.constant 0 : index
        %c0_121 = arith.constant 0 : index
        %309 = vector.load %arg5[%c1_119, %c0_120, %c0_121] : memref<2x34x34xf32, #tpu.memory_space<vmem>>, vector<1x34x34xf32>
        %310 = vector.shape_cast %309 : vector<1x34x34xf32> to vector<34x34xf32>
        %cst_122 = arith.constant dense<0.000000e+00> : vector<34x32xf32>
        %311 = tpu.matmul %310, %308, %cst_122 {dimension_numbers = #tpu.dot_dimension_numbers<[1], [0], [0], [1], [0, 0, 1, 1], [], []>} : vector<34x34xf32>, vector<34x32xf32>, vector<34x32xf32> -> vector<34x32xf32>
        %c1_123 = arith.constant 1 : index
        %c0_124 = arith.constant 0 : index
        %c0_125 = arith.constant 0 : index
        %312 = vector.load %arg10[%c1_123, %c0_124, %c0_125] : memref<2x32x64xf32, #tpu.memory_space<vmem>>, vector<1x32x64xf32>
        %313 = vector.shape_cast %312 : vector<1x32x64xf32> to vector<32x64xf32>
        %cst_126 = arith.constant dense<0.000000e+00> : vector<34x64xf32>
        %314 = tpu.matmul %311, %313, %cst_126 {dimension_numbers = #tpu.dot_dimension_numbers<[1], [0], [0], [1], [0, 0, 1, 1], [], []>} : vector<34x32xf32>, vector<32x64xf32>, vector<34x64xf32> -> vector<34x64xf32>
        %c1_127 = arith.constant 1 : index
        %c0_128 = arith.constant 0 : index
        %c0_129 = arith.constant 0 : index
        %315 = vector.load %arg11[%c1_127, %c0_128, %c0_129] : memref<2x1x64xf32, #tpu.memory_space<vmem>>, vector<1x1x64xf32>
        %316 = vector.shape_cast %315 : vector<1x1x64xf32> to vector<1x64xf32>
        %317 = vector.broadcast %316 : vector<1x64xf32> to vector<34x64xf32>
        %318 = arith.addf %314, %317 : vector<34x64xf32>
        %cst_130 = arith.constant 0.000000e+00 : f32
        %319 = vector.broadcast %cst_130 : f32 to vector<34x64xf32>
        %320 = arith.maximumf %318, %319 : vector<34x64xf32>
        %cst_131 = arith.constant dense<0.000000e+00> : vector<34x64xf32>
        %321 = tpu.matmul %310, %320, %cst_131 {dimension_numbers = #tpu.dot_dimension_numbers<[1], [0], [0], [1], [0, 0, 1, 1], [], []>} : vector<34x34xf32>, vector<34x64xf32>, vector<34x64xf32> -> vector<34x64xf32>
        %c1_132 = arith.constant 1 : index
        %c0_133 = arith.constant 0 : index
        %c0_134 = arith.constant 0 : index
        %322 = vector.load %arg12[%c1_132, %c0_133, %c0_134] : memref<2x64x32xf32, #tpu.memory_space<vmem>>, vector<1x64x32xf32>
        %323 = vector.shape_cast %322 : vector<1x64x32xf32> to vector<64x32xf32>
        %cst_135 = arith.constant dense<0.000000e+00> : vector<34x32xf32>
        %324 = tpu.matmul %321, %323, %cst_135 {dimension_numbers = #tpu.dot_dimension_numbers<[1], [0], [0], [1], [0, 0, 1, 1], [], []>} : vector<34x64xf32>, vector<64x32xf32>, vector<34x32xf32> -> vector<34x32xf32>
        %325 = vector.extract_strided_slice %194 {offsets = [1, 0], sizes = [1, 32], strides = [1, 1]} : vector<4x32xf32> to vector<1x32xf32>
        %326 = vector.broadcast %325 : vector<1x32xf32> to vector<34x32xf32>
        %327 = arith.addf %324, %326 : vector<34x32xf32>
        %328 = arith.addf %284, %327 : vector<34x32xf32>
        %c1_136 = arith.constant 1 : index
        %c0_137 = arith.constant 0 : index
        %c0_138 = arith.constant 0 : index
        %c0_139 = arith.constant 0 : index
        %329 = vector.load %arg14[%c1_136, %c0_137, %c0_138, %c0_139] : memref<2x2x32x64xf32, #tpu.memory_space<vmem>>, vector<1x2x32x64xf32>
        %330 = vector.shape_cast %329 : vector<1x2x32x64xf32> to vector<2x32x64xf32>
        %331 = vector.extract_strided_slice %330 {offsets = [0, 0, 0], sizes = [1, 32, 64], strides = [1, 1, 1]} : vector<2x32x64xf32> to vector<1x32x64xf32>
        %332 = vector.shape_cast %331 : vector<1x32x64xf32> to vector<32x64xf32>
        %333 = vector.extract_strided_slice %194 {offsets = [2, 0], sizes = [1, 32], strides = [1, 1]} : vector<4x32xf32> to vector<1x32xf32>
        %cst_140 = arith.constant dense<0.000000e+00> : vector<34x64xf32>
        %334 = tpu.matmul %328, %332, %cst_140 {dimension_numbers = #tpu.dot_dimension_numbers<[1], [0], [0], [1], [0, 0, 1, 1], [], []>} : vector<34x32xf32>, vector<32x64xf32>, vector<34x64xf32> -> vector<34x64xf32>
        %335 = vector.extract_strided_slice %334 {offsets = [0, 0], sizes = [34, 32], strides = [1, 1]} : vector<34x64xf32> to vector<34x32xf32>
        %336 = vector.extract_strided_slice %334 {offsets = [0, 32], sizes = [34, 32], strides = [1, 1]} : vector<34x64xf32> to vector<34x32xf32>
        %cst_141 = arith.constant dense<0.000000e+00> : vector<34x32xf32>
        %337 = tpu.matmul %1, %336, %cst_141 {dimension_numbers = #tpu.dot_dimension_numbers<[1], [0], [0], [1], [0, 0, 1, 1], [], []>} : vector<34x34xf32>, vector<34x32xf32>, vector<34x32xf32> -> vector<34x32xf32>
        %338 = arith.addf %335, %337 : vector<34x32xf32>
        %339 = vector.broadcast %333 : vector<1x32xf32> to vector<34x32xf32>
        %340 = arith.addf %338, %339 : vector<34x32xf32>
        %cst_142 = arith.constant 0.000000e+00 : f32
        %341 = vector.broadcast %cst_142 : f32 to vector<34x32xf32>
        %342 = arith.maximumf %340, %341 : vector<34x32xf32>
        %c1_143 = arith.constant 1 : index
        %c0_144 = arith.constant 0 : index
        %c0_145 = arith.constant 0 : index
        %343 = vector.load %arg3[%c1_143, %c0_144, %c0_145] : memref<2x34x32xf32, #tpu.memory_space<vmem>>, vector<1x34x32xf32>
        %344 = vector.shape_cast %343 : vector<1x34x32xf32> to vector<34x32xf32>
        %345 = arith.addf %342, %344 : vector<34x32xf32>
        %346 = vector.extract_strided_slice %330 {offsets = [1, 0, 0], sizes = [1, 32, 64], strides = [1, 1, 1]} : vector<2x32x64xf32> to vector<1x32x64xf32>
        %347 = vector.shape_cast %346 : vector<1x32x64xf32> to vector<32x64xf32>
        %348 = vector.extract_strided_slice %194 {offsets = [3, 0], sizes = [1, 32], strides = [1, 1]} : vector<4x32xf32> to vector<1x32xf32>
        %cst_146 = arith.constant dense<0.000000e+00> : vector<34x64xf32>
        %349 = tpu.matmul %345, %347, %cst_146 {dimension_numbers = #tpu.dot_dimension_numbers<[1], [0], [0], [1], [0, 0, 1, 1], [], []>} : vector<34x32xf32>, vector<32x64xf32>, vector<34x64xf32> -> vector<34x64xf32>
        %350 = vector.extract_strided_slice %349 {offsets = [0, 0], sizes = [34, 32], strides = [1, 1]} : vector<34x64xf32> to vector<34x32xf32>
        %351 = vector.extract_strided_slice %349 {offsets = [0, 32], sizes = [34, 32], strides = [1, 1]} : vector<34x64xf32> to vector<34x32xf32>
        %cst_147 = arith.constant dense<0.000000e+00> : vector<34x32xf32>
        %352 = tpu.matmul %1, %351, %cst_147 {dimension_numbers = #tpu.dot_dimension_numbers<[1], [0], [0], [1], [0, 0, 1, 1], [], []>} : vector<34x34xf32>, vector<34x32xf32>, vector<34x32xf32> -> vector<34x32xf32>
        %353 = arith.addf %350, %352 : vector<34x32xf32>
        %354 = vector.broadcast %348 : vector<1x32xf32> to vector<34x32xf32>
        %355 = arith.addf %353, %354 : vector<34x32xf32>
        %cst_148 = arith.constant 0.000000e+00 : f32
        %356 = vector.broadcast %cst_148 : f32 to vector<34x32xf32>
        %357 = arith.maximumf %355, %356 : vector<34x32xf32>
        %358 = arith.addf %328, %357 : vector<34x32xf32>
        %359 = arith.subf %358, %22 : vector<34x32xf32>
        %c5_i32 = arith.constant 5 : i32
        %c0_i32_149 = arith.constant 0 : i32
        %360 = arith.cmpi eq, %c5_i32, %c0_i32_149 : i32
        %c1_i32_150 = arith.constant 1 : i32
        %361 = arith.select %360, %c1_i32_150, %c5_i32 : i32
        %362 = arith.remsi %arg20, %361 : i32
        %c0_i32_151 = arith.constant 0 : i32
        %363 = arith.cmpi ne, %362, %c0_i32_151 : i32
        %c0_i32_152 = arith.constant 0 : i32
        %364 = arith.cmpi slt, %362, %c0_i32_152 : i32
        %c0_i32_153 = arith.constant 0 : i32
        %365 = arith.cmpi slt, %361, %c0_i32_153 : i32
        %366 = arith.xori %364, %365 : i1
        %367 = arith.andi %366, %363 : i1
        %368 = arith.addi %362, %361 : i32
        %369 = arith.select %367, %368, %362 : i32
        %370 = tpu.iota {dimensions = array<i32: 0>} : vector<5x1x1xi32>
        %371 = vector.broadcast %369 : i32 to vector<5x1x1xi32>
        %372 = arith.cmpi eq, %370, %371 : vector<5x1x1xi32>
        %373 = vector.shape_cast %22 : vector<34x32xf32> to vector<1x34x32xf32>
        %c0_154 = arith.constant 0 : index
        %c0_155 = arith.constant 0 : index
        %c0_156 = arith.constant 0 : index
        %374 = vector.load %arg16[%c0_154, %c0_155, %c0_156] : memref<5x34x32xf32, #tpu.memory_space<vmem>>, vector<5x34x32xf32>
        %375 = vector.shape_cast %372 : vector<5x1x1xi1> to vector<5x1x1xi1>
        %376 = vector.broadcast %375 : vector<5x1x1xi1> to vector<5x34x32xi1>
        %377 = vector.shape_cast %373 : vector<1x34x32xf32> to vector<1x34x32xf32>
        %378 = vector.broadcast %377 : vector<1x34x32xf32> to vector<5x34x32xf32>
        %379 = arith.select %376, %378, %374 : vector<5x34x32xi1>, vector<5x34x32xf32>
        %c0_157 = arith.constant 0 : index
        %c0_158 = arith.constant 0 : index
        %c0_159 = arith.constant 0 : index
        %380 = vector.load %arg16[%c0_157, %c0_158, %c0_159] : memref<5x34x32xf32, #tpu.memory_space<vmem>>, vector<5x34x32xf32>
        tpu.vector_store %arg16[%c0_157, %c0_158, %c0_159], %379 {strides = array<i32>} : memref<5x34x32xf32, #tpu.memory_space<vmem>>, vector<5x34x32xf32>,
        %381 = vector.shape_cast %359 : vector<34x32xf32> to vector<1x34x32xf32>
        %c0_160 = arith.constant 0 : index
        %c0_161 = arith.constant 0 : index
        %c0_162 = arith.constant 0 : index
        %382 = vector.load %arg17[%c0_160, %c0_161, %c0_162] : memref<5x34x32xf32, #tpu.memory_space<vmem>>, vector<5x34x32xf32>
        %383 = vector.shape_cast %372 : vector<5x1x1xi1> to vector<5x1x1xi1>
        %384 = vector.broadcast %383 : vector<5x1x1xi1> to vector<5x34x32xi1>
        %385 = vector.shape_cast %381 : vector<1x34x32xf32> to vector<1x34x32xf32>
        %386 = vector.broadcast %385 : vector<1x34x32xf32> to vector<5x34x32xf32>
        %387 = arith.select %384, %386, %382 : vector<5x34x32xi1>, vector<5x34x32xf32>
        %c0_163 = arith.constant 0 : index
        %c0_164 = arith.constant 0 : index
        %c0_165 = arith.constant 0 : index
        %388 = vector.load %arg17[%c0_163, %c0_164, %c0_165] : memref<5x34x32xf32, #tpu.memory_space<vmem>>, vector<5x34x32xf32>
        tpu.vector_store %arg17[%c0_163, %c0_164, %c0_165], %387 {strides = array<i32>} : memref<5x34x32xf32, #tpu.memory_space<vmem>>, vector<5x34x32xf32>,
        %c0_166 = arith.constant 0 : index
        %c0_167 = arith.constant 0 : index
        %c0_168 = arith.constant 0 : index
        %389 = vector.load %arg16[%c0_166, %c0_167, %c0_168] : memref<5x34x32xf32, #tpu.memory_space<vmem>>, vector<5x34x32xf32>
        %c0_169 = arith.constant 0 : index
        %c0_170 = arith.constant 0 : index
        %c0_171 = arith.constant 0 : index
        %390 = vector.load %arg17[%c0_169, %c0_170, %c0_171] : memref<5x34x32xf32, #tpu.memory_space<vmem>>, vector<5x34x32xf32>
        %c1_i32_172 = arith.constant 1 : i32
        %391 = arith.addi %arg20, %c1_i32_172 : i32
        %c5_i32_173 = arith.constant 5 : i32
        %392 = arith.minsi %391, %c5_i32_173 : i32
        %c0_i32_174 = arith.constant 0 : i32
        %393 = arith.cmpi sgt, %392, %c0_i32_174 : i32
        %394 = vector.extract_strided_slice %390 {offsets = [0, 0, 0], sizes = [1, 34, 32], strides = [1, 1, 1]} : vector<5x34x32xf32> to vector<1x34x32xf32>
        %395 = vector.shape_cast %394 : vector<1x34x32xf32> to vector<34x32xf32>
        %396 = arith.subf %395, %359 : vector<34x32xf32>
        %cst_175 = arith.constant 0.000000e+00 : f32
        %397 = vector.broadcast %cst_175 : f32 to vector<34x32xf32>
        %398 = arith.select %393, %396, %397 : vector<34x32xf32>
        %c1_i32_176 = arith.constant 1 : i32
        %399 = arith.cmpi sgt, %392, %c1_i32_176 : i32
        %400 = vector.extract_strided_slice %390 {offsets = [1, 0, 0], sizes = [1, 34, 32], strides = [1, 1, 1]} : vector<5x34x32xf32> to vector<1x34x32xf32>
        %401 = vector.shape_cast %400 : vector<1x34x32xf32> to vector<34x32xf32>
        %402 = arith.subf %401, %359 : vector<34x32xf32>
        %cst_177 = arith.constant 0.000000e+00 : f32
        %403 = vector.broadcast %cst_177 : f32 to vector<34x32xf32>
        %404 = arith.select %399, %402, %403 : vector<34x32xf32>
        %c2_i32 = arith.constant 2 : i32
        %405 = arith.cmpi sgt, %392, %c2_i32 : i32
        %406 = vector.extract_strided_slice %390 {offsets = [2, 0, 0], sizes = [1, 34, 32], strides = [1, 1, 1]} : vector<5x34x32xf32> to vector<1x34x32xf32>
        %407 = vector.shape_cast %406 : vector<1x34x32xf32> to vector<34x32xf32>
        %408 = arith.subf %407, %359 : vector<34x32xf32>
        %cst_178 = arith.constant 0.000000e+00 : f32
        %409 = vector.broadcast %cst_178 : f32 to vector<34x32xf32>
        %410 = arith.select %405, %408, %409 : vector<34x32xf32>
        %c3_i32 = arith.constant 3 : i32
        %411 = arith.cmpi sgt, %392, %c3_i32 : i32
        %412 = vector.extract_strided_slice %390 {offsets = [3, 0, 0], sizes = [1, 34, 32], strides = [1, 1, 1]} : vector<5x34x32xf32> to vector<1x34x32xf32>
        %413 = vector.shape_cast %412 : vector<1x34x32xf32> to vector<34x32xf32>
        %414 = arith.subf %413, %359 : vector<34x32xf32>
        %cst_179 = arith.constant 0.000000e+00 : f32
        %415 = vector.broadcast %cst_179 : f32 to vector<34x32xf32>
        %416 = arith.select %411, %414, %415 : vector<34x32xf32>
        %c4_i32 = arith.constant 4 : i32
        %417 = arith.cmpi sgt, %392, %c4_i32 : i32
        %418 = vector.extract_strided_slice %390 {offsets = [4, 0, 0], sizes = [1, 34, 32], strides = [1, 1, 1]} : vector<5x34x32xf32> to vector<1x34x32xf32>
        %419 = vector.shape_cast %418 : vector<1x34x32xf32> to vector<34x32xf32>
        %420 = arith.subf %419, %359 : vector<34x32xf32>
        %cst_180 = arith.constant 0.000000e+00 : f32
        %421 = vector.broadcast %cst_180 : f32 to vector<34x32xf32>
        %422 = arith.select %417, %420, %421 : vector<34x32xf32>
        %cst_181 = arith.constant 0.000000e+00 : f32
        %423 = vector.broadcast %cst_181 : f32 to vector<5x5xf32>
        %cst_182 = arith.constant 0.000000e+00 : f32
        %424 = vector.broadcast %cst_182 : f32 to vector<5x1xf32>
        %425 = arith.mulf %398, %398 : vector<34x32xf32>
        %426 = vector.shape_cast %425 : vector<34x32xf32> to vector<1x34x32xf32>
        %cst_183 = arith.constant dense<0.000000e+00> : vector<1xf32>
        %427 = vector.multi_reduction <add>, %426, %cst_183 [1, 2] : vector<1x34x32xf32> to vector<1xf32>
        %428 = vector.shape_cast %427 : vector<1xf32> to vector<1x1x1xf32>
        %429 = vector.extract %428[0, 0, 0] : f32 from vector<1x1x1xf32>
        %cst_184 = arith.constant 0.000000e+00 : f32
        %430 = arith.addf %cst_184, %429 : f32
        %c0_i32_185 = arith.constant 0 : i32
        %431 = vector.broadcast %c0_i32_185 : i32 to vector<5x5xi32>
        %432 = arith.cmpi eq, %9, %431 : vector<5x5xi32>
        %c0_i32_186 = arith.constant 0 : i32
        %433 = vector.broadcast %c0_i32_186 : i32 to vector<5x5xi32>
        %434 = arith.cmpi eq, %10, %433 : vector<5x5xi32>
        %435 = arith.andi %432, %434 : vector<5x5xi1>
        %436 = arith.extui %435 : vector<5x5xi1> to vector<5x5xi32>
        %437 = arith.sitofp %436 : vector<5x5xi32> to vector<5x5xf32>
        %438 = vector.broadcast %429 : f32 to vector<5x5xf32>
        %439 = arith.mulf %438, %437 : vector<5x5xf32>
        %440 = arith.addf %423, %439 : vector<5x5xf32>
        %441 = arith.mulf %398, %359 : vector<34x32xf32>
        %442 = vector.shape_cast %441 : vector<34x32xf32> to vector<1x34x32xf32>
        %cst_187 = arith.constant dense<0.000000e+00> : vector<1xf32>
        %443 = vector.multi_reduction <add>, %442, %cst_187 [1, 2] : vector<1x34x32xf32> to vector<1xf32>
        %444 = vector.shape_cast %443 : vector<1xf32> to vector<1x1x1xf32>
        %445 = vector.extract %444[0, 0, 0] : f32 from vector<1x1x1xf32>
        %c0_i32_188 = arith.constant 0 : i32
        %446 = vector.broadcast %c0_i32_188 : i32 to vector<5x1xi32>
        %447 = arith.cmpi eq, %11, %446 : vector<5x1xi32>
        %448 = arith.extui %447 : vector<5x1xi1> to vector<5x1xi32>
        %449 = arith.sitofp %448 : vector<5x1xi32> to vector<5x1xf32>
        %450 = vector.broadcast %445 : f32 to vector<5x1xf32>
        %451 = arith.mulf %450, %449 : vector<5x1xf32>
        %452 = arith.subf %424, %451 : vector<5x1xf32>
        %453 = arith.mulf %398, %404 : vector<34x32xf32>
        %454 = vector.shape_cast %453 : vector<34x32xf32> to vector<1x34x32xf32>
        %cst_189 = arith.constant dense<0.000000e+00> : vector<1xf32>
        %455 = vector.multi_reduction <add>, %454, %cst_189 [1, 2] : vector<1x34x32xf32> to vector<1xf32>
        %456 = vector.shape_cast %455 : vector<1xf32> to vector<1x1x1xf32>
        %457 = vector.extract %456[0, 0, 0] : f32 from vector<1x1x1xf32>
        %c0_i32_190 = arith.constant 0 : i32
        %458 = vector.broadcast %c0_i32_190 : i32 to vector<5x5xi32>
        %459 = arith.cmpi eq, %9, %458 : vector<5x5xi32>
        %c1_i32_191 = arith.constant 1 : i32
        %460 = vector.broadcast %c1_i32_191 : i32 to vector<5x5xi32>
        %461 = arith.cmpi eq, %10, %460 : vector<5x5xi32>
        %462 = arith.andi %459, %461 : vector<5x5xi1>
        %c1_i32_192 = arith.constant 1 : i32
        %463 = vector.broadcast %c1_i32_192 : i32 to vector<5x5xi32>
        %464 = arith.cmpi eq, %9, %463 : vector<5x5xi32>
        %c0_i32_193 = arith.constant 0 : i32
        %465 = vector.broadcast %c0_i32_193 : i32 to vector<5x5xi32>
        %466 = arith.cmpi eq, %10, %465 : vector<5x5xi32>
        %467 = arith.andi %464, %466 : vector<5x5xi1>
        %468 = arith.ori %462, %467 : vector<5x5xi1>
        %469 = arith.extui %468 : vector<5x5xi1> to vector<5x5xi32>
        %470 = arith.sitofp %469 : vector<5x5xi32> to vector<5x5xf32>
        %471 = vector.broadcast %457 : f32 to vector<5x5xf32>
        %472 = arith.mulf %471, %470 : vector<5x5xf32>
        %473 = arith.addf %440, %472 : vector<5x5xf32>
        %474 = arith.mulf %398, %410 : vector<34x32xf32>
        %475 = vector.shape_cast %474 : vector<34x32xf32> to vector<1x34x32xf32>
        %cst_194 = arith.constant dense<0.000000e+00> : vector<1xf32>
        %476 = vector.multi_reduction <add>, %475, %cst_194 [1, 2] : vector<1x34x32xf32> to vector<1xf32>
        %477 = vector.shape_cast %476 : vector<1xf32> to vector<1x1x1xf32>
        %478 = vector.extract %477[0, 0, 0] : f32 from vector<1x1x1xf32>
        %c0_i32_195 = arith.constant 0 : i32
        %479 = vector.broadcast %c0_i32_195 : i32 to vector<5x5xi32>
        %480 = arith.cmpi eq, %9, %479 : vector<5x5xi32>
        %c2_i32_196 = arith.constant 2 : i32
        %481 = vector.broadcast %c2_i32_196 : i32 to vector<5x5xi32>
        %482 = arith.cmpi eq, %10, %481 : vector<5x5xi32>
        %483 = arith.andi %480, %482 : vector<5x5xi1>
        %c2_i32_197 = arith.constant 2 : i32
        %484 = vector.broadcast %c2_i32_197 : i32 to vector<5x5xi32>
        %485 = arith.cmpi eq, %9, %484 : vector<5x5xi32>
        %c0_i32_198 = arith.constant 0 : i32
        %486 = vector.broadcast %c0_i32_198 : i32 to vector<5x5xi32>
        %487 = arith.cmpi eq, %10, %486 : vector<5x5xi32>
        %488 = arith.andi %485, %487 : vector<5x5xi1>
        %489 = arith.ori %483, %488 : vector<5x5xi1>
        %490 = arith.extui %489 : vector<5x5xi1> to vector<5x5xi32>
        %491 = arith.sitofp %490 : vector<5x5xi32> to vector<5x5xf32>
        %492 = vector.broadcast %478 : f32 to vector<5x5xf32>
        %493 = arith.mulf %492, %491 : vector<5x5xf32>
        %494 = arith.addf %473, %493 : vector<5x5xf32>
        %495 = arith.mulf %398, %416 : vector<34x32xf32>
        %496 = vector.shape_cast %495 : vector<34x32xf32> to vector<1x34x32xf32>
        %cst_199 = arith.constant dense<0.000000e+00> : vector<1xf32>
        %497 = vector.multi_reduction <add>, %496, %cst_199 [1, 2] : vector<1x34x32xf32> to vector<1xf32>
        %498 = vector.shape_cast %497 : vector<1xf32> to vector<1x1x1xf32>
        %499 = vector.extract %498[0, 0, 0] : f32 from vector<1x1x1xf32>
        %c0_i32_200 = arith.constant 0 : i32
        %500 = vector.broadcast %c0_i32_200 : i32 to vector<5x5xi32>
        %501 = arith.cmpi eq, %9, %500 : vector<5x5xi32>
        %c3_i32_201 = arith.constant 3 : i32
        %502 = vector.broadcast %c3_i32_201 : i32 to vector<5x5xi32>
        %503 = arith.cmpi eq, %10, %502 : vector<5x5xi32>
        %504 = arith.andi %501, %503 : vector<5x5xi1>
        %c3_i32_202 = arith.constant 3 : i32
        %505 = vector.broadcast %c3_i32_202 : i32 to vector<5x5xi32>
        %506 = arith.cmpi eq, %9, %505 : vector<5x5xi32>
        %c0_i32_203 = arith.constant 0 : i32
        %507 = vector.broadcast %c0_i32_203 : i32 to vector<5x5xi32>
        %508 = arith.cmpi eq, %10, %507 : vector<5x5xi32>
        %509 = arith.andi %506, %508 : vector<5x5xi1>
        %510 = arith.ori %504, %509 : vector<5x5xi1>
        %511 = arith.extui %510 : vector<5x5xi1> to vector<5x5xi32>
        %512 = arith.sitofp %511 : vector<5x5xi32> to vector<5x5xf32>
        %513 = vector.broadcast %499 : f32 to vector<5x5xf32>
        %514 = arith.mulf %513, %512 : vector<5x5xf32>
        %515 = arith.addf %494, %514 : vector<5x5xf32>
        %516 = arith.mulf %398, %422 : vector<34x32xf32>
        %517 = vector.shape_cast %516 : vector<34x32xf32> to vector<1x34x32xf32>
        %cst_204 = arith.constant dense<0.000000e+00> : vector<1xf32>
        %518 = vector.multi_reduction <add>, %517, %cst_204 [1, 2] : vector<1x34x32xf32> to vector<1xf32>
        %519 = vector.shape_cast %518 : vector<1xf32> to vector<1x1x1xf32>
        %520 = vector.extract %519[0, 0, 0] : f32 from vector<1x1x1xf32>
        %c0_i32_205 = arith.constant 0 : i32
        %521 = vector.broadcast %c0_i32_205 : i32 to vector<5x5xi32>
        %522 = arith.cmpi eq, %9, %521 : vector<5x5xi32>
        %c4_i32_206 = arith.constant 4 : i32
        %523 = vector.broadcast %c4_i32_206 : i32 to vector<5x5xi32>
        %524 = arith.cmpi eq, %10, %523 : vector<5x5xi32>
        %525 = arith.andi %522, %524 : vector<5x5xi1>
        %c4_i32_207 = arith.constant 4 : i32
        %526 = vector.broadcast %c4_i32_207 : i32 to vector<5x5xi32>
        %527 = arith.cmpi eq, %9, %526 : vector<5x5xi32>
        %c0_i32_208 = arith.constant 0 : i32
        %528 = vector.broadcast %c0_i32_208 : i32 to vector<5x5xi32>
        %529 = arith.cmpi eq, %10, %528 : vector<5x5xi32>
        %530 = arith.andi %527, %529 : vector<5x5xi1>
        %531 = arith.ori %525, %530 : vector<5x5xi1>
        %532 = arith.extui %531 : vector<5x5xi1> to vector<5x5xi32>
        %533 = arith.sitofp %532 : vector<5x5xi32> to vector<5x5xf32>
        %534 = vector.broadcast %520 : f32 to vector<5x5xf32>
        %535 = arith.mulf %534, %533 : vector<5x5xf32>
        %536 = arith.addf %515, %535 : vector<5x5xf32>
        %537 = arith.mulf %404, %404 : vector<34x32xf32>
        %538 = vector.shape_cast %537 : vector<34x32xf32> to vector<1x34x32xf32>
        %cst_209 = arith.constant dense<0.000000e+00> : vector<1xf32>
        %539 = vector.multi_reduction <add>, %538, %cst_209 [1, 2] : vector<1x34x32xf32> to vector<1xf32>
        %540 = vector.shape_cast %539 : vector<1xf32> to vector<1x1x1xf32>
        %541 = vector.extract %540[0, 0, 0] : f32 from vector<1x1x1xf32>
        %542 = arith.addf %430, %541 : f32
        %c1_i32_210 = arith.constant 1 : i32
        %543 = vector.broadcast %c1_i32_210 : i32 to vector<5x5xi32>
        %544 = arith.cmpi eq, %9, %543 : vector<5x5xi32>
        %c1_i32_211 = arith.constant 1 : i32
        %545 = vector.broadcast %c1_i32_211 : i32 to vector<5x5xi32>
        %546 = arith.cmpi eq, %10, %545 : vector<5x5xi32>
        %547 = arith.andi %544, %546 : vector<5x5xi1>
        %548 = arith.extui %547 : vector<5x5xi1> to vector<5x5xi32>
        %549 = arith.sitofp %548 : vector<5x5xi32> to vector<5x5xf32>
        %550 = vector.broadcast %541 : f32 to vector<5x5xf32>
        %551 = arith.mulf %550, %549 : vector<5x5xf32>
        %552 = arith.addf %536, %551 : vector<5x5xf32>
        %553 = arith.mulf %404, %359 : vector<34x32xf32>
        %554 = vector.shape_cast %553 : vector<34x32xf32> to vector<1x34x32xf32>
        %cst_212 = arith.constant dense<0.000000e+00> : vector<1xf32>
        %555 = vector.multi_reduction <add>, %554, %cst_212 [1, 2] : vector<1x34x32xf32> to vector<1xf32>
        %556 = vector.shape_cast %555 : vector<1xf32> to vector<1x1x1xf32>
        %557 = vector.extract %556[0, 0, 0] : f32 from vector<1x1x1xf32>
        %c1_i32_213 = arith.constant 1 : i32
        %558 = vector.broadcast %c1_i32_213 : i32 to vector<5x1xi32>
        %559 = arith.cmpi eq, %11, %558 : vector<5x1xi32>
        %560 = arith.extui %559 : vector<5x1xi1> to vector<5x1xi32>
        %561 = arith.sitofp %560 : vector<5x1xi32> to vector<5x1xf32>
        %562 = vector.broadcast %557 : f32 to vector<5x1xf32>
        %563 = arith.mulf %562, %561 : vector<5x1xf32>
        %564 = arith.subf %452, %563 : vector<5x1xf32>
        %565 = arith.mulf %404, %410 : vector<34x32xf32>
        %566 = vector.shape_cast %565 : vector<34x32xf32> to vector<1x34x32xf32>
        %cst_214 = arith.constant dense<0.000000e+00> : vector<1xf32>
        %567 = vector.multi_reduction <add>, %566, %cst_214 [1, 2] : vector<1x34x32xf32> to vector<1xf32>
        %568 = vector.shape_cast %567 : vector<1xf32> to vector<1x1x1xf32>
        %569 = vector.extract %568[0, 0, 0] : f32 from vector<1x1x1xf32>
        %c1_i32_215 = arith.constant 1 : i32
        %570 = vector.broadcast %c1_i32_215 : i32 to vector<5x5xi32>
        %571 = arith.cmpi eq, %9, %570 : vector<5x5xi32>
        %c2_i32_216 = arith.constant 2 : i32
        %572 = vector.broadcast %c2_i32_216 : i32 to vector<5x5xi32>
        %573 = arith.cmpi eq, %10, %572 : vector<5x5xi32>
        %574 = arith.andi %571, %573 : vector<5x5xi1>
        %c2_i32_217 = arith.constant 2 : i32
        %575 = vector.broadcast %c2_i32_217 : i32 to vector<5x5xi32>
        %576 = arith.cmpi eq, %9, %575 : vector<5x5xi32>
        %c1_i32_218 = arith.constant 1 : i32
        %577 = vector.broadcast %c1_i32_218 : i32 to vector<5x5xi32>
        %578 = arith.cmpi eq, %10, %577 : vector<5x5xi32>
        %579 = arith.andi %576, %578 : vector<5x5xi1>
        %580 = arith.ori %574, %579 : vector<5x5xi1>
        %581 = arith.extui %580 : vector<5x5xi1> to vector<5x5xi32>
        %582 = arith.sitofp %581 : vector<5x5xi32> to vector<5x5xf32>
        %583 = vector.broadcast %569 : f32 to vector<5x5xf32>
        %584 = arith.mulf %583, %582 : vector<5x5xf32>
        %585 = arith.addf %552, %584 : vector<5x5xf32>
        %586 = arith.mulf %404, %416 : vector<34x32xf32>
        %587 = vector.shape_cast %586 : vector<34x32xf32> to vector<1x34x32xf32>
        %cst_219 = arith.constant dense<0.000000e+00> : vector<1xf32>
        %588 = vector.multi_reduction <add>, %587, %cst_219 [1, 2] : vector<1x34x32xf32> to vector<1xf32>
        %589 = vector.shape_cast %588 : vector<1xf32> to vector<1x1x1xf32>
        %590 = vector.extract %589[0, 0, 0] : f32 from vector<1x1x1xf32>
        %c1_i32_220 = arith.constant 1 : i32
        %591 = vector.broadcast %c1_i32_220 : i32 to vector<5x5xi32>
        %592 = arith.cmpi eq, %9, %591 : vector<5x5xi32>
        %c3_i32_221 = arith.constant 3 : i32
        %593 = vector.broadcast %c3_i32_221 : i32 to vector<5x5xi32>
        %594 = arith.cmpi eq, %10, %593 : vector<5x5xi32>
        %595 = arith.andi %592, %594 : vector<5x5xi1>
        %c3_i32_222 = arith.constant 3 : i32
        %596 = vector.broadcast %c3_i32_222 : i32 to vector<5x5xi32>
        %597 = arith.cmpi eq, %9, %596 : vector<5x5xi32>
        %c1_i32_223 = arith.constant 1 : i32
        %598 = vector.broadcast %c1_i32_223 : i32 to vector<5x5xi32>
        %599 = arith.cmpi eq, %10, %598 : vector<5x5xi32>
        %600 = arith.andi %597, %599 : vector<5x5xi1>
        %601 = arith.ori %595, %600 : vector<5x5xi1>
        %602 = arith.extui %601 : vector<5x5xi1> to vector<5x5xi32>
        %603 = arith.sitofp %602 : vector<5x5xi32> to vector<5x5xf32>
        %604 = vector.broadcast %590 : f32 to vector<5x5xf32>
        %605 = arith.mulf %604, %603 : vector<5x5xf32>
        %606 = arith.addf %585, %605 : vector<5x5xf32>
        %607 = arith.mulf %404, %422 : vector<34x32xf32>
        %608 = vector.shape_cast %607 : vector<34x32xf32> to vector<1x34x32xf32>
        %cst_224 = arith.constant dense<0.000000e+00> : vector<1xf32>
        %609 = vector.multi_reduction <add>, %608, %cst_224 [1, 2] : vector<1x34x32xf32> to vector<1xf32>
        %610 = vector.shape_cast %609 : vector<1xf32> to vector<1x1x1xf32>
        %611 = vector.extract %610[0, 0, 0] : f32 from vector<1x1x1xf32>
        %c1_i32_225 = arith.constant 1 : i32
        %612 = vector.broadcast %c1_i32_225 : i32 to vector<5x5xi32>
        %613 = arith.cmpi eq, %9, %612 : vector<5x5xi32>
        %c4_i32_226 = arith.constant 4 : i32
        %614 = vector.broadcast %c4_i32_226 : i32 to vector<5x5xi32>
        %615 = arith.cmpi eq, %10, %614 : vector<5x5xi32>
        %616 = arith.andi %613, %615 : vector<5x5xi1>
        %c4_i32_227 = arith.constant 4 : i32
        %617 = vector.broadcast %c4_i32_227 : i32 to vector<5x5xi32>
        %618 = arith.cmpi eq, %9, %617 : vector<5x5xi32>
        %c1_i32_228 = arith.constant 1 : i32
        %619 = vector.broadcast %c1_i32_228 : i32 to vector<5x5xi32>
        %620 = arith.cmpi eq, %10, %619 : vector<5x5xi32>
        %621 = arith.andi %618, %620 : vector<5x5xi1>
        %622 = arith.ori %616, %621 : vector<5x5xi1>
        %623 = arith.extui %622 : vector<5x5xi1> to vector<5x5xi32>
        %624 = arith.sitofp %623 : vector<5x5xi32> to vector<5x5xf32>
        %625 = vector.broadcast %611 : f32 to vector<5x5xf32>
        %626 = arith.mulf %625, %624 : vector<5x5xf32>
        %627 = arith.addf %606, %626 : vector<5x5xf32>
        %628 = arith.mulf %410, %410 : vector<34x32xf32>
        %629 = vector.shape_cast %628 : vector<34x32xf32> to vector<1x34x32xf32>
        %cst_229 = arith.constant dense<0.000000e+00> : vector<1xf32>
        %630 = vector.multi_reduction <add>, %629, %cst_229 [1, 2] : vector<1x34x32xf32> to vector<1xf32>
        %631 = vector.shape_cast %630 : vector<1xf32> to vector<1x1x1xf32>
        %632 = vector.extract %631[0, 0, 0] : f32 from vector<1x1x1xf32>
        %633 = arith.addf %542, %632 : f32
        %c2_i32_230 = arith.constant 2 : i32
        %634 = vector.broadcast %c2_i32_230 : i32 to vector<5x5xi32>
        %635 = arith.cmpi eq, %9, %634 : vector<5x5xi32>
        %c2_i32_231 = arith.constant 2 : i32
        %636 = vector.broadcast %c2_i32_231 : i32 to vector<5x5xi32>
        %637 = arith.cmpi eq, %10, %636 : vector<5x5xi32>
        %638 = arith.andi %635, %637 : vector<5x5xi1>
        %639 = arith.extui %638 : vector<5x5xi1> to vector<5x5xi32>
        %640 = arith.sitofp %639 : vector<5x5xi32> to vector<5x5xf32>
        %641 = vector.broadcast %632 : f32 to vector<5x5xf32>
        %642 = arith.mulf %641, %640 : vector<5x5xf32>
        %643 = arith.addf %627, %642 : vector<5x5xf32>
        %644 = arith.mulf %410, %359 : vector<34x32xf32>
        %645 = vector.shape_cast %644 : vector<34x32xf32> to vector<1x34x32xf32>
        %cst_232 = arith.constant dense<0.000000e+00> : vector<1xf32>
        %646 = vector.multi_reduction <add>, %645, %cst_232 [1, 2] : vector<1x34x32xf32> to vector<1xf32>
        %647 = vector.shape_cast %646 : vector<1xf32> to vector<1x1x1xf32>
        %648 = vector.extract %647[0, 0, 0] : f32 from vector<1x1x1xf32>
        %c2_i32_233 = arith.constant 2 : i32
        %649 = vector.broadcast %c2_i32_233 : i32 to vector<5x1xi32>
        %650 = arith.cmpi eq, %11, %649 : vector<5x1xi32>
        %651 = arith.extui %650 : vector<5x1xi1> to vector<5x1xi32>
        %652 = arith.sitofp %651 : vector<5x1xi32> to vector<5x1xf32>
        %653 = vector.broadcast %648 : f32 to vector<5x1xf32>
        %654 = arith.mulf %653, %652 : vector<5x1xf32>
        %655 = arith.subf %564, %654 : vector<5x1xf32>
        %656 = arith.mulf %410, %416 : vector<34x32xf32>
        %657 = vector.shape_cast %656 : vector<34x32xf32> to vector<1x34x32xf32>
        %cst_234 = arith.constant dense<0.000000e+00> : vector<1xf32>
        %658 = vector.multi_reduction <add>, %657, %cst_234 [1, 2] : vector<1x34x32xf32> to vector<1xf32>
        %659 = vector.shape_cast %658 : vector<1xf32> to vector<1x1x1xf32>
        %660 = vector.extract %659[0, 0, 0] : f32 from vector<1x1x1xf32>
        %c2_i32_235 = arith.constant 2 : i32
        %661 = vector.broadcast %c2_i32_235 : i32 to vector<5x5xi32>
        %662 = arith.cmpi eq, %9, %661 : vector<5x5xi32>
        %c3_i32_236 = arith.constant 3 : i32
        %663 = vector.broadcast %c3_i32_236 : i32 to vector<5x5xi32>
        %664 = arith.cmpi eq, %10, %663 : vector<5x5xi32>
        %665 = arith.andi %662, %664 : vector<5x5xi1>
        %c3_i32_237 = arith.constant 3 : i32
        %666 = vector.broadcast %c3_i32_237 : i32 to vector<5x5xi32>
        %667 = arith.cmpi eq, %9, %666 : vector<5x5xi32>
        %c2_i32_238 = arith.constant 2 : i32
        %668 = vector.broadcast %c2_i32_238 : i32 to vector<5x5xi32>
        %669 = arith.cmpi eq, %10, %668 : vector<5x5xi32>
        %670 = arith.andi %667, %669 : vector<5x5xi1>
        %671 = arith.ori %665, %670 : vector<5x5xi1>
        %672 = arith.extui %671 : vector<5x5xi1> to vector<5x5xi32>
        %673 = arith.sitofp %672 : vector<5x5xi32> to vector<5x5xf32>
        %674 = vector.broadcast %660 : f32 to vector<5x5xf32>
        %675 = arith.mulf %674, %673 : vector<5x5xf32>
        %676 = arith.addf %643, %675 : vector<5x5xf32>
        %677 = arith.mulf %410, %422 : vector<34x32xf32>
        %678 = vector.shape_cast %677 : vector<34x32xf32> to vector<1x34x32xf32>
        %cst_239 = arith.constant dense<0.000000e+00> : vector<1xf32>
        %679 = vector.multi_reduction <add>, %678, %cst_239 [1, 2] : vector<1x34x32xf32> to vector<1xf32>
        %680 = vector.shape_cast %679 : vector<1xf32> to vector<1x1x1xf32>
        %681 = vector.extract %680[0, 0, 0] : f32 from vector<1x1x1xf32>
        %c2_i32_240 = arith.constant 2 : i32
        %682 = vector.broadcast %c2_i32_240 : i32 to vector<5x5xi32>
        %683 = arith.cmpi eq, %9, %682 : vector<5x5xi32>
        %c4_i32_241 = arith.constant 4 : i32
        %684 = vector.broadcast %c4_i32_241 : i32 to vector<5x5xi32>
        %685 = arith.cmpi eq, %10, %684 : vector<5x5xi32>
        %686 = arith.andi %683, %685 : vector<5x5xi1>
        %c4_i32_242 = arith.constant 4 : i32
        %687 = vector.broadcast %c4_i32_242 : i32 to vector<5x5xi32>
        %688 = arith.cmpi eq, %9, %687 : vector<5x5xi32>
        %c2_i32_243 = arith.constant 2 : i32
        %689 = vector.broadcast %c2_i32_243 : i32 to vector<5x5xi32>
        %690 = arith.cmpi eq, %10, %689 : vector<5x5xi32>
        %691 = arith.andi %688, %690 : vector<5x5xi1>
        %692 = arith.ori %686, %691 : vector<5x5xi1>
        %693 = arith.extui %692 : vector<5x5xi1> to vector<5x5xi32>
        %694 = arith.sitofp %693 : vector<5x5xi32> to vector<5x5xf32>
        %695 = vector.broadcast %681 : f32 to vector<5x5xf32>
        %696 = arith.mulf %695, %694 : vector<5x5xf32>
        %697 = arith.addf %676, %696 : vector<5x5xf32>
        %698 = arith.mulf %416, %416 : vector<34x32xf32>
        %699 = vector.shape_cast %698 : vector<34x32xf32> to vector<1x34x32xf32>
        %cst_244 = arith.constant dense<0.000000e+00> : vector<1xf32>
        %700 = vector.multi_reduction <add>, %699, %cst_244 [1, 2] : vector<1x34x32xf32> to vector<1xf32>
        %701 = vector.shape_cast %700 : vector<1xf32> to vector<1x1x1xf32>
        %702 = vector.extract %701[0, 0, 0] : f32 from vector<1x1x1xf32>
        %703 = arith.addf %633, %702 : f32
        %c3_i32_245 = arith.constant 3 : i32
        %704 = vector.broadcast %c3_i32_245 : i32 to vector<5x5xi32>
        %705 = arith.cmpi eq, %9, %704 : vector<5x5xi32>
        %c3_i32_246 = arith.constant 3 : i32
        %706 = vector.broadcast %c3_i32_246 : i32 to vector<5x5xi32>
        %707 = arith.cmpi eq, %10, %706 : vector<5x5xi32>
        %708 = arith.andi %705, %707 : vector<5x5xi1>
        %709 = arith.extui %708 : vector<5x5xi1> to vector<5x5xi32>
        %710 = arith.sitofp %709 : vector<5x5xi32> to vector<5x5xf32>
        %711 = vector.broadcast %702 : f32 to vector<5x5xf32>
        %712 = arith.mulf %711, %710 : vector<5x5xf32>
        %713 = arith.addf %697, %712 : vector<5x5xf32>
        %714 = arith.mulf %416, %359 : vector<34x32xf32>
        %715 = vector.shape_cast %714 : vector<34x32xf32> to vector<1x34x32xf32>
        %cst_247 = arith.constant dense<0.000000e+00> : vector<1xf32>
        %716 = vector.multi_reduction <add>, %715, %cst_247 [1, 2] : vector<1x34x32xf32> to vector<1xf32>
        %717 = vector.shape_cast %716 : vector<1xf32> to vector<1x1x1xf32>
        %718 = vector.extract %717[0, 0, 0] : f32 from vector<1x1x1xf32>
        %c3_i32_248 = arith.constant 3 : i32
        %719 = vector.broadcast %c3_i32_248 : i32 to vector<5x1xi32>
        %720 = arith.cmpi eq, %11, %719 : vector<5x1xi32>
        %721 = arith.extui %720 : vector<5x1xi1> to vector<5x1xi32>
        %722 = arith.sitofp %721 : vector<5x1xi32> to vector<5x1xf32>
        %723 = vector.broadcast %718 : f32 to vector<5x1xf32>
        %724 = arith.mulf %723, %722 : vector<5x1xf32>
        %725 = arith.subf %655, %724 : vector<5x1xf32>
        %726 = arith.mulf %416, %422 : vector<34x32xf32>
        %727 = vector.shape_cast %726 : vector<34x32xf32> to vector<1x34x32xf32>
        %cst_249 = arith.constant dense<0.000000e+00> : vector<1xf32>
        %728 = vector.multi_reduction <add>, %727, %cst_249 [1, 2] : vector<1x34x32xf32> to vector<1xf32>
        %729 = vector.shape_cast %728 : vector<1xf32> to vector<1x1x1xf32>
        %730 = vector.extract %729[0, 0, 0] : f32 from vector<1x1x1xf32>
        %c3_i32_250 = arith.constant 3 : i32
        %731 = vector.broadcast %c3_i32_250 : i32 to vector<5x5xi32>
        %732 = arith.cmpi eq, %9, %731 : vector<5x5xi32>
        %c4_i32_251 = arith.constant 4 : i32
        %733 = vector.broadcast %c4_i32_251 : i32 to vector<5x5xi32>
        %734 = arith.cmpi eq, %10, %733 : vector<5x5xi32>
        %735 = arith.andi %732, %734 : vector<5x5xi1>
        %c4_i32_252 = arith.constant 4 : i32
        %736 = vector.broadcast %c4_i32_252 : i32 to vector<5x5xi32>
        %737 = arith.cmpi eq, %9, %736 : vector<5x5xi32>
        %c3_i32_253 = arith.constant 3 : i32
        %738 = vector.broadcast %c3_i32_253 : i32 to vector<5x5xi32>
        %739 = arith.cmpi eq, %10, %738 : vector<5x5xi32>
        %740 = arith.andi %737, %739 : vector<5x5xi1>
        %741 = arith.ori %735, %740 : vector<5x5xi1>
        %742 = arith.extui %741 : vector<5x5xi1> to vector<5x5xi32>
        %743 = arith.sitofp %742 : vector<5x5xi32> to vector<5x5xf32>
        %744 = vector.broadcast %730 : f32 to vector<5x5xf32>
        %745 = arith.mulf %744, %743 : vector<5x5xf32>
        %746 = arith.addf %713, %745 : vector<5x5xf32>
        %747 = arith.mulf %422, %422 : vector<34x32xf32>
        %748 = vector.shape_cast %747 : vector<34x32xf32> to vector<1x34x32xf32>
        %cst_254 = arith.constant dense<0.000000e+00> : vector<1xf32>
        %749 = vector.multi_reduction <add>, %748, %cst_254 [1, 2] : vector<1x34x32xf32> to vector<1xf32>
        %750 = vector.shape_cast %749 : vector<1xf32> to vector<1x1x1xf32>
        %751 = vector.extract %750[0, 0, 0] : f32 from vector<1x1x1xf32>
        %752 = arith.addf %703, %751 : f32
        %c4_i32_255 = arith.constant 4 : i32
        %753 = vector.broadcast %c4_i32_255 : i32 to vector<5x5xi32>
        %754 = arith.cmpi eq, %9, %753 : vector<5x5xi32>
        %c4_i32_256 = arith.constant 4 : i32
        %755 = vector.broadcast %c4_i32_256 : i32 to vector<5x5xi32>
        %756 = arith.cmpi eq, %10, %755 : vector<5x5xi32>
        %757 = arith.andi %754, %756 : vector<5x5xi1>
        %758 = arith.extui %757 : vector<5x5xi1> to vector<5x5xi32>
        %759 = arith.sitofp %758 : vector<5x5xi32> to vector<5x5xf32>
        %760 = vector.broadcast %751 : f32 to vector<5x5xf32>
        %761 = arith.mulf %760, %759 : vector<5x5xf32>
        %762 = arith.addf %746, %761 : vector<5x5xf32>
        %763 = arith.mulf %422, %359 : vector<34x32xf32>
        %764 = vector.shape_cast %763 : vector<34x32xf32> to vector<1x34x32xf32>
        %cst_257 = arith.constant dense<0.000000e+00> : vector<1xf32>
        %765 = vector.multi_reduction <add>, %764, %cst_257 [1, 2] : vector<1x34x32xf32> to vector<1xf32>
        %766 = vector.shape_cast %765 : vector<1xf32> to vector<1x1x1xf32>
        %767 = vector.extract %766[0, 0, 0] : f32 from vector<1x1x1xf32>
        %c4_i32_258 = arith.constant 4 : i32
        %768 = vector.broadcast %c4_i32_258 : i32 to vector<5x1xi32>
        %769 = arith.cmpi eq, %11, %768 : vector<5x1xi32>
        %770 = arith.extui %769 : vector<5x1xi1> to vector<5x1xi32>
        %771 = arith.sitofp %770 : vector<5x1xi32> to vector<5x1xf32>
        %772 = vector.broadcast %767 : f32 to vector<5x1xf32>
        %773 = arith.mulf %772, %771 : vector<5x1xf32>
        %774 = arith.subf %725, %773 : vector<5x1xf32>
        %cst_259 = arith.constant 9.99999974E-5 : f32
        %775 = vector.broadcast %cst_259 : f32 to vector<5x5xf32>
        %776 = arith.mulf %775, %14 : vector<5x5xf32>
        %777 = arith.addf %762, %776 : vector<5x5xf32>
        %778 = tpu.concatenate %777, %774 in 1 : vector<5x5xf32>, vector<5x1xf32> -> vector<5x6xf32>
        %779 = tpu.iota {dimensions = array<i32: 0>} : vector<5x1xi32>
        %780 = vector.extract_strided_slice %778 {offsets = [0, 0], sizes = [1, 6], strides = [1, 1]} : vector<5x6xf32> to vector<1x6xf32>
        %781 = vector.extract_strided_slice %780 {offsets = [0, 0], sizes = [1, 1], strides = [1, 1]} : vector<1x6xf32> to vector<1x1xf32>
        %782 = vector.broadcast %781 : vector<1x1xf32> to vector<1x6xf32>
        %783 = arith.divf %780, %782 : vector<1x6xf32>
        %c0_i32_260 = arith.constant 0 : i32
        %784 = vector.broadcast %c0_i32_260 : i32 to vector<5x1xi32>
        %785 = arith.cmpi eq, %779, %784 : vector<5x1xi32>
        %786 = vector.extract_strided_slice %778 {offsets = [0, 0], sizes = [5, 1], strides = [1, 1]} : vector<5x6xf32> to vector<5x1xf32>
        %cst_261 = arith.constant 0.000000e+00 : f32
        %787 = vector.broadcast %cst_261 : f32 to vector<5x1xf32>
        %788 = arith.select %785, %787, %786 : vector<5x1xi1>, vector<5x1xf32>
        %789 = vector.broadcast %788 : vector<5x1xf32> to vector<5x6xf32>
        %790 = vector.broadcast %783 : vector<1x6xf32> to vector<5x6xf32>
        %791 = arith.mulf %789, %790 : vector<5x6xf32>
        %792 = arith.subf %778, %791 : vector<5x6xf32>
        %c0_i32_262 = arith.constant 0 : i32
        %793 = vector.broadcast %c0_i32_262 : i32 to vector<5x1xi32>
        %794 = arith.cmpi eq, %779, %793 : vector<5x1xi32>
        %795 = vector.shape_cast %794 : vector<5x1xi1> to vector<5x1xi1>
        %796 = vector.broadcast %795 : vector<5x1xi1> to vector<5x6xi1>
        %797 = vector.shape_cast %783 : vector<1x6xf32> to vector<1x6xf32>
        %798 = vector.broadcast %797 : vector<1x6xf32> to vector<5x6xf32>
        %799 = arith.select %796, %798, %792 : vector<5x6xi1>, vector<5x6xf32>
        %800 = vector.extract_strided_slice %799 {offsets = [1, 0], sizes = [1, 6], strides = [1, 1]} : vector<5x6xf32> to vector<1x6xf32>
        %801 = vector.extract_strided_slice %800 {offsets = [0, 1], sizes = [1, 1], strides = [1, 1]} : vector<1x6xf32> to vector<1x1xf32>
        %802 = vector.broadcast %801 : vector<1x1xf32> to vector<1x6xf32>
        %803 = arith.divf %800, %802 : vector<1x6xf32>
        %c1_i32_263 = arith.constant 1 : i32
        %804 = vector.broadcast %c1_i32_263 : i32 to vector<5x1xi32>
        %805 = arith.cmpi eq, %779, %804 : vector<5x1xi32>
        %806 = vector.extract_strided_slice %799 {offsets = [0, 1], sizes = [5, 1], strides = [1, 1]} : vector<5x6xf32> to vector<5x1xf32>
        %cst_264 = arith.constant 0.000000e+00 : f32
        %807 = vector.broadcast %cst_264 : f32 to vector<5x1xf32>
        %808 = arith.select %805, %807, %806 : vector<5x1xi1>, vector<5x1xf32>
        %809 = vector.broadcast %808 : vector<5x1xf32> to vector<5x6xf32>
        %810 = vector.broadcast %803 : vector<1x6xf32> to vector<5x6xf32>
        %811 = arith.mulf %809, %810 : vector<5x6xf32>
        %812 = arith.subf %799, %811 : vector<5x6xf32>
        %c1_i32_265 = arith.constant 1 : i32
        %813 = vector.broadcast %c1_i32_265 : i32 to vector<5x1xi32>
        %814 = arith.cmpi eq, %779, %813 : vector<5x1xi32>
        %815 = vector.shape_cast %814 : vector<5x1xi1> to vector<5x1xi1>
        %816 = vector.broadcast %815 : vector<5x1xi1> to vector<5x6xi1>
        %817 = vector.shape_cast %803 : vector<1x6xf32> to vector<1x6xf32>
        %818 = vector.broadcast %817 : vector<1x6xf32> to vector<5x6xf32>
        %819 = arith.select %816, %818, %812 : vector<5x6xi1>, vector<5x6xf32>
        %820 = vector.extract_strided_slice %819 {offsets = [2, 0], sizes = [1, 6], strides = [1, 1]} : vector<5x6xf32> to vector<1x6xf32>
        %821 = vector.extract_strided_slice %820 {offsets = [0, 2], sizes = [1, 1], strides = [1, 1]} : vector<1x6xf32> to vector<1x1xf32>
        %822 = vector.broadcast %821 : vector<1x1xf32> to vector<1x6xf32>
        %823 = arith.divf %820, %822 : vector<1x6xf32>
        %c2_i32_266 = arith.constant 2 : i32
        %824 = vector.broadcast %c2_i32_266 : i32 to vector<5x1xi32>
        %825 = arith.cmpi eq, %779, %824 : vector<5x1xi32>
        %826 = vector.extract_strided_slice %819 {offsets = [0, 2], sizes = [5, 1], strides = [1, 1]} : vector<5x6xf32> to vector<5x1xf32>
        %cst_267 = arith.constant 0.000000e+00 : f32
        %827 = vector.broadcast %cst_267 : f32 to vector<5x1xf32>
        %828 = arith.select %825, %827, %826 : vector<5x1xi1>, vector<5x1xf32>
        %829 = vector.broadcast %828 : vector<5x1xf32> to vector<5x6xf32>
        %830 = vector.broadcast %823 : vector<1x6xf32> to vector<5x6xf32>
        %831 = arith.mulf %829, %830 : vector<5x6xf32>
        %832 = arith.subf %819, %831 : vector<5x6xf32>
        %c2_i32_268 = arith.constant 2 : i32
        %833 = vector.broadcast %c2_i32_268 : i32 to vector<5x1xi32>
        %834 = arith.cmpi eq, %779, %833 : vector<5x1xi32>
        %835 = vector.shape_cast %834 : vector<5x1xi1> to vector<5x1xi1>
        %836 = vector.broadcast %835 : vector<5x1xi1> to vector<5x6xi1>
        %837 = vector.shape_cast %823 : vector<1x6xf32> to vector<1x6xf32>
        %838 = vector.broadcast %837 : vector<1x6xf32> to vector<5x6xf32>
        %839 = arith.select %836, %838, %832 : vector<5x6xi1>, vector<5x6xf32>
        %840 = vector.extract_strided_slice %839 {offsets = [3, 0], sizes = [1, 6], strides = [1, 1]} : vector<5x6xf32> to vector<1x6xf32>
        %841 = vector.extract_strided_slice %840 {offsets = [0, 3], sizes = [1, 1], strides = [1, 1]} : vector<1x6xf32> to vector<1x1xf32>
        %842 = vector.broadcast %841 : vector<1x1xf32> to vector<1x6xf32>
        %843 = arith.divf %840, %842 : vector<1x6xf32>
        %c3_i32_269 = arith.constant 3 : i32
        %844 = vector.broadcast %c3_i32_269 : i32 to vector<5x1xi32>
        %845 = arith.cmpi eq, %779, %844 : vector<5x1xi32>
        %846 = vector.extract_strided_slice %839 {offsets = [0, 3], sizes = [5, 1], strides = [1, 1]} : vector<5x6xf32> to vector<5x1xf32>
        %cst_270 = arith.constant 0.000000e+00 : f32
        %847 = vector.broadcast %cst_270 : f32 to vector<5x1xf32>
        %848 = arith.select %845, %847, %846 : vector<5x1xi1>, vector<5x1xf32>
        %849 = vector.broadcast %848 : vector<5x1xf32> to vector<5x6xf32>
        %850 = vector.broadcast %843 : vector<1x6xf32> to vector<5x6xf32>
        %851 = arith.mulf %849, %850 : vector<5x6xf32>
        %852 = arith.subf %839, %851 : vector<5x6xf32>
        %c3_i32_271 = arith.constant 3 : i32
        %853 = vector.broadcast %c3_i32_271 : i32 to vector<5x1xi32>
        %854 = arith.cmpi eq, %779, %853 : vector<5x1xi32>
        %855 = vector.shape_cast %854 : vector<5x1xi1> to vector<5x1xi1>
        %856 = vector.broadcast %855 : vector<5x1xi1> to vector<5x6xi1>
        %857 = vector.shape_cast %843 : vector<1x6xf32> to vector<1x6xf32>
        %858 = vector.broadcast %857 : vector<1x6xf32> to vector<5x6xf32>
        %859 = arith.select %856, %858, %852 : vector<5x6xi1>, vector<5x6xf32>
        %860 = vector.extract_strided_slice %859 {offsets = [4, 0], sizes = [1, 6], strides = [1, 1]} : vector<5x6xf32> to vector<1x6xf32>
        %861 = vector.extract_strided_slice %860 {offsets = [0, 4], sizes = [1, 1], strides = [1, 1]} : vector<1x6xf32> to vector<1x1xf32>
        %862 = vector.broadcast %861 : vector<1x1xf32> to vector<1x6xf32>
        %863 = arith.divf %860, %862 : vector<1x6xf32>
        %c4_i32_272 = arith.constant 4 : i32
        %864 = vector.broadcast %c4_i32_272 : i32 to vector<5x1xi32>
        %865 = arith.cmpi eq, %779, %864 : vector<5x1xi32>
        %866 = vector.extract_strided_slice %859 {offsets = [0, 4], sizes = [5, 1], strides = [1, 1]} : vector<5x6xf32> to vector<5x1xf32>
        %cst_273 = arith.constant 0.000000e+00 : f32
        %867 = vector.broadcast %cst_273 : f32 to vector<5x1xf32>
        %868 = arith.select %865, %867, %866 : vector<5x1xi1>, vector<5x1xf32>
        %869 = vector.broadcast %868 : vector<5x1xf32> to vector<5x6xf32>
        %870 = vector.broadcast %863 : vector<1x6xf32> to vector<5x6xf32>
        %871 = arith.mulf %869, %870 : vector<5x6xf32>
        %872 = arith.subf %859, %871 : vector<5x6xf32>
        %c4_i32_274 = arith.constant 4 : i32
        %873 = vector.broadcast %c4_i32_274 : i32 to vector<5x1xi32>
        %874 = arith.cmpi eq, %779, %873 : vector<5x1xi32>
        %875 = vector.shape_cast %874 : vector<5x1xi1> to vector<5x1xi1>
        %876 = vector.broadcast %875 : vector<5x1xi1> to vector<5x6xi1>
        %877 = vector.shape_cast %863 : vector<1x6xf32> to vector<1x6xf32>
        %878 = vector.broadcast %877 : vector<1x6xf32> to vector<5x6xf32>
        %879 = arith.select %876, %878, %872 : vector<5x6xi1>, vector<5x6xf32>
        %880 = vector.extract_strided_slice %879 {offsets = [0, 5], sizes = [5, 1], strides = [1, 1]} : vector<5x6xf32> to vector<5x1xf32>
        %881 = vector.shape_cast %880 : vector<5x1xf32> to vector<1x5x1xf32>
        %cst_275 = arith.constant dense<0.000000e+00> : vector<1xf32>
        %882 = vector.multi_reduction <add>, %881, %cst_275 [1, 2] : vector<1x5x1xf32> to vector<1xf32>
        %883 = vector.shape_cast %882 : vector<1xf32> to vector<1x1x1xf32>
        %884 = vector.extract %883[0, 0, 0] : f32 from vector<1x1x1xf32>
        %885 = vector.broadcast %884 : f32 to vector<5x1xf32>
        %886 = arith.divf %880, %885 : vector<5x1xf32>
        %cst_276 = arith.constant 0.000000e+00 : f32
        %887 = vector.broadcast %cst_276 : f32 to vector<34x32xf32>
        %cst_277 = arith.constant 0.000000e+00 : f32
        %888 = vector.broadcast %cst_277 : f32 to vector<34x32xf32>
        %889 = vector.extract_strided_slice %886 {offsets = [0, 0], sizes = [1, 1], strides = [1, 1]} : vector<5x1xf32> to vector<1x1xf32>
        %890 = vector.extract_strided_slice %389 {offsets = [0, 0, 0], sizes = [1, 34, 32], strides = [1, 1, 1]} : vector<5x34x32xf32> to vector<1x34x32xf32>
        %891 = vector.shape_cast %890 : vector<1x34x32xf32> to vector<34x32xf32>
        %892 = vector.broadcast %889 : vector<1x1xf32> to vector<34x32xf32>
        %893 = arith.mulf %892, %891 : vector<34x32xf32>
        %894 = arith.addf %887, %893 : vector<34x32xf32>
        %895 = vector.extract_strided_slice %390 {offsets = [0, 0, 0], sizes = [1, 34, 32], strides = [1, 1, 1]} : vector<5x34x32xf32> to vector<1x34x32xf32>
        %896 = vector.shape_cast %895 : vector<1x34x32xf32> to vector<34x32xf32>
        %897 = vector.broadcast %889 : vector<1x1xf32> to vector<34x32xf32>
        %898 = arith.mulf %897, %896 : vector<34x32xf32>
        %899 = arith.addf %888, %898 : vector<34x32xf32>
        %900 = vector.extract_strided_slice %886 {offsets = [1, 0], sizes = [1, 1], strides = [1, 1]} : vector<5x1xf32> to vector<1x1xf32>
        %901 = vector.extract_strided_slice %389 {offsets = [1, 0, 0], sizes = [1, 34, 32], strides = [1, 1, 1]} : vector<5x34x32xf32> to vector<1x34x32xf32>
        %902 = vector.shape_cast %901 : vector<1x34x32xf32> to vector<34x32xf32>
        %903 = vector.broadcast %900 : vector<1x1xf32> to vector<34x32xf32>
        %904 = arith.mulf %903, %902 : vector<34x32xf32>
        %905 = arith.addf %894, %904 : vector<34x32xf32>
        %906 = vector.extract_strided_slice %390 {offsets = [1, 0, 0], sizes = [1, 34, 32], strides = [1, 1, 1]} : vector<5x34x32xf32> to vector<1x34x32xf32>
        %907 = vector.shape_cast %906 : vector<1x34x32xf32> to vector<34x32xf32>
        %908 = vector.broadcast %900 : vector<1x1xf32> to vector<34x32xf32>
        %909 = arith.mulf %908, %907 : vector<34x32xf32>
        %910 = arith.addf %899, %909 : vector<34x32xf32>
        %911 = vector.extract_strided_slice %886 {offsets = [2, 0], sizes = [1, 1], strides = [1, 1]} : vector<5x1xf32> to vector<1x1xf32>
        %912 = vector.extract_strided_slice %389 {offsets = [2, 0, 0], sizes = [1, 34, 32], strides = [1, 1, 1]} : vector<5x34x32xf32> to vector<1x34x32xf32>
        %913 = vector.shape_cast %912 : vector<1x34x32xf32> to vector<34x32xf32>
        %914 = vector.broadcast %911 : vector<1x1xf32> to vector<34x32xf32>
        %915 = arith.mulf %914, %913 : vector<34x32xf32>
        %916 = arith.addf %905, %915 : vector<34x32xf32>
        %917 = vector.extract_strided_slice %390 {offsets = [2, 0, 0], sizes = [1, 34, 32], strides = [1, 1, 1]} : vector<5x34x32xf32> to vector<1x34x32xf32>
        %918 = vector.shape_cast %917 : vector<1x34x32xf32> to vector<34x32xf32>
        %919 = vector.broadcast %911 : vector<1x1xf32> to vector<34x32xf32>
        %920 = arith.mulf %919, %918 : vector<34x32xf32>
        %921 = arith.addf %910, %920 : vector<34x32xf32>
        %922 = vector.extract_strided_slice %886 {offsets = [3, 0], sizes = [1, 1], strides = [1, 1]} : vector<5x1xf32> to vector<1x1xf32>
        %923 = vector.extract_strided_slice %389 {offsets = [3, 0, 0], sizes = [1, 34, 32], strides = [1, 1, 1]} : vector<5x34x32xf32> to vector<1x34x32xf32>
        %924 = vector.shape_cast %923 : vector<1x34x32xf32> to vector<34x32xf32>
        %925 = vector.broadcast %922 : vector<1x1xf32> to vector<34x32xf32>
        %926 = arith.mulf %925, %924 : vector<34x32xf32>
        %927 = arith.addf %916, %926 : vector<34x32xf32>
        %928 = vector.extract_strided_slice %390 {offsets = [3, 0, 0], sizes = [1, 34, 32], strides = [1, 1, 1]} : vector<5x34x32xf32> to vector<1x34x32xf32>
        %929 = vector.shape_cast %928 : vector<1x34x32xf32> to vector<34x32xf32>
        %930 = vector.broadcast %922 : vector<1x1xf32> to vector<34x32xf32>
        %931 = arith.mulf %930, %929 : vector<34x32xf32>
        %932 = arith.addf %921, %931 : vector<34x32xf32>
        %933 = vector.extract_strided_slice %886 {offsets = [4, 0], sizes = [1, 1], strides = [1, 1]} : vector<5x1xf32> to vector<1x1xf32>
        %934 = vector.extract_strided_slice %389 {offsets = [4, 0, 0], sizes = [1, 34, 32], strides = [1, 1, 1]} : vector<5x34x32xf32> to vector<1x34x32xf32>
        %935 = vector.shape_cast %934 : vector<1x34x32xf32> to vector<34x32xf32>
        %936 = vector.broadcast %933 : vector<1x1xf32> to vector<34x32xf32>
        %937 = arith.mulf %936, %935 : vector<34x32xf32>
        %938 = arith.addf %927, %937 : vector<34x32xf32>
        %939 = vector.extract_strided_slice %390 {offsets = [4, 0, 0], sizes = [1, 34, 32], strides = [1, 1, 1]} : vector<5x34x32xf32> to vector<1x34x32xf32>
        %940 = vector.shape_cast %939 : vector<1x34x32xf32> to vector<34x32xf32>
        %941 = vector.broadcast %933 : vector<1x1xf32> to vector<34x32xf32>
        %942 = arith.mulf %941, %940 : vector<34x32xf32>
        %943 = arith.addf %932, %942 : vector<34x32xf32>
        %cst_278 = arith.constant 1.000000e+00 : f32
        %944 = vector.broadcast %cst_278 : f32 to vector<34x32xf32>
        %945 = arith.mulf %944, %943 : vector<34x32xf32>
        %946 = arith.addf %938, %945 : vector<34x32xf32>
        %cst_279 = arith.constant 1.000000e+00 : f32
        %947 = vector.broadcast %cst_279 : f32 to vector<34x32xf32>
        %948 = arith.mulf %947, %359 : vector<34x32xf32>
        %949 = arith.addf %22, %948 : vector<34x32xf32>
        %cst_280 = arith.constant 9.99999968E-21 : f32
        %950 = arith.cmpf olt, %752, %cst_280 : f32
        %c1_i32_281 = arith.constant 1 : i32
        %951 = arith.cmpi slt, %arg20, %c1_i32_281 : i32
        %952 = arith.ori %951, %950 : i1
        %953 = arith.select %952, %949, %946 : vector<34x32xf32>
        %c0_282 = arith.constant 0 : index
        %c0_283 = arith.constant 0 : index
        %954 = vector.load %arg18[%c0_282, %c0_283] : memref<34x32xf32, #tpu.memory_space<vmem>>, vector<34x32xf32>
        tpu.vector_store %arg18[%c0_282, %c0_283], %953 {strides = array<i32>} : memref<34x32xf32, #tpu.memory_space<vmem>>, vector<34x32xf32>,
        %955 = arith.subf %953, %22 : vector<34x32xf32>
        %956 = arith.mulf %955, %955 : vector<34x32xf32>
        %957 = vector.shape_cast %956 : vector<34x32xf32> to vector<1x34x32xf32>
        %cst_284 = arith.constant dense<0.000000e+00> : vector<1xf32>
        %958 = vector.multi_reduction <add>, %957, %cst_284 [1, 2] : vector<1x34x32xf32> to vector<1xf32>
        %959 = vector.shape_cast %958 : vector<1xf32> to vector<1x1x1xf32>
        %960 = vector.extract %959[0, 0, 0] : f32 from vector<1x1x1xf32>
        %961 = math.sqrt %960 : f32
        %962 = arith.mulf %22, %22 : vector<34x32xf32>
        %963 = vector.shape_cast %962 : vector<34x32xf32> to vector<1x34x32xf32>
        %cst_285 = arith.constant dense<0.000000e+00> : vector<1xf32>
        %964 = vector.multi_reduction <add>, %963, %cst_285 [1, 2] : vector<1x34x32xf32> to vector<1xf32>
        %965 = vector.shape_cast %964 : vector<1xf32> to vector<1x1x1xf32>
        %966 = vector.extract %965[0, 0, 0] : f32 from vector<1x1x1xf32>
        %967 = math.sqrt %966 : f32
        %cst_286 = arith.constant 9.99999993E-9 : f32
        %968 = arith.addf %967, %cst_286 : f32
        %cst_287 = arith.constant 9.998020e-04 : f32
        %969 = arith.mulf %cst_287, %968 : f32
        %970 = arith.cmpf olt, %961, %969 : f32
        %c1_i32_288 = arith.constant 1 : i32
        %971 = arith.cmpi sge, %arg20, %c1_i32_288 : i32
        %972 = arith.andi %971, %950 : i1
        %true = arith.constant true
        %973 = arith.xori %972, %true : i1
        %974 = arith.andi %970, %973 : i1
        %975 = arith.extui %974 : i1 to i32
        %c0_289 = arith.constant 0 : index
        %976 = memref.load %arg19[%c0_289] : memref<1xi32, #tpu.memory_space<smem>>
        memref.store %975, %arg19[%c0_289] : memref<1xi32, #tpu.memory_space<smem>>
      } else {
      }
    }
    %c20_i32_16 = arith.constant 20 : i32
    %c0_17 = arith.constant 0 : index
    %c0_18 = arith.constant 0 : index
    %16 = vector.load %arg18[%c0_17, %c0_18] : memref<34x32xf32, #tpu.memory_space<vmem>>, vector<34x32xf32>
    %c0_19 = arith.constant 0 : index
    %c0_20 = arith.constant 0 : index
    %17 = vector.load %arg15[%c0_19, %c0_20] : memref<34x32xf32, #tpu.memory_space<vmem>>, vector<34x32xf32>
    tpu.vector_store %arg15[%c0_19, %c0_20], %16 {strides = array<i32>} : memref<34x32xf32, #tpu.memory_space<vmem>>, vector<34x32xf32>,
    return
  }
  func.func @transform_0(%arg0: i32) -> (i32, i32) {
    %c0_i32 = arith.constant 0 : i32
    %c0_i32_0 = arith.constant 0 : i32
    %c0_i32_1 = arith.constant 0 : i32
    return %c0_i32, %c0_i32_0 : i32, i32
  }
  func.func @transform_1(%arg0: i32) -> (i32, i32) {
    %c0_i32 = arith.constant 0 : i32
    %c0_i32_0 = arith.constant 0 : i32
    %c0_i32_1 = arith.constant 0 : i32
    return %c0_i32, %c0_i32_0 : i32, i32
  }
  func.func @transform_2(%arg0: i32) -> (i32, i32, i32) {
    %c0_i32 = arith.constant 0 : i32
    %c0_i32_0 = arith.constant 0 : i32
    %c0_i32_1 = arith.constant 0 : i32
    %c0_i32_2 = arith.constant 0 : i32
    return %c0_i32, %c0_i32_0, %c0_i32_1 : i32, i32, i32
  }
  func.func @transform_3(%arg0: i32) -> (i32, i32) {
    %c0_i32 = arith.constant 0 : i32
    %c0_i32_0 = arith.constant 0 : i32
    %c0_i32_1 = arith.constant 0 : i32
    return %c0_i32, %c0_i32_0 : i32, i32
  }
  func.func @transform_4(%arg0: i32) -> (i32, i32, i32) {
    %c0_i32 = arith.constant 0 : i32
    %c0_i32_0 = arith.constant 0 : i32
    %c0_i32_1 = arith.constant 0 : i32
    %c0_i32_2 = arith.constant 0 : i32
    return %c0_i32, %c0_i32_0, %c0_i32_1 : i32, i32, i32
  }
  func.func @transform_5(%arg0: i32) -> (i32, i32, i32) {
    %c0_i32 = arith.constant 0 : i32
    %c0_i32_0 = arith.constant 0 : i32
    %c0_i32_1 = arith.constant 0 : i32
    %c0_i32_2 = arith.constant 0 : i32
    return %c0_i32, %c0_i32_0, %c0_i32_1 : i32, i32, i32
  }
  func.func @transform_6(%arg0: i32) -> (i32, i32, i32) {
    %c0_i32 = arith.constant 0 : i32
    %c0_i32_0 = arith.constant 0 : i32
    %c0_i32_1 = arith.constant 0 : i32
    %c0_i32_2 = arith.constant 0 : i32
    return %c0_i32, %c0_i32_0, %c0_i32_1 : i32, i32, i32
  }
  func.func @transform_7(%arg0: i32) -> (i32, i32, i32) {
    %c0_i32 = arith.constant 0 : i32
    %c0_i32_0 = arith.constant 0 : i32
    %c0_i32_1 = arith.constant 0 : i32
    %c0_i32_2 = arith.constant 0 : i32
    return %c0_i32, %c0_i32_0, %c0_i32_1 : i32, i32, i32
  }
  func.func @transform_8(%arg0: i32) -> (i32, i32, i32) {
    %c0_i32 = arith.constant 0 : i32
    %c0_i32_0 = arith.constant 0 : i32
    %c0_i32_1 = arith.constant 0 : i32
    %c0_i32_2 = arith.constant 0 : i32
    return %c0_i32, %c0_i32_0, %c0_i32_1 : i32, i32, i32
  }
  func.func @transform_9(%arg0: i32) -> (i32, i32, i32) {
    %c0_i32 = arith.constant 0 : i32
    %c0_i32_0 = arith.constant 0 : i32
    %c0_i32_1 = arith.constant 0 : i32
    %c0_i32_2 = arith.constant 0 : i32
    return %c0_i32, %c0_i32_0, %c0_i32_1 : i32, i32, i32
  }
  func.func @transform_10(%arg0: i32) -> (i32, i32, i32) {
    %c0_i32 = arith.constant 0 : i32
    %c0_i32_0 = arith.constant 0 : i32
    %c0_i32_1 = arith.constant 0 : i32
    %c0_i32_2 = arith.constant 0 : i32
    return %c0_i32, %c0_i32_0, %c0_i32_1 : i32, i32, i32
  }
  func.func @transform_11(%arg0: i32) -> (i32, i32, i32) {
    %c0_i32 = arith.constant 0 : i32
    %c0_i32_0 = arith.constant 0 : i32
    %c0_i32_1 = arith.constant 0 : i32
    %c0_i32_2 = arith.constant 0 : i32
    return %c0_i32, %c0_i32_0, %c0_i32_1 : i32, i32, i32
  }
  func.func @transform_12(%arg0: i32) -> (i32, i32, i32) {
    %c0_i32 = arith.constant 0 : i32
    %c0_i32_0 = arith.constant 0 : i32
    %c0_i32_1 = arith.constant 0 : i32
    %c0_i32_2 = arith.constant 0 : i32
    return %c0_i32, %c0_i32_0, %c0_i32_1 : i32, i32, i32
  }
  func.func @transform_13(%arg0: i32) -> (i32, i32, i32, i32) {
    %c0_i32 = arith.constant 0 : i32
    %c0_i32_0 = arith.constant 0 : i32
    %c0_i32_1 = arith.constant 0 : i32
    %c0_i32_2 = arith.constant 0 : i32
    %c0_i32_3 = arith.constant 0 : i32
    return %c0_i32, %c0_i32_0, %c0_i32_1, %c0_i32_2 : i32, i32, i32, i32
  }
  func.func @transform_14(%arg0: i32) -> (i32, i32) {
    %c0_i32 = arith.constant 0 : i32
    %c0_i32_0 = arith.constant 0 : i32
    %c0_i32_1 = arith.constant 0 : i32
    return %c0_i32, %c0_i32_0 : i32, i32
  }
}

</mosaic_0001>

<llo_original>
// kernel: adaptive_gcn_diff_forward.1
$region0: #{adaptive_gcn_diff_forward.1}
  #allocation0 [shape = 'u32[]', space=smem, size = 0x4, offset = 0x4, fixed_abs, tag = 'smem constant byte address 0x4 - core index']
  #allocation1 [shape = 'u32[144,128]{1,0:T(1,128)}', space=vmem, size = 0x12000, scoped, tag = 'internal scratch']
  #allocation2 [shape = 'f32[5,34,32]{2,1,0:T(8,128)}', space=vmem, size = 0x19000, scoped, tag = 'scratch operand']
  #allocation3 [shape = 'f32[5,34,32]{2,1,0:T(8,128)}', space=vmem, size = 0x19000, scoped, tag = 'scratch operand']
  #allocation4 [shape = 'f32[34,32]{1,0:T(8,128)}', space=vmem, size = 0x5000, scoped, tag = 'scratch operand']
  #allocation5 [shape = 's32[1]{0:T(128)}', space=smem, size = 0x200, scoped, tag = 'scratch operand']
  %s0 = inlined_call_operand.vmem [shape: f32[34,32], index: 0, kind: input, shape index: {}]
  %s1 = inlined_call_operand.vmem [shape: f32[34,34], index: 1, kind: input, shape index: {}]
  %s2 = inlined_call_operand.vmem [shape: f32[2,34,32], index: 2, kind: input, shape index: {}]
  %s3 = inlined_call_operand.vmem [shape: f32[34,34], index: 3, kind: input, shape index: {}]
  %s4 = inlined_call_operand.vmem [shape: f32[2,34,34], index: 4, kind: input, shape index: {}]
  %s5 = inlined_call_operand.vmem [shape: f32[2,4,32], index: 5, kind: input, shape index: {}]
  %s6 = inlined_call_operand.vmem [shape: f32[2,32,96], index: 6, kind: input, shape index: {}]
  %s7 = inlined_call_operand.vmem [shape: f32[2,1,96], index: 7, kind: input, shape index: {}]
  %s8 = inlined_call_operand.vmem [shape: f32[2,32,32], index: 8, kind: input, shape index: {}]
  %s9 = inlined_call_operand.vmem [shape: f32[2,32,64], index: 9, kind: input, shape index: {}]
  %s10 = inlined_call_operand.vmem [shape: f32[2,1,64], index: 10, kind: input, shape index: {}]
  %s11 = inlined_call_operand.vmem [shape: f32[2,64,32], index: 11, kind: input, shape index: {}]
  %s12 = inlined_call_operand.vmem [shape: f32[2,4,32], index: 12, kind: input, shape index: {}]
  %s13 = inlined_call_operand.vmem [shape: f32[2,2,32,64], index: 13, kind: input, shape index: {}]
  %s14 = inlined_call_operand.vmem [shape: f32[34,32], index: 14, kind: output, shape index: {}]
  %s15 = sld [smem:[#allocation0]]
  $region77: #{adaptive_gcn_diff_forward.1} parent=0
    _
  %s17 = ssub.s32 1, %s15
  %s18 = scalar_select 0, %s17, %s15
  // Predicated region
  $region2: #{adaptive_gcn_diff_forward.1} parent=0 // pred_check
    _
  $region3: #{adaptive_gcn_diff_forward.1} parent=0 // pred_check_branch
    %20 = sbr.rel (0) target = $region5
  $region4: #{adaptive_gcn_diff_forward.1} parent=0 // pred_region
    _
  $region5: #{adaptive_gcn_diff_forward.1} parent=0 // pred_fallthru
    _
  // Predicated region
  $region6: #{adaptive_gcn_diff_forward.1} parent=0 // pred_check
    _
  $region7: #{adaptive_gcn_diff_forward.1} parent=0 // pred_check_branch
    %22 = sbr.rel (0) target = $region9
  $region8: #{adaptive_gcn_diff_forward.1} parent=0 // pred_region
    _
  $region9: #{adaptive_gcn_diff_forward.1} parent=0 // pred_fallthru
    _
  // Predicated region
  $region10: #{adaptive_gcn_diff_forward.1} parent=0 // pred_check
    _
  $region11: #{adaptive_gcn_diff_forward.1} parent=0 // pred_check_branch
    %24 = sbr.rel (0) target = $region13
  $region12: #{adaptive_gcn_diff_forward.1} parent=0 // pred_region
    _
  $region13: #{adaptive_gcn_diff_forward.1} parent=0 // pred_fallthru
    _
  // Predicated region
  $region14: #{adaptive_gcn_diff_forward.1} parent=0 // pred_check
    _
  $region15: #{adaptive_gcn_diff_forward.1} parent=0 // pred_check_branch
    %26 = sbr.rel (0) target = $region17
  $region16: #{adaptive_gcn_diff_forward.1} parent=0 // pred_region
    _
  $region17: #{adaptive_gcn_diff_forward.1} parent=0 // pred_fallthru
    _
  // Predicated region
  $region18: #{adaptive_gcn_diff_forward.1} parent=0 // pred_check
    _
  $region19: #{adaptive_gcn_diff_forward.1} parent=0 // pred_check_branch
    %28 = sbr.rel (0) target = $region21
  $region20: #{adaptive_gcn_diff_forward.1} parent=0 // pred_region
    _
  $region21: #{adaptive_gcn_diff_forward.1} parent=0 // pred_fallthru
    _
  // Predicated region
  $region22: #{adaptive_gcn_diff_forward.1} parent=0 // pred_check
    _
  $region23: #{adaptive_gcn_diff_forward.1} parent=0 // pred_check_branch
    %30 = sbr.rel (0) target = $region25
  $region24: #{adaptive_gcn_diff_forward.1} parent=0 // pred_region
    _
  $region25: #{adaptive_gcn_diff_forward.1} parent=0 // pred_fallthru
    _
  // Predicated region
  $region26: #{adaptive_gcn_diff_forward.1} parent=0 // pred_check
    _
  $region27: #{adaptive_gcn_diff_forward.1} parent=0 // pred_check_branch
    %32 = sbr.rel (0) target = $region29
  $region28: #{adaptive_gcn_diff_forward.1} parent=0 // pred_region
    _
  $region29: #{adaptive_gcn_diff_forward.1} parent=0 // pred_fallthru
    _
  // Predicated region
  $region30: #{adaptive_gcn_diff_forward.1} parent=0 // pred_check
    _
  $region31: #{adaptive_gcn_diff_forward.1} parent=0 // pred_check_branch
    %34 = sbr.rel (0) target = $region33
  $region32: #{adaptive_gcn_diff_forward.1} parent=0 // pred_region
    _
  $region33: #{adaptive_gcn_diff_forward.1} parent=0 // pred_fallthru
    _
  // Predicated region
  $region34: #{adaptive_gcn_diff_forward.1} parent=0 // pred_check
    _
  $region35: #{adaptive_gcn_diff_forward.1} parent=0 // pred_check_branch
    %36 = sbr.rel (0) target = $region37
  $region36: #{adaptive_gcn_diff_forward.1} parent=0 // pred_region
    _
  $region37: #{adaptive_gcn_diff_forward.1} parent=0 // pred_fallthru
    _
  // Predicated region
  $region38: #{adaptive_gcn_diff_forward.1} parent=0 // pred_check
    _
  $region39: #{adaptive_gcn_diff_forward.1} parent=0 // pred_check_branch
    %38 = sbr.rel (0) target = $region41
  $region40: #{adaptive_gcn_diff_forward.1} parent=0 // pred_region
    _
  $region41: #{adaptive_gcn_diff_forward.1} parent=0 // pred_fallthru
    _
  // Predicated region
  $region42: #{adaptive_gcn_diff_forward.1} parent=0 // pred_check
    _
  $region43: #{adaptive_gcn_diff_forward.1} parent=0 // pred_check_branch
    %40 = sbr.rel (0) target = $region45
  $region44: #{adaptive_gcn_diff_forward.1} parent=0 // pred_region
    _
  $region45: #{adaptive_gcn_diff_forward.1} parent=0 // pred_fallthru
    _
  // Predicated region
  $region46: #{adaptive_gcn_diff_forward.1} parent=0 // pred_check
    _
  $region47: #{adaptive_gcn_diff_forward.1} parent=0 // pred_check_branch
    %42 = sbr.rel (0) target = $region49
  $region48: #{adaptive_gcn_diff_forward.1} parent=0 // pred_region
    _
  $region49: #{adaptive_gcn_diff_forward.1} parent=0 // pred_fallthru
    _
  // Predicated region
  $region50: #{adaptive_gcn_diff_forward.1} parent=0 // pred_check
    _
  $region51: #{adaptive_gcn_diff_forward.1} parent=0 // pred_check_branch
    %44 = sbr.rel (0) target = $region53
  $region52: #{adaptive_gcn_diff_forward.1} parent=0 // pred_region
    _
  $region53: #{adaptive_gcn_diff_forward.1} parent=0 // pred_fallthru
    _
  // Predicated region
  $region54: #{adaptive_gcn_diff_forward.1} parent=0 // pred_check
    _
  $region55: #{adaptive_gcn_diff_forward.1} parent=0 // pred_check_branch
    %46 = sbr.rel (0) target = $region57
  $region56: #{adaptive_gcn_diff_forward.1} parent=0 // pred_region
    _
  $region57: #{adaptive_gcn_diff_forward.1} parent=0 // pred_fallthru
    _
  %v47 = vld [vmem:[%s1] sm:$0xff]
  %v48 = vld [vmem:[%s1 + $0x8] sm:$0xff]
  %v49 = vld [vmem:[%s1 + $0x10] sm:$0xff]
  %v50 = vld [vmem:[%s1 + $0x18] sm:$0xff]
  %v51 = vld [vmem:[%s1 + $0x20] sm:$0x3]
  %v52 = vld [vmem:[%s3] sm:$0xff]
  %v53 = vld [vmem:[%s3 + $0x8] sm:$0xff]
  %v54 = vld [vmem:[%s3 + $0x10] sm:$0xff]
  %v55 = vld [vmem:[%s3 + $0x18] sm:$0xff]
  %v56 = vld [vmem:[%s3 + $0x20] sm:$0x3]
  %v57 = vld [vmem:[%s0] sm:$0xff]
  %v58 = vld [vmem:[%s0 + $0x8] sm:$0xff]
  %v59 = vld [vmem:[%s0 + $0x10] sm:$0xff]
  %v60 = vld [vmem:[%s0 + $0x18] sm:$0xff]
  %v61 = vld [vmem:[%s0 + $0x20] sm:$0x3]
  %vm62 = vcmask 261120
  %63 = vst.msk [vmem:[#allocation4] sm:$0xff] %vm62, %v57
  %64 = vst.msk [vmem:[#allocation4 + $0x8] sm:$0xff] %vm62, %v58
  %65 = vst.msk [vmem:[#allocation4 + $0x10] sm:$0xff] %vm62, %v59
  %66 = vst.msk [vmem:[#allocation4 + $0x18] sm:$0xff] %vm62, %v60
  %vm67 = vcmask 254976
  %68 = vst.msk [vmem:[#allocation4 + $0x20] sm:$0x3] %vm67, %v61
  %69 = vst.msk [vmem:[#allocation2] sm:$0xff] %vm62, 0.0
  %70 = vst.msk [vmem:[#allocation2 + $0x8] sm:$0xff] %vm62, 0.0
  %71 = vst.msk [vmem:[#allocation2 + $0x10] sm:$0xff] %vm62, 0.0
  %72 = vst.msk [vmem:[#allocation2 + $0x18] sm:$0xff] %vm62, 0.0
  %73 = vst.msk [vmem:[#allocation2 + $0x20] sm:$0x3] %vm67, 0.0
  %74 = vst.msk [vmem:[#allocation2 + $0x28] sm:$0xff] %vm62, 0.0
  %75 = vst.msk [vmem:[#allocation2 + $0x30] sm:$0xff] %vm62, 0.0
  %76 = vst.msk [vmem:[#allocation2 + $0x38] sm:$0xff] %vm62, 0.0
  %77 = vst.msk [vmem:[#allocation2 + $0x40] sm:$0xff] %vm62, 0.0
  %78 = vst.msk [vmem:[#allocation2 + $0x48] sm:$0x3] %vm67, 0.0
  %79 = vst.msk [vmem:[#allocation2 + $0x50] sm:$0xff] %vm62, 0.0
  %80 = vst.msk [vmem:[#allocation2 + $0x58] sm:$0xff] %vm62, 0.0
  %81 = vst.msk [vmem:[#allocation2 + $0x60] sm:$0xff] %vm62, 0.0
  %82 = vst.msk [vmem:[#allocation2 + $0x68] sm:$0xff] %vm62, 0.0
  %83 = vst.msk [vmem:[#allocation2 + $0x70] sm:$0x3] %vm67, 0.0
  %84 = vst.msk [vmem:[#allocation2 + $0x78] sm:$0xff] %vm62, 0.0
  %85 = vst.msk [vmem:[#allocation2 + $0x80] sm:$0xff] %vm62, 0.0
  %86 = vst.msk [vmem:[#allocation2 + $0x88] sm:$0xff] %vm62, 0.0
  %87 = vst.msk [vmem:[#allocation2 + $0x90] sm:$0xff] %vm62, 0.0
  %88 = vst.msk [vmem:[#allocation2 + $0x98] sm:$0x3] %vm67, 0.0
  %89 = vst.msk [vmem:[#allocation2 + $0xa0] sm:$0xff] %vm62, 0.0
  %90 = vst.msk [vmem:[#allocation2 + $0xa8] sm:$0xff] %vm62, 0.0
  %91 = vst.msk [vmem:[#allocation2 + $0xb0] sm:$0xff] %vm62, 0.0
  %92 = vst.msk [vmem:[#allocation2 + $0xb8] sm:$0xff] %vm62, 0.0
  %93 = vst.msk [vmem:[#allocation2 + $0xc0] sm:$0x3] %vm67, 0.0
  %94 = vst.msk [vmem:[#allocation3] sm:$0xff] %vm62, 0.0
  %95 = vst.msk [vmem:[#allocation3 + $0x8] sm:$0xff] %vm62, 0.0
  %96 = vst.msk [vmem:[#allocation3 + $0x10] sm:$0xff] %vm62, 0.0
  %97 = vst.msk [vmem:[#allocation3 + $0x18] sm:$0xff] %vm62, 0.0
  %98 = vst.msk [vmem:[#allocation3 + $0x20] sm:$0x3] %vm67, 0.0
  %99 = vst.msk [vmem:[#allocation3 + $0x28] sm:$0xff] %vm62, 0.0
  %100 = vst.msk [vmem:[#allocation3 + $0x30] sm:$0xff] %vm62, 0.0
  %101 = vst.msk [vmem:[#allocation3 + $0x38] sm:$0xff] %vm62, 0.0
  %102 = vst.msk [vmem:[#allocation3 + $0x40] sm:$0xff] %vm62, 0.0
  %103 = vst.msk [vmem:[#allocation3 + $0x48] sm:$0x3] %vm67, 0.0
  %104 = vst.msk [vmem:[#allocation3 + $0x50] sm:$0xff] %vm62, 0.0
  %105 = vst.msk [vmem:[#allocation3 + $0x58] sm:$0xff] %vm62, 0.0
  %106 = vst.msk [vmem:[#allocation3 + $0x60] sm:$0xff] %vm62, 0.0
  %107 = vst.msk [vmem:[#allocation3 + $0x68] sm:$0xff] %vm62, 0.0
  %108 = vst.msk [vmem:[#allocation3 + $0x70] sm:$0x3] %vm67, 0.0
  %109 = vst.msk [vmem:[#allocation3 + $0x78] sm:$0xff] %vm62, 0.0
  %110 = vst.msk [vmem:[#allocation3 + $0x80] sm:$0xff] %vm62, 0.0
  %111 = vst.msk [vmem:[#allocation3 + $0x88] sm:$0xff] %vm62, 0.0
  %112 = vst.msk [vmem:[#allocation3 + $0x90] sm:$0xff] %vm62, 0.0
  %113 = vst.msk [vmem:[#allocation3 + $0x98] sm:$0x3] %vm67, 0.0
  %114 = vst.msk [vmem:[#allocation3 + $0xa0] sm:$0xff] %vm62, 0.0
  %115 = vst.msk [vmem:[#allocation3 + $0xa8] sm:$0xff] %vm62, 0.0
  %116 = vst.msk [vmem:[#allocation3 + $0xb0] sm:$0xff] %vm62, 0.0
  %117 = vst.msk [vmem:[#allocation3 + $0xb8] sm:$0xff] %vm62, 0.0
  %118 = vst.msk [vmem:[#allocation3 + $0xc0] sm:$0x3] %vm67, 0.0
  %s119 = scalar_lea.smem [#allocation5], 0
  %120 = sst [smem:[%s119]] 0
  %v121 = vlaneseq
  %v122 = vshrl.u32 %v121, 7
  %v123 = vlaneseq
  %v124 = vand.u32 %v123, 127
  %vm125 = vcmp.eq.s32.totalorder %v122, %v124
  %v126 = vsel %vm125, 1, 0
  %v127 = vcvt.s32.f32 %v126
  loop: start=0, step=1, limit=20
  $region58: #{adaptive_gcn_diff_forward.1} parent=0 // loop_pre_header
    _
  $region59: #{adaptive_gcn_diff_forward.1} parent=0 // loop_header
    %s129 = sphi 0, %s133
    %p130 = scmp.ge.s32.totalorder %s129, 20
  $region60: #{adaptive_gcn_diff_forward.1} parent=0 // loop_header_branch
    %132 = sbr.rel (%p130) target = $region64
  $region61: #{adaptive_gcn_diff_forward.1} parent=0 // loop_body
    %s134 = sld [smem:[#allocation5]]
    %p135 = scmp.eq.s32.totalorder %s134, 0
    // Predicated region
    $region65: #{adaptive_gcn_diff_forward.1} parent=61 // pred_check
      %p136 = pneg %p135
    $region66: #{adaptive_gcn_diff_forward.1} parent=61 // pred_check_branch
      %138 = sbr.rel (%p136) target = $region68
    $region67: #{adaptive_gcn_diff_forward.1} parent=61 // pred_region
      %v139 = vld [vmem:[#allocation4] sm:$0xff]
      %v140 = vld [vmem:[#allocation4 + $0x8] sm:$0xff]
      %v141 = vld [vmem:[#allocation4 + $0x10] sm:$0xff]
      %v142 = vld [vmem:[#allocation4 + $0x18] sm:$0xff]
      %v143 = vld [vmem:[#allocation4 + $0x20] sm:$0x3]
      %v144 = vld [vmem:[%s5] sm:$0xf]
      %v145 = vld [vmem:[%s12] sm:$0xf]
      %v146 = vsel %vm62, %v139, 0.0
      %147 = vadd.xlane.f32.xlu0 %v146
      %v148 = vpop.xlane.xlu0 %147
      %v149 = vsel %vm62, %v140, 0.0
      %150 = vadd.xlane.f32.xlu0 %v149
      %v151 = vpop.xlane.xlu0 %150
      %v152 = vsel %vm62, %v141, 0.0
      %153 = vadd.xlane.f32.xlu0 %v152
      %v154 = vpop.xlane.xlu0 %153
      %v155 = vsel %vm62, %v142, 0.0
      %156 = vadd.xlane.f32.xlu0 %v155
      %v157 = vpop.xlane.xlu0 %156
      %v158 = vsel %vm67, %v143, 0.0
      %159 = vadd.xlane.f32.xlu0 %v158
      %v160 = vpop.xlane.xlu0 %159
      %v161 = vrcp.pop 32.0
      %v162 = vmul.f32 %v148, %v161
      %v163 = vmul.f32 %v151, %v161
      %v164 = vmul.f32 %v154, %v161
      %v165 = vmul.f32 %v157, %v161
      %v166 = vmul.f32 %v160, %v161
      %v167 = vsub.f32 %v139, %v162
      %v168 = vsub.f32 %v140, %v163
      %v169 = vsub.f32 %v141, %v164
      %v170 = vsub.f32 %v142, %v165
      %v171 = vsub.f32 %v143, %v166
      %v172 = vmul.f32 %v167, %v167
      %v173 = vmul.f32 %v168, %v168
      %v174 = vmul.f32 %v169, %v169
      %v175 = vmul.f32 %v170, %v170
      %v176 = vmul.f32 %v171, %v171
      %v177 = vsel %vm62, %v172, 0.0
      %178 = vadd.xlane.f32.xlu0 %v177
      %v179 = vpop.xlane.xlu0 %178
      %v180 = vsel %vm62, %v173, 0.0
      %181 = vadd.xlane.f32.xlu0 %v180
      %v182 = vpop.xlane.xlu0 %181
      %v183 = vsel %vm62, %v174, 0.0
      %184 = vadd.xlane.f32.xlu0 %v183
      %v185 = vpop.xlane.xlu0 %184
      %v186 = vsel %vm62, %v175, 0.0
      %187 = vadd.xlane.f32.xlu0 %v186
      %v188 = vpop.xlane.xlu0 %187
      %v189 = vsel %vm67, %v176, 0.0
      %190 = vadd.xlane.f32.xlu0 %v189
      %v191 = vpop.xlane.xlu0 %190
      %v192 = vrcp.pop 31.0
      %v193 = vmul.f32 %v179, %v192
      %v194 = vmul.f32 %v182, %v192
      %v195 = vmul.f32 %v185, %v192
      %v196 = vmul.f32 %v188, %v192
      %v197 = vmul.f32 %v191, %v192
      %v198 = vlaneseq
      %v199 = vshrl.u32 %v198, 7
      %v200 = vsub.s32 0, %v199
      %v201 = vrot.slane %v144, %v200
      %v202 = vmul.f32 %v201, %v167
      %v203 = vmul.f32 %v201, %v168
      %v204 = vmul.f32 %v201, %v169
      %v205 = vmul.f32 %v201, %v170
      %v206 = vmul.f32 %v201, %v171
      %v207 = vrsqrt.pop %v193
      %v208 = vmul.f32 %v193, %v207
      %vm209 = vcmp.eq.f32.partialorder %v193, inf
      %v210 = vsel %vm209, %v193, %v208
      %vm211 = vcmp.eq.f32.partialorder %v193, 0.0
      %v212 = vand.u32 %v193, 2147483648
      %v213 = vsel %vm211, %v212, %v210
      %v214 = vrsqrt.pop %v194
      %v215 = vmul.f32 %v194, %v214
      %vm216 = vcmp.eq.f32.partialorder %v194, inf
      %v217 = vsel %vm216, %v194, %v215
      %vm218 = vcmp.eq.f32.partialorder %v194, 0.0
      %v219 = vand.u32 %v194, 2147483648
      %v220 = vsel %vm218, %v219, %v217
      %v221 = vrsqrt.pop %v195
      %v222 = vmul.f32 %v195, %v221
      %vm223 = vcmp.eq.f32.partialorder %v195, inf
      %v224 = vsel %vm223, %v195, %v222
      %vm225 = vcmp.eq.f32.partialorder %v195, 0.0
      %v226 = vand.u32 %v195, 2147483648
      %v227 = vsel %vm225, %v226, %v224
      %v228 = vrsqrt.pop %v196
      %v229 = vmul.f32 %v196, %v228
      %vm230 = vcmp.eq.f32.partialorder %v196, inf
      %v231 = vsel %vm230, %v196, %v229
      %vm232 = vcmp.eq.f32.partialorder %v196, 0.0
      %v233 = vand.u32 %v196, 2147483648
      %v234 = vsel %vm232, %v233, %v231
      %v235 = vrsqrt.pop %v197
      %v236 = vmul.f32 %v197, %v235
      %vm237 = vcmp.eq.f32.partialorder %v197, inf
      %v238 = vsel %vm237, %v197, %v236
      %vm239 = vcmp.eq.f32.partialorder %v197, 0.0
      %v240 = vand.u32 %v197, 2147483648
      %v241 = vsel %vm239, %v240, %v238
      %v242 = vadd.f32 %v213, 1e-06
      %v243 = vadd.f32 %v220, 1e-06
      %v244 = vadd.f32 %v227, 1e-06
      %v245 = vadd.f32 %v234, 1e-06
      %v246 = vadd.f32 %v241, 1e-06
      %v247 = vrcp.pop %v242
      %v248 = vmul.f32 %v202, %v247
      %v249 = vrcp.pop %v243
      %v250 = vmul.f32 %v203, %v249
      %v251 = vrcp.pop %v244
      %v252 = vmul.f32 %v204, %v251
      %v253 = vrcp.pop %v245
      %v254 = vmul.f32 %v205, %v253
      %v255 = vrcp.pop %v246
      %v256 = vmul.f32 %v206, %v255
      %v257 = vlaneseq
      %v258 = vshrl.u32 %v257, 7
      %v259 = vsub.s32 1, %v258
      %v260 = vrot.slane %v144, %v259
      %v261 = vadd.f32 %v248, %v260
      %v262 = vadd.f32 %v250, %v260
      %v263 = vadd.f32 %v252, %v260
      %v264 = vadd.f32 %v254, %v260
      %v265 = vadd.f32 %v256, %v260
      %v266 = vld [vmem:[%s6] sm:$0xff]
      %v267 = vld [vmem:[%s6 + $0x8] sm:$0xff]
      %v268 = vld [vmem:[%s6 + $0x10] sm:$0xff]
      %v269 = vld [vmem:[%s6 + $0x18] sm:$0xff]
      %v270 = vld [vmem:[%s7] sm:$0x1]
      %v272 = vlaneseq
      %v273 = vshrl.u32 %v272, 7
      %v274 = vsub.s32 0, %v273
      %v275 = vrot.slane %v270, %v274
      %v278 = vsel %vm62, %v261, 0
      %v281 = vsel %vm62, %v262, 0
      %v284 = vsel %vm62, %v263, 0
      %v287 = vsel %vm62, %v264, 0
      %v290 = vsel %vm62, %v265, 0
      %292 = vmatprep.subr.mxu0 0.0
      %293 = vmatpush1.msra.mxu0 %v266
      %294 = vmatprep.subr.mxu0 0.0
      %295 = vmatpush1.msra.mxu0 %v267
      %296 = vmatprep.subr.mxu0 0.0
      %297 = vmatpush1.msra.mxu0 %v268
      %298 = vmatprep.subr.mxu0 0.0
      %299 = vmatpush1.msra.mxu0 %v269
      %300 = vmatprep.subr.mxu0 0.0
      %301 = vmatpush1.msra.mxu0 0.0
      %302 = vmatprep.subr.mxu0 0.0
      %303 = vmatpush1.msra.mxu0 0.0
      %304 = vmatprep.subr.mxu0 0.0
      %305 = vmatpush1.msra.mxu0 0.0
      %306 = vmatprep.subr.mxu0 0.0
      %307 = vmatpush1.msra.mxu0 0.0
      %308 = vmatprep.subr.mxu0 0.0
      %309 = vmatpush1.msra.mxu0 0.0
      %310 = vmatprep.subr.mxu0 0.0
      %311 = vmatpush1.msra.mxu0 0.0
      %312 = vmatprep.subr.mxu0 0.0
      %313 = vmatpush1.msra.mxu0 0.0
      %314 = vmatprep.subr.mxu0 0.0
      %315 = vmatpush1.msra.mxu0 0.0
      %316 = vmatprep.subr.mxu0 0.0
      %317 = vmatpush1.msra.mxu0 0.0
      %318 = vmatprep.subr.mxu0 0.0
      %319 = vmatpush1.msra.mxu0 0.0
      %320 = vmatprep.subr.mxu0 0.0
      %321 = vmatpush1.msra.mxu0 0.0
      %322 = vmatprep.subr.mxu0 0.0
      %323 = vmatpush1.msra.mxu0 0.0
      %324 = vmatprep.subr.mxu0 0.0
      %325 = vmatpush1.msra.mxu0 0.0
      %326 = vmatprep.subr.mxu0 0.0
      %327 = vmatpush1.msra.mxu0 0.0
      %328 = vmatprep.subr.mxu0 0.0
      %329 = vmatpush1.msra.mxu0 0.0
      %330 = vmatprep.subr.mxu0 0.0
      %331 = vmatpush1.msra.mxu0 0.0
      %332 = vmatprep.subr.mxu0 0.0
      %333 = vmatpush1.msra.mxu0 0.0
      %334 = vmatprep.subr.mxu0 0.0
      %335 = vmatpush1.msra.mxu0 0.0
      %336 = vmatprep.subr.mxu0 0.0
      %337 = vmatpush1.msra.mxu0 0.0
      %338 = vmatprep.subr.mxu0 0.0
      %339 = vmatpush1.msra.mxu0 0.0
      %340 = vmatprep.subr.mxu0 0.0
      %341 = vmatpush1.msra.mxu0 0.0
      %342 = vmatprep.subr.mxu0 0.0
      %343 = vmatpush1.msra.mxu0 0.0
      %344 = vmatprep.subr.mxu0 0.0
      %345 = vmatpush1.msra.mxu0 0.0
      %346 = vmatprep.subr.mxu0 0.0
      %347 = vmatpush1.msra.mxu0 0.0
      %348 = vmatprep.subr.mxu0 0.0
      %349 = vmatpush1.msra.mxu0 0.0
      %350 = vmatprep.subr.mxu0 0.0
      %351 = vmatpush1.msra.mxu0 0.0
      %352 = vmatprep.subr.mxu0 0.0
      %353 = vmatpush1.msra.mxu0 0.0
      %354 = vmatprep.subr.mxu0 0.0
      %355 = vmatpush1.msra.mxu0 0.0
      %356 = vmatprep.mubr.f32.mxu0 0.0
      %357 = vmatmul.mubr.f32.gmra.mrb[0].mxu0 %v278
      %v358 = vpop.f32.mrb[0].mxu0
      %v359 = vadd.f32 %v275, %v358
      %v360 = vpop.f32.mrb[0].mxu0
      %361 = vmatprep.mubr.f32.mxu0 0.0
      %362 = vmatmul.mubr.f32.gmra.mrb[0].mxu0 %v281
      %v363 = vpop.f32.mrb[0].mxu0
      %v364 = vadd.f32 %v275, %v363
      %v365 = vpop.f32.mrb[0].mxu0
      %366 = vmatprep.mubr.f32.mxu0 0.0
      %367 = vmatmul.mubr.f32.gmra.mrb[0].mxu0 %v284
      %v368 = vpop.f32.mrb[0].mxu0
      %v369 = vadd.f32 %v275, %v368
      %v370 = vpop.f32.mrb[0].mxu0
      %371 = vmatprep.mubr.f32.mxu0 0.0
      %372 = vmatmul.mubr.f32.gmra.mrb[0].mxu0 %v287
      %v373 = vpop.f32.mrb[0].mxu0
      %v374 = vadd.f32 %v275, %v373
      %v375 = vpop.f32.mrb[0].mxu0
      %376 = vmatprep.mubr.f32.mxu0 0.0
      %377 = vmatmul.mubr.f32.gmra.mrb[0].mxu0 %v290
      %v378 = vpop.f32.mrb[0].mxu0
      %v379 = vadd.f32 %v275, %v378
      %v380 = vpop.f32.mrb[0].mxu0
      %381 = vdwg.mxu0
      %387 = vrot.lane.b32.xlu0 %v359, 120
      %v388 = vpop.permute.xlu0 %387
      %389 = vrot.lane.b32.xlu0 %v364, 120
      %v390 = vpop.permute.xlu0 %389
      %391 = vrot.lane.b32.xlu0 %v369, 120
      %v392 = vpop.permute.xlu0 %391
      %393 = vrot.lane.b32.xlu0 %v374, 120
      %v394 = vpop.permute.xlu0 %393
      %395 = vrot.lane.b32.xlu0 %v379, 120
      %v396 = vpop.permute.xlu0 %395
      %397 = vrot.lane.b32.xlu0 %v359, 112
      %v398 = vpop.permute.xlu0 %397
      %399 = vrot.lane.b32.xlu0 %v364, 112
      %v400 = vpop.permute.xlu0 %399
      %401 = vrot.lane.b32.xlu0 %v369, 112
      %v402 = vpop.permute.xlu0 %401
      %403 = vrot.lane.b32.xlu0 %v374, 112
      %v404 = vpop.permute.xlu0 %403
      %405 = vrot.lane.b32.xlu0 %v379, 112
      %v406 = vpop.permute.xlu0 %405
      %407 = vrot.lane.b32.xlu0 %v359, 104
      %v408 = vpop.permute.xlu0 %407
      %409 = vrot.lane.b32.xlu0 %v364, 104
      %v410 = vpop.permute.xlu0 %409
      %411 = vrot.lane.b32.xlu0 %v369, 104
      %v412 = vpop.permute.xlu0 %411
      %413 = vrot.lane.b32.xlu0 %v374, 104
      %v414 = vpop.permute.xlu0 %413
      %415 = vrot.lane.b32.xlu0 %v379, 104
      %v416 = vpop.permute.xlu0 %415
      %417 = vrot.lane.b32.xlu0 %v359, 96
      %v418 = vpop.permute.xlu0 %417
      %419 = vrot.lane.b32.xlu0 %v364, 96
      %v420 = vpop.permute.xlu0 %419
      %421 = vrot.lane.b32.xlu0 %v369, 96
      %v422 = vpop.permute.xlu0 %421
      %423 = vrot.lane.b32.xlu0 %v374, 96
      %v424 = vpop.permute.xlu0 %423
      %425 = vrot.lane.b32.xlu0 %v379, 96
      %v426 = vpop.permute.xlu0 %425
      %vm427 = vcmask 64512
      %v428 = vsel %vm427, %v359, 0
      %v430 = vsel %vm427, %v364, 0
      %v432 = vsel %vm427, %v369, 0
      %v434 = vsel %vm427, %v374, 0
      %v436 = vsel %vm427, %v379, 0
      %v438 = vsel %vm427, %v418, 0
      %v440 = vsel %vm427, %v420, 0
      %v442 = vsel %vm427, %v422, 0
      %v444 = vsel %vm427, %v424, 0
      %v446 = vsel %vm427, %v426, 0
      %448 = vmatprep.subr.mxu0 0.0
      %449 = vmatpush1.xpose.msra.mxu0 %v438
      %450 = vmatprep.subr.mxu0 0.0
      %451 = vmatpush1.xpose.msra.mxu0 %v440
      %452 = vmatprep.subr.mxu0 0.0
      %453 = vmatpush1.xpose.msra.mxu0 %v442
      %454 = vmatprep.subr.mxu0 0.0
      %455 = vmatpush1.xpose.msra.mxu0 %v444
      %456 = vmatprep.subr.mxu0 0.0
      %457 = vmatpush1.xpose.msra.mxu0 %v446
      %458 = vmatprep.subr.mxu0 0.0
      %459 = vmatpush1.xpose.msra.mxu0 0.0
      %460 = vmatprep.subr.mxu0 0.0
      %461 = vmatpush1.xpose.msra.mxu0 0.0
      %462 = vmatprep.subr.mxu0 0.0
      %463 = vmatpush1.xpose.msra.mxu0 0.0
      %464 = vmatprep.subr.mxu0 0.0
      %465 = vmatpush1.xpose.msra.mxu0 0.0
      %466 = vmatprep.subr.mxu0 0.0
      %467 = vmatpush1.xpose.msra.mxu0 0.0
      %468 = vmatprep.subr.mxu0 0.0
      %469 = vmatpush1.xpose.msra.mxu0 0.0
      %470 = vmatprep.subr.mxu0 0.0
      %471 = vmatpush1.xpose.msra.mxu0 0.0
      %472 = vmatprep.subr.mxu0 0.0
      %473 = vmatpush1.xpose.msra.mxu0 0.0
      %474 = vmatprep.subr.mxu0 0.0
      %475 = vmatpush1.xpose.msra.mxu0 0.0
      %476 = vmatprep.subr.mxu0 0.0
      %477 = vmatpush1.xpose.msra.mxu0 0.0
      %478 = vmatprep.subr.mxu0 0.0
      %479 = vmatpush1.xpose.msra.mxu0 0.0
      %480 = vmatprep.subr.mxu0 0.0
      %481 = vmatpush1.xpose.msra.mxu0 0.0
      %482 = vmatprep.subr.mxu0 0.0
      %483 = vmatpush1.xpose.msra.mxu0 0.0
      %484 = vmatprep.subr.mxu0 0.0
      %485 = vmatpush1.xpose.msra.mxu0 0.0
      %486 = vmatprep.subr.mxu0 0.0
      %487 = vmatpush1.xpose.msra.mxu0 0.0
      %488 = vmatprep.subr.mxu0 0.0
      %489 = vmatpush1.xpose.msra.mxu0 0.0
      %490 = vmatprep.subr.mxu0 0.0
      %491 = vmatpush1.xpose.msra.mxu0 0.0
      %492 = vmatprep.subr.mxu0 0.0
      %493 = vmatpush1.xpose.msra.mxu0 0.0
      %494 = vmatprep.subr.mxu0 0.0
      %495 = vmatpush1.xpose.msra.mxu0 0.0
      %496 = vmatprep.subr.mxu0 0.0
      %497 = vmatpush1.xpose.msra.mxu0 0.0
      %498 = vmatprep.subr.mxu0 0.0
      %499 = vmatpush1.xpose.msra.mxu0 0.0
      %500 = vmatprep.subr.mxu0 0.0
      %501 = vmatpush1.xpose.msra.mxu0 0.0
      %502 = vmatprep.subr.mxu0 0.0
      %503 = vmatpush1.xpose.msra.mxu0 0.0
      %504 = vmatprep.subr.mxu0 0.0
      %505 = vmatpush1.xpose.msra.mxu0 0.0
      %506 = vmatprep.subr.mxu0 0.0
      %507 = vmatpush1.xpose.msra.mxu0 0.0
      %508 = vmatprep.subr.mxu0 0.0
      %509 = vmatpush1.xpose.msra.mxu0 0.0
      %510 = vmatprep.subr.mxu0 0.0
      %511 = vmatpush1.xpose.msra.mxu0 0.0
      %512 = vmatprep.mubr.f32.mxu0 0.0
      %513 = vmatmul.mubr.f32.gmra.mrb[0].mxu0 %v428
      %v514 = vpop.f32.mrb[0].mxu0
      %v515 = vadd.f32 0.0, %v514
      %v516 = vpop.f32.mrb[0].mxu0
      %517 = vmatprep.mubr.f32.mxu0 0.0
      %518 = vmatmul.mubr.f32.gmra.mrb[0].mxu0 %v430
      %v519 = vpop.f32.mrb[0].mxu0
      %v520 = vadd.f32 0.0, %v519
      %v521 = vpop.f32.mrb[0].mxu0
      %522 = vmatprep.mubr.f32.mxu0 0.0
      %523 = vmatmul.mubr.f32.gmra.mrb[0].mxu0 %v432
      %v524 = vpop.f32.mrb[0].mxu0
      %v525 = vadd.f32 0.0, %v524
      %v526 = vpop.f32.mrb[0].mxu0
      %527 = vmatprep.mubr.f32.mxu0 0.0
      %528 = vmatmul.mubr.f32.gmra.mrb[0].mxu0 %v434
      %v529 = vpop.f32.mrb[0].mxu0
      %v530 = vadd.f32 0.0, %v529
      %v531 = vpop.f32.mrb[0].mxu0
      %532 = vmatprep.mubr.f32.mxu0 0.0
      %533 = vmatmul.mubr.f32.gmra.mrb[0].mxu0 %v436
      %v534 = vpop.f32.mrb[0].mxu0
      %v535 = vadd.f32 0.0, %v534
      %v536 = vpop.f32.mrb[0].mxu0
      %537 = vdwg.mxu0
      %538 = vrot.lane.b32.xlu0 %v388, 96
      %v539 = vpop.permute.xlu0 %538
      %540 = vrot.lane.b32.xlu0 %v390, 96
      %v541 = vpop.permute.xlu0 %540
      %542 = vrot.lane.b32.xlu0 %v392, 96
      %v543 = vpop.permute.xlu0 %542
      %544 = vrot.lane.b32.xlu0 %v394, 96
      %v545 = vpop.permute.xlu0 %544
      %546 = vrot.lane.b32.xlu0 %v396, 96
      %v547 = vpop.permute.xlu0 %546
      %v548 = vsel %vm427, %v388, 0
      %v550 = vsel %vm427, %v390, 0
      %v552 = vsel %vm427, %v392, 0
      %v554 = vsel %vm427, %v394, 0
      %v556 = vsel %vm427, %v396, 0
      %v558 = vsel %vm427, %v539, 0
      %v560 = vsel %vm427, %v541, 0
      %v562 = vsel %vm427, %v543, 0
      %v564 = vsel %vm427, %v545, 0
      %v566 = vsel %vm427, %v547, 0
      %568 = vmatprep.subr.mxu0 0.0
      %569 = vmatpush1.xpose.msra.mxu0 %v558
      %570 = vmatprep.subr.mxu0 0.0
      %571 = vmatpush1.xpose.msra.mxu0 %v560
      %572 = vmatprep.subr.mxu0 0.0
      %573 = vmatpush1.xpose.msra.mxu0 %v562
      %574 = vmatprep.subr.mxu0 0.0
      %575 = vmatpush1.xpose.msra.mxu0 %v564
      %576 = vmatprep.subr.mxu0 0.0
      %577 = vmatpush1.xpose.msra.mxu0 %v566
      %578 = vmatprep.subr.mxu0 0.0
      %579 = vmatpush1.xpose.msra.mxu0 0.0
      %580 = vmatprep.subr.mxu0 0.0
      %581 = vmatpush1.xpose.msra.mxu0 0.0
      %582 = vmatprep.subr.mxu0 0.0
      %583 = vmatpush1.xpose.msra.mxu0 0.0
      %584 = vmatprep.subr.mxu0 0.0
      %585 = vmatpush1.xpose.msra.mxu0 0.0
      %586 = vmatprep.subr.mxu0 0.0
      %587 = vmatpush1.xpose.msra.mxu0 0.0
      %588 = vmatprep.subr.mxu0 0.0
      %589 = vmatpush1.xpose.msra.mxu0 0.0
      %590 = vmatprep.subr.mxu0 0.0
      %591 = vmatpush1.xpose.msra.mxu0 0.0
      %592 = vmatprep.subr.mxu0 0.0
      %593 = vmatpush1.xpose.msra.mxu0 0.0
      %594 = vmatprep.subr.mxu0 0.0
      %595 = vmatpush1.xpose.msra.mxu0 0.0
      %596 = vmatprep.subr.mxu0 0.0
      %597 = vmatpush1.xpose.msra.mxu0 0.0
      %598 = vmatprep.subr.mxu0 0.0
      %599 = vmatpush1.xpose.msra.mxu0 0.0
      %600 = vmatprep.subr.mxu0 0.0
      %601 = vmatpush1.xpose.msra.mxu0 0.0
      %602 = vmatprep.subr.mxu0 0.0
      %603 = vmatpush1.xpose.msra.mxu0 0.0
      %604 = vmatprep.subr.mxu0 0.0
      %605 = vmatpush1.xpose.msra.mxu0 0.0
      %606 = vmatprep.subr.mxu0 0.0
      %607 = vmatpush1.xpose.msra.mxu0 0.0
      %608 = vmatprep.subr.mxu0 0.0
      %609 = vmatpush1.xpose.msra.mxu0 0.0
      %610 = vmatprep.subr.mxu0 0.0
      %611 = vmatpush1.xpose.msra.mxu0 0.0
      %612 = vmatprep.subr.mxu0 0.0
      %613 = vmatpush1.xpose.msra.mxu0 0.0
      %614 = vmatprep.subr.mxu0 0.0
      %615 = vmatpush1.xpose.msra.mxu0 0.0
      %616 = vmatprep.subr.mxu0 0.0
      %617 = vmatpush1.xpose.msra.mxu0 0.0
      %618 = vmatprep.subr.mxu0 0.0
      %619 = vmatpush1.xpose.msra.mxu0 0.0
      %620 = vmatprep.subr.mxu0 0.0
      %621 = vmatpush1.xpose.msra.mxu0 0.0
      %622 = vmatprep.subr.mxu0 0.0
      %623 = vmatpush1.xpose.msra.mxu0 0.0
      %624 = vmatprep.subr.mxu0 0.0
      %625 = vmatpush1.xpose.msra.mxu0 0.0
      %626 = vmatprep.subr.mxu0 0.0
      %627 = vmatpush1.xpose.msra.mxu0 0.0
      %628 = vmatprep.subr.mxu0 0.0
      %629 = vmatpush1.xpose.msra.mxu0 0.0
      %630 = vmatprep.subr.mxu0 0.0
      %631 = vmatpush1.xpose.msra.mxu0 0.0
      %632 = vmatprep.mubr.f32.mxu0 0.0
      %633 = vmatmul.mubr.f32.gmra.mrb[0].mxu0 %v548
      %v634 = vpop.f32.mrb[0].mxu0
      %v635 = vadd.f32 0.0, %v634
      %v636 = vpop.f32.mrb[0].mxu0
      %637 = vmatprep.mubr.f32.mxu0 0.0
      %638 = vmatmul.mubr.f32.gmra.mrb[0].mxu0 %v550
      %v639 = vpop.f32.mrb[0].mxu0
      %v640 = vadd.f32 0.0, %v639
      %v641 = vpop.f32.mrb[0].mxu0
      %642 = vmatprep.mubr.f32.mxu0 0.0
      %643 = vmatmul.mubr.f32.gmra.mrb[0].mxu0 %v552
      %v644 = vpop.f32.mrb[0].mxu0
      %v645 = vadd.f32 0.0, %v644
      %v646 = vpop.f32.mrb[0].mxu0
      %647 = vmatprep.mubr.f32.mxu0 0.0
      %648 = vmatmul.mubr.f32.gmra.mrb[0].mxu0 %v554
      %v649 = vpop.f32.mrb[0].mxu0
      %v650 = vadd.f32 0.0, %v649
      %v651 = vpop.f32.mrb[0].mxu0
      %652 = vmatprep.mubr.f32.mxu0 0.0
      %653 = vmatmul.mubr.f32.gmra.mrb[0].mxu0 %v556
      %v654 = vpop.f32.mrb[0].mxu0
      %v655 = vadd.f32 0.0, %v654
      %v656 = vpop.f32.mrb[0].mxu0
      %657 = vdwg.mxu0
      %658 = vrot.lane.b32.xlu0 %v398, 96
      %v659 = vpop.permute.xlu0 %658
      %660 = vrot.lane.b32.xlu0 %v400, 96
      %v661 = vpop.permute.xlu0 %660
      %662 = vrot.lane.b32.xlu0 %v402, 96
      %v663 = vpop.permute.xlu0 %662
      %664 = vrot.lane.b32.xlu0 %v404, 96
      %v665 = vpop.permute.xlu0 %664
      %666 = vrot.lane.b32.xlu0 %v406, 96
      %v667 = vpop.permute.xlu0 %666
      %v668 = vsel %vm427, %v398, 0
      %v670 = vsel %vm427, %v400, 0
      %v672 = vsel %vm427, %v402, 0
      %v674 = vsel %vm427, %v404, 0
      %v676 = vsel %vm427, %v406, 0
      %v678 = vsel %vm427, %v659, 0
      %v680 = vsel %vm427, %v661, 0
      %v682 = vsel %vm427, %v663, 0
      %v684 = vsel %vm427, %v665, 0
      %v686 = vsel %vm427, %v667, 0
      %688 = vmatprep.subr.mxu0 0.0
      %689 = vmatpush1.xpose.msra.mxu0 %v678
      %690 = vmatprep.subr.mxu0 0.0
      %691 = vmatpush1.xpose.msra.mxu0 %v680
      %692 = vmatprep.subr.mxu0 0.0
      %693 = vmatpush1.xpose.msra.mxu0 %v682
      %694 = vmatprep.subr.mxu0 0.0
      %695 = vmatpush1.xpose.msra.mxu0 %v684
      %696 = vmatprep.subr.mxu0 0.0
      %697 = vmatpush1.xpose.msra.mxu0 %v686
      %698 = vmatprep.subr.mxu0 0.0
      %699 = vmatpush1.xpose.msra.mxu0 0.0
      %700 = vmatprep.subr.mxu0 0.0
      %701 = vmatpush1.xpose.msra.mxu0 0.0
      %702 = vmatprep.subr.mxu0 0.0
      %703 = vmatpush1.xpose.msra.mxu0 0.0
      %704 = vmatprep.subr.mxu0 0.0
      %705 = vmatpush1.xpose.msra.mxu0 0.0
      %706 = vmatprep.subr.mxu0 0.0
      %707 = vmatpush1.xpose.msra.mxu0 0.0
      %708 = vmatprep.subr.mxu0 0.0
      %709 = vmatpush1.xpose.msra.mxu0 0.0
      %710 = vmatprep.subr.mxu0 0.0
      %711 = vmatpush1.xpose.msra.mxu0 0.0
      %712 = vmatprep.subr.mxu0 0.0
      %713 = vmatpush1.xpose.msra.mxu0 0.0
      %714 = vmatprep.subr.mxu0 0.0
      %715 = vmatpush1.xpose.msra.mxu0 0.0
      %716 = vmatprep.subr.mxu0 0.0
      %717 = vmatpush1.xpose.msra.mxu0 0.0
      %718 = vmatprep.subr.mxu0 0.0
      %719 = vmatpush1.xpose.msra.mxu0 0.0
      %720 = vmatprep.subr.mxu0 0.0
      %721 = vmatpush1.xpose.msra.mxu0 0.0
      %722 = vmatprep.subr.mxu0 0.0
      %723 = vmatpush1.xpose.msra.mxu0 0.0
      %724 = vmatprep.subr.mxu0 0.0
      %725 = vmatpush1.xpose.msra.mxu0 0.0
      %726 = vmatprep.subr.mxu0 0.0
      %727 = vmatpush1.xpose.msra.mxu0 0.0
      %728 = vmatprep.subr.mxu0 0.0
      %729 = vmatpush1.xpose.msra.mxu0 0.0
      %730 = vmatprep.subr.mxu0 0.0
      %731 = vmatpush1.xpose.msra.mxu0 0.0
      %732 = vmatprep.subr.mxu0 0.0
      %733 = vmatpush1.xpose.msra.mxu0 0.0
      %734 = vmatprep.subr.mxu0 0.0
      %735 = vmatpush1.xpose.msra.mxu0 0.0
      %736 = vmatprep.subr.mxu0 0.0
      %737 = vmatpush1.xpose.msra.mxu0 0.0
      %738 = vmatprep.subr.mxu0 0.0
      %739 = vmatpush1.xpose.msra.mxu0 0.0
      %740 = vmatprep.subr.mxu0 0.0
      %741 = vmatpush1.xpose.msra.mxu0 0.0
      %742 = vmatprep.subr.mxu0 0.0
      %743 = vmatpush1.xpose.msra.mxu0 0.0
      %744 = vmatprep.subr.mxu0 0.0
      %745 = vmatpush1.xpose.msra.mxu0 0.0
      %746 = vmatprep.subr.mxu0 0.0
      %747 = vmatpush1.xpose.msra.mxu0 0.0
      %748 = vmatprep.subr.mxu0 0.0
      %749 = vmatpush1.xpose.msra.mxu0 0.0
      %750 = vmatprep.subr.mxu0 0.0
      %751 = vmatpush1.xpose.msra.mxu0 0.0
      %752 = vmatprep.mubr.f32.mxu0 0.0
      %753 = vmatmul.mubr.f32.gmra.mrb[0].mxu0 %v668
      %v754 = vpop.f32.mrb[0].mxu0
      %v755 = vadd.f32 0.0, %v754
      %v756 = vpop.f32.mrb[0].mxu0
      %757 = vmatprep.mubr.f32.mxu0 0.0
      %758 = vmatmul.mubr.f32.gmra.mrb[0].mxu0 %v670
      %v759 = vpop.f32.mrb[0].mxu0
      %v760 = vadd.f32 0.0, %v759
      %v761 = vpop.f32.mrb[0].mxu0
      %762 = vmatprep.mubr.f32.mxu0 0.0
      %763 = vmatmul.mubr.f32.gmra.mrb[0].mxu0 %v672
      %v764 = vpop.f32.mrb[0].mxu0
      %v765 = vadd.f32 0.0, %v764
      %v766 = vpop.f32.mrb[0].mxu0
      %767 = vmatprep.mubr.f32.mxu0 0.0
      %768 = vmatmul.mubr.f32.gmra.mrb[0].mxu0 %v674
      %v769 = vpop.f32.mrb[0].mxu0
      %v770 = vadd.f32 0.0, %v769
      %v771 = vpop.f32.mrb[0].mxu0
      %772 = vmatprep.mubr.f32.mxu0 0.0
      %773 = vmatmul.mubr.f32.gmra.mrb[0].mxu0 %v676
      %v774 = vpop.f32.mrb[0].mxu0
      %v775 = vadd.f32 0.0, %v774
      %v776 = vpop.f32.mrb[0].mxu0
      %777 = vdwg.mxu0
      %778 = vrot.lane.b32.xlu0 %v408, 96
      %v779 = vpop.permute.xlu0 %778
      %780 = vrot.lane.b32.xlu0 %v410, 96
      %v781 = vpop.permute.xlu0 %780
      %782 = vrot.lane.b32.xlu0 %v412, 96
      %v783 = vpop.permute.xlu0 %782
      %784 = vrot.lane.b32.xlu0 %v414, 96
      %v785 = vpop.permute.xlu0 %784
      %786 = vrot.lane.b32.xlu0 %v416, 96
      %v787 = vpop.permute.xlu0 %786
      %v788 = vsel %vm427, %v408, 0
      %v790 = vsel %vm427, %v410, 0
      %v792 = vsel %vm427, %v412, 0
      %v794 = vsel %vm427, %v414, 0
      %v796 = vsel %vm427, %v416, 0
      %v798 = vsel %vm427, %v779, 0
      %v800 = vsel %vm427, %v781, 0
      %v802 = vsel %vm427, %v783, 0
      %v804 = vsel %vm427, %v785, 0
      %v806 = vsel %vm427, %v787, 0
      %808 = vmatprep.subr.mxu0 0.0
      %809 = vmatpush1.xpose.msra.mxu0 %v798
      %810 = vmatprep.subr.mxu0 0.0
      %811 = vmatpush1.xpose.msra.mxu0 %v800
      %812 = vmatprep.subr.mxu0 0.0
      %813 = vmatpush1.xpose.msra.mxu0 %v802
      %814 = vmatprep.subr.mxu0 0.0
      %815 = vmatpush1.xpose.msra.mxu0 %v804
      %816 = vmatprep.subr.mxu0 0.0
      %817 = vmatpush1.xpose.msra.mxu0 %v806
      %818 = vmatprep.subr.mxu0 0.0
      %819 = vmatpush1.xpose.msra.mxu0 0.0
      %820 = vmatprep.subr.mxu0 0.0
      %821 = vmatpush1.xpose.msra.mxu0 0.0
      %822 = vmatprep.subr.mxu0 0.0
      %823 = vmatpush1.xpose.msra.mxu0 0.0
      %824 = vmatprep.subr.mxu0 0.0
      %825 = vmatpush1.xpose.msra.mxu0 0.0
      %826 = vmatprep.subr.mxu0 0.0
      %827 = vmatpush1.xpose.msra.mxu0 0.0
      %828 = vmatprep.subr.mxu0 0.0
      %829 = vmatpush1.xpose.msra.mxu0 0.0
      %830 = vmatprep.subr.mxu0 0.0
      %831 = vmatpush1.xpose.msra.mxu0 0.0
      %832 = vmatprep.subr.mxu0 0.0
      %833 = vmatpush1.xpose.msra.mxu0 0.0
      %834 = vmatprep.subr.mxu0 0.0
      %835 = vmatpush1.xpose.msra.mxu0 0.0
      %836 = vmatprep.subr.mxu0 0.0
      %837 = vmatpush1.xpose.msra.mxu0 0.0
      %838 = vmatprep.subr.mxu0 0.0
      %839 = vmatpush1.xpose.msra.mxu0 0.0
      %840 = vmatprep.subr.mxu0 0.0
      %841 = vmatpush1.xpose.msra.mxu0 0.0
      %842 = vmatprep.subr.mxu0 0.0
      %843 = vmatpush1.xpose.msra.mxu0 0.0
      %844 = vmatprep.subr.mxu0 0.0
      %845 = vmatpush1.xpose.msra.mxu0 0.0
      %846 = vmatprep.subr.mxu0 0.0
      %847 = vmatpush1.xpose.msra.mxu0 0.0
      %848 = vmatprep.subr.mxu0 0.0
      %849 = vmatpush1.xpose.msra.mxu0 0.0
      %850 = vmatprep.subr.mxu0 0.0
      %851 = vmatpush1.xpose.msra.mxu0 0.0
      %852 = vmatprep.subr.mxu0 0.0
      %853 = vmatpush1.xpose.msra.mxu0 0.0
      %854 = vmatprep.subr.mxu0 0.0
      %855 = vmatpush1.xpose.msra.mxu0 0.0
      %856 = vmatprep.subr.mxu0 0.0
      %857 = vmatpush1.xpose.msra.mxu0 0.0
      %858 = vmatprep.subr.mxu0 0.0
      %859 = vmatpush1.xpose.msra.mxu0 0.0
      %860 = vmatprep.subr.mxu0 0.0
      %861 = vmatpush1.xpose.msra.mxu0 0.0
      %862 = vmatprep.subr.mxu0 0.0
      %863 = vmatpush1.xpose.msra.mxu0 0.0
      %864 = vmatprep.subr.mxu0 0.0
      %865 = vmatpush1.xpose.msra.mxu0 0.0
      %866 = vmatprep.subr.mxu0 0.0
      %867 = vmatpush1.xpose.msra.mxu0 0.0
      %868 = vmatprep.subr.mxu0 0.0
      %869 = vmatpush1.xpose.msra.mxu0 0.0
      %870 = vmatprep.subr.mxu0 0.0
      %871 = vmatpush1.xpose.msra.mxu0 0.0
      %872 = vmatprep.mubr.f32.mxu0 0.0
      %873 = vmatmul.mubr.f32.gmra.mrb[0].mxu0 %v788
      %v874 = vpop.f32.mrb[0].mxu0
      %v875 = vadd.f32 0.0, %v874
      %v876 = vpop.f32.mrb[0].mxu0
      %877 = vmatprep.mubr.f32.mxu0 0.0
      %878 = vmatmul.mubr.f32.gmra.mrb[0].mxu0 %v790
      %v879 = vpop.f32.mrb[0].mxu0
      %v880 = vadd.f32 0.0, %v879
      %v881 = vpop.f32.mrb[0].mxu0
      %882 = vmatprep.mubr.f32.mxu0 0.0
      %883 = vmatmul.mubr.f32.gmra.mrb[0].mxu0 %v792
      %v884 = vpop.f32.mrb[0].mxu0
      %v885 = vadd.f32 0.0, %v884
      %v886 = vpop.f32.mrb[0].mxu0
      %887 = vmatprep.mubr.f32.mxu0 0.0
      %888 = vmatmul.mubr.f32.gmra.mrb[0].mxu0 %v794
      %v889 = vpop.f32.mrb[0].mxu0
      %v890 = vadd.f32 0.0, %v889
      %v891 = vpop.f32.mrb[0].mxu0
      %892 = vmatprep.mubr.f32.mxu0 0.0
      %893 = vmatmul.mubr.f32.gmra.mrb[0].mxu0 %v796
      %v894 = vpop.f32.mrb[0].mxu0
      %v895 = vadd.f32 0.0, %v894
      %v896 = vpop.f32.mrb[0].mxu0
      %897 = vdwg.mxu0
      %v898 = vmul.f32 %v515, 0.35355338
      %v899 = vmul.f32 %v520, 0.35355338
      %v900 = vmul.f32 %v525, 0.35355338
      %v901 = vmul.f32 %v530, 0.35355338
      %v902 = vmul.f32 %v535, 0.35355338
      %v903 = vmul.f32 %v635, 0.35355338
      %v904 = vmul.f32 %v640, 0.35355338
      %v905 = vmul.f32 %v645, 0.35355338
      %v906 = vmul.f32 %v650, 0.35355338
      %v907 = vmul.f32 %v655, 0.35355338
      %v908 = vmul.f32 %v755, 0.35355338
      %v909 = vmul.f32 %v760, 0.35355338
      %v910 = vmul.f32 %v765, 0.35355338
      %v911 = vmul.f32 %v770, 0.35355338
      %v912 = vmul.f32 %v775, 0.35355338
      %v913 = vmul.f32 %v875, 0.35355338
      %v914 = vmul.f32 %v880, 0.35355338
      %v915 = vmul.f32 %v885, 0.35355338
      %v916 = vmul.f32 %v890, 0.35355338
      %v917 = vmul.f32 %v895, 0.35355338
      %v918 = vadd.f32 %v898, %v47
      %v919 = vadd.f32 %v899, %v48
      %v920 = vadd.f32 %v900, %v49
      %v921 = vadd.f32 %v901, %v50
      %v922 = vadd.f32 %v902, %v51
      %v923 = vadd.f32 %v903, %v47
      %v924 = vadd.f32 %v904, %v48
      %v925 = vadd.f32 %v905, %v49
      %v926 = vadd.f32 %v906, %v50
      %v927 = vadd.f32 %v907, %v51
      %v928 = vadd.f32 %v908, %v47
      %v929 = vadd.f32 %v909, %v48
      %v930 = vadd.f32 %v910, %v49
      %v931 = vadd.f32 %v911, %v50
      %v932 = vadd.f32 %v912, %v51
      %v933 = vadd.f32 %v913, %v47
      %v934 = vadd.f32 %v914, %v48
      %v935 = vadd.f32 %v915, %v49
      %v936 = vadd.f32 %v916, %v50
      %v937 = vadd.f32 %v917, %v51
      %vm938 = vcmask 277504
      %v939 = vsel %vm938, %v918, -inf
      %940 = vmax.xlane.f32.xlu0 %v939
      %v941 = vpop.xlane.xlu0 %940
      %v942 = vsel %vm938, %v919, -inf
      %943 = vmax.xlane.f32.xlu0 %v942
      %v944 = vpop.xlane.xlu0 %943
      %v945 = vsel %vm938, %v920, -inf
      %946 = vmax.xlane.f32.xlu0 %v945
      %v947 = vpop.xlane.xlu0 %946
      %v948 = vsel %vm938, %v921, -inf
      %949 = vmax.xlane.f32.xlu0 %v948
      %v950 = vpop.xlane.xlu0 %949
      %vm951 = vcmask 271360
      %v952 = vsel %vm951, %v922, -inf
      %953 = vmax.xlane.f32.xlu0 %v952
      %v954 = vpop.xlane.xlu0 %953
      %v955 = vsel %vm938, %v923, -inf
      %956 = vmax.xlane.f32.xlu0 %v955
      %v957 = vpop.xlane.xlu0 %956
      %v958 = vsel %vm938, %v924, -inf
      %959 = vmax.xlane.f32.xlu0 %v958
      %v960 = vpop.xlane.xlu0 %959
      %v961 = vsel %vm938, %v925, -inf
      %962 = vmax.xlane.f32.xlu0 %v961
      %v963 = vpop.xlane.xlu0 %962
      %v964 = vsel %vm938, %v926, -inf
      %965 = vmax.xlane.f32.xlu0 %v964
      %v966 = vpop.xlane.xlu0 %965
      %v967 = vsel %vm951, %v927, -inf
      %968 = vmax.xlane.f32.xlu0 %v967
      %v969 = vpop.xlane.xlu0 %968
      %v970 = vsel %vm938, %v928, -inf
      %971 = vmax.xlane.f32.xlu0 %v970
      %v972 = vpop.xlane.xlu0 %971
      %v973 = vsel %vm938, %v929, -inf
      %974 = vmax.xlane.f32.xlu0 %v973
      %v975 = vpop.xlane.xlu0 %974
      %v976 = vsel %vm938, %v930, -inf
      %977 = vmax.xlane.f32.xlu0 %v976
      %v978 = vpop.xlane.xlu0 %977
      %v979 = vsel %vm938, %v931, -inf
      %980 = vmax.xlane.f32.xlu0 %v979
      %v981 = vpop.xlane.xlu0 %980
      %v982 = vsel %vm951, %v932, -inf
      %983 = vmax.xlane.f32.xlu0 %v982
      %v984 = vpop.xlane.xlu0 %983
      %v985 = vsel %vm938, %v933, -inf
      %986 = vmax.xlane.f32.xlu0 %v985
      %v987 = vpop.xlane.xlu0 %986
      %v988 = vsel %vm938, %v934, -inf
      %989 = vmax.xlane.f32.xlu0 %v988
      %v990 = vpop.xlane.xlu0 %989
      %v991 = vsel %vm938, %v935, -inf
      %992 = vmax.xlane.f32.xlu0 %v991
      %v993 = vpop.xlane.xlu0 %992
      %v994 = vsel %vm938, %v936, -inf
      %995 = vmax.xlane.f32.xlu0 %v994
      %v996 = vpop.xlane.xlu0 %995
      %v997 = vsel %vm951, %v937, -inf
      %998 = vmax.xlane.f32.xlu0 %v997
      %v999 = vpop.xlane.xlu0 %998
      %v1000 = vsub.f32 %v918, %v941
      %v1001 = vsub.f32 %v919, %v944
      %v1002 = vsub.f32 %v920, %v947
      %v1003 = vsub.f32 %v921, %v950
      %v1004 = vsub.f32 %v922, %v954
      %v1005 = vsub.f32 %v923, %v957
      %v1006 = vsub.f32 %v924, %v960
      %v1007 = vsub.f32 %v925, %v963
      %v1008 = vsub.f32 %v926, %v966
      %v1009 = vsub.f32 %v927, %v969
      %v1010 = vsub.f32 %v928, %v972
      %v1011 = vsub.f32 %v929, %v975
      %v1012 = vsub.f32 %v930, %v978
      %v1013 = vsub.f32 %v931, %v981
      %v1014 = vsub.f32 %v932, %v984
      %v1015 = vsub.f32 %v933, %v987
      %v1016 = vsub.f32 %v934, %v990
      %v1017 = vsub.f32 %v935, %v993
      %v1018 = vsub.f32 %v936, %v996
      %v1019 = vsub.f32 %v937, %v999
      %v1020 = vmul.f32 %v1000, 1.442695
      %v1021 = vpow.pop %v1020
      %v1022 = vmul.f32 %v1001, 1.442695
      %v1023 = vpow.pop %v1022
      %v1024 = vmul.f32 %v1002, 1.442695
      %v1025 = vpow.pop %v1024
      %v1026 = vmul.f32 %v1003, 1.442695
      %v1027 = vpow.pop %v1026
      %v1028 = vmul.f32 %v1004, 1.442695
      %v1029 = vpow.pop %v1028
      %v1030 = vmul.f32 %v1005, 1.442695
      %v1031 = vpow.pop %v1030
      %v1032 = vmul.f32 %v1006, 1.442695
      %v1033 = vpow.pop %v1032
      %v1034 = vmul.f32 %v1007, 1.442695
      %v1035 = vpow.pop %v1034
      %v1036 = vmul.f32 %v1008, 1.442695
      %v1037 = vpow.pop %v1036
      %v1038 = vmul.f32 %v1009, 1.442695
      %v1039 = vpow.pop %v1038
      %v1040 = vmul.f32 %v1010, 1.442695
      %v1041 = vpow.pop %v1040
      %v1042 = vmul.f32 %v1011, 1.442695
      %v1043 = vpow.pop %v1042
      %v1044 = vmul.f32 %v1012, 1.442695
      %v1045 = vpow.pop %v1044
      %v1046 = vmul.f32 %v1013, 1.442695
      %v1047 = vpow.pop %v1046
      %v1048 = vmul.f32 %v1014, 1.442695
      %v1049 = vpow.pop %v1048
      %v1050 = vmul.f32 %v1015, 1.442695
      %v1051 = vpow.pop %v1050
      %v1052 = vmul.f32 %v1016, 1.442695
      %v1053 = vpow.pop %v1052
      %v1054 = vmul.f32 %v1017, 1.442695
      %v1055 = vpow.pop %v1054
      %v1056 = vmul.f32 %v1018, 1.442695
      %v1057 = vpow.pop %v1056
      %v1058 = vmul.f32 %v1019, 1.442695
      %v1059 = vpow.pop %v1058
      %v1060 = vsel %vm938, %v1021, 0.0
      %1061 = vadd.xlane.f32.xlu0 %v1060
      %v1062 = vpop.xlane.xlu0 %1061
      %v1063 = vsel %vm938, %v1023, 0.0
      %1064 = vadd.xlane.f32.xlu0 %v1063
      %v1065 = vpop.xlane.xlu0 %1064
      %v1066 = vsel %vm938, %v1025, 0.0
      %1067 = vadd.xlane.f32.xlu0 %v1066
      %v1068 = vpop.xlane.xlu0 %1067
      %v1069 = vsel %vm938, %v1027, 0.0
      %1070 = vadd.xlane.f32.xlu0 %v1069
      %v1071 = vpop.xlane.xlu0 %1070
      %v1072 = vsel %vm951, %v1029, 0.0
      %1073 = vadd.xlane.f32.xlu0 %v1072
      %v1074 = vpop.xlane.xlu0 %1073
      %v1075 = vsel %vm938, %v1031, 0.0
      %1076 = vadd.xlane.f32.xlu0 %v1075
      %v1077 = vpop.xlane.xlu0 %1076
      %v1078 = vsel %vm938, %v1033, 0.0
      %1079 = vadd.xlane.f32.xlu0 %v1078
      %v1080 = vpop.xlane.xlu0 %1079
      %v1081 = vsel %vm938, %v1035, 0.0
      %1082 = vadd.xlane.f32.xlu0 %v1081
      %v1083 = vpop.xlane.xlu0 %1082
      %v1084 = vsel %vm938, %v1037, 0.0
      %1085 = vadd.xlane.f32.xlu0 %v1084
      %v1086 = vpop.xlane.xlu0 %1085
      %v1087 = vsel %vm951, %v1039, 0.0
      %1088 = vadd.xlane.f32.xlu0 %v1087
      %v1089 = vpop.xlane.xlu0 %1088
      %v1090 = vsel %vm938, %v1041, 0.0
      %1091 = vadd.xlane.f32.xlu0 %v1090
      %v1092 = vpop.xlane.xlu0 %1091
      %v1093 = vsel %vm938, %v1043, 0.0
      %1094 = vadd.xlane.f32.xlu0 %v1093
      %v1095 = vpop.xlane.xlu0 %1094
      %v1096 = vsel %vm938, %v1045, 0.0
      %1097 = vadd.xlane.f32.xlu0 %v1096
      %v1098 = vpop.xlane.xlu0 %1097
      %v1099 = vsel %vm938, %v1047, 0.0
      %1100 = vadd.xlane.f32.xlu0 %v1099
      %v1101 = vpop.xlane.xlu0 %1100
      %v1102 = vsel %vm951, %v1049, 0.0
      %1103 = vadd.xlane.f32.xlu0 %v1102
      %v1104 = vpop.xlane.xlu0 %1103
      %v1105 = vsel %vm938, %v1051, 0.0
      %1106 = vadd.xlane.f32.xlu0 %v1105
      %v1107 = vpop.xlane.xlu0 %1106
      %v1108 = vsel %vm938, %v1053, 0.0
      %1109 = vadd.xlane.f32.xlu0 %v1108
      %v1110 = vpop.xlane.xlu0 %1109
      %v1111 = vsel %vm938, %v1055, 0.0
      %1112 = vadd.xlane.f32.xlu0 %v1111
      %v1113 = vpop.xlane.xlu0 %1112
      %v1114 = vsel %vm938, %v1057, 0.0
      %1115 = vadd.xlane.f32.xlu0 %v1114
      %v1116 = vpop.xlane.xlu0 %1115
      %v1117 = vsel %vm951, %v1059, 0.0
      %1118 = vadd.xlane.f32.xlu0 %v1117
      %v1119 = vpop.xlane.xlu0 %1118
      %v1120 = vrcp.pop %v1062
      %v1121 = vmul.f32 %v1021, %v1120
      %v1122 = vrcp.pop %v1065
      %v1123 = vmul.f32 %v1023, %v1122
      %v1124 = vrcp.pop %v1068
      %v1125 = vmul.f32 %v1025, %v1124
      %v1126 = vrcp.pop %v1071
      %v1127 = vmul.f32 %v1027, %v1126
      %v1128 = vrcp.pop %v1074
      %v1129 = vmul.f32 %v1029, %v1128
      %v1130 = vrcp.pop %v1077
      %v1131 = vmul.f32 %v1031, %v1130
      %v1132 = vrcp.pop %v1080
      %v1133 = vmul.f32 %v1033, %v1132
      %v1134 = vrcp.pop %v1083
      %v1135 = vmul.f32 %v1035, %v1134
      %v1136 = vrcp.pop %v1086
      %v1137 = vmul.f32 %v1037, %v1136
      %v1138 = vrcp.pop %v1089
      %v1139 = vmul.f32 %v1039, %v1138
      %v1140 = vrcp.pop %v1092
      %v1141 = vmul.f32 %v1041, %v1140
      %v1142 = vrcp.pop %v1095
      %v1143 = vmul.f32 %v1043, %v1142
      %v1144 = vrcp.pop %v1098
      %v1145 = vmul.f32 %v1045, %v1144
      %v1146 = vrcp.pop %v1101
      %v1147 = vmul.f32 %v1047, %v1146
      %v1148 = vrcp.pop %v1104
      %v1149 = vmul.f32 %v1049, %v1148
      %v1150 = vrcp.pop %v1107
      %v1151 = vmul.f32 %v1051, %v1150
      %v1152 = vrcp.pop %v1110
      %v1153 = vmul.f32 %v1053, %v1152
      %v1154 = vrcp.pop %v1113
      %v1155 = vmul.f32 %v1055, %v1154
      %v1156 = vrcp.pop %v1116
      %v1157 = vmul.f32 %v1057, %v1156
      %v1158 = vrcp.pop %v1119
      %v1159 = vmul.f32 %v1059, %v1158
      %1160 = vrot.lane.b32.xlu0 %v359, 64
      %v1161 = vpop.permute.xlu0 %1160
      %1162 = vrot.lane.b32.xlu0 %v364, 64
      %v1163 = vpop.permute.xlu0 %1162
      %1164 = vrot.lane.b32.xlu0 %v369, 64
      %v1165 = vpop.permute.xlu0 %1164
      %1166 = vrot.lane.b32.xlu0 %v374, 64
      %v1167 = vpop.permute.xlu0 %1166
      %1168 = vrot.lane.b32.xlu0 %v379, 64
      %v1169 = vpop.permute.xlu0 %1168
      %v1175 = vsel %vm938, %v1121, 0
      %v1178 = vsel %vm938, %v1123, 0
      %v1181 = vsel %vm938, %v1125, 0
      %v1184 = vsel %vm938, %v1127, 0
      %v1187 = vsel %vm938, %v1129, 0
      %vm1189 = vcmask 1041408
      %v1190 = vsel %vm1189, %v1169, 0
      %1192 = vmatprep.subr.mxu0 0.0
      %1193 = vmatpush1.msra.mxu0 %v1161
      %1194 = vmatprep.subr.mxu0 0.0
      %1195 = vmatpush1.msra.mxu0 %v1163
      %1196 = vmatprep.subr.mxu0 0.0
      %1197 = vmatpush1.msra.mxu0 %v1165
      %1198 = vmatprep.subr.mxu0 0.0
      %1199 = vmatpush1.msra.mxu0 %v1167
      %1200 = vmatprep.subr.mxu0 0.0
      %1201 = vmatpush1.msra.mxu0 %v1190
      %1202 = vmatprep.subr.mxu0 0.0
      %1203 = vmatpush1.msra.mxu0 0.0
      %1204 = vmatprep.subr.mxu0 0.0
      %1205 = vmatpush1.msra.mxu0 0.0
      %1206 = vmatprep.subr.mxu0 0.0
      %1207 = vmatpush1.msra.mxu0 0.0
      %1208 = vmatprep.subr.mxu0 0.0
      %1209 = vmatpush1.msra.mxu0 0.0
      %1210 = vmatprep.subr.mxu0 0.0
      %1211 = vmatpush1.msra.mxu0 0.0
      %1212 = vmatprep.subr.mxu0 0.0
      %1213 = vmatpush1.msra.mxu0 0.0
      %1214 = vmatprep.subr.mxu0 0.0
      %1215 = vmatpush1.msra.mxu0 0.0
      %1216 = vmatprep.subr.mxu0 0.0
      %1217 = vmatpush1.msra.mxu0 0.0
      %1218 = vmatprep.subr.mxu0 0.0
      %1219 = vmatpush1.msra.mxu0 0.0
      %1220 = vmatprep.subr.mxu0 0.0
      %1221 = vmatpush1.msra.mxu0 0.0
      %1222 = vmatprep.subr.mxu0 0.0
      %1223 = vmatpush1.msra.mxu0 0.0
      %1224 = vmatprep.subr.mxu0 0.0
      %1225 = vmatpush1.msra.mxu0 0.0
      %1226 = vmatprep.subr.mxu0 0.0
      %1227 = vmatpush1.msra.mxu0 0.0
      %1228 = vmatprep.subr.mxu0 0.0
      %1229 = vmatpush1.msra.mxu0 0.0
      %1230 = vmatprep.subr.mxu0 0.0
      %1231 = vmatpush1.msra.mxu0 0.0
      %1232 = vmatprep.subr.mxu0 0.0
      %1233 = vmatpush1.msra.mxu0 0.0
      %1234 = vmatprep.subr.mxu0 0.0
      %1235 = vmatpush1.msra.mxu0 0.0
      %1236 = vmatprep.subr.mxu0 0.0
      %1237 = vmatpush1.msra.mxu0 0.0
      %1238 = vmatprep.subr.mxu0 0.0
      %1239 = vmatpush1.msra.mxu0 0.0
      %1240 = vmatprep.subr.mxu0 0.0
      %1241 = vmatpush1.msra.mxu0 0.0
      %1242 = vmatprep.subr.mxu0 0.0
      %1243 = vmatpush1.msra.mxu0 0.0
      %1244 = vmatprep.subr.mxu0 0.0
      %1245 = vmatpush1.msra.mxu0 0.0
      %1246 = vmatprep.subr.mxu0 0.0
      %1247 = vmatpush1.msra.mxu0 0.0
      %1248 = vmatprep.subr.mxu0 0.0
      %1249 = vmatpush1.msra.mxu0 0.0
      %1250 = vmatprep.subr.mxu0 0.0
      %1251 = vmatpush1.msra.mxu0 0.0
      %1252 = vmatprep.subr.mxu0 0.0
      %1253 = vmatpush1.msra.mxu0 0.0
      %1254 = vmatprep.subr.mxu0 0.0
      %1255 = vmatpush1.msra.mxu0 0.0
      %1256 = vmatprep.mubr.f32.mxu0 0.0
      %1257 = vmatmul.mubr.f32.gmra.mrb[0].mxu0 %v1175
      %v1258 = vpop.f32.mrb[0].mxu0
      %v1259 = vadd.f32 0.0, %v1258
      %v1260 = vpop.f32.mrb[0].mxu0
      %1261 = vmatprep.mubr.f32.mxu0 0.0
      %1262 = vmatmul.mubr.f32.gmra.mrb[0].mxu0 %v1178
      %v1263 = vpop.f32.mrb[0].mxu0
      %v1264 = vadd.f32 0.0, %v1263
      %v1265 = vpop.f32.mrb[0].mxu0
      %1266 = vmatprep.mubr.f32.mxu0 0.0
      %1267 = vmatmul.mubr.f32.gmra.mrb[0].mxu0 %v1181
      %v1268 = vpop.f32.mrb[0].mxu0
      %v1269 = vadd.f32 0.0, %v1268
      %v1270 = vpop.f32.mrb[0].mxu0
      %1271 = vmatprep.mubr.f32.mxu0 0.0
      %1272 = vmatmul.mubr.f32.gmra.mrb[0].mxu0 %v1184
      %v1273 = vpop.f32.mrb[0].mxu0
      %v1274 = vadd.f32 0.0, %v1273
      %v1275 = vpop.f32.mrb[0].mxu0
      %1276 = vmatprep.mubr.f32.mxu0 0.0
      %1277 = vmatmul.mubr.f32.gmra.mrb[0].mxu0 %v1187
      %v1278 = vpop.f32.mrb[0].mxu0
      %v1279 = vadd.f32 0.0, %v1278
      %v1280 = vpop.f32.mrb[0].mxu0
      %1281 = vdwg.mxu0
      %1282 = vrot.lane.b32.xlu0 %v388, 64
      %v1283 = vpop.permute.xlu0 %1282
      %1284 = vrot.lane.b32.xlu0 %v390, 64
      %v1285 = vpop.permute.xlu0 %1284
      %1286 = vrot.lane.b32.xlu0 %v392, 64
      %v1287 = vpop.permute.xlu0 %1286
      %1288 = vrot.lane.b32.xlu0 %v394, 64
      %v1289 = vpop.permute.xlu0 %1288
      %1290 = vrot.lane.b32.xlu0 %v396, 64
      %v1291 = vpop.permute.xlu0 %1290
      %v1297 = vsel %vm938, %v1131, 0
      %v1300 = vsel %vm938, %v1133, 0
      %v1303 = vsel %vm938, %v1135, 0
      %v1306 = vsel %vm938, %v1137, 0
      %v1309 = vsel %vm938, %v1139, 0
      %v1311 = vsel %vm1189, %v1291, 0
      %1313 = vmatprep.subr.mxu0 0.0
      %1314 = vmatpush1.msra.mxu0 %v1283
      %1315 = vmatprep.subr.mxu0 0.0
      %1316 = vmatpush1.msra.mxu0 %v1285
      %1317 = vmatprep.subr.mxu0 0.0
      %1318 = vmatpush1.msra.mxu0 %v1287
      %1319 = vmatprep.subr.mxu0 0.0
      %1320 = vmatpush1.msra.mxu0 %v1289
      %1321 = vmatprep.subr.mxu0 0.0
      %1322 = vmatpush1.msra.mxu0 %v1311
      %1323 = vmatprep.subr.mxu0 0.0
      %1324 = vmatpush1.msra.mxu0 0.0
      %1325 = vmatprep.subr.mxu0 0.0
      %1326 = vmatpush1.msra.mxu0 0.0
      %1327 = vmatprep.subr.mxu0 0.0
      %1328 = vmatpush1.msra.mxu0 0.0
      %1329 = vmatprep.subr.mxu0 0.0
      %1330 = vmatpush1.msra.mxu0 0.0
      %1331 = vmatprep.subr.mxu0 0.0
      %1332 = vmatpush1.msra.mxu0 0.0
      %1333 = vmatprep.subr.mxu0 0.0
      %1334 = vmatpush1.msra.mxu0 0.0
      %1335 = vmatprep.subr.mxu0 0.0
      %1336 = vmatpush1.msra.mxu0 0.0
      %1337 = vmatprep.subr.mxu0 0.0
      %1338 = vmatpush1.msra.mxu0 0.0
      %1339 = vmatprep.subr.mxu0 0.0
      %1340 = vmatpush1.msra.mxu0 0.0
      %1341 = vmatprep.subr.mxu0 0.0
      %1342 = vmatpush1.msra.mxu0 0.0
      %1343 = vmatprep.subr.mxu0 0.0
      %1344 = vmatpush1.msra.mxu0 0.0
      %1345 = vmatprep.subr.mxu0 0.0
      %1346 = vmatpush1.msra.mxu0 0.0
      %1347 = vmatprep.subr.mxu0 0.0
      %1348 = vmatpush1.msra.mxu0 0.0
      %1349 = vmatprep.subr.mxu0 0.0
      %1350 = vmatpush1.msra.mxu0 0.0
      %1351 = vmatprep.subr.mxu0 0.0
      %1352 = vmatpush1.msra.mxu0 0.0
      %1353 = vmatprep.subr.mxu0 0.0
      %1354 = vmatpush1.msra.mxu0 0.0
      %1355 = vmatprep.subr.mxu0 0.0
      %1356 = vmatpush1.msra.mxu0 0.0
      %1357 = vmatprep.subr.mxu0 0.0
      %1358 = vmatpush1.msra.mxu0 0.0
      %1359 = vmatprep.subr.mxu0 0.0
      %1360 = vmatpush1.msra.mxu0 0.0
      %1361 = vmatprep.subr.mxu0 0.0
      %1362 = vmatpush1.msra.mxu0 0.0
      %1363 = vmatprep.subr.mxu0 0.0
      %1364 = vmatpush1.msra.mxu0 0.0
      %1365 = vmatprep.subr.mxu0 0.0
      %1366 = vmatpush1.msra.mxu0 0.0
      %1367 = vmatprep.subr.mxu0 0.0
      %1368 = vmatpush1.msra.mxu0 0.0
      %1369 = vmatprep.subr.mxu0 0.0
      %1370 = vmatpush1.msra.mxu0 0.0
      %1371 = vmatprep.subr.mxu0 0.0
      %1372 = vmatpush1.msra.mxu0 0.0
      %1373 = vmatprep.subr.mxu0 0.0
      %1374 = vmatpush1.msra.mxu0 0.0
      %1375 = vmatprep.subr.mxu0 0.0
      %1376 = vmatpush1.msra.mxu0 0.0
      %1377 = vmatprep.mubr.f32.mxu0 0.0
      %1378 = vmatmul.mubr.f32.gmra.mrb[0].mxu0 %v1297
      %v1379 = vpop.f32.mrb[0].mxu0
      %v1380 = vadd.f32 0.0, %v1379
      %v1381 = vpop.f32.mrb[0].mxu0
      %1382 = vmatprep.mubr.f32.mxu0 0.0
      %1383 = vmatmul.mubr.f32.gmra.mrb[0].mxu0 %v1300
      %v1384 = vpop.f32.mrb[0].mxu0
      %v1385 = vadd.f32 0.0, %v1384
      %v1386 = vpop.f32.mrb[0].mxu0
      %1387 = vmatprep.mubr.f32.mxu0 0.0
      %1388 = vmatmul.mubr.f32.gmra.mrb[0].mxu0 %v1303
      %v1389 = vpop.f32.mrb[0].mxu0
      %v1390 = vadd.f32 0.0, %v1389
      %v1391 = vpop.f32.mrb[0].mxu0
      %1392 = vmatprep.mubr.f32.mxu0 0.0
      %1393 = vmatmul.mubr.f32.gmra.mrb[0].mxu0 %v1306
      %v1394 = vpop.f32.mrb[0].mxu0
      %v1395 = vadd.f32 0.0, %v1394
      %v1396 = vpop.f32.mrb[0].mxu0
      %1397 = vmatprep.mubr.f32.mxu0 0.0
      %1398 = vmatmul.mubr.f32.gmra.mrb[0].mxu0 %v1309
      %v1399 = vpop.f32.mrb[0].mxu0
      %v1400 = vadd.f32 0.0, %v1399
      %v1401 = vpop.f32.mrb[0].mxu0
      %1402 = vdwg.mxu0
      %1403 = vrot.lane.b32.xlu0 %v398, 64
      %v1404 = vpop.permute.xlu0 %1403
      %1405 = vrot.lane.b32.xlu0 %v400, 64
      %v1406 = vpop.permute.xlu0 %1405
      %1407 = vrot.lane.b32.xlu0 %v402, 64
      %v1408 = vpop.permute.xlu0 %1407
      %1409 = vrot.lane.b32.xlu0 %v404, 64
      %v1410 = vpop.permute.xlu0 %1409
      %1411 = vrot.lane.b32.xlu0 %v406, 64
      %v1412 = vpop.permute.xlu0 %1411
      %v1418 = vsel %vm938, %v1141, 0
      %v1421 = vsel %vm938, %v1143, 0
      %v1424 = vsel %vm938, %v1145, 0
      %v1427 = vsel %vm938, %v1147, 0
      %v1430 = vsel %vm938, %v1149, 0
      %v1432 = vsel %vm1189, %v1412, 0
      %1434 = vmatprep.subr.mxu0 0.0
      %1435 = vmatpush1.msra.mxu0 %v1404
      %1436 = vmatprep.subr.mxu0 0.0
      %1437 = vmatpush1.msra.mxu0 %v1406
      %1438 = vmatprep.subr.mxu0 0.0
      %1439 = vmatpush1.msra.mxu0 %v1408
      %1440 = vmatprep.subr.mxu0 0.0
      %1441 = vmatpush1.msra.mxu0 %v1410
      %1442 = vmatprep.subr.mxu0 0.0
      %1443 = vmatpush1.msra.mxu0 %v1432
      %1444 = vmatprep.subr.mxu0 0.0
      %1445 = vmatpush1.msra.mxu0 0.0
      %1446 = vmatprep.subr.mxu0 0.0
      %1447 = vmatpush1.msra.mxu0 0.0
      %1448 = vmatprep.subr.mxu0 0.0
      %1449 = vmatpush1.msra.mxu0 0.0
      %1450 = vmatprep.subr.mxu0 0.0
      %1451 = vmatpush1.msra.mxu0 0.0
      %1452 = vmatprep.subr.mxu0 0.0
      %1453 = vmatpush1.msra.mxu0 0.0
      %1454 = vmatprep.subr.mxu0 0.0
      %1455 = vmatpush1.msra.mxu0 0.0
      %1456 = vmatprep.subr.mxu0 0.0
      %1457 = vmatpush1.msra.mxu0 0.0
      %1458 = vmatprep.subr.mxu0 0.0
      %1459 = vmatpush1.msra.mxu0 0.0
      %1460 = vmatprep.subr.mxu0 0.0
      %1461 = vmatpush1.msra.mxu0 0.0
      %1462 = vmatprep.subr.mxu0 0.0
      %1463 = vmatpush1.msra.mxu0 0.0
      %1464 = vmatprep.subr.mxu0 0.0
      %1465 = vmatpush1.msra.mxu0 0.0
      %1466 = vmatprep.subr.mxu0 0.0
      %1467 = vmatpush1.msra.mxu0 0.0
      %1468 = vmatprep.subr.mxu0 0.0
      %1469 = vmatpush1.msra.mxu0 0.0
      %1470 = vmatprep.subr.mxu0 0.0
      %1471 = vmatpush1.msra.mxu0 0.0
      %1472 = vmatprep.subr.mxu0 0.0
      %1473 = vmatpush1.msra.mxu0 0.0
      %1474 = vmatprep.subr.mxu0 0.0
      %1475 = vmatpush1.msra.mxu0 0.0
      %1476 = vmatprep.subr.mxu0 0.0
      %1477 = vmatpush1.msra.mxu0 0.0
      %1478 = vmatprep.subr.mxu0 0.0
      %1479 = vmatpush1.msra.mxu0 0.0
      %1480 = vmatprep.subr.mxu0 0.0
      %1481 = vmatpush1.msra.mxu0 0.0
      %1482 = vmatprep.subr.mxu0 0.0
      %1483 = vmatpush1.msra.mxu0 0.0
      %1484 = vmatprep.subr.mxu0 0.0
      %1485 = vmatpush1.msra.mxu0 0.0
      %1486 = vmatprep.subr.mxu0 0.0
      %1487 = vmatpush1.msra.mxu0 0.0
      %1488 = vmatprep.subr.mxu0 0.0
      %1489 = vmatpush1.msra.mxu0 0.0
      %1490 = vmatprep.subr.mxu0 0.0
      %1491 = vmatpush1.msra.mxu0 0.0
      %1492 = vmatprep.subr.mxu0 0.0
      %1493 = vmatpush1.msra.mxu0 0.0
      %1494 = vmatprep.subr.mxu0 0.0
      %1495 = vmatpush1.msra.mxu0 0.0
      %1496 = vmatprep.subr.mxu0 0.0
      %1497 = vmatpush1.msra.mxu0 0.0
      %1498 = vmatprep.mubr.f32.mxu0 0.0
      %1499 = vmatmul.mubr.f32.gmra.mrb[0].mxu0 %v1418
      %v1500 = vpop.f32.mrb[0].mxu0
      %v1501 = vadd.f32 0.0, %v1500
      %v1502 = vpop.f32.mrb[0].mxu0
      %1503 = vmatprep.mubr.f32.mxu0 0.0
      %1504 = vmatmul.mubr.f32.gmra.mrb[0].mxu0 %v1421
      %v1505 = vpop.f32.mrb[0].mxu0
      %v1506 = vadd.f32 0.0, %v1505
      %v1507 = vpop.f32.mrb[0].mxu0
      %1508 = vmatprep.mubr.f32.mxu0 0.0
      %1509 = vmatmul.mubr.f32.gmra.mrb[0].mxu0 %v1424
      %v1510 = vpop.f32.mrb[0].mxu0
      %v1511 = vadd.f32 0.0, %v1510
      %v1512 = vpop.f32.mrb[0].mxu0
      %1513 = vmatprep.mubr.f32.mxu0 0.0
      %1514 = vmatmul.mubr.f32.gmra.mrb[0].mxu0 %v1427
      %v1515 = vpop.f32.mrb[0].mxu0
      %v1516 = vadd.f32 0.0, %v1515
      %v1517 = vpop.f32.mrb[0].mxu0
      %1518 = vmatprep.mubr.f32.mxu0 0.0
      %1519 = vmatmul.mubr.f32.gmra.mrb[0].mxu0 %v1430
      %v1520 = vpop.f32.mrb[0].mxu0
      %v1521 = vadd.f32 0.0, %v1520
      %v1522 = vpop.f32.mrb[0].mxu0
      %1523 = vdwg.mxu0
      %1524 = vrot.lane.b32.xlu0 %v408, 64
      %v1525 = vpop.permute.xlu0 %1524
      %1526 = vrot.lane.b32.xlu0 %v410, 64
      %v1527 = vpop.permute.xlu0 %1526
      %1528 = vrot.lane.b32.xlu0 %v412, 64
      %v1529 = vpop.permute.xlu0 %1528
      %1530 = vrot.lane.b32.xlu0 %v414, 64
      %v1531 = vpop.permute.xlu0 %1530
      %1532 = vrot.lane.b32.xlu0 %v416, 64
      %v1533 = vpop.permute.xlu0 %1532
      %v1539 = vsel %vm938, %v1151, 0
      %v1542 = vsel %vm938, %v1153, 0
      %v1545 = vsel %vm938, %v1155, 0
      %v1548 = vsel %vm938, %v1157, 0
      %v1551 = vsel %vm938, %v1159, 0
      %v1553 = vsel %vm1189, %v1533, 0
      %1555 = vmatprep.subr.mxu0 0.0
      %1556 = vmatpush1.msra.mxu0 %v1525
      %1557 = vmatprep.subr.mxu0 0.0
      %1558 = vmatpush1.msra.mxu0 %v1527
      %1559 = vmatprep.subr.mxu0 0.0
      %1560 = vmatpush1.msra.mxu0 %v1529
      %1561 = vmatprep.subr.mxu0 0.0
      %1562 = vmatpush1.msra.mxu0 %v1531
      %1563 = vmatprep.subr.mxu0 0.0
      %1564 = vmatpush1.msra.mxu0 %v1553
      %1565 = vmatprep.subr.mxu0 0.0
      %1566 = vmatpush1.msra.mxu0 0.0
      %1567 = vmatprep.subr.mxu0 0.0
      %1568 = vmatpush1.msra.mxu0 0.0
      %1569 = vmatprep.subr.mxu0 0.0
      %1570 = vmatpush1.msra.mxu0 0.0
      %1571 = vmatprep.subr.mxu0 0.0
      %1572 = vmatpush1.msra.mxu0 0.0
      %1573 = vmatprep.subr.mxu0 0.0
      %1574 = vmatpush1.msra.mxu0 0.0
      %1575 = vmatprep.subr.mxu0 0.0
      %1576 = vmatpush1.msra.mxu0 0.0
      %1577 = vmatprep.subr.mxu0 0.0
      %1578 = vmatpush1.msra.mxu0 0.0
      %1579 = vmatprep.subr.mxu0 0.0
      %1580 = vmatpush1.msra.mxu0 0.0
      %1581 = vmatprep.subr.mxu0 0.0
      %1582 = vmatpush1.msra.mxu0 0.0
      %1583 = vmatprep.subr.mxu0 0.0
      %1584 = vmatpush1.msra.mxu0 0.0
      %1585 = vmatprep.subr.mxu0 0.0
      %1586 = vmatpush1.msra.mxu0 0.0
      %1587 = vmatprep.subr.mxu0 0.0
      %1588 = vmatpush1.msra.mxu0 0.0
      %1589 = vmatprep.subr.mxu0 0.0
      %1590 = vmatpush1.msra.mxu0 0.0
      %1591 = vmatprep.subr.mxu0 0.0
      %1592 = vmatpush1.msra.mxu0 0.0
      %1593 = vmatprep.subr.mxu0 0.0
      %1594 = vmatpush1.msra.mxu0 0.0
      %1595 = vmatprep.subr.mxu0 0.0
      %1596 = vmatpush1.msra.mxu0 0.0
      %1597 = vmatprep.subr.mxu0 0.0
      %1598 = vmatpush1.msra.mxu0 0.0
      %1599 = vmatprep.subr.mxu0 0.0
      %1600 = vmatpush1.msra.mxu0 0.0
      %1601 = vmatprep.subr.mxu0 0.0
      %1602 = vmatpush1.msra.mxu0 0.0
      %1603 = vmatprep.subr.mxu0 0.0
      %1604 = vmatpush1.msra.mxu0 0.0
      %1605 = vmatprep.subr.mxu0 0.0
      %1606 = vmatpush1.msra.mxu0 0.0
      %1607 = vmatprep.subr.mxu0 0.0
      %1608 = vmatpush1.msra.mxu0 0.0
      %1609 = vmatprep.subr.mxu0 0.0
      %1610 = vmatpush1.msra.mxu0 0.0
      %1611 = vmatprep.subr.mxu0 0.0
      %1612 = vmatpush1.msra.mxu0 0.0
      %1613 = vmatprep.subr.mxu0 0.0
      %1614 = vmatpush1.msra.mxu0 0.0
      %1615 = vmatprep.subr.mxu0 0.0
      %1616 = vmatpush1.msra.mxu0 0.0
      %1617 = vmatprep.subr.mxu0 0.0
      %1618 = vmatpush1.msra.mxu0 0.0
      %1619 = vmatprep.mubr.f32.mxu0 0.0
      %1620 = vmatmul.mubr.f32.gmra.mrb[0].mxu0 %v1539
      %v1621 = vpop.f32.mrb[0].mxu0
      %v1622 = vadd.f32 0.0, %v1621
      %v1623 = vpop.f32.mrb[0].mxu0
      %1624 = vmatprep.mubr.f32.mxu0 0.0
      %1625 = vmatmul.mubr.f32.gmra.mrb[0].mxu0 %v1542
      %v1626 = vpop.f32.mrb[0].mxu0
      %v1627 = vadd.f32 0.0, %v1626
      %v1628 = vpop.f32.mrb[0].mxu0
      %1629 = vmatprep.mubr.f32.mxu0 0.0
      %1630 = vmatmul.mubr.f32.gmra.mrb[0].mxu0 %v1545
      %v1631 = vpop.f32.mrb[0].mxu0
      %v1632 = vadd.f32 0.0, %v1631
      %v1633 = vpop.f32.mrb[0].mxu0
      %1634 = vmatprep.mubr.f32.mxu0 0.0
      %1635 = vmatmul.mubr.f32.gmra.mrb[0].mxu0 %v1548
      %v1636 = vpop.f32.mrb[0].mxu0
      %v1637 = vadd.f32 0.0, %v1636
      %v1638 = vpop.f32.mrb[0].mxu0
      %1639 = vmatprep.mubr.f32.mxu0 0.0
      %1640 = vmatmul.mubr.f32.gmra.mrb[0].mxu0 %v1551
      %v1641 = vpop.f32.mrb[0].mxu0
      %v1642 = vadd.f32 0.0, %v1641
      %v1643 = vpop.f32.mrb[0].mxu0
      %1644 = vdwg.mxu0
      %1650 = vrot.lane.b32.xlu0 %v1380, 8
      %v1651 = vpop.permute.xlu0 %1650
      %1652 = vrot.lane.b32.xlu0 %v1385, 8
      %v1653 = vpop.permute.xlu0 %1652
      %1654 = vrot.lane.b32.xlu0 %v1390, 8
      %v1655 = vpop.permute.xlu0 %1654
      %1656 = vrot.lane.b32.xlu0 %v1395, 8
      %v1657 = vpop.permute.xlu0 %1656
      %1658 = vrot.lane.b32.xlu0 %v1400, 8
      %v1659 = vpop.permute.xlu0 %1658
      %1670 = vrot.lane.b32.xlu0 %v1501, 16
      %v1671 = vpop.permute.xlu0 %1670
      %1672 = vrot.lane.b32.xlu0 %v1506, 16
      %v1673 = vpop.permute.xlu0 %1672
      %1674 = vrot.lane.b32.xlu0 %v1511, 16
      %v1675 = vpop.permute.xlu0 %1674
      %1676 = vrot.lane.b32.xlu0 %v1516, 16
      %v1677 = vpop.permute.xlu0 %1676
      %1678 = vrot.lane.b32.xlu0 %v1521, 16
      %v1679 = vpop.permute.xlu0 %1678
      %1690 = vrot.lane.b32.xlu0 %v1622, 24
      %v1691 = vpop.permute.xlu0 %1690
      %1692 = vrot.lane.b32.xlu0 %v1627, 24
      %v1693 = vpop.permute.xlu0 %1692
      %1694 = vrot.lane.b32.xlu0 %v1632, 24
      %v1695 = vpop.permute.xlu0 %1694
      %1696 = vrot.lane.b32.xlu0 %v1637, 24
      %v1697 = vpop.permute.xlu0 %1696
      %1698 = vrot.lane.b32.xlu0 %v1642, 24
      %v1699 = vpop.permute.xlu0 %1698
      %v1705 = vsel %vm427, %v1259, %v1651
      %v1706 = vsel %vm427, %v1264, %v1653
      %v1707 = vsel %vm427, %v1269, %v1655
      %v1708 = vsel %vm427, %v1274, %v1657
      %v1709 = vsel %vm427, %v1279, %v1659
      %vm1710 = vcmask 130048
      %v1711 = vsel %vm1710, %v1705, %v1671
      %v1712 = vsel %vm1710, %v1706, %v1673
      %v1713 = vsel %vm1710, %v1707, %v1675
      %v1714 = vsel %vm1710, %v1708, %v1677
      %v1715 = vsel %vm1710, %v1709, %v1679
      %vm1716 = vcmask 195584
      %v1717 = vsel %vm1716, %v1711, %v1691
      %v1718 = vsel %vm1716, %v1712, %v1693
      %v1719 = vsel %vm1716, %v1713, %v1695
      %v1720 = vsel %vm1716, %v1714, %v1697
      %v1721 = vsel %vm1716, %v1715, %v1699
      %v1722 = vld [vmem:[%s8] sm:$0xff]
      %v1723 = vld [vmem:[%s8 + $0x8] sm:$0xff]
      %v1724 = vld [vmem:[%s8 + $0x10] sm:$0xff]
      %v1725 = vld [vmem:[%s8 + $0x18] sm:$0xff]
      %v1727 = vsel %vm62, %v1717, 0
      %v1730 = vsel %vm62, %v1718, 0
      %v1733 = vsel %vm62, %v1719, 0
      %v1736 = vsel %vm62, %v1720, 0
      %v1739 = vsel %vm62, %v1721, 0
      %1741 = vmatprep.subr.mxu0 0.0
      %1742 = vmatpush1.msra.mxu0 %v1722
      %1743 = vmatprep.subr.mxu0 0.0
      %1744 = vmatpush1.msra.mxu0 %v1723
      %1745 = vmatprep.subr.mxu0 0.0
      %1746 = vmatpush1.msra.mxu0 %v1724
      %1747 = vmatprep.subr.mxu0 0.0
      %1748 = vmatpush1.msra.mxu0 %v1725
      %1749 = vmatprep.subr.mxu0 0.0
      %1750 = vmatpush1.msra.mxu0 0.0
      %1751 = vmatprep.subr.mxu0 0.0
      %1752 = vmatpush1.msra.mxu0 0.0
      %1753 = vmatprep.subr.mxu0 0.0
      %1754 = vmatpush1.msra.mxu0 0.0
      %1755 = vmatprep.subr.mxu0 0.0
      %1756 = vmatpush1.msra.mxu0 0.0
      %1757 = vmatprep.subr.mxu0 0.0
      %1758 = vmatpush1.msra.mxu0 0.0
      %1759 = vmatprep.subr.mxu0 0.0
      %1760 = vmatpush1.msra.mxu0 0.0
      %1761 = vmatprep.subr.mxu0 0.0
      %1762 = vmatpush1.msra.mxu0 0.0
      %1763 = vmatprep.subr.mxu0 0.0
      %1764 = vmatpush1.msra.mxu0 0.0
      %1765 = vmatprep.subr.mxu0 0.0
      %1766 = vmatpush1.msra.mxu0 0.0
      %1767 = vmatprep.subr.mxu0 0.0
      %1768 = vmatpush1.msra.mxu0 0.0
      %1769 = vmatprep.subr.mxu0 0.0
      %1770 = vmatpush1.msra.mxu0 0.0
      %1771 = vmatprep.subr.mxu0 0.0
      %1772 = vmatpush1.msra.mxu0 0.0
      %1773 = vmatprep.subr.mxu0 0.0
      %1774 = vmatpush1.msra.mxu0 0.0
      %1775 = vmatprep.subr.mxu0 0.0
      %1776 = vmatpush1.msra.mxu0 0.0
      %1777 = vmatprep.subr.mxu0 0.0
      %1778 = vmatpush1.msra.mxu0 0.0
      %1779 = vmatprep.subr.mxu0 0.0
      %1780 = vmatpush1.msra.mxu0 0.0
      %1781 = vmatprep.subr.mxu0 0.0
      %1782 = vmatpush1.msra.mxu0 0.0
      %1783 = vmatprep.subr.mxu0 0.0
      %1784 = vmatpush1.msra.mxu0 0.0
      %1785 = vmatprep.subr.mxu0 0.0
      %1786 = vmatpush1.msra.mxu0 0.0
      %1787 = vmatprep.subr.mxu0 0.0
      %1788 = vmatpush1.msra.mxu0 0.0
      %1789 = vmatprep.subr.mxu0 0.0
      %1790 = vmatpush1.msra.mxu0 0.0
      %1791 = vmatprep.subr.mxu0 0.0
      %1792 = vmatpush1.msra.mxu0 0.0
      %1793 = vmatprep.subr.mxu0 0.0
      %1794 = vmatpush1.msra.mxu0 0.0
      %1795 = vmatprep.subr.mxu0 0.0
      %1796 = vmatpush1.msra.mxu0 0.0
      %1797 = vmatprep.subr.mxu0 0.0
      %1798 = vmatpush1.msra.mxu0 0.0
      %1799 = vmatprep.subr.mxu0 0.0
      %1800 = vmatpush1.msra.mxu0 0.0
      %1801 = vmatprep.subr.mxu0 0.0
      %1802 = vmatpush1.msra.mxu0 0.0
      %1803 = vmatprep.subr.mxu0 0.0
      %1804 = vmatpush1.msra.mxu0 0.0
      %1805 = vmatprep.mubr.f32.mxu0 0.0
      %1806 = vmatmul.mubr.f32.gmra.mrb[0].mxu0 %v1727
      %v1807 = vpop.f32.mrb[0].mxu0
      %v1808 = vadd.f32 0.0, %v1807
      %v1809 = vpop.f32.mrb[0].mxu0
      %1810 = vmatprep.mubr.f32.mxu0 0.0
      %1811 = vmatmul.mubr.f32.gmra.mrb[0].mxu0 %v1730
      %v1812 = vpop.f32.mrb[0].mxu0
      %v1813 = vadd.f32 0.0, %v1812
      %v1814 = vpop.f32.mrb[0].mxu0
      %1815 = vmatprep.mubr.f32.mxu0 0.0
      %1816 = vmatmul.mubr.f32.gmra.mrb[0].mxu0 %v1733
      %v1817 = vpop.f32.mrb[0].mxu0
      %v1818 = vadd.f32 0.0, %v1817
      %v1819 = vpop.f32.mrb[0].mxu0
      %1820 = vmatprep.mubr.f32.mxu0 0.0
      %1821 = vmatmul.mubr.f32.gmra.mrb[0].mxu0 %v1736
      %v1822 = vpop.f32.mrb[0].mxu0
      %v1823 = vadd.f32 0.0, %v1822
      %v1824 = vpop.f32.mrb[0].mxu0
      %1825 = vmatprep.mubr.f32.mxu0 0.0
      %1826 = vmatmul.mubr.f32.gmra.mrb[0].mxu0 %v1739
      %v1827 = vpop.f32.mrb[0].mxu0
      %v1828 = vadd.f32 0.0, %v1827
      %v1829 = vpop.f32.mrb[0].mxu0
      %1830 = vdwg.mxu0
      %v1831 = vadd.f32 %v139, %v1808
      %v1832 = vadd.f32 %v140, %v1813
      %v1833 = vadd.f32 %v141, %v1818
      %v1834 = vadd.f32 %v142, %v1823
      %v1835 = vadd.f32 %v143, %v1828
      %v1836 = vlaneseq
      %v1837 = vshrl.u32 %v1836, 7
      %v1838 = vsub.s32 0, %v1837
      %v1839 = vrot.slane %v145, %v1838
      %v1840 = vadd.f32 %v1831, %v1839
      %v1841 = vadd.f32 %v1832, %v1839
      %v1842 = vadd.f32 %v1833, %v1839
      %v1843 = vadd.f32 %v1834, %v1839
      %v1844 = vadd.f32 %v1835, %v1839
      %v1845 = vsel %vm62, %v1840, 0.0
      %1846 = vadd.xlane.f32.xlu0 %v1845
      %v1847 = vpop.xlane.xlu0 %1846
      %v1848 = vsel %vm62, %v1841, 0.0
      %1849 = vadd.xlane.f32.xlu0 %v1848
      %v1850 = vpop.xlane.xlu0 %1849
      %v1851 = vsel %vm62, %v1842, 0.0
      %1852 = vadd.xlane.f32.xlu0 %v1851
      %v1853 = vpop.xlane.xlu0 %1852
      %v1854 = vsel %vm62, %v1843, 0.0
      %1855 = vadd.xlane.f32.xlu0 %v1854
      %v1856 = vpop.xlane.xlu0 %1855
      %v1857 = vsel %vm67, %v1844, 0.0
      %1858 = vadd.xlane.f32.xlu0 %v1857
      %v1859 = vpop.xlane.xlu0 %1858
      %v1860 = vmul.f32 %v1847, %v161
      %v1861 = vmul.f32 %v1850, %v161
      %v1862 = vmul.f32 %v1853, %v161
      %v1863 = vmul.f32 %v1856, %v161
      %v1864 = vmul.f32 %v1859, %v161
      %v1865 = vsub.f32 %v1840, %v1860
      %v1866 = vsub.f32 %v1841, %v1861
      %v1867 = vsub.f32 %v1842, %v1862
      %v1868 = vsub.f32 %v1843, %v1863
      %v1869 = vsub.f32 %v1844, %v1864
      %v1870 = vmul.f32 %v1865, %v1865
      %v1871 = vmul.f32 %v1866, %v1866
      %v1872 = vmul.f32 %v1867, %v1867
      %v1873 = vmul.f32 %v1868, %v1868
      %v1874 = vmul.f32 %v1869, %v1869
      %v1875 = vsel %vm62, %v1870, 0.0
      %1876 = vadd.xlane.f32.xlu0 %v1875
      %v1877 = vpop.xlane.xlu0 %1876
      %v1878 = vsel %vm62, %v1871, 0.0
      %1879 = vadd.xlane.f32.xlu0 %v1878
      %v1880 = vpop.xlane.xlu0 %1879
      %v1881 = vsel %vm62, %v1872, 0.0
      %1882 = vadd.xlane.f32.xlu0 %v1881
      %v1883 = vpop.xlane.xlu0 %1882
      %v1884 = vsel %vm62, %v1873, 0.0
      %1885 = vadd.xlane.f32.xlu0 %v1884
      %v1886 = vpop.xlane.xlu0 %1885
      %v1887 = vsel %vm67, %v1874, 0.0
      %1888 = vadd.xlane.f32.xlu0 %v1887
      %v1889 = vpop.xlane.xlu0 %1888
      %v1890 = vmul.f32 %v1877, %v192
      %v1891 = vmul.f32 %v1880, %v192
      %v1892 = vmul.f32 %v1883, %v192
      %v1893 = vmul.f32 %v1886, %v192
      %v1894 = vmul.f32 %v1889, %v192
      %v1895 = vlaneseq
      %v1896 = vshrl.u32 %v1895, 7
      %v1897 = vsub.s32 2, %v1896
      %v1898 = vrot.slane %v144, %v1897
      %v1899 = vmul.f32 %v1898, %v1865
      %v1900 = vmul.f32 %v1898, %v1866
      %v1901 = vmul.f32 %v1898, %v1867
      %v1902 = vmul.f32 %v1898, %v1868
      %v1903 = vmul.f32 %v1898, %v1869
      %v1904 = vrsqrt.pop %v1890
      %v1905 = vmul.f32 %v1890, %v1904
      %vm1906 = vcmp.eq.f32.partialorder %v1890, inf
      %v1907 = vsel %vm1906, %v1890, %v1905
      %vm1908 = vcmp.eq.f32.partialorder %v1890, 0.0
      %v1909 = vand.u32 %v1890, 2147483648
      %v1910 = vsel %vm1908, %v1909, %v1907
      %v1911 = vrsqrt.pop %v1891
      %v1912 = vmul.f32 %v1891, %v1911
      %vm1913 = vcmp.eq.f32.partialorder %v1891, inf
      %v1914 = vsel %vm1913, %v1891, %v1912
      %vm1915 = vcmp.eq.f32.partialorder %v1891, 0.0
      %v1916 = vand.u32 %v1891, 2147483648
      %v1917 = vsel %vm1915, %v1916, %v1914
      %v1918 = vrsqrt.pop %v1892
      %v1919 = vmul.f32 %v1892, %v1918
      %vm1920 = vcmp.eq.f32.partialorder %v1892, inf
      %v1921 = vsel %vm1920, %v1892, %v1919
      %vm1922 = vcmp.eq.f32.partialorder %v1892, 0.0
      %v1923 = vand.u32 %v1892, 2147483648
      %v1924 = vsel %vm1922, %v1923, %v1921
      %v1925 = vrsqrt.pop %v1893
      %v1926 = vmul.f32 %v1893, %v1925
      %vm1927 = vcmp.eq.f32.partialorder %v1893, inf
      %v1928 = vsel %vm1927, %v1893, %v1926
      %vm1929 = vcmp.eq.f32.partialorder %v1893, 0.0
      %v1930 = vand.u32 %v1893, 2147483648
      %v1931 = vsel %vm1929, %v1930, %v1928
      %v1932 = vrsqrt.pop %v1894
      %v1933 = vmul.f32 %v1894, %v1932
      %vm1934 = vcmp.eq.f32.partialorder %v1894, inf
      %v1935 = vsel %vm1934, %v1894, %v1933
      %vm1936 = vcmp.eq.f32.partialorder %v1894, 0.0
      %v1937 = vand.u32 %v1894, 2147483648
      %v1938 = vsel %vm1936, %v1937, %v1935
      %v1939 = vadd.f32 %v1910, 1e-06
      %v1940 = vadd.f32 %v1917, 1e-06
      %v1941 = vadd.f32 %v1924, 1e-06
      %v1942 = vadd.f32 %v1931, 1e-06
      %v1943 = vadd.f32 %v1938, 1e-06
      %v1944 = vrcp.pop %v1939
      %v1945 = vmul.f32 %v1899, %v1944
      %v1946 = vrcp.pop %v1940
      %v1947 = vmul.f32 %v1900, %v1946
      %v1948 = vrcp.pop %v1941
      %v1949 = vmul.f32 %v1901, %v1948
      %v1950 = vrcp.pop %v1942
      %v1951 = vmul.f32 %v1902, %v1950
      %v1952 = vrcp.pop %v1943
      %v1953 = vmul.f32 %v1903, %v1952
      %v1954 = vlaneseq
      %v1955 = vshrl.u32 %v1954, 7
      %v1956 = vsub.s32 3, %v1955
      %v1957 = vrot.slane %v144, %v1956
      %v1958 = vadd.f32 %v1945, %v1957
      %v1959 = vadd.f32 %v1947, %v1957
      %v1960 = vadd.f32 %v1949, %v1957
      %v1961 = vadd.f32 %v1951, %v1957
      %v1962 = vadd.f32 %v1953, %v1957
      %v1963 = vld [vmem:[%s4] sm:$0xff]
      %v1964 = vld [vmem:[%s4 + $0x8] sm:$0xff]
      %v1965 = vld [vmem:[%s4 + $0x10] sm:$0xff]
      %v1966 = vld [vmem:[%s4 + $0x18] sm:$0xff]
      %v1967 = vld [vmem:[%s4 + $0x20] sm:$0x3]
      %v1969 = vsel %vm938, %v1963, 0
      %v1972 = vsel %vm938, %v1964, 0
      %v1975 = vsel %vm938, %v1965, 0
      %v1978 = vsel %vm938, %v1966, 0
      %v1981 = vsel %vm938, %v1967, 0
      %v1984 = vsel %vm1189, %v1962, 0
      %1986 = vmatprep.subr.mxu0 0.0
      %1987 = vmatpush1.msra.mxu0 %v1958
      %1988 = vmatprep.subr.mxu0 0.0
      %1989 = vmatpush1.msra.mxu0 %v1959
      %1990 = vmatprep.subr.mxu0 0.0
      %1991 = vmatpush1.msra.mxu0 %v1960
      %1992 = vmatprep.subr.mxu0 0.0
      %1993 = vmatpush1.msra.mxu0 %v1961
      %1994 = vmatprep.subr.mxu0 0.0
      %1995 = vmatpush1.msra.mxu0 %v1984
      %1996 = vmatprep.subr.mxu0 0.0
      %1997 = vmatpush1.msra.mxu0 0.0
      %1998 = vmatprep.subr.mxu0 0.0
      %1999 = vmatpush1.msra.mxu0 0.0
      %2000 = vmatprep.subr.mxu0 0.0
      %2001 = vmatpush1.msra.mxu0 0.0
      %2002 = vmatprep.subr.mxu0 0.0
      %2003 = vmatpush1.msra.mxu0 0.0
      %2004 = vmatprep.subr.mxu0 0.0
      %2005 = vmatpush1.msra.mxu0 0.0
      %2006 = vmatprep.subr.mxu0 0.0
      %2007 = vmatpush1.msra.mxu0 0.0
      %2008 = vmatprep.subr.mxu0 0.0
      %2009 = vmatpush1.msra.mxu0 0.0
      %2010 = vmatprep.subr.mxu0 0.0
      %2011 = vmatpush1.msra.mxu0 0.0
      %2012 = vmatprep.subr.mxu0 0.0
      %2013 = vmatpush1.msra.mxu0 0.0
      %2014 = vmatprep.subr.mxu0 0.0
      %2015 = vmatpush1.msra.mxu0 0.0
      %2016 = vmatprep.subr.mxu0 0.0
      %2017 = vmatpush1.msra.mxu0 0.0
      %2018 = vmatprep.subr.mxu0 0.0
      %2019 = vmatpush1.msra.mxu0 0.0
      %2020 = vmatprep.subr.mxu0 0.0
      %2021 = vmatpush1.msra.mxu0 0.0
      %2022 = vmatprep.subr.mxu0 0.0
      %2023 = vmatpush1.msra.mxu0 0.0
      %2024 = vmatprep.subr.mxu0 0.0
      %2025 = vmatpush1.msra.mxu0 0.0
      %2026 = vmatprep.subr.mxu0 0.0
      %2027 = vmatpush1.msra.mxu0 0.0
      %2028 = vmatprep.subr.mxu0 0.0
      %2029 = vmatpush1.msra.mxu0 0.0
      %2030 = vmatprep.subr.mxu0 0.0
      %2031 = vmatpush1.msra.mxu0 0.0
      %2032 = vmatprep.subr.mxu0 0.0
      %2033 = vmatpush1.msra.mxu0 0.0
      %2034 = vmatprep.subr.mxu0 0.0
      %2035 = vmatpush1.msra.mxu0 0.0
      %2036 = vmatprep.subr.mxu0 0.0
      %2037 = vmatpush1.msra.mxu0 0.0
      %2038 = vmatprep.subr.mxu0 0.0
      %2039 = vmatpush1.msra.mxu0 0.0
      %2040 = vmatprep.subr.mxu0 0.0
      %2041 = vmatpush1.msra.mxu0 0.0
      %2042 = vmatprep.subr.mxu0 0.0
      %2043 = vmatpush1.msra.mxu0 0.0
      %2044 = vmatprep.subr.mxu0 0.0
      %2045 = vmatpush1.msra.mxu0 0.0
      %2046 = vmatprep.subr.mxu0 0.0
      %2047 = vmatpush1.msra.mxu0 0.0
      %2048 = vmatprep.subr.mxu0 0.0
      %2049 = vmatpush1.msra.mxu0 0.0
      %2050 = vmatprep.mubr.f32.mxu0 0.0
      %2051 = vmatmul.mubr.f32.gmra.mrb[0].mxu0 %v1969
      %v2052 = vpop.f32.mrb[0].mxu0
      %v2053 = vadd.f32 0.0, %v2052
      %v2054 = vpop.f32.mrb[0].mxu0
      %2055 = vmatprep.mubr.f32.mxu0 0.0
      %2056 = vmatmul.mubr.f32.gmra.mrb[0].mxu0 %v1972
      %v2057 = vpop.f32.mrb[0].mxu0
      %v2058 = vadd.f32 0.0, %v2057
      %v2059 = vpop.f32.mrb[0].mxu0
      %2060 = vmatprep.mubr.f32.mxu0 0.0
      %2061 = vmatmul.mubr.f32.gmra.mrb[0].mxu0 %v1975
      %v2062 = vpop.f32.mrb[0].mxu0
      %v2063 = vadd.f32 0.0, %v2062
      %v2064 = vpop.f32.mrb[0].mxu0
      %2065 = vmatprep.mubr.f32.mxu0 0.0
      %2066 = vmatmul.mubr.f32.gmra.mrb[0].mxu0 %v1978
      %v2067 = vpop.f32.mrb[0].mxu0
      %v2068 = vadd.f32 0.0, %v2067
      %v2069 = vpop.f32.mrb[0].mxu0
      %2070 = vmatprep.mubr.f32.mxu0 0.0
      %2071 = vmatmul.mubr.f32.gmra.mrb[0].mxu0 %v1981
      %v2072 = vpop.f32.mrb[0].mxu0
      %v2073 = vadd.f32 0.0, %v2072
      %v2074 = vpop.f32.mrb[0].mxu0
      %2075 = vdwg.mxu0
      %v2076 = vld [vmem:[%s9] sm:$0xff]
      %v2077 = vld [vmem:[%s9 + $0x8] sm:$0xff]
      %v2078 = vld [vmem:[%s9 + $0x10] sm:$0xff]
      %v2079 = vld [vmem:[%s9 + $0x18] sm:$0xff]
      %v2080 = vld [vmem:[%s10] sm:$0x1]
      %v2082 = vlaneseq
      %v2083 = vshrl.u32 %v2082, 7
      %v2084 = vsub.s32 0, %v2083
      %v2085 = vrot.slane %v2080, %v2084
      %v2088 = vsel %vm62, %v2053, 0
      %v2091 = vsel %vm62, %v2058, 0
      %v2094 = vsel %vm62, %v2063, 0
      %v2097 = vsel %vm62, %v2068, 0
      %v2100 = vsel %vm62, %v2073, 0
      %2102 = vmatprep.subr.mxu0 0.0
      %2103 = vmatpush1.msra.mxu0 %v2076
      %2104 = vmatprep.subr.mxu0 0.0
      %2105 = vmatpush1.msra.mxu0 %v2077
      %2106 = vmatprep.subr.mxu0 0.0
      %2107 = vmatpush1.msra.mxu0 %v2078
      %2108 = vmatprep.subr.mxu0 0.0
      %2109 = vmatpush1.msra.mxu0 %v2079
      %2110 = vmatprep.subr.mxu0 0.0
      %2111 = vmatpush1.msra.mxu0 0.0
      %2112 = vmatprep.subr.mxu0 0.0
      %2113 = vmatpush1.msra.mxu0 0.0
      %2114 = vmatprep.subr.mxu0 0.0
      %2115 = vmatpush1.msra.mxu0 0.0
      %2116 = vmatprep.subr.mxu0 0.0
      %2117 = vmatpush1.msra.mxu0 0.0
      %2118 = vmatprep.subr.mxu0 0.0
      %2119 = vmatpush1.msra.mxu0 0.0
      %2120 = vmatprep.subr.mxu0 0.0
      %2121 = vmatpush1.msra.mxu0 0.0
      %2122 = vmatprep.subr.mxu0 0.0
      %2123 = vmatpush1.msra.mxu0 0.0
      %2124 = vmatprep.subr.mxu0 0.0
      %2125 = vmatpush1.msra.mxu0 0.0
      %2126 = vmatprep.subr.mxu0 0.0
      %2127 = vmatpush1.msra.mxu0 0.0
      %2128 = vmatprep.subr.mxu0 0.0
      %2129 = vmatpush1.msra.mxu0 0.0
      %2130 = vmatprep.subr.mxu0 0.0
      %2131 = vmatpush1.msra.mxu0 0.0
      %2132 = vmatprep.subr.mxu0 0.0
      %2133 = vmatpush1.msra.mxu0 0.0
      %2134 = vmatprep.subr.mxu0 0.0
      %2135 = vmatpush1.msra.mxu0 0.0
      %2136 = vmatprep.subr.mxu0 0.0
      %2137 = vmatpush1.msra.mxu0 0.0
      %2138 = vmatprep.subr.mxu0 0.0
      %2139 = vmatpush1.msra.mxu0 0.0
      %2140 = vmatprep.subr.mxu0 0.0
      %2141 = vmatpush1.msra.mxu0 0.0
      %2142 = vmatprep.subr.mxu0 0.0
      %2143 = vmatpush1.msra.mxu0 0.0
      %2144 = vmatprep.subr.mxu0 0.0
      %2145 = vmatpush1.msra.mxu0 0.0
      %2146 = vmatprep.subr.mxu0 0.0
      %2147 = vmatpush1.msra.mxu0 0.0
      %2148 = vmatprep.subr.mxu0 0.0
      %2149 = vmatpush1.msra.mxu0 0.0
      %2150 = vmatprep.subr.mxu0 0.0
      %2151 = vmatpush1.msra.mxu0 0.0
      %2152 = vmatprep.subr.mxu0 0.0
      %2153 = vmatpush1.msra.mxu0 0.0
      %2154 = vmatprep.subr.mxu0 0.0
      %2155 = vmatpush1.msra.mxu0 0.0
      %2156 = vmatprep.subr.mxu0 0.0
      %2157 = vmatpush1.msra.mxu0 0.0
      %2158 = vmatprep.subr.mxu0 0.0
      %2159 = vmatpush1.msra.mxu0 0.0
      %2160 = vmatprep.subr.mxu0 0.0
      %2161 = vmatpush1.msra.mxu0 0.0
      %2162 = vmatprep.subr.mxu0 0.0
      %2163 = vmatpush1.msra.mxu0 0.0
      %2164 = vmatprep.subr.mxu0 0.0
      %2165 = vmatpush1.msra.mxu0 0.0
      %2166 = vmatprep.mubr.f32.mxu0 0.0
      %2167 = vmatmul.mubr.f32.gmra.mrb[0].mxu0 %v2088
      %v2168 = vpop.f32.mrb[0].mxu0
      %v2169 = vadd.f32 %v2085, %v2168
      %v2170 = vpop.f32.mrb[0].mxu0
      %2171 = vmatprep.mubr.f32.mxu0 0.0
      %2172 = vmatmul.mubr.f32.gmra.mrb[0].mxu0 %v2091
      %v2173 = vpop.f32.mrb[0].mxu0
      %v2174 = vadd.f32 %v2085, %v2173
      %v2175 = vpop.f32.mrb[0].mxu0
      %2176 = vmatprep.mubr.f32.mxu0 0.0
      %2177 = vmatmul.mubr.f32.gmra.mrb[0].mxu0 %v2094
      %v2178 = vpop.f32.mrb[0].mxu0
      %v2179 = vadd.f32 %v2085, %v2178
      %v2180 = vpop.f32.mrb[0].mxu0
      %2181 = vmatprep.mubr.f32.mxu0 0.0
      %2182 = vmatmul.mubr.f32.gmra.mrb[0].mxu0 %v2097
      %v2183 = vpop.f32.mrb[0].mxu0
      %v2184 = vadd.f32 %v2085, %v2183
      %v2185 = vpop.f32.mrb[0].mxu0
      %2186 = vmatprep.mubr.f32.mxu0 0.0
      %2187 = vmatmul.mubr.f32.gmra.mrb[0].mxu0 %v2100
      %v2188 = vpop.f32.mrb[0].mxu0
      %v2189 = vadd.f32 %v2085, %v2188
      %v2190 = vpop.f32.mrb[0].mxu0
      %2191 = vdwg.mxu0
      %v2192 = vmax.f32 %v2169, 0.0
      %v2193 = vmax.f32 %v2174, 0.0
      %v2194 = vmax.f32 %v2179, 0.0
      %v2195 = vmax.f32 %v2184, 0.0
      %v2196 = vmax.f32 %v2189, 0.0
      %v2198 = vsel %vm1189, %v2196, 0
      %2200 = vmatprep.subr.mxu0 0.0
      %2201 = vmatpush1.msra.mxu0 %v2192
      %2202 = vmatprep.subr.mxu0 0.0
      %2203 = vmatpush1.msra.mxu0 %v2193
      %2204 = vmatprep.subr.mxu0 0.0
      %2205 = vmatpush1.msra.mxu0 %v2194
      %2206 = vmatprep.subr.mxu0 0.0
      %2207 = vmatpush1.msra.mxu0 %v2195
      %2208 = vmatprep.subr.mxu0 0.0
      %2209 = vmatpush1.msra.mxu0 %v2198
      %2210 = vmatprep.subr.mxu0 0.0
      %2211 = vmatpush1.msra.mxu0 0.0
      %2212 = vmatprep.subr.mxu0 0.0
      %2213 = vmatpush1.msra.mxu0 0.0
      %2214 = vmatprep.subr.mxu0 0.0
      %2215 = vmatpush1.msra.mxu0 0.0
      %2216 = vmatprep.subr.mxu0 0.0
      %2217 = vmatpush1.msra.mxu0 0.0
      %2218 = vmatprep.subr.mxu0 0.0
      %2219 = vmatpush1.msra.mxu0 0.0
      %2220 = vmatprep.subr.mxu0 0.0
      %2221 = vmatpush1.msra.mxu0 0.0
      %2222 = vmatprep.subr.mxu0 0.0
      %2223 = vmatpush1.msra.mxu0 0.0
      %2224 = vmatprep.subr.mxu0 0.0
      %2225 = vmatpush1.msra.mxu0 0.0
      %2226 = vmatprep.subr.mxu0 0.0
      %2227 = vmatpush1.msra.mxu0 0.0
      %2228 = vmatprep.subr.mxu0 0.0
      %2229 = vmatpush1.msra.mxu0 0.0
      %2230 = vmatprep.subr.mxu0 0.0
      %2231 = vmatpush1.msra.mxu0 0.0
      %2232 = vmatprep.subr.mxu0 0.0
      %2233 = vmatpush1.msra.mxu0 0.0
      %2234 = vmatprep.subr.mxu0 0.0
      %2235 = vmatpush1.msra.mxu0 0.0
      %2236 = vmatprep.subr.mxu0 0.0
      %2237 = vmatpush1.msra.mxu0 0.0
      %2238 = vmatprep.subr.mxu0 0.0
      %2239 = vmatpush1.msra.mxu0 0.0
      %2240 = vmatprep.subr.mxu0 0.0
      %2241 = vmatpush1.msra.mxu0 0.0
      %2242 = vmatprep.subr.mxu0 0.0
      %2243 = vmatpush1.msra.mxu0 0.0
      %2244 = vmatprep.subr.mxu0 0.0
      %2245 = vmatpush1.msra.mxu0 0.0
      %2246 = vmatprep.subr.mxu0 0.0
      %2247 = vmatpush1.msra.mxu0 0.0
      %2248 = vmatprep.subr.mxu0 0.0
      %2249 = vmatpush1.msra.mxu0 0.0
      %2250 = vmatprep.subr.mxu0 0.0
      %2251 = vmatpush1.msra.mxu0 0.0
      %2252 = vmatprep.subr.mxu0 0.0
      %2253 = vmatpush1.msra.mxu0 0.0
      %2254 = vmatprep.subr.mxu0 0.0
      %2255 = vmatpush1.msra.mxu0 0.0
      %2256 = vmatprep.subr.mxu0 0.0
      %2257 = vmatpush1.msra.mxu0 0.0
      %2258 = vmatprep.subr.mxu0 0.0
      %2259 = vmatpush1.msra.mxu0 0.0
      %2260 = vmatprep.subr.mxu0 0.0
      %2261 = vmatpush1.msra.mxu0 0.0
      %2262 = vmatprep.subr.mxu0 0.0
      %2263 = vmatpush1.msra.mxu0 0.0
      %2264 = vmatprep.mubr.f32.mxu0 0.0
      %2265 = vmatmul.mubr.f32.gmra.mrb[0].mxu0 %v1969
      %v2266 = vpop.f32.mrb[0].mxu0
      %v2267 = vadd.f32 0.0, %v2266
      %v2268 = vpop.f32.mrb[0].mxu0
      %2269 = vmatprep.mubr.f32.mxu0 0.0
      %2270 = vmatmul.mubr.f32.gmra.mrb[0].mxu0 %v1972
      %v2271 = vpop.f32.mrb[0].mxu0
      %v2272 = vadd.f32 0.0, %v2271
      %v2273 = vpop.f32.mrb[0].mxu0
      %2274 = vmatprep.mubr.f32.mxu0 0.0
      %2275 = vmatmul.mubr.f32.gmra.mrb[0].mxu0 %v1975
      %v2276 = vpop.f32.mrb[0].mxu0
      %v2277 = vadd.f32 0.0, %v2276
      %v2278 = vpop.f32.mrb[0].mxu0
      %2279 = vmatprep.mubr.f32.mxu0 0.0
      %2280 = vmatmul.mubr.f32.gmra.mrb[0].mxu0 %v1978
      %v2281 = vpop.f32.mrb[0].mxu0
      %v2282 = vadd.f32 0.0, %v2281
      %v2283 = vpop.f32.mrb[0].mxu0
      %2284 = vmatprep.mubr.f32.mxu0 0.0
      %2285 = vmatmul.mubr.f32.gmra.mrb[0].mxu0 %v1981
      %v2286 = vpop.f32.mrb[0].mxu0
      %v2287 = vadd.f32 0.0, %v2286
      %v2288 = vpop.f32.mrb[0].mxu0
      %2289 = vdwg.mxu0
      %v2290 = vld [vmem:[%s11] sm:$0xff]
      %v2291 = vld [vmem:[%s11 + $0x8] sm:$0xff]
      %v2292 = vld [vmem:[%s11 + $0x10] sm:$0xff]
      %v2293 = vld [vmem:[%s11 + $0x18] sm:$0xff]
      %v2294 = vld [vmem:[%s11 + $0x20] sm:$0xff]
      %v2295 = vld [vmem:[%s11 + $0x28] sm:$0xff]
      %v2296 = vld [vmem:[%s11 + $0x30] sm:$0xff]
      %v2297 = vld [vmem:[%s11 + $0x38] sm:$0xff]
      %v2298 = vlaneseq
      %v2299 = vshrl.u32 %v2298, 7
      %v2300 = vsub.s32 1, %v2299
      %v2301 = vrot.slane %v145, %v2300
      %vm2302 = vcmask 523264
      %v2304 = vsel %vm2302, %v2267, 0
      %v2307 = vsel %vm2302, %v2272, 0
      %v2310 = vsel %vm2302, %v2277, 0
      %v2313 = vsel %vm2302, %v2282, 0
      %v2316 = vsel %vm2302, %v2287, 0
      %2318 = vmatprep.subr.mxu0 0.0
      %2319 = vmatpush1.msra.mxu0 %v2290
      %2320 = vmatprep.subr.mxu0 0.0
      %2321 = vmatpush1.msra.mxu0 %v2291
      %2322 = vmatprep.subr.mxu0 0.0
      %2323 = vmatpush1.msra.mxu0 %v2292
      %2324 = vmatprep.subr.mxu0 0.0
      %2325 = vmatpush1.msra.mxu0 %v2293
      %2326 = vmatprep.subr.mxu0 0.0
      %2327 = vmatpush1.msra.mxu0 %v2294
      %2328 = vmatprep.subr.mxu0 0.0
      %2329 = vmatpush1.msra.mxu0 %v2295
      %2330 = vmatprep.subr.mxu0 0.0
      %2331 = vmatpush1.msra.mxu0 %v2296
      %2332 = vmatprep.subr.mxu0 0.0
      %2333 = vmatpush1.msra.mxu0 %v2297
      %2334 = vmatprep.subr.mxu0 0.0
      %2335 = vmatpush1.msra.mxu0 0.0
      %2336 = vmatprep.subr.mxu0 0.0
      %2337 = vmatpush1.msra.mxu0 0.0
      %2338 = vmatprep.subr.mxu0 0.0
      %2339 = vmatpush1.msra.mxu0 0.0
      %2340 = vmatprep.subr.mxu0 0.0
      %2341 = vmatpush1.msra.mxu0 0.0
      %2342 = vmatprep.subr.mxu0 0.0
      %2343 = vmatpush1.msra.mxu0 0.0
      %2344 = vmatprep.subr.mxu0 0.0
      %2345 = vmatpush1.msra.mxu0 0.0
      %2346 = vmatprep.subr.mxu0 0.0
      %2347 = vmatpush1.msra.mxu0 0.0
      %2348 = vmatprep.subr.mxu0 0.0
      %2349 = vmatpush1.msra.mxu0 0.0
      %2350 = vmatprep.subr.mxu0 0.0
      %2351 = vmatpush1.msra.mxu0 0.0
      %2352 = vmatprep.subr.mxu0 0.0
      %2353 = vmatpush1.msra.mxu0 0.0
      %2354 = vmatprep.subr.mxu0 0.0
      %2355 = vmatpush1.msra.mxu0 0.0
      %2356 = vmatprep.subr.mxu0 0.0
      %2357 = vmatpush1.msra.mxu0 0.0
      %2358 = vmatprep.subr.mxu0 0.0
      %2359 = vmatpush1.msra.mxu0 0.0
      %2360 = vmatprep.subr.mxu0 0.0
      %2361 = vmatpush1.msra.mxu0 0.0
      %2362 = vmatprep.subr.mxu0 0.0
      %2363 = vmatpush1.msra.mxu0 0.0
      %2364 = vmatprep.subr.mxu0 0.0
      %2365 = vmatpush1.msra.mxu0 0.0
      %2366 = vmatprep.subr.mxu0 0.0
      %2367 = vmatpush1.msra.mxu0 0.0
      %2368 = vmatprep.subr.mxu0 0.0
      %2369 = vmatpush1.msra.mxu0 0.0
      %2370 = vmatprep.subr.mxu0 0.0
      %2371 = vmatpush1.msra.mxu0 0.0
      %2372 = vmatprep.subr.mxu0 0.0
      %2373 = vmatpush1.msra.mxu0 0.0
      %2374 = vmatprep.subr.mxu0 0.0
      %2375 = vmatpush1.msra.mxu0 0.0
      %2376 = vmatprep.subr.mxu0 0.0
      %2377 = vmatpush1.msra.mxu0 0.0
      %2378 = vmatprep.subr.mxu0 0.0
      %2379 = vmatpush1.msra.mxu0 0.0
      %2380 = vmatprep.subr.mxu0 0.0
      %2381 = vmatpush1.msra.mxu0 0.0
      %2382 = vmatprep.mubr.f32.mxu0 0.0
      %2383 = vmatmul.mubr.f32.gmra.mrb[0].mxu0 %v2304
      %v2384 = vpop.f32.mrb[0].mxu0
      %v2385 = vadd.f32 %v2301, %v2384
      %v2386 = vpop.f32.mrb[0].mxu0
      %2387 = vmatprep.mubr.f32.mxu0 0.0
      %2388 = vmatmul.mubr.f32.gmra.mrb[0].mxu0 %v2307
      %v2389 = vpop.f32.mrb[0].mxu0
      %v2390 = vadd.f32 %v2301, %v2389
      %v2391 = vpop.f32.mrb[0].mxu0
      %2392 = vmatprep.mubr.f32.mxu0 0.0
      %2393 = vmatmul.mubr.f32.gmra.mrb[0].mxu0 %v2310
      %v2394 = vpop.f32.mrb[0].mxu0
      %v2395 = vadd.f32 %v2301, %v2394
      %v2396 = vpop.f32.mrb[0].mxu0
      %2397 = vmatprep.mubr.f32.mxu0 0.0
      %2398 = vmatmul.mubr.f32.gmra.mrb[0].mxu0 %v2313
      %v2399 = vpop.f32.mrb[0].mxu0
      %v2400 = vadd.f32 %v2301, %v2399
      %v2401 = vpop.f32.mrb[0].mxu0
      %2402 = vmatprep.mubr.f32.mxu0 0.0
      %2403 = vmatmul.mubr.f32.gmra.mrb[0].mxu0 %v2316
      %v2404 = vpop.f32.mrb[0].mxu0
      %v2405 = vadd.f32 %v2301, %v2404
      %v2406 = vpop.f32.mrb[0].mxu0
      %2407 = vdwg.mxu0
      %v2408 = vadd.f32 %v1840, %v2385
      %v2409 = vadd.f32 %v1841, %v2390
      %v2410 = vadd.f32 %v1842, %v2395
      %v2411 = vadd.f32 %v1843, %v2400
      %v2412 = vadd.f32 %v1844, %v2405
      %v2413 = vld [vmem:[%s13] sm:$0xff]
      %v2414 = vld [vmem:[%s13 + $0x8] sm:$0xff]
      %v2415 = vld [vmem:[%s13 + $0x10] sm:$0xff]
      %v2416 = vld [vmem:[%s13 + $0x18] sm:$0xff]
      %v2417 = vld [vmem:[%s13 + $0x20] sm:$0xff]
      %v2418 = vld [vmem:[%s13 + $0x28] sm:$0xff]
      %v2419 = vld [vmem:[%s13 + $0x30] sm:$0xff]
      %v2420 = vld [vmem:[%s13 + $0x38] sm:$0xff]
      %v2422 = vsel %vm62, %v2408, 0
      %v2425 = vsel %vm62, %v2409, 0
      %v2428 = vsel %vm62, %v2410, 0
      %v2431 = vsel %vm62, %v2411, 0
      %v2434 = vsel %vm62, %v2412, 0
      %2436 = vmatprep.subr.mxu0 0.0
      %2437 = vmatpush1.msra.mxu0 %v2413
      %2438 = vmatprep.subr.mxu0 0.0
      %2439 = vmatpush1.msra.mxu0 %v2414
      %2440 = vmatprep.subr.mxu0 0.0
      %2441 = vmatpush1.msra.mxu0 %v2415
      %2442 = vmatprep.subr.mxu0 0.0
      %2443 = vmatpush1.msra.mxu0 %v2416
      %2444 = vmatprep.subr.mxu0 0.0
      %2445 = vmatpush1.msra.mxu0 0.0
      %2446 = vmatprep.subr.mxu0 0.0
      %2447 = vmatpush1.msra.mxu0 0.0
      %2448 = vmatprep.subr.mxu0 0.0
      %2449 = vmatpush1.msra.mxu0 0.0
      %2450 = vmatprep.subr.mxu0 0.0
      %2451 = vmatpush1.msra.mxu0 0.0
      %2452 = vmatprep.subr.mxu0 0.0
      %2453 = vmatpush1.msra.mxu0 0.0
      %2454 = vmatprep.subr.mxu0 0.0
      %2455 = vmatpush1.msra.mxu0 0.0
      %2456 = vmatprep.subr.mxu0 0.0
      %2457 = vmatpush1.msra.mxu0 0.0
      %2458 = vmatprep.subr.mxu0 0.0
      %2459 = vmatpush1.msra.mxu0 0.0
      %2460 = vmatprep.subr.mxu0 0.0
      %2461 = vmatpush1.msra.mxu0 0.0
      %2462 = vmatprep.subr.mxu0 0.0
      %2463 = vmatpush1.msra.mxu0 0.0
      %2464 = vmatprep.subr.mxu0 0.0
      %2465 = vmatpush1.msra.mxu0 0.0
      %2466 = vmatprep.subr.mxu0 0.0
      %2467 = vmatpush1.msra.mxu0 0.0
      %2468 = vmatprep.subr.mxu0 0.0
      %2469 = vmatpush1.msra.mxu0 0.0
      %2470 = vmatprep.subr.mxu0 0.0
      %2471 = vmatpush1.msra.mxu0 0.0
      %2472 = vmatprep.subr.mxu0 0.0
      %2473 = vmatpush1.msra.mxu0 0.0
      %2474 = vmatprep.subr.mxu0 0.0
      %2475 = vmatpush1.msra.mxu0 0.0
      %2476 = vmatprep.subr.mxu0 0.0
      %2477 = vmatpush1.msra.mxu0 0.0
      %2478 = vmatprep.subr.mxu0 0.0
      %2479 = vmatpush1.msra.mxu0 0.0
      %2480 = vmatprep.subr.mxu0 0.0
      %2481 = vmatpush1.msra.mxu0 0.0
      %2482 = vmatprep.subr.mxu0 0.0
      %2483 = vmatpush1.msra.mxu0 0.0
      %2484 = vmatprep.subr.mxu0 0.0
      %2485 = vmatpush1.msra.mxu0 0.0
      %2486 = vmatprep.subr.mxu0 0.0
      %2487 = vmatpush1.msra.mxu0 0.0
      %2488 = vmatprep.subr.mxu0 0.0
      %2489 = vmatpush1.msra.mxu0 0.0
      %2490 = vmatprep.subr.mxu0 0.0
      %2491 = vmatpush1.msra.mxu0 0.0
      %2492 = vmatprep.subr.mxu0 0.0
      %2493 = vmatpush1.msra.mxu0 0.0
      %2494 = vmatprep.subr.mxu0 0.0
      %2495 = vmatpush1.msra.mxu0 0.0
      %2496 = vmatprep.subr.mxu0 0.0
      %2497 = vmatpush1.msra.mxu0 0.0
      %2498 = vmatprep.subr.mxu0 0.0
      %2499 = vmatpush1.msra.mxu0 0.0
      %2500 = vmatprep.mubr.f32.mxu0 0.0
      %2501 = vmatmul.mubr.f32.gmra.mrb[0].mxu0 %v2422
      %v2502 = vpop.f32.mrb[0].mxu0
      %v2503 = vadd.f32 0.0, %v2502
      %v2504 = vpop.f32.mrb[0].mxu0
      %2505 = vmatprep.mubr.f32.mxu0 0.0
      %2506 = vmatmul.mubr.f32.gmra.mrb[0].mxu0 %v2425
      %v2507 = vpop.f32.mrb[0].mxu0
      %v2508 = vadd.f32 0.0, %v2507
      %v2509 = vpop.f32.mrb[0].mxu0
      %2510 = vmatprep.mubr.f32.mxu0 0.0
      %2511 = vmatmul.mubr.f32.gmra.mrb[0].mxu0 %v2428
      %v2512 = vpop.f32.mrb[0].mxu0
      %v2513 = vadd.f32 0.0, %v2512
      %v2514 = vpop.f32.mrb[0].mxu0
      %2515 = vmatprep.mubr.f32.mxu0 0.0
      %2516 = vmatmul.mubr.f32.gmra.mrb[0].mxu0 %v2431
      %v2517 = vpop.f32.mrb[0].mxu0
      %v2518 = vadd.f32 0.0, %v2517
      %v2519 = vpop.f32.mrb[0].mxu0
      %2520 = vmatprep.mubr.f32.mxu0 0.0
      %2521 = vmatmul.mubr.f32.gmra.mrb[0].mxu0 %v2434
      %v2522 = vpop.f32.mrb[0].mxu0
      %v2523 = vadd.f32 0.0, %v2522
      %v2524 = vpop.f32.mrb[0].mxu0
      %2525 = vdwg.mxu0
      %2531 = vrot.lane.b32.xlu0 %v2503, 96
      %v2532 = vpop.permute.xlu0 %2531
      %2533 = vrot.lane.b32.xlu0 %v2508, 96
      %v2534 = vpop.permute.xlu0 %2533
      %2535 = vrot.lane.b32.xlu0 %v2513, 96
      %v2536 = vpop.permute.xlu0 %2535
      %2537 = vrot.lane.b32.xlu0 %v2518, 96
      %v2538 = vpop.permute.xlu0 %2537
      %2539 = vrot.lane.b32.xlu0 %v2523, 96
      %v2540 = vpop.permute.xlu0 %2539
      %v2546 = vsel %vm938, %v52, 0
      %v2549 = vsel %vm938, %v53, 0
      %v2552 = vsel %vm938, %v54, 0
      %v2555 = vsel %vm938, %v55, 0
      %v2558 = vsel %vm938, %v56, 0
      %v2560 = vsel %vm1189, %v2540, 0
      %2562 = vmatprep.subr.mxu0 0.0
      %2563 = vmatpush1.msra.mxu0 %v2532
      %2564 = vmatprep.subr.mxu0 0.0
      %2565 = vmatpush1.msra.mxu0 %v2534
      %2566 = vmatprep.subr.mxu0 0.0
      %2567 = vmatpush1.msra.mxu0 %v2536
      %2568 = vmatprep.subr.mxu0 0.0
      %2569 = vmatpush1.msra.mxu0 %v2538
      %2570 = vmatprep.subr.mxu0 0.0
      %2571 = vmatpush1.msra.mxu0 %v2560
      %2572 = vmatprep.subr.mxu0 0.0
      %2573 = vmatpush1.msra.mxu0 0.0
      %2574 = vmatprep.subr.mxu0 0.0
      %2575 = vmatpush1.msra.mxu0 0.0
      %2576 = vmatprep.subr.mxu0 0.0
      %2577 = vmatpush1.msra.mxu0 0.0
      %2578 = vmatprep.subr.mxu0 0.0
      %2579 = vmatpush1.msra.mxu0 0.0
      %2580 = vmatprep.subr.mxu0 0.0
      %2581 = vmatpush1.msra.mxu0 0.0
      %2582 = vmatprep.subr.mxu0 0.0
      %2583 = vmatpush1.msra.mxu0 0.0
      %2584 = vmatprep.subr.mxu0 0.0
      %2585 = vmatpush1.msra.mxu0 0.0
      %2586 = vmatprep.subr.mxu0 0.0
      %2587 = vmatpush1.msra.mxu0 0.0
      %2588 = vmatprep.subr.mxu0 0.0
      %2589 = vmatpush1.msra.mxu0 0.0
      %2590 = vmatprep.subr.mxu0 0.0
      %2591 = vmatpush1.msra.mxu0 0.0
      %2592 = vmatprep.subr.mxu0 0.0
      %2593 = vmatpush1.msra.mxu0 0.0
      %2594 = vmatprep.subr.mxu0 0.0
      %2595 = vmatpush1.msra.mxu0 0.0
      %2596 = vmatprep.subr.mxu0 0.0
      %2597 = vmatpush1.msra.mxu0 0.0
      %2598 = vmatprep.subr.mxu0 0.0
      %2599 = vmatpush1.msra.mxu0 0.0
      %2600 = vmatprep.subr.mxu0 0.0
      %2601 = vmatpush1.msra.mxu0 0.0
      %2602 = vmatprep.subr.mxu0 0.0
      %2603 = vmatpush1.msra.mxu0 0.0
      %2604 = vmatprep.subr.mxu0 0.0
      %2605 = vmatpush1.msra.mxu0 0.0
      %2606 = vmatprep.subr.mxu0 0.0
      %2607 = vmatpush1.msra.mxu0 0.0
      %2608 = vmatprep.subr.mxu0 0.0
      %2609 = vmatpush1.msra.mxu0 0.0
      %2610 = vmatprep.subr.mxu0 0.0
      %2611 = vmatpush1.msra.mxu0 0.0
      %2612 = vmatprep.subr.mxu0 0.0
      %2613 = vmatpush1.msra.mxu0 0.0
      %2614 = vmatprep.subr.mxu0 0.0
      %2615 = vmatpush1.msra.mxu0 0.0
      %2616 = vmatprep.subr.mxu0 0.0
      %2617 = vmatpush1.msra.mxu0 0.0
      %2618 = vmatprep.subr.mxu0 0.0
      %2619 = vmatpush1.msra.mxu0 0.0
      %2620 = vmatprep.subr.mxu0 0.0
      %2621 = vmatpush1.msra.mxu0 0.0
      %2622 = vmatprep.subr.mxu0 0.0
      %2623 = vmatpush1.msra.mxu0 0.0
      %2624 = vmatprep.subr.mxu0 0.0
      %2625 = vmatpush1.msra.mxu0 0.0
      %2626 = vmatprep.mubr.f32.mxu0 0.0
      %2627 = vmatmul.mubr.f32.gmra.mrb[0].mxu0 %v2546
      %v2628 = vpop.f32.mrb[0].mxu0
      %v2629 = vadd.f32 0.0, %v2628
      %v2630 = vpop.f32.mrb[0].mxu0
      %2631 = vmatprep.mubr.f32.mxu0 0.0
      %2632 = vmatmul.mubr.f32.gmra.mrb[0].mxu0 %v2549
      %v2633 = vpop.f32.mrb[0].mxu0
      %v2634 = vadd.f32 0.0, %v2633
      %v2635 = vpop.f32.mrb[0].mxu0
      %2636 = vmatprep.mubr.f32.mxu0 0.0
      %2637 = vmatmul.mubr.f32.gmra.mrb[0].mxu0 %v2552
      %v2638 = vpop.f32.mrb[0].mxu0
      %v2639 = vadd.f32 0.0, %v2638
      %v2640 = vpop.f32.mrb[0].mxu0
      %2641 = vmatprep.mubr.f32.mxu0 0.0
      %2642 = vmatmul.mubr.f32.gmra.mrb[0].mxu0 %v2555
      %v2643 = vpop.f32.mrb[0].mxu0
      %v2644 = vadd.f32 0.0, %v2643
      %v2645 = vpop.f32.mrb[0].mxu0
      %2646 = vmatprep.mubr.f32.mxu0 0.0
      %2647 = vmatmul.mubr.f32.gmra.mrb[0].mxu0 %v2558
      %v2648 = vpop.f32.mrb[0].mxu0
      %v2649 = vadd.f32 0.0, %v2648
      %v2650 = vpop.f32.mrb[0].mxu0
      %2651 = vdwg.mxu0
      %v2652 = vadd.f32 %v2503, %v2629
      %v2653 = vadd.f32 %v2508, %v2634
      %v2654 = vadd.f32 %v2513, %v2639
      %v2655 = vadd.f32 %v2518, %v2644
      %v2656 = vadd.f32 %v2523, %v2649
      %v2657 = vlaneseq
      %v2658 = vshrl.u32 %v2657, 7
      %v2659 = vsub.s32 2, %v2658
      %v2660 = vrot.slane %v145, %v2659
      %v2661 = vadd.f32 %v2652, %v2660
      %v2662 = vadd.f32 %v2653, %v2660
      %v2663 = vadd.f32 %v2654, %v2660
      %v2664 = vadd.f32 %v2655, %v2660
      %v2665 = vadd.f32 %v2656, %v2660
      %v2666 = vmax.f32 %v2661, 0.0
      %v2667 = vmax.f32 %v2662, 0.0
      %v2668 = vmax.f32 %v2663, 0.0
      %v2669 = vmax.f32 %v2664, 0.0
      %v2670 = vmax.f32 %v2665, 0.0
      %v2671 = vld [vmem:[%s2] sm:$0xff]
      %v2672 = vld [vmem:[%s2 + $0x8] sm:$0xff]
      %v2673 = vld [vmem:[%s2 + $0x10] sm:$0xff]
      %v2674 = vld [vmem:[%s2 + $0x18] sm:$0xff]
      %v2675 = vld [vmem:[%s2 + $0x20] sm:$0x3]
      %v2676 = vadd.f32 %v2666, %v2671
      %v2677 = vadd.f32 %v2667, %v2672
      %v2678 = vadd.f32 %v2668, %v2673
      %v2679 = vadd.f32 %v2669, %v2674
      %v2680 = vadd.f32 %v2670, %v2675
      %v2682 = vsel %vm62, %v2676, 0
      %v2685 = vsel %vm62, %v2677, 0
      %v2688 = vsel %vm62, %v2678, 0
      %v2691 = vsel %vm62, %v2679, 0
      %v2694 = vsel %vm62, %v2680, 0
      %2696 = vmatprep.subr.mxu0 0.0
      %2697 = vmatpush1.msra.mxu0 %v2417
      %2698 = vmatprep.subr.mxu0 0.0
      %2699 = vmatpush1.msra.mxu0 %v2418
      %2700 = vmatprep.subr.mxu0 0.0
      %2701 = vmatpush1.msra.mxu0 %v2419
      %2702 = vmatprep.subr.mxu0 0.0
      %2703 = vmatpush1.msra.mxu0 %v2420
      %2704 = vmatprep.subr.mxu0 0.0
      %2705 = vmatpush1.msra.mxu0 0.0
      %2706 = vmatprep.subr.mxu0 0.0
      %2707 = vmatpush1.msra.mxu0 0.0
      %2708 = vmatprep.subr.mxu0 0.0
      %2709 = vmatpush1.msra.mxu0 0.0
      %2710 = vmatprep.subr.mxu0 0.0
      %2711 = vmatpush1.msra.mxu0 0.0
      %2712 = vmatprep.subr.mxu0 0.0
      %2713 = vmatpush1.msra.mxu0 0.0
      %2714 = vmatprep.subr.mxu0 0.0
      %2715 = vmatpush1.msra.mxu0 0.0
      %2716 = vmatprep.subr.mxu0 0.0
      %2717 = vmatpush1.msra.mxu0 0.0
      %2718 = vmatprep.subr.mxu0 0.0
      %2719 = vmatpush1.msra.mxu0 0.0
      %2720 = vmatprep.subr.mxu0 0.0
      %2721 = vmatpush1.msra.mxu0 0.0
      %2722 = vmatprep.subr.mxu0 0.0
      %2723 = vmatpush1.msra.mxu0 0.0
      %2724 = vmatprep.subr.mxu0 0.0
      %2725 = vmatpush1.msra.mxu0 0.0
      %2726 = vmatprep.subr.mxu0 0.0
      %2727 = vmatpush1.msra.mxu0 0.0
      %2728 = vmatprep.subr.mxu0 0.0
      %2729 = vmatpush1.msra.mxu0 0.0
      %2730 = vmatprep.subr.mxu0 0.0
      %2731 = vmatpush1.msra.mxu0 0.0
      %2732 = vmatprep.subr.mxu0 0.0
      %2733 = vmatpush1.msra.mxu0 0.0
      %2734 = vmatprep.subr.mxu0 0.0
      %2735 = vmatpush1.msra.mxu0 0.0
      %2736 = vmatprep.subr.mxu0 0.0
      %2737 = vmatpush1.msra.mxu0 0.0
      %2738 = vmatprep.subr.mxu0 0.0
      %2739 = vmatpush1.msra.mxu0 0.0
      %2740 = vmatprep.subr.mxu0 0.0
      %2741 = vmatpush1.msra.mxu0 0.0
      %2742 = vmatprep.subr.mxu0 0.0
      %2743 = vmatpush1.msra.mxu0 0.0
      %2744 = vmatprep.subr.mxu0 0.0
      %2745 = vmatpush1.msra.mxu0 0.0
      %2746 = vmatprep.subr.mxu0 0.0
      %2747 = vmatpush1.msra.mxu0 0.0
      %2748 = vmatprep.subr.mxu0 0.0
      %2749 = vmatpush1.msra.mxu0 0.0
      %2750 = vmatprep.subr.mxu0 0.0
      %2751 = vmatpush1.msra.mxu0 0.0
      %2752 = vmatprep.subr.mxu0 0.0
      %2753 = vmatpush1.msra.mxu0 0.0
      %2754 = vmatprep.subr.mxu0 0.0
      %2755 = vmatpush1.msra.mxu0 0.0
      %2756 = vmatprep.subr.mxu0 0.0
      %2757 = vmatpush1.msra.mxu0 0.0
      %2758 = vmatprep.subr.mxu0 0.0
      %2759 = vmatpush1.msra.mxu0 0.0
      %2760 = vmatprep.mubr.f32.mxu0 0.0
      %2761 = vmatmul.mubr.f32.gmra.mrb[0].mxu0 %v2682
      %v2762 = vpop.f32.mrb[0].mxu0
      %v2763 = vadd.f32 0.0, %v2762
      %v2764 = vpop.f32.mrb[0].mxu0
      %2765 = vmatprep.mubr.f32.mxu0 0.0
      %2766 = vmatmul.mubr.f32.gmra.mrb[0].mxu0 %v2685
      %v2767 = vpop.f32.mrb[0].mxu0
      %v2768 = vadd.f32 0.0, %v2767
      %v2769 = vpop.f32.mrb[0].mxu0
      %2770 = vmatprep.mubr.f32.mxu0 0.0
      %2771 = vmatmul.mubr.f32.gmra.mrb[0].mxu0 %v2688
      %v2772 = vpop.f32.mrb[0].mxu0
      %v2773 = vadd.f32 0.0, %v2772
      %v2774 = vpop.f32.mrb[0].mxu0
      %2775 = vmatprep.mubr.f32.mxu0 0.0
      %2776 = vmatmul.mubr.f32.gmra.mrb[0].mxu0 %v2691
      %v2777 = vpop.f32.mrb[0].mxu0
      %v2778 = vadd.f32 0.0, %v2777
      %v2779 = vpop.f32.mrb[0].mxu0
      %2780 = vmatprep.mubr.f32.mxu0 0.0
      %2781 = vmatmul.mubr.f32.gmra.mrb[0].mxu0 %v2694
      %v2782 = vpop.f32.mrb[0].mxu0
      %v2783 = vadd.f32 0.0, %v2782
      %v2784 = vpop.f32.mrb[0].mxu0
      %2785 = vdwg.mxu0
      %2791 = vrot.lane.b32.xlu0 %v2763, 96
      %v2792 = vpop.permute.xlu0 %2791
      %2793 = vrot.lane.b32.xlu0 %v2768, 96
      %v2794 = vpop.permute.xlu0 %2793
      %2795 = vrot.lane.b32.xlu0 %v2773, 96
      %v2796 = vpop.permute.xlu0 %2795
      %2797 = vrot.lane.b32.xlu0 %v2778, 96
      %v2798 = vpop.permute.xlu0 %2797
      %2799 = vrot.lane.b32.xlu0 %v2783, 96
      %v2800 = vpop.permute.xlu0 %2799
      %v2805 = vsel %vm1189, %v2800, 0
      %2807 = vmatprep.subr.mxu0 0.0
      %2808 = vmatpush1.msra.mxu0 %v2792
      %2809 = vmatprep.subr.mxu0 0.0
      %2810 = vmatpush1.msra.mxu0 %v2794
      %2811 = vmatprep.subr.mxu0 0.0
      %2812 = vmatpush1.msra.mxu0 %v2796
      %2813 = vmatprep.subr.mxu0 0.0
      %2814 = vmatpush1.msra.mxu0 %v2798
      %2815 = vmatprep.subr.mxu0 0.0
      %2816 = vmatpush1.msra.mxu0 %v2805
      %2817 = vmatprep.subr.mxu0 0.0
      %2818 = vmatpush1.msra.mxu0 0.0
      %2819 = vmatprep.subr.mxu0 0.0
      %2820 = vmatpush1.msra.mxu0 0.0
      %2821 = vmatprep.subr.mxu0 0.0
      %2822 = vmatpush1.msra.mxu0 0.0
      %2823 = vmatprep.subr.mxu0 0.0
      %2824 = vmatpush1.msra.mxu0 0.0
      %2825 = vmatprep.subr.mxu0 0.0
      %2826 = vmatpush1.msra.mxu0 0.0
      %2827 = vmatprep.subr.mxu0 0.0
      %2828 = vmatpush1.msra.mxu0 0.0
      %2829 = vmatprep.subr.mxu0 0.0
      %2830 = vmatpush1.msra.mxu0 0.0
      %2831 = vmatprep.subr.mxu0 0.0
      %2832 = vmatpush1.msra.mxu0 0.0
      %2833 = vmatprep.subr.mxu0 0.0
      %2834 = vmatpush1.msra.mxu0 0.0
      %2835 = vmatprep.subr.mxu0 0.0
      %2836 = vmatpush1.msra.mxu0 0.0
      %2837 = vmatprep.subr.mxu0 0.0
      %2838 = vmatpush1.msra.mxu0 0.0
      %2839 = vmatprep.subr.mxu0 0.0
      %2840 = vmatpush1.msra.mxu0 0.0
      %2841 = vmatprep.subr.mxu0 0.0
      %2842 = vmatpush1.msra.mxu0 0.0
      %2843 = vmatprep.subr.mxu0 0.0
      %2844 = vmatpush1.msra.mxu0 0.0
      %2845 = vmatprep.subr.mxu0 0.0
      %2846 = vmatpush1.msra.mxu0 0.0
      %2847 = vmatprep.subr.mxu0 0.0
      %2848 = vmatpush1.msra.mxu0 0.0
      %2849 = vmatprep.subr.mxu0 0.0
      %2850 = vmatpush1.msra.mxu0 0.0
      %2851 = vmatprep.subr.mxu0 0.0
      %2852 = vmatpush1.msra.mxu0 0.0
      %2853 = vmatprep.subr.mxu0 0.0
      %2854 = vmatpush1.msra.mxu0 0.0
      %2855 = vmatprep.subr.mxu0 0.0
      %2856 = vmatpush1.msra.mxu0 0.0
      %2857 = vmatprep.subr.mxu0 0.0
      %2858 = vmatpush1.msra.mxu0 0.0
      %2859 = vmatprep.subr.mxu0 0.0
      %2860 = vmatpush1.msra.mxu0 0.0
      %2861 = vmatprep.subr.mxu0 0.0
      %2862 = vmatpush1.msra.mxu0 0.0
      %2863 = vmatprep.subr.mxu0 0.0
      %2864 = vmatpush1.msra.mxu0 0.0
      %2865 = vmatprep.subr.mxu0 0.0
      %2866 = vmatpush1.msra.mxu0 0.0
      %2867 = vmatprep.subr.mxu0 0.0
      %2868 = vmatpush1.msra.mxu0 0.0
      %2869 = vmatprep.subr.mxu0 0.0
      %2870 = vmatpush1.msra.mxu0 0.0
      %2871 = vmatprep.mubr.f32.mxu0 0.0
      %2872 = vmatmul.mubr.f32.gmra.mrb[0].mxu0 %v2546
      %v2873 = vpop.f32.mrb[0].mxu0
      %v2874 = vadd.f32 0.0, %v2873
      %v2875 = vpop.f32.mrb[0].mxu0
      %2876 = vmatprep.mubr.f32.mxu0 0.0
      %2877 = vmatmul.mubr.f32.gmra.mrb[0].mxu0 %v2549
      %v2878 = vpop.f32.mrb[0].mxu0
      %v2879 = vadd.f32 0.0, %v2878
      %v2880 = vpop.f32.mrb[0].mxu0
      %2881 = vmatprep.mubr.f32.mxu0 0.0
      %2882 = vmatmul.mubr.f32.gmra.mrb[0].mxu0 %v2552
      %v2883 = vpop.f32.mrb[0].mxu0
      %v2884 = vadd.f32 0.0, %v2883
      %v2885 = vpop.f32.mrb[0].mxu0
      %2886 = vmatprep.mubr.f32.mxu0 0.0
      %2887 = vmatmul.mubr.f32.gmra.mrb[0].mxu0 %v2555
      %v2888 = vpop.f32.mrb[0].mxu0
      %v2889 = vadd.f32 0.0, %v2888
      %v2890 = vpop.f32.mrb[0].mxu0
      %2891 = vmatprep.mubr.f32.mxu0 0.0
      %2892 = vmatmul.mubr.f32.gmra.mrb[0].mxu0 %v2558
      %v2893 = vpop.f32.mrb[0].mxu0
      %v2894 = vadd.f32 0.0, %v2893
      %v2895 = vpop.f32.mrb[0].mxu0
      %2896 = vdwg.mxu0
      %v2897 = vadd.f32 %v2763, %v2874
      %v2898 = vadd.f32 %v2768, %v2879
      %v2899 = vadd.f32 %v2773, %v2884
      %v2900 = vadd.f32 %v2778, %v2889
      %v2901 = vadd.f32 %v2783, %v2894
      %v2902 = vlaneseq
      %v2903 = vshrl.u32 %v2902, 7
      %v2904 = vsub.s32 3, %v2903
      %v2905 = vrot.slane %v145, %v2904
      %v2906 = vadd.f32 %v2897, %v2905
      %v2907 = vadd.f32 %v2898, %v2905
      %v2908 = vadd.f32 %v2899, %v2905
      %v2909 = vadd.f32 %v2900, %v2905
      %v2910 = vadd.f32 %v2901, %v2905
      %v2911 = vmax.f32 %v2906, 0.0
      %v2912 = vmax.f32 %v2907, 0.0
      %v2913 = vmax.f32 %v2908, 0.0
      %v2914 = vmax.f32 %v2909, 0.0
      %v2915 = vmax.f32 %v2910, 0.0
      %v2916 = vadd.f32 %v2408, %v2911
      %v2917 = vadd.f32 %v2409, %v2912
      %v2918 = vadd.f32 %v2410, %v2913
      %v2919 = vadd.f32 %v2411, %v2914
      %v2920 = vadd.f32 %v2412, %v2915
      %s2921 = scalar_lea.vmem %s5, 4
      %v2922 = vld [vmem:[%s2921] sm:$0xf]
      %s2923 = scalar_lea.vmem %s12, 4
      %v2924 = vld [vmem:[%s2923] sm:$0xf]
      %v2925 = vsel %vm62, %v2916, 0.0
      %2926 = vadd.xlane.f32.xlu0 %v2925
      %v2927 = vpop.xlane.xlu0 %2926
      %v2928 = vsel %vm62, %v2917, 0.0
      %2929 = vadd.xlane.f32.xlu0 %v2928
      %v2930 = vpop.xlane.xlu0 %2929
      %v2931 = vsel %vm62, %v2918, 0.0
      %2932 = vadd.xlane.f32.xlu0 %v2931
      %v2933 = vpop.xlane.xlu0 %2932
      %v2934 = vsel %vm62, %v2919, 0.0
      %2935 = vadd.xlane.f32.xlu0 %v2934
      %v2936 = vpop.xlane.xlu0 %2935
      %v2937 = vsel %vm67, %v2920, 0.0
      %2938 = vadd.xlane.f32.xlu0 %v2937
      %v2939 = vpop.xlane.xlu0 %2938
      %v2940 = vmul.f32 %v2927, %v161
      %v2941 = vmul.f32 %v2930, %v161
      %v2942 = vmul.f32 %v2933, %v161
      %v2943 = vmul.f32 %v2936, %v161
      %v2944 = vmul.f32 %v2939, %v161
      %v2945 = vsub.f32 %v2916, %v2940
      %v2946 = vsub.f32 %v2917, %v2941
      %v2947 = vsub.f32 %v2918, %v2942
      %v2948 = vsub.f32 %v2919, %v2943
      %v2949 = vsub.f32 %v2920, %v2944
      %v2950 = vmul.f32 %v2945, %v2945
      %v2951 = vmul.f32 %v2946, %v2946
      %v2952 = vmul.f32 %v2947, %v2947
      %v2953 = vmul.f32 %v2948, %v2948
      %v2954 = vmul.f32 %v2949, %v2949
      %v2955 = vsel %vm62, %v2950, 0.0
      %2956 = vadd.xlane.f32.xlu0 %v2955
      %v2957 = vpop.xlane.xlu0 %2956
      %v2958 = vsel %vm62, %v2951, 0.0
      %2959 = vadd.xlane.f32.xlu0 %v2958
      %v2960 = vpop.xlane.xlu0 %2959
      %v2961 = vsel %vm62, %v2952, 0.0
      %2962 = vadd.xlane.f32.xlu0 %v2961
      %v2963 = vpop.xlane.xlu0 %2962
      %v2964 = vsel %vm62, %v2953, 0.0
      %2965 = vadd.xlane.f32.xlu0 %v2964
      %v2966 = vpop.xlane.xlu0 %2965
      %v2967 = vsel %vm67, %v2954, 0.0
      %2968 = vadd.xlane.f32.xlu0 %v2967
      %v2969 = vpop.xlane.xlu0 %2968
      %v2970 = vmul.f32 %v2957, %v192
      %v2971 = vmul.f32 %v2960, %v192
      %v2972 = vmul.f32 %v2963, %v192
      %v2973 = vmul.f32 %v2966, %v192
      %v2974 = vmul.f32 %v2969, %v192
      %v2975 = vlaneseq
      %v2976 = vshrl.u32 %v2975, 7
      %v2977 = vsub.s32 0, %v2976
      %v2978 = vrot.slane %v2922, %v2977
      %v2979 = vmul.f32 %v2978, %v2945
      %v2980 = vmul.f32 %v2978, %v2946
      %v2981 = vmul.f32 %v2978, %v2947
      %v2982 = vmul.f32 %v2978, %v2948
      %v2983 = vmul.f32 %v2978, %v2949
      %v2984 = vrsqrt.pop %v2970
      %v2985 = vmul.f32 %v2970, %v2984
      %vm2986 = vcmp.eq.f32.partialorder %v2970, inf
      %v2987 = vsel %vm2986, %v2970, %v2985
      %vm2988 = vcmp.eq.f32.partialorder %v2970, 0.0
      %v2989 = vand.u32 %v2970, 2147483648
      %v2990 = vsel %vm2988, %v2989, %v2987
      %v2991 = vrsqrt.pop %v2971
      %v2992 = vmul.f32 %v2971, %v2991
      %vm2993 = vcmp.eq.f32.partialorder %v2971, inf
      %v2994 = vsel %vm2993, %v2971, %v2992
      %vm2995 = vcmp.eq.f32.partialorder %v2971, 0.0
      %v2996 = vand.u32 %v2971, 2147483648
      %v2997 = vsel %vm2995, %v2996, %v2994
      %v2998 = vrsqrt.pop %v2972
      %v2999 = vmul.f32 %v2972, %v2998
      %vm3000 = vcmp.eq.f32.partialorder %v2972, inf
      %v3001 = vsel %vm3000, %v2972, %v2999
      %vm3002 = vcmp.eq.f32.partialorder %v2972, 0.0
      %v3003 = vand.u32 %v2972, 2147483648
      %v3004 = vsel %vm3002, %v3003, %v3001
      %v3005 = vrsqrt.pop %v2973
      %v3006 = vmul.f32 %v2973, %v3005
      %vm3007 = vcmp.eq.f32.partialorder %v2973, inf
      %v3008 = vsel %vm3007, %v2973, %v3006
      %vm3009 = vcmp.eq.f32.partialorder %v2973, 0.0
      %v3010 = vand.u32 %v2973, 2147483648
      %v3011 = vsel %vm3009, %v3010, %v3008
      %v3012 = vrsqrt.pop %v2974
      %v3013 = vmul.f32 %v2974, %v3012
      %vm3014 = vcmp.eq.f32.partialorder %v2974, inf
      %v3015 = vsel %vm3014, %v2974, %v3013
      %vm3016 = vcmp.eq.f32.partialorder %v2974, 0.0
      %v3017 = vand.u32 %v2974, 2147483648
      %v3018 = vsel %vm3016, %v3017, %v3015
      %v3019 = vadd.f32 %v2990, 1e-06
      %v3020 = vadd.f32 %v2997, 1e-06
      %v3021 = vadd.f32 %v3004, 1e-06
      %v3022 = vadd.f32 %v3011, 1e-06
      %v3023 = vadd.f32 %v3018, 1e-06
      %v3024 = vrcp.pop %v3019
      %v3025 = vmul.f32 %v2979, %v3024
      %v3026 = vrcp.pop %v3020
      %v3027 = vmul.f32 %v2980, %v3026
      %v3028 = vrcp.pop %v3021
      %v3029 = vmul.f32 %v2981, %v3028
      %v3030 = vrcp.pop %v3022
      %v3031 = vmul.f32 %v2982, %v3030
      %v3032 = vrcp.pop %v3023
      %v3033 = vmul.f32 %v2983, %v3032
      %v3034 = vlaneseq
      %v3035 = vshrl.u32 %v3034, 7
      %v3036 = vsub.s32 1, %v3035
      %v3037 = vrot.slane %v2922, %v3036
      %v3038 = vadd.f32 %v3025, %v3037
      %v3039 = vadd.f32 %v3027, %v3037
      %v3040 = vadd.f32 %v3029, %v3037
      %v3041 = vadd.f32 %v3031, %v3037
      %v3042 = vadd.f32 %v3033, %v3037
      %s3043 = scalar_lea.vmem %s6, 32
      %v3044 = vld [vmem:[%s3043] sm:$0xff]
      %v3045 = vld [vmem:[%s3043 + $0x8] sm:$0xff]
      %v3046 = vld [vmem:[%s3043 + $0x10] sm:$0xff]
      %v3047 = vld [vmem:[%s3043 + $0x18] sm:$0xff]
      %s3048 = scalar_lea.vmem %s7, 1
      %v3049 = vld [vmem:[%s3048] sm:$0x1]
      %v3051 = vlaneseq
      %v3052 = vshrl.u32 %v3051, 7
      %v3053 = vsub.s32 0, %v3052
      %v3054 = vrot.slane %v3049, %v3053
      %v3057 = vsel %vm62, %v3038, 0
      %v3060 = vsel %vm62, %v3039, 0
      %v3063 = vsel %vm62, %v3040, 0
      %v3066 = vsel %vm62, %v3041, 0
      %v3069 = vsel %vm62, %v3042, 0
      %3071 = vmatprep.subr.mxu0 0.0
      %3072 = vmatpush1.msra.mxu0 %v3044
      %3073 = vmatprep.subr.mxu0 0.0
      %3074 = vmatpush1.msra.mxu0 %v3045
      %3075 = vmatprep.subr.mxu0 0.0
      %3076 = vmatpush1.msra.mxu0 %v3046
      %3077 = vmatprep.subr.mxu0 0.0
      %3078 = vmatpush1.msra.mxu0 %v3047
      %3079 = vmatprep.subr.mxu0 0.0
      %3080 = vmatpush1.msra.mxu0 0.0
      %3081 = vmatprep.subr.mxu0 0.0
      %3082 = vmatpush1.msra.mxu0 0.0
      %3083 = vmatprep.subr.mxu0 0.0
      %3084 = vmatpush1.msra.mxu0 0.0
      %3085 = vmatprep.subr.mxu0 0.0
      %3086 = vmatpush1.msra.mxu0 0.0
      %3087 = vmatprep.subr.mxu0 0.0
      %3088 = vmatpush1.msra.mxu0 0.0
      %3089 = vmatprep.subr.mxu0 0.0
      %3090 = vmatpush1.msra.mxu0 0.0
      %3091 = vmatprep.subr.mxu0 0.0
      %3092 = vmatpush1.msra.mxu0 0.0
      %3093 = vmatprep.subr.mxu0 0.0
      %3094 = vmatpush1.msra.mxu0 0.0
      %3095 = vmatprep.subr.mxu0 0.0
      %3096 = vmatpush1.msra.mxu0 0.0
      %3097 = vmatprep.subr.mxu0 0.0
      %3098 = vmatpush1.msra.mxu0 0.0
      %3099 = vmatprep.subr.mxu0 0.0
      %3100 = vmatpush1.msra.mxu0 0.0
      %3101 = vmatprep.subr.mxu0 0.0
      %3102 = vmatpush1.msra.mxu0 0.0
      %3103 = vmatprep.subr.mxu0 0.0
      %3104 = vmatpush1.msra.mxu0 0.0
      %3105 = vmatprep.subr.mxu0 0.0
      %3106 = vmatpush1.msra.mxu0 0.0
      %3107 = vmatprep.subr.mxu0 0.0
      %3108 = vmatpush1.msra.mxu0 0.0
      %3109 = vmatprep.subr.mxu0 0.0
      %3110 = vmatpush1.msra.mxu0 0.0
      %3111 = vmatprep.subr.mxu0 0.0
      %3112 = vmatpush1.msra.mxu0 0.0
      %3113 = vmatprep.subr.mxu0 0.0
      %3114 = vmatpush1.msra.mxu0 0.0
      %3115 = vmatprep.subr.mxu0 0.0
      %3116 = vmatpush1.msra.mxu0 0.0
      %3117 = vmatprep.subr.mxu0 0.0
      %3118 = vmatpush1.msra.mxu0 0.0
      %3119 = vmatprep.subr.mxu0 0.0
      %3120 = vmatpush1.msra.mxu0 0.0
      %3121 = vmatprep.subr.mxu0 0.0
      %3122 = vmatpush1.msra.mxu0 0.0
      %3123 = vmatprep.subr.mxu0 0.0
      %3124 = vmatpush1.msra.mxu0 0.0
      %3125 = vmatprep.subr.mxu0 0.0
      %3126 = vmatpush1.msra.mxu0 0.0
      %3127 = vmatprep.subr.mxu0 0.0
      %3128 = vmatpush1.msra.mxu0 0.0
      %3129 = vmatprep.subr.mxu0 0.0
      %3130 = vmatpush1.msra.mxu0 0.0
      %3131 = vmatprep.subr.mxu0 0.0
      %3132 = vmatpush1.msra.mxu0 0.0
      %3133 = vmatprep.subr.mxu0 0.0
      %3134 = vmatpush1.msra.mxu0 0.0
      %3135 = vmatprep.mubr.f32.mxu0 0.0
      %3136 = vmatmul.mubr.f32.gmra.mrb[0].mxu0 %v3057
      %v3137 = vpop.f32.mrb[0].mxu0
      %v3138 = vadd.f32 %v3054, %v3137
      %v3139 = vpop.f32.mrb[0].mxu0
      %3140 = vmatprep.mubr.f32.mxu0 0.0
      %3141 = vmatmul.mubr.f32.gmra.mrb[0].mxu0 %v3060
      %v3142 = vpop.f32.mrb[0].mxu0
      %v3143 = vadd.f32 %v3054, %v3142
      %v3144 = vpop.f32.mrb[0].mxu0
      %3145 = vmatprep.mubr.f32.mxu0 0.0
      %3146 = vmatmul.mubr.f32.gmra.mrb[0].mxu0 %v3063
      %v3147 = vpop.f32.mrb[0].mxu0
      %v3148 = vadd.f32 %v3054, %v3147
      %v3149 = vpop.f32.mrb[0].mxu0
      %3150 = vmatprep.mubr.f32.mxu0 0.0
      %3151 = vmatmul.mubr.f32.gmra.mrb[0].mxu0 %v3066
      %v3152 = vpop.f32.mrb[0].mxu0
      %v3153 = vadd.f32 %v3054, %v3152
      %v3154 = vpop.f32.mrb[0].mxu0
      %3155 = vmatprep.mubr.f32.mxu0 0.0
      %3156 = vmatmul.mubr.f32.gmra.mrb[0].mxu0 %v3069
      %v3157 = vpop.f32.mrb[0].mxu0
      %v3158 = vadd.f32 %v3054, %v3157
      %v3159 = vpop.f32.mrb[0].mxu0
      %3160 = vdwg.mxu0
      %3166 = vrot.lane.b32.xlu0 %v3138, 120
      %v3167 = vpop.permute.xlu0 %3166
      %3168 = vrot.lane.b32.xlu0 %v3143, 120
      %v3169 = vpop.permute.xlu0 %3168
      %3170 = vrot.lane.b32.xlu0 %v3148, 120
      %v3171 = vpop.permute.xlu0 %3170
      %3172 = vrot.lane.b32.xlu0 %v3153, 120
      %v3173 = vpop.permute.xlu0 %3172
      %3174 = vrot.lane.b32.xlu0 %v3158, 120
      %v3175 = vpop.permute.xlu0 %3174
      %3176 = vrot.lane.b32.xlu0 %v3138, 112
      %v3177 = vpop.permute.xlu0 %3176
      %3178 = vrot.lane.b32.xlu0 %v3143, 112
      %v3179 = vpop.permute.xlu0 %3178
      %3180 = vrot.lane.b32.xlu0 %v3148, 112
      %v3181 = vpop.permute.xlu0 %3180
      %3182 = vrot.lane.b32.xlu0 %v3153, 112
      %v3183 = vpop.permute.xlu0 %3182
      %3184 = vrot.lane.b32.xlu0 %v3158, 112
      %v3185 = vpop.permute.xlu0 %3184
      %3186 = vrot.lane.b32.xlu0 %v3138, 104
      %v3187 = vpop.permute.xlu0 %3186
      %3188 = vrot.lane.b32.xlu0 %v3143, 104
      %v3189 = vpop.permute.xlu0 %3188
      %3190 = vrot.lane.b32.xlu0 %v3148, 104
      %v3191 = vpop.permute.xlu0 %3190
      %3192 = vrot.lane.b32.xlu0 %v3153, 104
      %v3193 = vpop.permute.xlu0 %3192
      %3194 = vrot.lane.b32.xlu0 %v3158, 104
      %v3195 = vpop.permute.xlu0 %3194
      %3196 = vrot.lane.b32.xlu0 %v3138, 96
      %v3197 = vpop.permute.xlu0 %3196
      %3198 = vrot.lane.b32.xlu0 %v3143, 96
      %v3199 = vpop.permute.xlu0 %3198
      %3200 = vrot.lane.b32.xlu0 %v3148, 96
      %v3201 = vpop.permute.xlu0 %3200
      %3202 = vrot.lane.b32.xlu0 %v3153, 96
      %v3203 = vpop.permute.xlu0 %3202
      %3204 = vrot.lane.b32.xlu0 %v3158, 96
      %v3205 = vpop.permute.xlu0 %3204
      %v3206 = vsel %vm427, %v3138, 0
      %v3208 = vsel %vm427, %v3143, 0
      %v3210 = vsel %vm427, %v3148, 0
      %v3212 = vsel %vm427, %v3153, 0
      %v3214 = vsel %vm427, %v3158, 0
      %v3216 = vsel %vm427, %v3197, 0
      %v3218 = vsel %vm427, %v3199, 0
      %v3220 = vsel %vm427, %v3201, 0
      %v3222 = vsel %vm427, %v3203, 0
      %v3224 = vsel %vm427, %v3205, 0
      %3226 = vmatprep.subr.mxu0 0.0
      %3227 = vmatpush1.xpose.msra.mxu0 %v3216
      %3228 = vmatprep.subr.mxu0 0.0
      %3229 = vmatpush1.xpose.msra.mxu0 %v3218
      %3230 = vmatprep.subr.mxu0 0.0
      %3231 = vmatpush1.xpose.msra.mxu0 %v3220
      %3232 = vmatprep.subr.mxu0 0.0
      %3233 = vmatpush1.xpose.msra.mxu0 %v3222
      %3234 = vmatprep.subr.mxu0 0.0
      %3235 = vmatpush1.xpose.msra.mxu0 %v3224
      %3236 = vmatprep.subr.mxu0 0.0
      %3237 = vmatpush1.xpose.msra.mxu0 0.0
      %3238 = vmatprep.subr.mxu0 0.0
      %3239 = vmatpush1.xpose.msra.mxu0 0.0
      %3240 = vmatprep.subr.mxu0 0.0
      %3241 = vmatpush1.xpose.msra.mxu0 0.0
      %3242 = vmatprep.subr.mxu0 0.0
      %3243 = vmatpush1.xpose.msra.mxu0 0.0
      %3244 = vmatprep.subr.mxu0 0.0
      %3245 = vmatpush1.xpose.msra.mxu0 0.0
      %3246 = vmatprep.subr.mxu0 0.0
      %3247 = vmatpush1.xpose.msra.mxu0 0.0
      %3248 = vmatprep.subr.mxu0 0.0
      %3249 = vmatpush1.xpose.msra.mxu0 0.0
      %3250 = vmatprep.subr.mxu0 0.0
      %3251 = vmatpush1.xpose.msra.mxu0 0.0
      %3252 = vmatprep.subr.mxu0 0.0
      %3253 = vmatpush1.xpose.msra.mxu0 0.0
      %3254 = vmatprep.subr.mxu0 0.0
      %3255 = vmatpush1.xpose.msra.mxu0 0.0
      %3256 = vmatprep.subr.mxu0 0.0
      %3257 = vmatpush1.xpose.msra.mxu0 0.0
      %3258 = vmatprep.subr.mxu0 0.0
      %3259 = vmatpush1.xpose.msra.mxu0 0.0
      %3260 = vmatprep.subr.mxu0 0.0
      %3261 = vmatpush1.xpose.msra.mxu0 0.0
      %3262 = vmatprep.subr.mxu0 0.0
      %3263 = vmatpush1.xpose.msra.mxu0 0.0
      %3264 = vmatprep.subr.mxu0 0.0
      %3265 = vmatpush1.xpose.msra.mxu0 0.0
      %3266 = vmatprep.subr.mxu0 0.0
      %3267 = vmatpush1.xpose.msra.mxu0 0.0
      %3268 = vmatprep.subr.mxu0 0.0
      %3269 = vmatpush1.xpose.msra.mxu0 0.0
      %3270 = vmatprep.subr.mxu0 0.0
      %3271 = vmatpush1.xpose.msra.mxu0 0.0
      %3272 = vmatprep.subr.mxu0 0.0
      %3273 = vmatpush1.xpose.msra.mxu0 0.0
      %3274 = vmatprep.subr.mxu0 0.0
      %3275 = vmatpush1.xpose.msra.mxu0 0.0
      %3276 = vmatprep.subr.mxu0 0.0
      %3277 = vmatpush1.xpose.msra.mxu0 0.0
      %3278 = vmatprep.subr.mxu0 0.0
      %3279 = vmatpush1.xpose.msra.mxu0 0.0
      %3280 = vmatprep.subr.mxu0 0.0
      %3281 = vmatpush1.xpose.msra.mxu0 0.0
      %3282 = vmatprep.subr.mxu0 0.0
      %3283 = vmatpush1.xpose.msra.mxu0 0.0
      %3284 = vmatprep.subr.mxu0 0.0
      %3285 = vmatpush1.xpose.msra.mxu0 0.0
      %3286 = vmatprep.subr.mxu0 0.0
      %3287 = vmatpush1.xpose.msra.mxu0 0.0
      %3288 = vmatprep.subr.mxu0 0.0
      %3289 = vmatpush1.xpose.msra.mxu0 0.0
      %3290 = vmatprep.mubr.f32.mxu0 0.0
      %3291 = vmatmul.mubr.f32.gmra.mrb[0].mxu0 %v3206
      %v3292 = vpop.f32.mrb[0].mxu0
      %v3293 = vadd.f32 0.0, %v3292
      %v3294 = vpop.f32.mrb[0].mxu0
      %3295 = vmatprep.mubr.f32.mxu0 0.0
      %3296 = vmatmul.mubr.f32.gmra.mrb[0].mxu0 %v3208
      %v3297 = vpop.f32.mrb[0].mxu0
      %v3298 = vadd.f32 0.0, %v3297
      %v3299 = vpop.f32.mrb[0].mxu0
      %3300 = vmatprep.mubr.f32.mxu0 0.0
      %3301 = vmatmul.mubr.f32.gmra.mrb[0].mxu0 %v3210
      %v3302 = vpop.f32.mrb[0].mxu0
      %v3303 = vadd.f32 0.0, %v3302
      %v3304 = vpop.f32.mrb[0].mxu0
      %3305 = vmatprep.mubr.f32.mxu0 0.0
      %3306 = vmatmul.mubr.f32.gmra.mrb[0].mxu0 %v3212
      %v3307 = vpop.f32.mrb[0].mxu0
      %v3308 = vadd.f32 0.0, %v3307
      %v3309 = vpop.f32.mrb[0].mxu0
      %3310 = vmatprep.mubr.f32.mxu0 0.0
      %3311 = vmatmul.mubr.f32.gmra.mrb[0].mxu0 %v3214
      %v3312 = vpop.f32.mrb[0].mxu0
      %v3313 = vadd.f32 0.0, %v3312
      %v3314 = vpop.f32.mrb[0].mxu0
      %3315 = vdwg.mxu0
      %3316 = vrot.lane.b32.xlu0 %v3167, 96
      %v3317 = vpop.permute.xlu0 %3316
      %3318 = vrot.lane.b32.xlu0 %v3169, 96
      %v3319 = vpop.permute.xlu0 %3318
      %3320 = vrot.lane.b32.xlu0 %v3171, 96
      %v3321 = vpop.permute.xlu0 %3320
      %3322 = vrot.lane.b32.xlu0 %v3173, 96
      %v3323 = vpop.permute.xlu0 %3322
      %3324 = vrot.lane.b32.xlu0 %v3175, 96
      %v3325 = vpop.permute.xlu0 %3324
      %v3326 = vsel %vm427, %v3167, 0
      %v3328 = vsel %vm427, %v3169, 0
      %v3330 = vsel %vm427, %v3171, 0
      %v3332 = vsel %vm427, %v3173, 0
      %v3334 = vsel %vm427, %v3175, 0
      %v3336 = vsel %vm427, %v3317, 0
      %v3338 = vsel %vm427, %v3319, 0
      %v3340 = vsel %vm427, %v3321, 0
      %v3342 = vsel %vm427, %v3323, 0
      %v3344 = vsel %vm427, %v3325, 0
      %3346 = vmatprep.subr.mxu0 0.0
      %3347 = vmatpush1.xpose.msra.mxu0 %v3336
      %3348 = vmatprep.subr.mxu0 0.0
      %3349 = vmatpush1.xpose.msra.mxu0 %v3338
      %3350 = vmatprep.subr.mxu0 0.0
      %3351 = vmatpush1.xpose.msra.mxu0 %v3340
      %3352 = vmatprep.subr.mxu0 0.0
      %3353 = vmatpush1.xpose.msra.mxu0 %v3342
      %3354 = vmatprep.subr.mxu0 0.0
      %3355 = vmatpush1.xpose.msra.mxu0 %v3344
      %3356 = vmatprep.subr.mxu0 0.0
      %3357 = vmatpush1.xpose.msra.mxu0 0.0
      %3358 = vmatprep.subr.mxu0 0.0
      %3359 = vmatpush1.xpose.msra.mxu0 0.0
      %3360 = vmatprep.subr.mxu0 0.0
      %3361 = vmatpush1.xpose.msra.mxu0 0.0
      %3362 = vmatprep.subr.mxu0 0.0
      %3363 = vmatpush1.xpose.msra.mxu0 0.0
      %3364 = vmatprep.subr.mxu0 0.0
      %3365 = vmatpush1.xpose.msra.mxu0 0.0
      %3366 = vmatprep.subr.mxu0 0.0
      %3367 = vmatpush1.xpose.msra.mxu0 0.0
      %3368 = vmatprep.subr.mxu0 0.0
      %3369 = vmatpush1.xpose.msra.mxu0 0.0
      %3370 = vmatprep.subr.mxu0 0.0
      %3371 = vmatpush1.xpose.msra.mxu0 0.0
      %3372 = vmatprep.subr.mxu0 0.0
      %3373 = vmatpush1.xpose.msra.mxu0 0.0
      %3374 = vmatprep.subr.mxu0 0.0
      %3375 = vmatpush1.xpose.msra.mxu0 0.0
      %3376 = vmatprep.subr.mxu0 0.0
      %3377 = vmatpush1.xpose.msra.mxu0 0.0
      %3378 = vmatprep.subr.mxu0 0.0
      %3379 = vmatpush1.xpose.msra.mxu0 0.0
      %3380 = vmatprep.subr.mxu0 0.0
      %3381 = vmatpush1.xpose.msra.mxu0 0.0
      %3382 = vmatprep.subr.mxu0 0.0
      %3383 = vmatpush1.xpose.msra.mxu0 0.0
      %3384 = vmatprep.subr.mxu0 0.0
      %3385 = vmatpush1.xpose.msra.mxu0 0.0
      %3386 = vmatprep.subr.mxu0 0.0
      %3387 = vmatpush1.xpose.msra.mxu0 0.0
      %3388 = vmatprep.subr.mxu0 0.0
      %3389 = vmatpush1.xpose.msra.mxu0 0.0
      %3390 = vmatprep.subr.mxu0 0.0
      %3391 = vmatpush1.xpose.msra.mxu0 0.0
      %3392 = vmatprep.subr.mxu0 0.0
      %3393 = vmatpush1.xpose.msra.mxu0 0.0
      %3394 = vmatprep.subr.mxu0 0.0
      %3395 = vmatpush1.xpose.msra.mxu0 0.0
      %3396 = vmatprep.subr.mxu0 0.0
      %3397 = vmatpush1.xpose.msra.mxu0 0.0
      %3398 = vmatprep.subr.mxu0 0.0
      %3399 = vmatpush1.xpose.msra.mxu0 0.0
      %3400 = vmatprep.subr.mxu0 0.0
      %3401 = vmatpush1.xpose.msra.mxu0 0.0
      %3402 = vmatprep.subr.mxu0 0.0
      %3403 = vmatpush1.xpose.msra.mxu0 0.0
      %3404 = vmatprep.subr.mxu0 0.0
      %3405 = vmatpush1.xpose.msra.mxu0 0.0
      %3406 = vmatprep.subr.mxu0 0.0
      %3407 = vmatpush1.xpose.msra.mxu0 0.0
      %3408 = vmatprep.subr.mxu0 0.0
      %3409 = vmatpush1.xpose.msra.mxu0 0.0
      %3410 = vmatprep.mubr.f32.mxu0 0.0
      %3411 = vmatmul.mubr.f32.gmra.mrb[0].mxu0 %v3326
      %v3412 = vpop.f32.mrb[0].mxu0
      %v3413 = vadd.f32 0.0, %v3412
      %v3414 = vpop.f32.mrb[0].mxu0
      %3415 = vmatprep.mubr.f32.mxu0 0.0
      %3416 = vmatmul.mubr.f32.gmra.mrb[0].mxu0 %v3328
      %v3417 = vpop.f32.mrb[0].mxu0
      %v3418 = vadd.f32 0.0, %v3417
      %v3419 = vpop.f32.mrb[0].mxu0
      %3420 = vmatprep.mubr.f32.mxu0 0.0
      %3421 = vmatmul.mubr.f32.gmra.mrb[0].mxu0 %v3330
      %v3422 = vpop.f32.mrb[0].mxu0
      %v3423 = vadd.f32 0.0, %v3422
      %v3424 = vpop.f32.mrb[0].mxu0
      %3425 = vmatprep.mubr.f32.mxu0 0.0
      %3426 = vmatmul.mubr.f32.gmra.mrb[0].mxu0 %v3332
      %v3427 = vpop.f32.mrb[0].mxu0
      %v3428 = vadd.f32 0.0, %v3427
      %v3429 = vpop.f32.mrb[0].mxu0
      %3430 = vmatprep.mubr.f32.mxu0 0.0
      %3431 = vmatmul.mubr.f32.gmra.mrb[0].mxu0 %v3334
      %v3432 = vpop.f32.mrb[0].mxu0
      %v3433 = vadd.f32 0.0, %v3432
      %v3434 = vpop.f32.mrb[0].mxu0
      %3435 = vdwg.mxu0
      %3436 = vrot.lane.b32.xlu0 %v3177, 96
      %v3437 = vpop.permute.xlu0 %3436
      %3438 = vrot.lane.b32.xlu0 %v3179, 96
      %v3439 = vpop.permute.xlu0 %3438
      %3440 = vrot.lane.b32.xlu0 %v3181, 96
      %v3441 = vpop.permute.xlu0 %3440
      %3442 = vrot.lane.b32.xlu0 %v3183, 96
      %v3443 = vpop.permute.xlu0 %3442
      %3444 = vrot.lane.b32.xlu0 %v3185, 96
      %v3445 = vpop.permute.xlu0 %3444
      %v3446 = vsel %vm427, %v3177, 0
      %v3448 = vsel %vm427, %v3179, 0
      %v3450 = vsel %vm427, %v3181, 0
      %v3452 = vsel %vm427, %v3183, 0
      %v3454 = vsel %vm427, %v3185, 0
      %v3456 = vsel %vm427, %v3437, 0
      %v3458 = vsel %vm427, %v3439, 0
      %v3460 = vsel %vm427, %v3441, 0
      %v3462 = vsel %vm427, %v3443, 0
      %v3464 = vsel %vm427, %v3445, 0
      %3466 = vmatprep.subr.mxu0 0.0
      %3467 = vmatpush1.xpose.msra.mxu0 %v3456
      %3468 = vmatprep.subr.mxu0 0.0
      %3469 = vmatpush1.xpose.msra.mxu0 %v3458
      %3470 = vmatprep.subr.mxu0 0.0
      %3471 = vmatpush1.xpose.msra.mxu0 %v3460
      %3472 = vmatprep.subr.mxu0 0.0
      %3473 = vmatpush1.xpose.msra.mxu0 %v3462
      %3474 = vmatprep.subr.mxu0 0.0
      %3475 = vmatpush1.xpose.msra.mxu0 %v3464
      %3476 = vmatprep.subr.mxu0 0.0
      %3477 = vmatpush1.xpose.msra.mxu0 0.0
      %3478 = vmatprep.subr.mxu0 0.0
      %3479 = vmatpush1.xpose.msra.mxu0 0.0
      %3480 = vmatprep.subr.mxu0 0.0
      %3481 = vmatpush1.xpose.msra.mxu0 0.0
      %3482 = vmatprep.subr.mxu0 0.0
      %3483 = vmatpush1.xpose.msra.mxu0 0.0
      %3484 = vmatprep.subr.mxu0 0.0
      %3485 = vmatpush1.xpose.msra.mxu0 0.0
      %3486 = vmatprep.subr.mxu0 0.0
      %3487 = vmatpush1.xpose.msra.mxu0 0.0
      %3488 = vmatprep.subr.mxu0 0.0
      %3489 = vmatpush1.xpose.msra.mxu0 0.0
      %3490 = vmatprep.subr.mxu0 0.0
      %3491 = vmatpush1.xpose.msra.mxu0 0.0
      %3492 = vmatprep.subr.mxu0 0.0
      %3493 = vmatpush1.xpose.msra.mxu0 0.0
      %3494 = vmatprep.subr.mxu0 0.0
      %3495 = vmatpush1.xpose.msra.mxu0 0.0
      %3496 = vmatprep.subr.mxu0 0.0
      %3497 = vmatpush1.xpose.msra.mxu0 0.0
      %3498 = vmatprep.subr.mxu0 0.0
      %3499 = vmatpush1.xpose.msra.mxu0 0.0
      %3500 = vmatprep.subr.mxu0 0.0
      %3501 = vmatpush1.xpose.msra.mxu0 0.0
      %3502 = vmatprep.subr.mxu0 0.0
      %3503 = vmatpush1.xpose.msra.mxu0 0.0
      %3504 = vmatprep.subr.mxu0 0.0
      %3505 = vmatpush1.xpose.msra.mxu0 0.0
      %3506 = vmatprep.subr.mxu0 0.0
      %3507 = vmatpush1.xpose.msra.mxu0 0.0
      %3508 = vmatprep.subr.mxu0 0.0
      %3509 = vmatpush1.xpose.msra.mxu0 0.0
      %3510 = vmatprep.subr.mxu0 0.0
      %3511 = vmatpush1.xpose.msra.mxu0 0.0
      %3512 = vmatprep.subr.mxu0 0.0
      %3513 = vmatpush1.xpose.msra.mxu0 0.0
      %3514 = vmatprep.subr.mxu0 0.0
      %3515 = vmatpush1.xpose.msra.mxu0 0.0
      %3516 = vmatprep.subr.mxu0 0.0
      %3517 = vmatpush1.xpose.msra.mxu0 0.0
      %3518 = vmatprep.subr.mxu0 0.0
      %3519 = vmatpush1.xpose.msra.mxu0 0.0
      %3520 = vmatprep.subr.mxu0 0.0
      %3521 = vmatpush1.xpose.msra.mxu0 0.0
      %3522 = vmatprep.subr.mxu0 0.0
      %3523 = vmatpush1.xpose.msra.mxu0 0.0
      %3524 = vmatprep.subr.mxu0 0.0
      %3525 = vmatpush1.xpose.msra.mxu0 0.0
      %3526 = vmatprep.subr.mxu0 0.0
      %3527 = vmatpush1.xpose.msra.mxu0 0.0
      %3528 = vmatprep.subr.mxu0 0.0
      %3529 = vmatpush1.xpose.msra.mxu0 0.0
      %3530 = vmatprep.mubr.f32.mxu0 0.0
      %3531 = vmatmul.mubr.f32.gmra.mrb[0].mxu0 %v3446
      %v3532 = vpop.f32.mrb[0].mxu0
      %v3533 = vadd.f32 0.0, %v3532
      %v3534 = vpop.f32.mrb[0].mxu0
      %3535 = vmatprep.mubr.f32.mxu0 0.0
      %3536 = vmatmul.mubr.f32.gmra.mrb[0].mxu0 %v3448
      %v3537 = vpop.f32.mrb[0].mxu0
      %v3538 = vadd.f32 0.0, %v3537
      %v3539 = vpop.f32.mrb[0].mxu0
      %3540 = vmatprep.mubr.f32.mxu0 0.0
      %3541 = vmatmul.mubr.f32.gmra.mrb[0].mxu0 %v3450
      %v3542 = vpop.f32.mrb[0].mxu0
      %v3543 = vadd.f32 0.0, %v3542
      %v3544 = vpop.f32.mrb[0].mxu0
      %3545 = vmatprep.mubr.f32.mxu0 0.0
      %3546 = vmatmul.mubr.f32.gmra.mrb[0].mxu0 %v3452
      %v3547 = vpop.f32.mrb[0].mxu0
      %v3548 = vadd.f32 0.0, %v3547
      %v3549 = vpop.f32.mrb[0].mxu0
      %3550 = vmatprep.mubr.f32.mxu0 0.0
      %3551 = vmatmul.mubr.f32.gmra.mrb[0].mxu0 %v3454
      %v3552 = vpop.f32.mrb[0].mxu0
      %v3553 = vadd.f32 0.0, %v3552
      %v3554 = vpop.f32.mrb[0].mxu0
      %3555 = vdwg.mxu0
      %3556 = vrot.lane.b32.xlu0 %v3187, 96
      %v3557 = vpop.permute.xlu0 %3556
      %3558 = vrot.lane.b32.xlu0 %v3189, 96
      %v3559 = vpop.permute.xlu0 %3558
      %3560 = vrot.lane.b32.xlu0 %v3191, 96
      %v3561 = vpop.permute.xlu0 %3560
      %3562 = vrot.lane.b32.xlu0 %v3193, 96
      %v3563 = vpop.permute.xlu0 %3562
      %3564 = vrot.lane.b32.xlu0 %v3195, 96
      %v3565 = vpop.permute.xlu0 %3564
      %v3566 = vsel %vm427, %v3187, 0
      %v3568 = vsel %vm427, %v3189, 0
      %v3570 = vsel %vm427, %v3191, 0
      %v3572 = vsel %vm427, %v3193, 0
      %v3574 = vsel %vm427, %v3195, 0
      %v3576 = vsel %vm427, %v3557, 0
      %v3578 = vsel %vm427, %v3559, 0
      %v3580 = vsel %vm427, %v3561, 0
      %v3582 = vsel %vm427, %v3563, 0
      %v3584 = vsel %vm427, %v3565, 0
      %3586 = vmatprep.subr.mxu0 0.0
      %3587 = vmatpush1.xpose.msra.mxu0 %v3576
      %3588 = vmatprep.subr.mxu0 0.0
      %3589 = vmatpush1.xpose.msra.mxu0 %v3578
      %3590 = vmatprep.subr.mxu0 0.0
      %3591 = vmatpush1.xpose.msra.mxu0 %v3580
      %3592 = vmatprep.subr.mxu0 0.0
      %3593 = vmatpush1.xpose.msra.mxu0 %v3582
      %3594 = vmatprep.subr.mxu0 0.0
      %3595 = vmatpush1.xpose.msra.mxu0 %v3584
      %3596 = vmatprep.subr.mxu0 0.0
      %3597 = vmatpush1.xpose.msra.mxu0 0.0
      %3598 = vmatprep.subr.mxu0 0.0
      %3599 = vmatpush1.xpose.msra.mxu0 0.0
      %3600 = vmatprep.subr.mxu0 0.0
      %3601 = vmatpush1.xpose.msra.mxu0 0.0
      %3602 = vmatprep.subr.mxu0 0.0
      %3603 = vmatpush1.xpose.msra.mxu0 0.0
      %3604 = vmatprep.subr.mxu0 0.0
      %3605 = vmatpush1.xpose.msra.mxu0 0.0
      %3606 = vmatprep.subr.mxu0 0.0
      %3607 = vmatpush1.xpose.msra.mxu0 0.0
      %3608 = vmatprep.subr.mxu0 0.0
      %3609 = vmatpush1.xpose.msra.mxu0 0.0
      %3610 = vmatprep.subr.mxu0 0.0
      %3611 = vmatpush1.xpose.msra.mxu0 0.0
      %3612 = vmatprep.subr.mxu0 0.0
      %3613 = vmatpush1.xpose.msra.mxu0 0.0
      %3614 = vmatprep.subr.mxu0 0.0
      %3615 = vmatpush1.xpose.msra.mxu0 0.0
      %3616 = vmatprep.subr.mxu0 0.0
      %3617 = vmatpush1.xpose.msra.mxu0 0.0
      %3618 = vmatprep.subr.mxu0 0.0
      %3619 = vmatpush1.xpose.msra.mxu0 0.0
      %3620 = vmatprep.subr.mxu0 0.0
      %3621 = vmatpush1.xpose.msra.mxu0 0.0
      %3622 = vmatprep.subr.mxu0 0.0
      %3623 = vmatpush1.xpose.msra.mxu0 0.0
      %3624 = vmatprep.subr.mxu0 0.0
      %3625 = vmatpush1.xpose.msra.mxu0 0.0
      %3626 = vmatprep.subr.mxu0 0.0
      %3627 = vmatpush1.xpose.msra.mxu0 0.0
      %3628 = vmatprep.subr.mxu0 0.0
      %3629 = vmatpush1.xpose.msra.mxu0 0.0
      %3630 = vmatprep.subr.mxu0 0.0
      %3631 = vmatpush1.xpose.msra.mxu0 0.0
      %3632 = vmatprep.subr.mxu0 0.0
      %3633 = vmatpush1.xpose.msra.mxu0 0.0
      %3634 = vmatprep.subr.mxu0 0.0
      %3635 = vmatpush1.xpose.msra.mxu0 0.0
      %3636 = vmatprep.subr.mxu0 0.0
      %3637 = vmatpush1.xpose.msra.mxu0 0.0
      %3638 = vmatprep.subr.mxu0 0.0
      %3639 = vmatpush1.xpose.msra.mxu0 0.0
      %3640 = vmatprep.subr.mxu0 0.0
      %3641 = vmatpush1.xpose.msra.mxu0 0.0
      %3642 = vmatprep.subr.mxu0 0.0
      %3643 = vmatpush1.xpose.msra.mxu0 0.0
      %3644 = vmatprep.subr.mxu0 0.0
      %3645 = vmatpush1.xpose.msra.mxu0 0.0
      %3646 = vmatprep.subr.mxu0 0.0
      %3647 = vmatpush1.xpose.msra.mxu0 0.0
      %3648 = vmatprep.subr.mxu0 0.0
      %3649 = vmatpush1.xpose.msra.mxu0 0.0
      %3650 = vmatprep.mubr.f32.mxu0 0.0
      %3651 = vmatmul.mubr.f32.gmra.mrb[0].mxu0 %v3566
      %v3652 = vpop.f32.mrb[0].mxu0
      %v3653 = vadd.f32 0.0, %v3652
      %v3654 = vpop.f32.mrb[0].mxu0
      %3655 = vmatprep.mubr.f32.mxu0 0.0
      %3656 = vmatmul.mubr.f32.gmra.mrb[0].mxu0 %v3568
      %v3657 = vpop.f32.mrb[0].mxu0
      %v3658 = vadd.f32 0.0, %v3657
      %v3659 = vpop.f32.mrb[0].mxu0
      %3660 = vmatprep.mubr.f32.mxu0 0.0
      %3661 = vmatmul.mubr.f32.gmra.mrb[0].mxu0 %v3570
      %v3662 = vpop.f32.mrb[0].mxu0
      %v3663 = vadd.f32 0.0, %v3662
      %v3664 = vpop.f32.mrb[0].mxu0
      %3665 = vmatprep.mubr.f32.mxu0 0.0
      %3666 = vmatmul.mubr.f32.gmra.mrb[0].mxu0 %v3572
      %v3667 = vpop.f32.mrb[0].mxu0
      %v3668 = vadd.f32 0.0, %v3667
      %v3669 = vpop.f32.mrb[0].mxu0
      %3670 = vmatprep.mubr.f32.mxu0 0.0
      %3671 = vmatmul.mubr.f32.gmra.mrb[0].mxu0 %v3574
      %v3672 = vpop.f32.mrb[0].mxu0
      %v3673 = vadd.f32 0.0, %v3672
      %v3674 = vpop.f32.mrb[0].mxu0
      %3675 = vdwg.mxu0
      %v3676 = vmul.f32 %v3293, 0.35355338
      %v3677 = vmul.f32 %v3298, 0.35355338
      %v3678 = vmul.f32 %v3303, 0.35355338
      %v3679 = vmul.f32 %v3308, 0.35355338
      %v3680 = vmul.f32 %v3313, 0.35355338
      %v3681 = vmul.f32 %v3413, 0.35355338
      %v3682 = vmul.f32 %v3418, 0.35355338
      %v3683 = vmul.f32 %v3423, 0.35355338
      %v3684 = vmul.f32 %v3428, 0.35355338
      %v3685 = vmul.f32 %v3433, 0.35355338
      %v3686 = vmul.f32 %v3533, 0.35355338
      %v3687 = vmul.f32 %v3538, 0.35355338
      %v3688 = vmul.f32 %v3543, 0.35355338
      %v3689 = vmul.f32 %v3548, 0.35355338
      %v3690 = vmul.f32 %v3553, 0.35355338
      %v3691 = vmul.f32 %v3653, 0.35355338
      %v3692 = vmul.f32 %v3658, 0.35355338
      %v3693 = vmul.f32 %v3663, 0.35355338
      %v3694 = vmul.f32 %v3668, 0.35355338
      %v3695 = vmul.f32 %v3673, 0.35355338
      %v3696 = vadd.f32 %v3676, %v47
      %v3697 = vadd.f32 %v3677, %v48
      %v3698 = vadd.f32 %v3678, %v49
      %v3699 = vadd.f32 %v3679, %v50
      %v3700 = vadd.f32 %v3680, %v51
      %v3701 = vadd.f32 %v3681, %v47
      %v3702 = vadd.f32 %v3682, %v48
      %v3703 = vadd.f32 %v3683, %v49
      %v3704 = vadd.f32 %v3684, %v50
      %v3705 = vadd.f32 %v3685, %v51
      %v3706 = vadd.f32 %v3686, %v47
      %v3707 = vadd.f32 %v3687, %v48
      %v3708 = vadd.f32 %v3688, %v49
      %v3709 = vadd.f32 %v3689, %v50
      %v3710 = vadd.f32 %v3690, %v51
      %v3711 = vadd.f32 %v3691, %v47
      %v3712 = vadd.f32 %v3692, %v48
      %v3713 = vadd.f32 %v3693, %v49
      %v3714 = vadd.f32 %v3694, %v50
      %v3715 = vadd.f32 %v3695, %v51
      %v3716 = vsel %vm938, %v3696, -inf
      %3717 = vmax.xlane.f32.xlu0 %v3716
      %v3718 = vpop.xlane.xlu0 %3717
      %v3719 = vsel %vm938, %v3697, -inf
      %3720 = vmax.xlane.f32.xlu0 %v3719
      %v3721 = vpop.xlane.xlu0 %3720
      %v3722 = vsel %vm938, %v3698, -inf
      %3723 = vmax.xlane.f32.xlu0 %v3722
      %v3724 = vpop.xlane.xlu0 %3723
      %v3725 = vsel %vm938, %v3699, -inf
      %3726 = vmax.xlane.f32.xlu0 %v3725
      %v3727 = vpop.xlane.xlu0 %3726
      %v3728 = vsel %vm951, %v3700, -inf
      %3729 = vmax.xlane.f32.xlu0 %v3728
      %v3730 = vpop.xlane.xlu0 %3729
      %v3731 = vsel %vm938, %v3701, -inf
      %3732 = vmax.xlane.f32.xlu0 %v3731
      %v3733 = vpop.xlane.xlu0 %3732
      %v3734 = vsel %vm938, %v3702, -inf
      %3735 = vmax.xlane.f32.xlu0 %v3734
      %v3736 = vpop.xlane.xlu0 %3735
      %v3737 = vsel %vm938, %v3703, -inf
      %3738 = vmax.xlane.f32.xlu0 %v3737
      %v3739 = vpop.xlane.xlu0 %3738
      %v3740 = vsel %vm938, %v3704, -inf
      %3741 = vmax.xlane.f32.xlu0 %v3740
      %v3742 = vpop.xlane.xlu0 %3741
      %v3743 = vsel %vm951, %v3705, -inf
      %3744 = vmax.xlane.f32.xlu0 %v3743
      %v3745 = vpop.xlane.xlu0 %3744
      %v3746 = vsel %vm938, %v3706, -inf
      %3747 = vmax.xlane.f32.xlu0 %v3746
      %v3748 = vpop.xlane.xlu0 %3747
      %v3749 = vsel %vm938, %v3707, -inf
      %3750 = vmax.xlane.f32.xlu0 %v3749
      %v3751 = vpop.xlane.xlu0 %3750
      %v3752 = vsel %vm938, %v3708, -inf
      %3753 = vmax.xlane.f32.xlu0 %v3752
      %v3754 = vpop.xlane.xlu0 %3753
      %v3755 = vsel %vm938, %v3709, -inf
      %3756 = vmax.xlane.f32.xlu0 %v3755
      %v3757 = vpop.xlane.xlu0 %3756
      %v3758 = vsel %vm951, %v3710, -inf
      %3759 = vmax.xlane.f32.xlu0 %v3758
      %v3760 = vpop.xlane.xlu0 %3759
      %v3761 = vsel %vm938, %v3711, -inf
      %3762 = vmax.xlane.f32.xlu0 %v3761
      %v3763 = vpop.xlane.xlu0 %3762
      %v3764 = vsel %vm938, %v3712, -inf
      %3765 = vmax.xlane.f32.xlu0 %v3764
      %v3766 = vpop.xlane.xlu0 %3765
      %v3767 = vsel %vm938, %v3713, -inf
      %3768 = vmax.xlane.f32.xlu0 %v3767
      %v3769 = vpop.xlane.xlu0 %3768
      %v3770 = vsel %vm938, %v3714, -inf
      %3771 = vmax.xlane.f32.xlu0 %v3770
      %v3772 = vpop.xlane.xlu0 %3771
      %v3773 = vsel %vm951, %v3715, -inf
      %3774 = vmax.xlane.f32.xlu0 %v3773
      %v3775 = vpop.xlane.xlu0 %3774
      %v3776 = vsub.f32 %v3696, %v3718
      %v3777 = vsub.f32 %v3697, %v3721
      %v3778 = vsub.f32 %v3698, %v3724
      %v3779 = vsub.f32 %v3699, %v3727
      %v3780 = vsub.f32 %v3700, %v3730
      %v3781 = vsub.f32 %v3701, %v3733
      %v3782 = vsub.f32 %v3702, %v3736
      %v3783 = vsub.f32 %v3703, %v3739
      %v3784 = vsub.f32 %v3704, %v3742
      %v3785 = vsub.f32 %v3705, %v3745
      %v3786 = vsub.f32 %v3706, %v3748
      %v3787 = vsub.f32 %v3707, %v3751
      %v3788 = vsub.f32 %v3708, %v3754
      %v3789 = vsub.f32 %v3709, %v3757
      %v3790 = vsub.f32 %v3710, %v3760
      %v3791 = vsub.f32 %v3711, %v3763
      %v3792 = vsub.f32 %v3712, %v3766
      %v3793 = vsub.f32 %v3713, %v3769
      %v3794 = vsub.f32 %v3714, %v3772
      %v3795 = vsub.f32 %v3715, %v3775
      %v3796 = vmul.f32 %v3776, 1.442695
      %v3797 = vpow.pop %v3796
      %v3798 = vmul.f32 %v3777, 1.442695
      %v3799 = vpow.pop %v3798
      %v3800 = vmul.f32 %v3778, 1.442695
      %v3801 = vpow.pop %v3800
      %v3802 = vmul.f32 %v3779, 1.442695
      %v3803 = vpow.pop %v3802
      %v3804 = vmul.f32 %v3780, 1.442695
      %v3805 = vpow.pop %v3804
      %v3806 = vmul.f32 %v3781, 1.442695
      %v3807 = vpow.pop %v3806
      %v3808 = vmul.f32 %v3782, 1.442695
      %v3809 = vpow.pop %v3808
      %v3810 = vmul.f32 %v3783, 1.442695
      %v3811 = vpow.pop %v3810
      %v3812 = vmul.f32 %v3784, 1.442695
      %v3813 = vpow.pop %v3812
      %v3814 = vmul.f32 %v3785, 1.442695
      %v3815 = vpow.pop %v3814
      %v3816 = vmul.f32 %v3786, 1.442695
      %v3817 = vpow.pop %v3816
      %v3818 = vmul.f32 %v3787, 1.442695
      %v3819 = vpow.pop %v3818
      %v3820 = vmul.f32 %v3788, 1.442695
      %v3821 = vpow.pop %v3820
      %v3822 = vmul.f32 %v3789, 1.442695
      %v3823 = vpow.pop %v3822
      %v3824 = vmul.f32 %v3790, 1.442695
      %v3825 = vpow.pop %v3824
      %v3826 = vmul.f32 %v3791, 1.442695
      %v3827 = vpow.pop %v3826
      %v3828 = vmul.f32 %v3792, 1.442695
      %v3829 = vpow.pop %v3828
      %v3830 = vmul.f32 %v3793, 1.442695
      %v3831 = vpow.pop %v3830
      %v3832 = vmul.f32 %v3794, 1.442695
      %v3833 = vpow.pop %v3832
      %v3834 = vmul.f32 %v3795, 1.442695
      %v3835 = vpow.pop %v3834
      %v3836 = vsel %vm938, %v3797, 0.0
      %3837 = vadd.xlane.f32.xlu0 %v3836
      %v3838 = vpop.xlane.xlu0 %3837
      %v3839 = vsel %vm938, %v3799, 0.0
      %3840 = vadd.xlane.f32.xlu0 %v3839
      %v3841 = vpop.xlane.xlu0 %3840
      %v3842 = vsel %vm938, %v3801, 0.0
      %3843 = vadd.xlane.f32.xlu0 %v3842
      %v3844 = vpop.xlane.xlu0 %3843
      %v3845 = vsel %vm938, %v3803, 0.0
      %3846 = vadd.xlane.f32.xlu0 %v3845
      %v3847 = vpop.xlane.xlu0 %3846
      %v3848 = vsel %vm951, %v3805, 0.0
      %3849 = vadd.xlane.f32.xlu0 %v3848
      %v3850 = vpop.xlane.xlu0 %3849
      %v3851 = vsel %vm938, %v3807, 0.0
      %3852 = vadd.xlane.f32.xlu0 %v3851
      %v3853 = vpop.xlane.xlu0 %3852
      %v3854 = vsel %vm938, %v3809, 0.0
      %3855 = vadd.xlane.f32.xlu0 %v3854
      %v3856 = vpop.xlane.xlu0 %3855
      %v3857 = vsel %vm938, %v3811, 0.0
      %3858 = vadd.xlane.f32.xlu0 %v3857
      %v3859 = vpop.xlane.xlu0 %3858
      %v3860 = vsel %vm938, %v3813, 0.0
      %3861 = vadd.xlane.f32.xlu0 %v3860
      %v3862 = vpop.xlane.xlu0 %3861
      %v3863 = vsel %vm951, %v3815, 0.0
      %3864 = vadd.xlane.f32.xlu0 %v3863
      %v3865 = vpop.xlane.xlu0 %3864
      %v3866 = vsel %vm938, %v3817, 0.0
      %3867 = vadd.xlane.f32.xlu0 %v3866
      %v3868 = vpop.xlane.xlu0 %3867
      %v3869 = vsel %vm938, %v3819, 0.0
      %3870 = vadd.xlane.f32.xlu0 %v3869
      %v3871 = vpop.xlane.xlu0 %3870
      %v3872 = vsel %vm938, %v3821, 0.0
      %3873 = vadd.xlane.f32.xlu0 %v3872
      %v3874 = vpop.xlane.xlu0 %3873
      %v3875 = vsel %vm938, %v3823, 0.0
      %3876 = vadd.xlane.f32.xlu0 %v3875
      %v3877 = vpop.xlane.xlu0 %3876
      %v3878 = vsel %vm951, %v3825, 0.0
      %3879 = vadd.xlane.f32.xlu0 %v3878
      %v3880 = vpop.xlane.xlu0 %3879
      %v3881 = vsel %vm938, %v3827, 0.0
      %3882 = vadd.xlane.f32.xlu0 %v3881
      %v3883 = vpop.xlane.xlu0 %3882
      %v3884 = vsel %vm938, %v3829, 0.0
      %3885 = vadd.xlane.f32.xlu0 %v3884
      %v3886 = vpop.xlane.xlu0 %3885
      %v3887 = vsel %vm938, %v3831, 0.0
      %3888 = vadd.xlane.f32.xlu0 %v3887
      %v3889 = vpop.xlane.xlu0 %3888
      %v3890 = vsel %vm938, %v3833, 0.0
      %3891 = vadd.xlane.f32.xlu0 %v3890
      %v3892 = vpop.xlane.xlu0 %3891
      %v3893 = vsel %vm951, %v3835, 0.0
      %3894 = vadd.xlane.f32.xlu0 %v3893
      %v3895 = vpop.xlane.xlu0 %3894
      %v3896 = vrcp.pop %v3838
      %v3897 = vmul.f32 %v3797, %v3896
      %v3898 = vrcp.pop %v3841
      %v3899 = vmul.f32 %v3799, %v3898
      %v3900 = vrcp.pop %v3844
      %v3901 = vmul.f32 %v3801, %v3900
      %v3902 = vrcp.pop %v3847
      %v3903 = vmul.f32 %v3803, %v3902
      %v3904 = vrcp.pop %v3850
      %v3905 = vmul.f32 %v3805, %v3904
      %v3906 = vrcp.pop %v3853
      %v3907 = vmul.f32 %v3807, %v3906
      %v3908 = vrcp.pop %v3856
      %v3909 = vmul.f32 %v3809, %v3908
      %v3910 = vrcp.pop %v3859
      %v3911 = vmul.f32 %v3811, %v3910
      %v3912 = vrcp.pop %v3862
      %v3913 = vmul.f32 %v3813, %v3912
      %v3914 = vrcp.pop %v3865
      %v3915 = vmul.f32 %v3815, %v3914
      %v3916 = vrcp.pop %v3868
      %v3917 = vmul.f32 %v3817, %v3916
      %v3918 = vrcp.pop %v3871
      %v3919 = vmul.f32 %v3819, %v3918
      %v3920 = vrcp.pop %v3874
      %v3921 = vmul.f32 %v3821, %v3920
      %v3922 = vrcp.pop %v3877
      %v3923 = vmul.f32 %v3823, %v3922
      %v3924 = vrcp.pop %v3880
      %v3925 = vmul.f32 %v3825, %v3924
      %v3926 = vrcp.pop %v3883
      %v3927 = vmul.f32 %v3827, %v3926
      %v3928 = vrcp.pop %v3886
      %v3929 = vmul.f32 %v3829, %v3928
      %v3930 = vrcp.pop %v3889
      %v3931 = vmul.f32 %v3831, %v3930
      %v3932 = vrcp.pop %v3892
      %v3933 = vmul.f32 %v3833, %v3932
      %v3934 = vrcp.pop %v3895
      %v3935 = vmul.f32 %v3835, %v3934
      %3936 = vrot.lane.b32.xlu0 %v3138, 64
      %v3937 = vpop.permute.xlu0 %3936
      %3938 = vrot.lane.b32.xlu0 %v3143, 64
      %v3939 = vpop.permute.xlu0 %3938
      %3940 = vrot.lane.b32.xlu0 %v3148, 64
      %v3941 = vpop.permute.xlu0 %3940
      %3942 = vrot.lane.b32.xlu0 %v3153, 64
      %v3943 = vpop.permute.xlu0 %3942
      %3944 = vrot.lane.b32.xlu0 %v3158, 64
      %v3945 = vpop.permute.xlu0 %3944
      %v3951 = vsel %vm938, %v3897, 0
      %v3954 = vsel %vm938, %v3899, 0
      %v3957 = vsel %vm938, %v3901, 0
      %v3960 = vsel %vm938, %v3903, 0
      %v3963 = vsel %vm938, %v3905, 0
      %v3965 = vsel %vm1189, %v3945, 0
      %3967 = vmatprep.subr.mxu0 0.0
      %3968 = vmatpush1.msra.mxu0 %v3937
      %3969 = vmatprep.subr.mxu0 0.0
      %3970 = vmatpush1.msra.mxu0 %v3939
      %3971 = vmatprep.subr.mxu0 0.0
      %3972 = vmatpush1.msra.mxu0 %v3941
      %3973 = vmatprep.subr.mxu0 0.0
      %3974 = vmatpush1.msra.mxu0 %v3943
      %3975 = vmatprep.subr.mxu0 0.0
      %3976 = vmatpush1.msra.mxu0 %v3965
      %3977 = vmatprep.subr.mxu0 0.0
      %3978 = vmatpush1.msra.mxu0 0.0
      %3979 = vmatprep.subr.mxu0 0.0
      %3980 = vmatpush1.msra.mxu0 0.0
      %3981 = vmatprep.subr.mxu0 0.0
      %3982 = vmatpush1.msra.mxu0 0.0
      %3983 = vmatprep.subr.mxu0 0.0
      %3984 = vmatpush1.msra.mxu0 0.0
      %3985 = vmatprep.subr.mxu0 0.0
      %3986 = vmatpush1.msra.mxu0 0.0
      %3987 = vmatprep.subr.mxu0 0.0
      %3988 = vmatpush1.msra.mxu0 0.0
      %3989 = vmatprep.subr.mxu0 0.0
      %3990 = vmatpush1.msra.mxu0 0.0
      %3991 = vmatprep.subr.mxu0 0.0
      %3992 = vmatpush1.msra.mxu0 0.0
      %3993 = vmatprep.subr.mxu0 0.0
      %3994 = vmatpush1.msra.mxu0 0.0
      %3995 = vmatprep.subr.mxu0 0.0
      %3996 = vmatpush1.msra.mxu0 0.0
      %3997 = vmatprep.subr.mxu0 0.0
      %3998 = vmatpush1.msra.mxu0 0.0
      %3999 = vmatprep.subr.mxu0 0.0
      %4000 = vmatpush1.msra.mxu0 0.0
      %4001 = vmatprep.subr.mxu0 0.0
      %4002 = vmatpush1.msra.mxu0 0.0
      %4003 = vmatprep.subr.mxu0 0.0
      %4004 = vmatpush1.msra.mxu0 0.0
      %4005 = vmatprep.subr.mxu0 0.0
      %4006 = vmatpush1.msra.mxu0 0.0
      %4007 = vmatprep.subr.mxu0 0.0
      %4008 = vmatpush1.msra.mxu0 0.0
      %4009 = vmatprep.subr.mxu0 0.0
      %4010 = vmatpush1.msra.mxu0 0.0
      %4011 = vmatprep.subr.mxu0 0.0
      %4012 = vmatpush1.msra.mxu0 0.0
      %4013 = vmatprep.subr.mxu0 0.0
      %4014 = vmatpush1.msra.mxu0 0.0
      %4015 = vmatprep.subr.mxu0 0.0
      %4016 = vmatpush1.msra.mxu0 0.0
      %4017 = vmatprep.subr.mxu0 0.0
      %4018 = vmatpush1.msra.mxu0 0.0
      %4019 = vmatprep.subr.mxu0 0.0
      %4020 = vmatpush1.msra.mxu0 0.0
      %4021 = vmatprep.subr.mxu0 0.0
      %4022 = vmatpush1.msra.mxu0 0.0
      %4023 = vmatprep.subr.mxu0 0.0
      %4024 = vmatpush1.msra.mxu0 0.0
      %4025 = vmatprep.subr.mxu0 0.0
      %4026 = vmatpush1.msra.mxu0 0.0
      %4027 = vmatprep.subr.mxu0 0.0
      %4028 = vmatpush1.msra.mxu0 0.0
      %4029 = vmatprep.subr.mxu0 0.0
      %4030 = vmatpush1.msra.mxu0 0.0
      %4031 = vmatprep.mubr.f32.mxu0 0.0
      %4032 = vmatmul.mubr.f32.gmra.mrb[0].mxu0 %v3951
      %v4033 = vpop.f32.mrb[0].mxu0
      %v4034 = vadd.f32 0.0, %v4033
      %v4035 = vpop.f32.mrb[0].mxu0
      %4036 = vmatprep.mubr.f32.mxu0 0.0
      %4037 = vmatmul.mubr.f32.gmra.mrb[0].mxu0 %v3954
      %v4038 = vpop.f32.mrb[0].mxu0
      %v4039 = vadd.f32 0.0, %v4038
      %v4040 = vpop.f32.mrb[0].mxu0
      %4041 = vmatprep.mubr.f32.mxu0 0.0
      %4042 = vmatmul.mubr.f32.gmra.mrb[0].mxu0 %v3957
      %v4043 = vpop.f32.mrb[0].mxu0
      %v4044 = vadd.f32 0.0, %v4043
      %v4045 = vpop.f32.mrb[0].mxu0
      %4046 = vmatprep.mubr.f32.mxu0 0.0
      %4047 = vmatmul.mubr.f32.gmra.mrb[0].mxu0 %v3960
      %v4048 = vpop.f32.mrb[0].mxu0
      %v4049 = vadd.f32 0.0, %v4048
      %v4050 = vpop.f32.mrb[0].mxu0
      %4051 = vmatprep.mubr.f32.mxu0 0.0
      %4052 = vmatmul.mubr.f32.gmra.mrb[0].mxu0 %v3963
      %v4053 = vpop.f32.mrb[0].mxu0
      %v4054 = vadd.f32 0.0, %v4053
      %v4055 = vpop.f32.mrb[0].mxu0
      %4056 = vdwg.mxu0
      %4057 = vrot.lane.b32.xlu0 %v3167, 64
      %v4058 = vpop.permute.xlu0 %4057
      %4059 = vrot.lane.b32.xlu0 %v3169, 64
      %v4060 = vpop.permute.xlu0 %4059
      %4061 = vrot.lane.b32.xlu0 %v3171, 64
      %v4062 = vpop.permute.xlu0 %4061
      %4063 = vrot.lane.b32.xlu0 %v3173, 64
      %v4064 = vpop.permute.xlu0 %4063
      %4065 = vrot.lane.b32.xlu0 %v3175, 64
      %v4066 = vpop.permute.xlu0 %4065
      %v4072 = vsel %vm938, %v3907, 0
      %v4075 = vsel %vm938, %v3909, 0
      %v4078 = vsel %vm938, %v3911, 0
      %v4081 = vsel %vm938, %v3913, 0
      %v4084 = vsel %vm938, %v3915, 0
      %v4086 = vsel %vm1189, %v4066, 0
      %4088 = vmatprep.subr.mxu0 0.0
      %4089 = vmatpush1.msra.mxu0 %v4058
      %4090 = vmatprep.subr.mxu0 0.0
      %4091 = vmatpush1.msra.mxu0 %v4060
      %4092 = vmatprep.subr.mxu0 0.0
      %4093 = vmatpush1.msra.mxu0 %v4062
      %4094 = vmatprep.subr.mxu0 0.0
      %4095 = vmatpush1.msra.mxu0 %v4064
      %4096 = vmatprep.subr.mxu0 0.0
      %4097 = vmatpush1.msra.mxu0 %v4086
      %4098 = vmatprep.subr.mxu0 0.0
      %4099 = vmatpush1.msra.mxu0 0.0
      %4100 = vmatprep.subr.mxu0 0.0
      %4101 = vmatpush1.msra.mxu0 0.0
      %4102 = vmatprep.subr.mxu0 0.0
      %4103 = vmatpush1.msra.mxu0 0.0
      %4104 = vmatprep.subr.mxu0 0.0
      %4105 = vmatpush1.msra.mxu0 0.0
      %4106 = vmatprep.subr.mxu0 0.0
      %4107 = vmatpush1.msra.mxu0 0.0
      %4108 = vmatprep.subr.mxu0 0.0
      %4109 = vmatpush1.msra.mxu0 0.0
      %4110 = vmatprep.subr.mxu0 0.0
      %4111 = vmatpush1.msra.mxu0 0.0
      %4112 = vmatprep.subr.mxu0 0.0
      %4113 = vmatpush1.msra.mxu0 0.0
      %4114 = vmatprep.subr.mxu0 0.0
      %4115 = vmatpush1.msra.mxu0 0.0
      %4116 = vmatprep.subr.mxu0 0.0
      %4117 = vmatpush1.msra.mxu0 0.0
      %4118 = vmatprep.subr.mxu0 0.0
      %4119 = vmatpush1.msra.mxu0 0.0
      %4120 = vmatprep.subr.mxu0 0.0
      %4121 = vmatpush1.msra.mxu0 0.0
      %4122 = vmatprep.subr.mxu0 0.0
      %4123 = vmatpush1.msra.mxu0 0.0
      %4124 = vmatprep.subr.mxu0 0.0
      %4125 = vmatpush1.msra.mxu0 0.0
      %4126 = vmatprep.subr.mxu0 0.0
      %4127 = vmatpush1.msra.mxu0 0.0
      %4128 = vmatprep.subr.mxu0 0.0
      %4129 = vmatpush1.msra.mxu0 0.0
      %4130 = vmatprep.subr.mxu0 0.0
      %4131 = vmatpush1.msra.mxu0 0.0
      %4132 = vmatprep.subr.mxu0 0.0
      %4133 = vmatpush1.msra.mxu0 0.0
      %4134 = vmatprep.subr.mxu0 0.0
      %4135 = vmatpush1.msra.mxu0 0.0
      %4136 = vmatprep.subr.mxu0 0.0
      %4137 = vmatpush1.msra.mxu0 0.0
      %4138 = vmatprep.subr.mxu0 0.0
      %4139 = vmatpush1.msra.mxu0 0.0
      %4140 = vmatprep.subr.mxu0 0.0
      %4141 = vmatpush1.msra.mxu0 0.0
      %4142 = vmatprep.subr.mxu0 0.0
      %4143 = vmatpush1.msra.mxu0 0.0
      %4144 = vmatprep.subr.mxu0 0.0
      %4145 = vmatpush1.msra.mxu0 0.0
      %4146 = vmatprep.subr.mxu0 0.0
      %4147 = vmatpush1.msra.mxu0 0.0
      %4148 = vmatprep.subr.mxu0 0.0
      %4149 = vmatpush1.msra.mxu0 0.0
      %4150 = vmatprep.subr.mxu0 0.0
      %4151 = vmatpush1.msra.mxu0 0.0
      %4152 = vmatprep.mubr.f32.mxu0 0.0
      %4153 = vmatmul.mubr.f32.gmra.mrb[0].mxu0 %v4072
      %v4154 = vpop.f32.mrb[0].mxu0
      %v4155 = vadd.f32 0.0, %v4154
      %v4156 = vpop.f32.mrb[0].mxu0
      %4157 = vmatprep.mubr.f32.mxu0 0.0
      %4158 = vmatmul.mubr.f32.gmra.mrb[0].mxu0 %v4075
      %v4159 = vpop.f32.mrb[0].mxu0
      %v4160 = vadd.f32 0.0, %v4159
      %v4161 = vpop.f32.mrb[0].mxu0
      %4162 = vmatprep.mubr.f32.mxu0 0.0
      %4163 = vmatmul.mubr.f32.gmra.mrb[0].mxu0 %v4078
      %v4164 = vpop.f32.mrb[0].mxu0
      %v4165 = vadd.f32 0.0, %v4164
      %v4166 = vpop.f32.mrb[0].mxu0
      %4167 = vmatprep.mubr.f32.mxu0 0.0
      %4168 = vmatmul.mubr.f32.gmra.mrb[0].mxu0 %v4081
      %v4169 = vpop.f32.mrb[0].mxu0
      %v4170 = vadd.f32 0.0, %v4169
      %v4171 = vpop.f32.mrb[0].mxu0
      %4172 = vmatprep.mubr.f32.mxu0 0.0
      %4173 = vmatmul.mubr.f32.gmra.mrb[0].mxu0 %v4084
      %v4174 = vpop.f32.mrb[0].mxu0
      %v4175 = vadd.f32 0.0, %v4174
      %v4176 = vpop.f32.mrb[0].mxu0
      %4177 = vdwg.mxu0
      %4178 = vrot.lane.b32.xlu0 %v3177, 64
      %v4179 = vpop.permute.xlu0 %4178
      %4180 = vrot.lane.b32.xlu0 %v3179, 64
      %v4181 = vpop.permute.xlu0 %4180
      %4182 = vrot.lane.b32.xlu0 %v3181, 64
      %v4183 = vpop.permute.xlu0 %4182
      %4184 = vrot.lane.b32.xlu0 %v3183, 64
      %v4185 = vpop.permute.xlu0 %4184
      %4186 = vrot.lane.b32.xlu0 %v3185, 64
      %v4187 = vpop.permute.xlu0 %4186
      %v4193 = vsel %vm938, %v3917, 0
      %v4196 = vsel %vm938, %v3919, 0
      %v4199 = vsel %vm938, %v3921, 0
      %v4202 = vsel %vm938, %v3923, 0
      %v4205 = vsel %vm938, %v3925, 0
      %v4207 = vsel %vm1189, %v4187, 0
      %4209 = vmatprep.subr.mxu0 0.0
      %4210 = vmatpush1.msra.mxu0 %v4179
      %4211 = vmatprep.subr.mxu0 0.0
      %4212 = vmatpush1.msra.mxu0 %v4181
      %4213 = vmatprep.subr.mxu0 0.0
      %4214 = vmatpush1.msra.mxu0 %v4183
      %4215 = vmatprep.subr.mxu0 0.0
      %4216 = vmatpush1.msra.mxu0 %v4185
      %4217 = vmatprep.subr.mxu0 0.0
      %4218 = vmatpush1.msra.mxu0 %v4207
      %4219 = vmatprep.subr.mxu0 0.0
      %4220 = vmatpush1.msra.mxu0 0.0
      %4221 = vmatprep.subr.mxu0 0.0
      %4222 = vmatpush1.msra.mxu0 0.0
      %4223 = vmatprep.subr.mxu0 0.0
      %4224 = vmatpush1.msra.mxu0 0.0
      %4225 = vmatprep.subr.mxu0 0.0
      %4226 = vmatpush1.msra.mxu0 0.0
      %4227 = vmatprep.subr.mxu0 0.0
      %4228 = vmatpush1.msra.mxu0 0.0
      %4229 = vmatprep.subr.mxu0 0.0
      %4230 = vmatpush1.msra.mxu0 0.0
      %4231 = vmatprep.subr.mxu0 0.0
      %4232 = vmatpush1.msra.mxu0 0.0
      %4233 = vmatprep.subr.mxu0 0.0
      %4234 = vmatpush1.msra.mxu0 0.0
      %4235 = vmatprep.subr.mxu0 0.0
      %4236 = vmatpush1.msra.mxu0 0.0
      %4237 = vmatprep.subr.mxu0 0.0
      %4238 = vmatpush1.msra.mxu0 0.0
      %4239 = vmatprep.subr.mxu0 0.0
      %4240 = vmatpush1.msra.mxu0 0.0
      %4241 = vmatprep.subr.mxu0 0.0
      %4242 = vmatpush1.msra.mxu0 0.0
      %4243 = vmatprep.subr.mxu0 0.0
      %4244 = vmatpush1.msra.mxu0 0.0
      %4245 = vmatprep.subr.mxu0 0.0
      %4246 = vmatpush1.msra.mxu0 0.0
      %4247 = vmatprep.subr.mxu0 0.0
      %4248 = vmatpush1.msra.mxu0 0.0
      %4249 = vmatprep.subr.mxu0 0.0
      %4250 = vmatpush1.msra.mxu0 0.0
      %4251 = vmatprep.subr.mxu0 0.0
      %4252 = vmatpush1.msra.mxu0 0.0
      %4253 = vmatprep.subr.mxu0 0.0
      %4254 = vmatpush1.msra.mxu0 0.0
      %4255 = vmatprep.subr.mxu0 0.0
      %4256 = vmatpush1.msra.mxu0 0.0
      %4257 = vmatprep.subr.mxu0 0.0
      %4258 = vmatpush1.msra.mxu0 0.0
      %4259 = vmatprep.subr.mxu0 0.0
      %4260 = vmatpush1.msra.mxu0 0.0
      %4261 = vmatprep.subr.mxu0 0.0
      %4262 = vmatpush1.msra.mxu0 0.0
      %4263 = vmatprep.subr.mxu0 0.0
      %4264 = vmatpush1.msra.mxu0 0.0
      %4265 = vmatprep.subr.mxu0 0.0
      %4266 = vmatpush1.msra.mxu0 0.0
      %4267 = vmatprep.subr.mxu0 0.0
      %4268 = vmatpush1.msra.mxu0 0.0
      %4269 = vmatprep.subr.mxu0 0.0
      %4270 = vmatpush1.msra.mxu0 0.0
      %4271 = vmatprep.subr.mxu0 0.0
      %4272 = vmatpush1.msra.mxu0 0.0
      %4273 = vmatprep.mubr.f32.mxu0 0.0
      %4274 = vmatmul.mubr.f32.gmra.mrb[0].mxu0 %v4193
      %v4275 = vpop.f32.mrb[0].mxu0
      %v4276 = vadd.f32 0.0, %v4275
      %v4277 = vpop.f32.mrb[0].mxu0
      %4278 = vmatprep.mubr.f32.mxu0 0.0
      %4279 = vmatmul.mubr.f32.gmra.mrb[0].mxu0 %v4196
      %v4280 = vpop.f32.mrb[0].mxu0
      %v4281 = vadd.f32 0.0, %v4280
      %v4282 = vpop.f32.mrb[0].mxu0
      %4283 = vmatprep.mubr.f32.mxu0 0.0
      %4284 = vmatmul.mubr.f32.gmra.mrb[0].mxu0 %v4199
      %v4285 = vpop.f32.mrb[0].mxu0
      %v4286 = vadd.f32 0.0, %v4285
      %v4287 = vpop.f32.mrb[0].mxu0
      %4288 = vmatprep.mubr.f32.mxu0 0.0
      %4289 = vmatmul.mubr.f32.gmra.mrb[0].mxu0 %v4202
      %v4290 = vpop.f32.mrb[0].mxu0
      %v4291 = vadd.f32 0.0, %v4290
      %v4292 = vpop.f32.mrb[0].mxu0
      %4293 = vmatprep.mubr.f32.mxu0 0.0
      %4294 = vmatmul.mubr.f32.gmra.mrb[0].mxu0 %v4205
      %v4295 = vpop.f32.mrb[0].mxu0
      %v4296 = vadd.f32 0.0, %v4295
      %v4297 = vpop.f32.mrb[0].mxu0
      %4298 = vdwg.mxu0
      %4299 = vrot.lane.b32.xlu0 %v3187, 64
      %v4300 = vpop.permute.xlu0 %4299
      %4301 = vrot.lane.b32.xlu0 %v3189, 64
      %v4302 = vpop.permute.xlu0 %4301
      %4303 = vrot.lane.b32.xlu0 %v3191, 64
      %v4304 = vpop.permute.xlu0 %4303
      %4305 = vrot.lane.b32.xlu0 %v3193, 64
      %v4306 = vpop.permute.xlu0 %4305
      %4307 = vrot.lane.b32.xlu0 %v3195, 64
      %v4308 = vpop.permute.xlu0 %4307
      %v4314 = vsel %vm938, %v3927, 0
      %v4317 = vsel %vm938, %v3929, 0
      %v4320 = vsel %vm938, %v3931, 0
      %v4323 = vsel %vm938, %v3933, 0
      %v4326 = vsel %vm938, %v3935, 0
      %v4328 = vsel %vm1189, %v4308, 0
      %4330 = vmatprep.subr.mxu0 0.0
      %4331 = vmatpush1.msra.mxu0 %v4300
      %4332 = vmatprep.subr.mxu0 0.0
      %4333 = vmatpush1.msra.mxu0 %v4302
      %4334 = vmatprep.subr.mxu0 0.0
      %4335 = vmatpush1.msra.mxu0 %v4304
      %4336 = vmatprep.subr.mxu0 0.0
      %4337 = vmatpush1.msra.mxu0 %v4306
      %4338 = vmatprep.subr.mxu0 0.0
      %4339 = vmatpush1.msra.mxu0 %v4328
      %4340 = vmatprep.subr.mxu0 0.0
      %4341 = vmatpush1.msra.mxu0 0.0
      %4342 = vmatprep.subr.mxu0 0.0
      %4343 = vmatpush1.msra.mxu0 0.0
      %4344 = vmatprep.subr.mxu0 0.0
      %4345 = vmatpush1.msra.mxu0 0.0
      %4346 = vmatprep.subr.mxu0 0.0
      %4347 = vmatpush1.msra.mxu0 0.0
      %4348 = vmatprep.subr.mxu0 0.0
      %4349 = vmatpush1.msra.mxu0 0.0
      %4350 = vmatprep.subr.mxu0 0.0
      %4351 = vmatpush1.msra.mxu0 0.0
      %4352 = vmatprep.subr.mxu0 0.0
      %4353 = vmatpush1.msra.mxu0 0.0
      %4354 = vmatprep.subr.mxu0 0.0
      %4355 = vmatpush1.msra.mxu0 0.0
      %4356 = vmatprep.subr.mxu0 0.0
      %4357 = vmatpush1.msra.mxu0 0.0
      %4358 = vmatprep.subr.mxu0 0.0
      %4359 = vmatpush1.msra.mxu0 0.0
      %4360 = vmatprep.subr.mxu0 0.0
      %4361 = vmatpush1.msra.mxu0 0.0
      %4362 = vmatprep.subr.mxu0 0.0
      %4363 = vmatpush1.msra.mxu0 0.0
      %4364 = vmatprep.subr.mxu0 0.0
      %4365 = vmatpush1.msra.mxu0 0.0
      %4366 = vmatprep.subr.mxu0 0.0
      %4367 = vmatpush1.msra.mxu0 0.0
      %4368 = vmatprep.subr.mxu0 0.0
      %4369 = vmatpush1.msra.mxu0 0.0
      %4370 = vmatprep.subr.mxu0 0.0
      %4371 = vmatpush1.msra.mxu0 0.0
      %4372 = vmatprep.subr.mxu0 0.0
      %4373 = vmatpush1.msra.mxu0 0.0
      %4374 = vmatprep.subr.mxu0 0.0
      %4375 = vmatpush1.msra.mxu0 0.0
      %4376 = vmatprep.subr.mxu0 0.0
      %4377 = vmatpush1.msra.mxu0 0.0
      %4378 = vmatprep.subr.mxu0 0.0
      %4379 = vmatpush1.msra.mxu0 0.0
      %4380 = vmatprep.subr.mxu0 0.0
      %4381 = vmatpush1.msra.mxu0 0.0
      %4382 = vmatprep.subr.mxu0 0.0
      %4383 = vmatpush1.msra.mxu0 0.0
      %4384 = vmatprep.subr.mxu0 0.0
      %4385 = vmatpush1.msra.mxu0 0.0
      %4386 = vmatprep.subr.mxu0 0.0
      %4387 = vmatpush1.msra.mxu0 0.0
      %4388 = vmatprep.subr.mxu0 0.0
      %4389 = vmatpush1.msra.mxu0 0.0
      %4390 = vmatprep.subr.mxu0 0.0
      %4391 = vmatpush1.msra.mxu0 0.0
      %4392 = vmatprep.subr.mxu0 0.0
      %4393 = vmatpush1.msra.mxu0 0.0
      %4394 = vmatprep.mubr.f32.mxu0 0.0
      %4395 = vmatmul.mubr.f32.gmra.mrb[0].mxu0 %v4314
      %v4396 = vpop.f32.mrb[0].mxu0
      %v4397 = vadd.f32 0.0, %v4396
      %v4398 = vpop.f32.mrb[0].mxu0
      %4399 = vmatprep.mubr.f32.mxu0 0.0
      %4400 = vmatmul.mubr.f32.gmra.mrb[0].mxu0 %v4317
      %v4401 = vpop.f32.mrb[0].mxu0
      %v4402 = vadd.f32 0.0, %v4401
      %v4403 = vpop.f32.mrb[0].mxu0
      %4404 = vmatprep.mubr.f32.mxu0 0.0
      %4405 = vmatmul.mubr.f32.gmra.mrb[0].mxu0 %v4320
      %v4406 = vpop.f32.mrb[0].mxu0
      %v4407 = vadd.f32 0.0, %v4406
      %v4408 = vpop.f32.mrb[0].mxu0
      %4409 = vmatprep.mubr.f32.mxu0 0.0
      %4410 = vmatmul.mubr.f32.gmra.mrb[0].mxu0 %v4323
      %v4411 = vpop.f32.mrb[0].mxu0
      %v4412 = vadd.f32 0.0, %v4411
      %v4413 = vpop.f32.mrb[0].mxu0
      %4414 = vmatprep.mubr.f32.mxu0 0.0
      %4415 = vmatmul.mubr.f32.gmra.mrb[0].mxu0 %v4326
      %v4416 = vpop.f32.mrb[0].mxu0
      %v4417 = vadd.f32 0.0, %v4416
      %v4418 = vpop.f32.mrb[0].mxu0
      %4419 = vdwg.mxu0
      %4425 = vrot.lane.b32.xlu0 %v4155, 8
      %v4426 = vpop.permute.xlu0 %4425
      %4427 = vrot.lane.b32.xlu0 %v4160, 8
      %v4428 = vpop.permute.xlu0 %4427
      %4429 = vrot.lane.b32.xlu0 %v4165, 8
      %v4430 = vpop.permute.xlu0 %4429
      %4431 = vrot.lane.b32.xlu0 %v4170, 8
      %v4432 = vpop.permute.xlu0 %4431
      %4433 = vrot.lane.b32.xlu0 %v4175, 8
      %v4434 = vpop.permute.xlu0 %4433
      %4445 = vrot.lane.b32.xlu0 %v4276, 16
      %v4446 = vpop.permute.xlu0 %4445
      %4447 = vrot.lane.b32.xlu0 %v4281, 16
      %v4448 = vpop.permute.xlu0 %4447
      %4449 = vrot.lane.b32.xlu0 %v4286, 16
      %v4450 = vpop.permute.xlu0 %4449
      %4451 = vrot.lane.b32.xlu0 %v4291, 16
      %v4452 = vpop.permute.xlu0 %4451
      %4453 = vrot.lane.b32.xlu0 %v4296, 16
      %v4454 = vpop.permute.xlu0 %4453
      %4465 = vrot.lane.b32.xlu0 %v4397, 24
      %v4466 = vpop.permute.xlu0 %4465
      %4467 = vrot.lane.b32.xlu0 %v4402, 24
      %v4468 = vpop.permute.xlu0 %4467
      %4469 = vrot.lane.b32.xlu0 %v4407, 24
      %v4470 = vpop.permute.xlu0 %4469
      %4471 = vrot.lane.b32.xlu0 %v4412, 24
      %v4472 = vpop.permute.xlu0 %4471
      %4473 = vrot.lane.b32.xlu0 %v4417, 24
      %v4474 = vpop.permute.xlu0 %4473
      %v4480 = vsel %vm427, %v4034, %v4426
      %v4481 = vsel %vm427, %v4039, %v4428
      %v4482 = vsel %vm427, %v4044, %v4430
      %v4483 = vsel %vm427, %v4049, %v4432
      %v4484 = vsel %vm427, %v4054, %v4434
      %v4485 = vsel %vm1710, %v4480, %v4446
      %v4486 = vsel %vm1710, %v4481, %v4448
      %v4487 = vsel %vm1710, %v4482, %v4450
      %v4488 = vsel %vm1710, %v4483, %v4452
      %v4489 = vsel %vm1710, %v4484, %v4454
      %v4490 = vsel %vm1716, %v4485, %v4466
      %v4491 = vsel %vm1716, %v4486, %v4468
      %v4492 = vsel %vm1716, %v4487, %v4470
      %v4493 = vsel %vm1716, %v4488, %v4472
      %v4494 = vsel %vm1716, %v4489, %v4474
      %s4495 = scalar_lea.vmem %s8, 32
      %v4496 = vld [vmem:[%s4495] sm:$0xff]
      %v4497 = vld [vmem:[%s4495 + $0x8] sm:$0xff]
      %v4498 = vld [vmem:[%s4495 + $0x10] sm:$0xff]
      %v4499 = vld [vmem:[%s4495 + $0x18] sm:$0xff]
      %v4501 = vsel %vm62, %v4490, 0
      %v4504 = vsel %vm62, %v4491, 0
      %v4507 = vsel %vm62, %v4492, 0
      %v4510 = vsel %vm62, %v4493, 0
      %v4513 = vsel %vm62, %v4494, 0
      %4515 = vmatprep.subr.mxu0 0.0
      %4516 = vmatpush1.msra.mxu0 %v4496
      %4517 = vmatprep.subr.mxu0 0.0
      %4518 = vmatpush1.msra.mxu0 %v4497
      %4519 = vmatprep.subr.mxu0 0.0
      %4520 = vmatpush1.msra.mxu0 %v4498
      %4521 = vmatprep.subr.mxu0 0.0
      %4522 = vmatpush1.msra.mxu0 %v4499
      %4523 = vmatprep.subr.mxu0 0.0
      %4524 = vmatpush1.msra.mxu0 0.0
      %4525 = vmatprep.subr.mxu0 0.0
      %4526 = vmatpush1.msra.mxu0 0.0
      %4527 = vmatprep.subr.mxu0 0.0
      %4528 = vmatpush1.msra.mxu0 0.0
      %4529 = vmatprep.subr.mxu0 0.0
      %4530 = vmatpush1.msra.mxu0 0.0
      %4531 = vmatprep.subr.mxu0 0.0
      %4532 = vmatpush1.msra.mxu0 0.0
      %4533 = vmatprep.subr.mxu0 0.0
      %4534 = vmatpush1.msra.mxu0 0.0
      %4535 = vmatprep.subr.mxu0 0.0
      %4536 = vmatpush1.msra.mxu0 0.0
      %4537 = vmatprep.subr.mxu0 0.0
      %4538 = vmatpush1.msra.mxu0 0.0
      %4539 = vmatprep.subr.mxu0 0.0
      %4540 = vmatpush1.msra.mxu0 0.0
      %4541 = vmatprep.subr.mxu0 0.0
      %4542 = vmatpush1.msra.mxu0 0.0
      %4543 = vmatprep.subr.mxu0 0.0
      %4544 = vmatpush1.msra.mxu0 0.0
      %4545 = vmatprep.subr.mxu0 0.0
      %4546 = vmatpush1.msra.mxu0 0.0
      %4547 = vmatprep.subr.mxu0 0.0
      %4548 = vmatpush1.msra.mxu0 0.0
      %4549 = vmatprep.subr.mxu0 0.0
      %4550 = vmatpush1.msra.mxu0 0.0
      %4551 = vmatprep.subr.mxu0 0.0
      %4552 = vmatpush1.msra.mxu0 0.0
      %4553 = vmatprep.subr.mxu0 0.0
      %4554 = vmatpush1.msra.mxu0 0.0
      %4555 = vmatprep.subr.mxu0 0.0
      %4556 = vmatpush1.msra.mxu0 0.0
      %4557 = vmatprep.subr.mxu0 0.0
      %4558 = vmatpush1.msra.mxu0 0.0
      %4559 = vmatprep.subr.mxu0 0.0
      %4560 = vmatpush1.msra.mxu0 0.0
      %4561 = vmatprep.subr.mxu0 0.0
      %4562 = vmatpush1.msra.mxu0 0.0
      %4563 = vmatprep.subr.mxu0 0.0
      %4564 = vmatpush1.msra.mxu0 0.0
      %4565 = vmatprep.subr.mxu0 0.0
      %4566 = vmatpush1.msra.mxu0 0.0
      %4567 = vmatprep.subr.mxu0 0.0
      %4568 = vmatpush1.msra.mxu0 0.0
      %4569 = vmatprep.subr.mxu0 0.0
      %4570 = vmatpush1.msra.mxu0 0.0
      %4571 = vmatprep.subr.mxu0 0.0
      %4572 = vmatpush1.msra.mxu0 0.0
      %4573 = vmatprep.subr.mxu0 0.0
      %4574 = vmatpush1.msra.mxu0 0.0
      %4575 = vmatprep.subr.mxu0 0.0
      %4576 = vmatpush1.msra.mxu0 0.0
      %4577 = vmatprep.subr.mxu0 0.0
      %4578 = vmatpush1.msra.mxu0 0.0
      %4579 = vmatprep.mubr.f32.mxu0 0.0
      %4580 = vmatmul.mubr.f32.gmra.mrb[0].mxu0 %v4501
      %v4581 = vpop.f32.mrb[0].mxu0
      %v4582 = vadd.f32 0.0, %v4581
      %v4583 = vpop.f32.mrb[0].mxu0
      %4584 = vmatprep.mubr.f32.mxu0 0.0
      %4585 = vmatmul.mubr.f32.gmra.mrb[0].mxu0 %v4504
      %v4586 = vpop.f32.mrb[0].mxu0
      %v4587 = vadd.f32 0.0, %v4586
      %v4588 = vpop.f32.mrb[0].mxu0
      %4589 = vmatprep.mubr.f32.mxu0 0.0
      %4590 = vmatmul.mubr.f32.gmra.mrb[0].mxu0 %v4507
      %v4591 = vpop.f32.mrb[0].mxu0
      %v4592 = vadd.f32 0.0, %v4591
      %v4593 = vpop.f32.mrb[0].mxu0
      %4594 = vmatprep.mubr.f32.mxu0 0.0
      %4595 = vmatmul.mubr.f32.gmra.mrb[0].mxu0 %v4510
      %v4596 = vpop.f32.mrb[0].mxu0
      %v4597 = vadd.f32 0.0, %v4596
      %v4598 = vpop.f32.mrb[0].mxu0
      %4599 = vmatprep.mubr.f32.mxu0 0.0
      %4600 = vmatmul.mubr.f32.gmra.mrb[0].mxu0 %v4513
      %v4601 = vpop.f32.mrb[0].mxu0
      %v4602 = vadd.f32 0.0, %v4601
      %v4603 = vpop.f32.mrb[0].mxu0
      %4604 = vdwg.mxu0
      %v4605 = vadd.f32 %v2916, %v4582
      %v4606 = vadd.f32 %v2917, %v4587
      %v4607 = vadd.f32 %v2918, %v4592
      %v4608 = vadd.f32 %v2919, %v4597
      %v4609 = vadd.f32 %v2920, %v4602
      %v4610 = vlaneseq
      %v4611 = vshrl.u32 %v4610, 7
      %v4612 = vsub.s32 0, %v4611
      %v4613 = vrot.slane %v2924, %v4612
      %v4614 = vadd.f32 %v4605, %v4613
      %v4615 = vadd.f32 %v4606, %v4613
      %v4616 = vadd.f32 %v4607, %v4613
      %v4617 = vadd.f32 %v4608, %v4613
      %v4618 = vadd.f32 %v4609, %v4613
      %v4619 = vsel %vm62, %v4614, 0.0
      %4620 = vadd.xlane.f32.xlu0 %v4619
      %v4621 = vpop.xlane.xlu0 %4620
      %v4622 = vsel %vm62, %v4615, 0.0
      %4623 = vadd.xlane.f32.xlu0 %v4622
      %v4624 = vpop.xlane.xlu0 %4623
      %v4625 = vsel %vm62, %v4616, 0.0
      %4626 = vadd.xlane.f32.xlu0 %v4625
      %v4627 = vpop.xlane.xlu0 %4626
      %v4628 = vsel %vm62, %v4617, 0.0
      %4629 = vadd.xlane.f32.xlu0 %v4628
      %v4630 = vpop.xlane.xlu0 %4629
      %v4631 = vsel %vm67, %v4618, 0.0
      %4632 = vadd.xlane.f32.xlu0 %v4631
      %v4633 = vpop.xlane.xlu0 %4632
      %v4634 = vmul.f32 %v4621, %v161
      %v4635 = vmul.f32 %v4624, %v161
      %v4636 = vmul.f32 %v4627, %v161
      %v4637 = vmul.f32 %v4630, %v161
      %v4638 = vmul.f32 %v4633, %v161
      %v4639 = vsub.f32 %v4614, %v4634
      %v4640 = vsub.f32 %v4615, %v4635
      %v4641 = vsub.f32 %v4616, %v4636
      %v4642 = vsub.f32 %v4617, %v4637
      %v4643 = vsub.f32 %v4618, %v4638
      %v4644 = vmul.f32 %v4639, %v4639
      %v4645 = vmul.f32 %v4640, %v4640
      %v4646 = vmul.f32 %v4641, %v4641
      %v4647 = vmul.f32 %v4642, %v4642
      %v4648 = vmul.f32 %v4643, %v4643
      %v4649 = vsel %vm62, %v4644, 0.0
      %4650 = vadd.xlane.f32.xlu0 %v4649
      %v4651 = vpop.xlane.xlu0 %4650
      %v4652 = vsel %vm62, %v4645, 0.0
      %4653 = vadd.xlane.f32.xlu0 %v4652
      %v4654 = vpop.xlane.xlu0 %4653
      %v4655 = vsel %vm62, %v4646, 0.0
      %4656 = vadd.xlane.f32.xlu0 %v4655
      %v4657 = vpop.xlane.xlu0 %4656
      %v4658 = vsel %vm62, %v4647, 0.0
      %4659 = vadd.xlane.f32.xlu0 %v4658
      %v4660 = vpop.xlane.xlu0 %4659
      %v4661 = vsel %vm67, %v4648, 0.0
      %4662 = vadd.xlane.f32.xlu0 %v4661
      %v4663 = vpop.xlane.xlu0 %4662
      %v4664 = vmul.f32 %v4651, %v192
      %v4665 = vmul.f32 %v4654, %v192
      %v4666 = vmul.f32 %v4657, %v192
      %v4667 = vmul.f32 %v4660, %v192
      %v4668 = vmul.f32 %v4663, %v192
      %v4669 = vlaneseq
      %v4670 = vshrl.u32 %v4669, 7
      %v4671 = vsub.s32 2, %v4670
      %v4672 = vrot.slane %v2922, %v4671
      %v4673 = vmul.f32 %v4672, %v4639
      %v4674 = vmul.f32 %v4672, %v4640
      %v4675 = vmul.f32 %v4672, %v4641
      %v4676 = vmul.f32 %v4672, %v4642
      %v4677 = vmul.f32 %v4672, %v4643
      %v4678 = vrsqrt.pop %v4664
      %v4679 = vmul.f32 %v4664, %v4678
      %vm4680 = vcmp.eq.f32.partialorder %v4664, inf
      %v4681 = vsel %vm4680, %v4664, %v4679
      %vm4682 = vcmp.eq.f32.partialorder %v4664, 0.0
      %v4683 = vand.u32 %v4664, 2147483648
      %v4684 = vsel %vm4682, %v4683, %v4681
      %v4685 = vrsqrt.pop %v4665
      %v4686 = vmul.f32 %v4665, %v4685
      %vm4687 = vcmp.eq.f32.partialorder %v4665, inf
      %v4688 = vsel %vm4687, %v4665, %v4686
      %vm4689 = vcmp.eq.f32.partialorder %v4665, 0.0
      %v4690 = vand.u32 %v4665, 2147483648
      %v4691 = vsel %vm4689, %v4690, %v4688
      %v4692 = vrsqrt.pop %v4666
      %v4693 = vmul.f32 %v4666, %v4692
      %vm4694 = vcmp.eq.f32.partialorder %v4666, inf
      %v4695 = vsel %vm4694, %v4666, %v4693
      %vm4696 = vcmp.eq.f32.partialorder %v4666, 0.0
      %v4697 = vand.u32 %v4666, 2147483648
      %v4698 = vsel %vm4696, %v4697, %v4695
      %v4699 = vrsqrt.pop %v4667
      %v4700 = vmul.f32 %v4667, %v4699
      %vm4701 = vcmp.eq.f32.partialorder %v4667, inf
      %v4702 = vsel %vm4701, %v4667, %v4700
      %vm4703 = vcmp.eq.f32.partialorder %v4667, 0.0
      %v4704 = vand.u32 %v4667, 2147483648
      %v4705 = vsel %vm4703, %v4704, %v4702
      %v4706 = vrsqrt.pop %v4668
      %v4707 = vmul.f32 %v4668, %v4706
      %vm4708 = vcmp.eq.f32.partialorder %v4668, inf
      %v4709 = vsel %vm4708, %v4668, %v4707
      %vm4710 = vcmp.eq.f32.partialorder %v4668, 0.0
      %v4711 = vand.u32 %v4668, 2147483648
      %v4712 = vsel %vm4710, %v4711, %v4709
      %v4713 = vadd.f32 %v4684, 1e-06
      %v4714 = vadd.f32 %v4691, 1e-06
      %v4715 = vadd.f32 %v4698, 1e-06
      %v4716 = vadd.f32 %v4705, 1e-06
      %v4717 = vadd.f32 %v4712, 1e-06
      %v4718 = vrcp.pop %v4713
      %v4719 = vmul.f32 %v4673, %v4718
      %v4720 = vrcp.pop %v4714
      %v4721 = vmul.f32 %v4674, %v4720
      %v4722 = vrcp.pop %v4715
      %v4723 = vmul.f32 %v4675, %v4722
      %v4724 = vrcp.pop %v4716
      %v4725 = vmul.f32 %v4676, %v4724
      %v4726 = vrcp.pop %v4717
      %v4727 = vmul.f32 %v4677, %v4726
      %v4728 = vlaneseq
      %v4729 = vshrl.u32 %v4728, 7
      %v4730 = vsub.s32 3, %v4729
      %v4731 = vrot.slane %v2922, %v4730
      %v4732 = vadd.f32 %v4719, %v4731
      %v4733 = vadd.f32 %v4721, %v4731
      %v4734 = vadd.f32 %v4723, %v4731
      %v4735 = vadd.f32 %v4725, %v4731
      %v4736 = vadd.f32 %v4727, %v4731
      %s4737 = scalar_lea.vmem %s4, 40
      %v4738 = vld [vmem:[%s4737] sm:$0xff]
      %v4739 = vld [vmem:[%s4737 + $0x8] sm:$0xff]
      %v4740 = vld [vmem:[%s4737 + $0x10] sm:$0xff]
      %v4741 = vld [vmem:[%s4737 + $0x18] sm:$0xff]
      %v4742 = vld [vmem:[%s4737 + $0x20] sm:$0x3]
      %v4744 = vsel %vm938, %v4738, 0
      %v4747 = vsel %vm938, %v4739, 0
      %v4750 = vsel %vm938, %v4740, 0
      %v4753 = vsel %vm938, %v4741, 0
      %v4756 = vsel %vm938, %v4742, 0
      %v4759 = vsel %vm1189, %v4736, 0
      %4761 = vmatprep.subr.mxu0 0.0
      %4762 = vmatpush1.msra.mxu0 %v4732
      %4763 = vmatprep.subr.mxu0 0.0
      %4764 = vmatpush1.msra.mxu0 %v4733
      %4765 = vmatprep.subr.mxu0 0.0
      %4766 = vmatpush1.msra.mxu0 %v4734
      %4767 = vmatprep.subr.mxu0 0.0
      %4768 = vmatpush1.msra.mxu0 %v4735
      %4769 = vmatprep.subr.mxu0 0.0
      %4770 = vmatpush1.msra.mxu0 %v4759
      %4771 = vmatprep.subr.mxu0 0.0
      %4772 = vmatpush1.msra.mxu0 0.0
      %4773 = vmatprep.subr.mxu0 0.0
      %4774 = vmatpush1.msra.mxu0 0.0
      %4775 = vmatprep.subr.mxu0 0.0
      %4776 = vmatpush1.msra.mxu0 0.0
      %4777 = vmatprep.subr.mxu0 0.0
      %4778 = vmatpush1.msra.mxu0 0.0
      %4779 = vmatprep.subr.mxu0 0.0
      %4780 = vmatpush1.msra.mxu0 0.0
      %4781 = vmatprep.subr.mxu0 0.0
      %4782 = vmatpush1.msra.mxu0 0.0
      %4783 = vmatprep.subr.mxu0 0.0
      %4784 = vmatpush1.msra.mxu0 0.0
      %4785 = vmatprep.subr.mxu0 0.0
      %4786 = vmatpush1.msra.mxu0 0.0
      %4787 = vmatprep.subr.mxu0 0.0
      %4788 = vmatpush1.msra.mxu0 0.0
      %4789 = vmatprep.subr.mxu0 0.0
      %4790 = vmatpush1.msra.mxu0 0.0
      %4791 = vmatprep.subr.mxu0 0.0
      %4792 = vmatpush1.msra.mxu0 0.0
      %4793 = vmatprep.subr.mxu0 0.0
      %4794 = vmatpush1.msra.mxu0 0.0
      %4795 = vmatprep.subr.mxu0 0.0
      %4796 = vmatpush1.msra.mxu0 0.0
      %4797 = vmatprep.subr.mxu0 0.0
      %4798 = vmatpush1.msra.mxu0 0.0
      %4799 = vmatprep.subr.mxu0 0.0
      %4800 = vmatpush1.msra.mxu0 0.0
      %4801 = vmatprep.subr.mxu0 0.0
      %4802 = vmatpush1.msra.mxu0 0.0
      %4803 = vmatprep.subr.mxu0 0.0
      %4804 = vmatpush1.msra.mxu0 0.0
      %4805 = vmatprep.subr.mxu0 0.0
      %4806 = vmatpush1.msra.mxu0 0.0
      %4807 = vmatprep.subr.mxu0 0.0
      %4808 = vmatpush1.msra.mxu0 0.0
      %4809 = vmatprep.subr.mxu0 0.0
      %4810 = vmatpush1.msra.mxu0 0.0
      %4811 = vmatprep.subr.mxu0 0.0
      %4812 = vmatpush1.msra.mxu0 0.0
      %4813 = vmatprep.subr.mxu0 0.0
      %4814 = vmatpush1.msra.mxu0 0.0
      %4815 = vmatprep.subr.mxu0 0.0
      %4816 = vmatpush1.msra.mxu0 0.0
      %4817 = vmatprep.subr.mxu0 0.0
      %4818 = vmatpush1.msra.mxu0 0.0
      %4819 = vmatprep.subr.mxu0 0.0
      %4820 = vmatpush1.msra.mxu0 0.0
      %4821 = vmatprep.subr.mxu0 0.0
      %4822 = vmatpush1.msra.mxu0 0.0
      %4823 = vmatprep.subr.mxu0 0.0
      %4824 = vmatpush1.msra.mxu0 0.0
      %4825 = vmatprep.mubr.f32.mxu0 0.0
      %4826 = vmatmul.mubr.f32.gmra.mrb[0].mxu0 %v4744
      %v4827 = vpop.f32.mrb[0].mxu0
      %v4828 = vadd.f32 0.0, %v4827
      %v4829 = vpop.f32.mrb[0].mxu0
      %4830 = vmatprep.mubr.f32.mxu0 0.0
      %4831 = vmatmul.mubr.f32.gmra.mrb[0].mxu0 %v4747
      %v4832 = vpop.f32.mrb[0].mxu0
      %v4833 = vadd.f32 0.0, %v4832
      %v4834 = vpop.f32.mrb[0].mxu0
      %4835 = vmatprep.mubr.f32.mxu0 0.0
      %4836 = vmatmul.mubr.f32.gmra.mrb[0].mxu0 %v4750
      %v4837 = vpop.f32.mrb[0].mxu0
      %v4838 = vadd.f32 0.0, %v4837
      %v4839 = vpop.f32.mrb[0].mxu0
      %4840 = vmatprep.mubr.f32.mxu0 0.0
      %4841 = vmatmul.mubr.f32.gmra.mrb[0].mxu0 %v4753
      %v4842 = vpop.f32.mrb[0].mxu0
      %v4843 = vadd.f32 0.0, %v4842
      %v4844 = vpop.f32.mrb[0].mxu0
      %4845 = vmatprep.mubr.f32.mxu0 0.0
      %4846 = vmatmul.mubr.f32.gmra.mrb[0].mxu0 %v4756
      %v4847 = vpop.f32.mrb[0].mxu0
      %v4848 = vadd.f32 0.0, %v4847
      %v4849 = vpop.f32.mrb[0].mxu0
      %4850 = vdwg.mxu0
      %s4851 = scalar_lea.vmem %s9, 32
      %v4852 = vld [vmem:[%s4851] sm:$0xff]
      %v4853 = vld [vmem:[%s4851 + $0x8] sm:$0xff]
      %v4854 = vld [vmem:[%s4851 + $0x10] sm:$0xff]
      %v4855 = vld [vmem:[%s4851 + $0x18] sm:$0xff]
      %s4856 = scalar_lea.vmem %s10, 1
      %v4857 = vld [vmem:[%s4856] sm:$0x1]
      %v4859 = vlaneseq
      %v4860 = vshrl.u32 %v4859, 7
      %v4861 = vsub.s32 0, %v4860
      %v4862 = vrot.slane %v4857, %v4861
      %v4865 = vsel %vm62, %v4828, 0
      %v4868 = vsel %vm62, %v4833, 0
      %v4871 = vsel %vm62, %v4838, 0
      %v4874 = vsel %vm62, %v4843, 0
      %v4877 = vsel %vm62, %v4848, 0
      %4879 = vmatprep.subr.mxu0 0.0
      %4880 = vmatpush1.msra.mxu0 %v4852
      %4881 = vmatprep.subr.mxu0 0.0
      %4882 = vmatpush1.msra.mxu0 %v4853
      %4883 = vmatprep.subr.mxu0 0.0
      %4884 = vmatpush1.msra.mxu0 %v4854
      %4885 = vmatprep.subr.mxu0 0.0
      %4886 = vmatpush1.msra.mxu0 %v4855
      %4887 = vmatprep.subr.mxu0 0.0
      %4888 = vmatpush1.msra.mxu0 0.0
      %4889 = vmatprep.subr.mxu0 0.0
      %4890 = vmatpush1.msra.mxu0 0.0
      %4891 = vmatprep.subr.mxu0 0.0
      %4892 = vmatpush1.msra.mxu0 0.0
      %4893 = vmatprep.subr.mxu0 0.0
      %4894 = vmatpush1.msra.mxu0 0.0
      %4895 = vmatprep.subr.mxu0 0.0
      %4896 = vmatpush1.msra.mxu0 0.0
      %4897 = vmatprep.subr.mxu0 0.0
      %4898 = vmatpush1.msra.mxu0 0.0
      %4899 = vmatprep.subr.mxu0 0.0
      %4900 = vmatpush1.msra.mxu0 0.0
      %4901 = vmatprep.subr.mxu0 0.0
      %4902 = vmatpush1.msra.mxu0 0.0
      %4903 = vmatprep.subr.mxu0 0.0
      %4904 = vmatpush1.msra.mxu0 0.0
      %4905 = vmatprep.subr.mxu0 0.0
      %4906 = vmatpush1.msra.mxu0 0.0
      %4907 = vmatprep.subr.mxu0 0.0
      %4908 = vmatpush1.msra.mxu0 0.0
      %4909 = vmatprep.subr.mxu0 0.0
      %4910 = vmatpush1.msra.mxu0 0.0
      %4911 = vmatprep.subr.mxu0 0.0
      %4912 = vmatpush1.msra.mxu0 0.0
      %4913 = vmatprep.subr.mxu0 0.0
      %4914 = vmatpush1.msra.mxu0 0.0
      %4915 = vmatprep.subr.mxu0 0.0
      %4916 = vmatpush1.msra.mxu0 0.0
      %4917 = vmatprep.subr.mxu0 0.0
      %4918 = vmatpush1.msra.mxu0 0.0
      %4919 = vmatprep.subr.mxu0 0.0
      %4920 = vmatpush1.msra.mxu0 0.0
      %4921 = vmatprep.subr.mxu0 0.0
      %4922 = vmatpush1.msra.mxu0 0.0
      %4923 = vmatprep.subr.mxu0 0.0
      %4924 = vmatpush1.msra.mxu0 0.0
      %4925 = vmatprep.subr.mxu0 0.0
      %4926 = vmatpush1.msra.mxu0 0.0
      %4927 = vmatprep.subr.mxu0 0.0
      %4928 = vmatpush1.msra.mxu0 0.0
      %4929 = vmatprep.subr.mxu0 0.0
      %4930 = vmatpush1.msra.mxu0 0.0
      %4931 = vmatprep.subr.mxu0 0.0
      %4932 = vmatpush1.msra.mxu0 0.0
      %4933 = vmatprep.subr.mxu0 0.0
      %4934 = vmatpush1.msra.mxu0 0.0
      %4935 = vmatprep.subr.mxu0 0.0
      %4936 = vmatpush1.msra.mxu0 0.0
      %4937 = vmatprep.subr.mxu0 0.0
      %4938 = vmatpush1.msra.mxu0 0.0
      %4939 = vmatprep.subr.mxu0 0.0
      %4940 = vmatpush1.msra.mxu0 0.0
      %4941 = vmatprep.subr.mxu0 0.0
      %4942 = vmatpush1.msra.mxu0 0.0
      %4943 = vmatprep.mubr.f32.mxu0 0.0
      %4944 = vmatmul.mubr.f32.gmra.mrb[0].mxu0 %v4865
      %v4945 = vpop.f32.mrb[0].mxu0
      %v4946 = vadd.f32 %v4862, %v4945
      %v4947 = vpop.f32.mrb[0].mxu0
      %4948 = vmatprep.mubr.f32.mxu0 0.0
      %4949 = vmatmul.mubr.f32.gmra.mrb[0].mxu0 %v4868
      %v4950 = vpop.f32.mrb[0].mxu0
      %v4951 = vadd.f32 %v4862, %v4950
      %v4952 = vpop.f32.mrb[0].mxu0
      %4953 = vmatprep.mubr.f32.mxu0 0.0
      %4954 = vmatmul.mubr.f32.gmra.mrb[0].mxu0 %v4871
      %v4955 = vpop.f32.mrb[0].mxu0
      %v4956 = vadd.f32 %v4862, %v4955
      %v4957 = vpop.f32.mrb[0].mxu0
      %4958 = vmatprep.mubr.f32.mxu0 0.0
      %4959 = vmatmul.mubr.f32.gmra.mrb[0].mxu0 %v4874
      %v4960 = vpop.f32.mrb[0].mxu0
      %v4961 = vadd.f32 %v4862, %v4960
      %v4962 = vpop.f32.mrb[0].mxu0
      %4963 = vmatprep.mubr.f32.mxu0 0.0
      %4964 = vmatmul.mubr.f32.gmra.mrb[0].mxu0 %v4877
      %v4965 = vpop.f32.mrb[0].mxu0
      %v4966 = vadd.f32 %v4862, %v4965
      %v4967 = vpop.f32.mrb[0].mxu0
      %4968 = vdwg.mxu0
      %v4969 = vmax.f32 %v4946, 0.0
      %v4970 = vmax.f32 %v4951, 0.0
      %v4971 = vmax.f32 %v4956, 0.0
      %v4972 = vmax.f32 %v4961, 0.0
      %v4973 = vmax.f32 %v4966, 0.0
      %v4975 = vsel %vm1189, %v4973, 0
      %4977 = vmatprep.subr.mxu0 0.0
      %4978 = vmatpush1.msra.mxu0 %v4969
      %4979 = vmatprep.subr.mxu0 0.0
      %4980 = vmatpush1.msra.mxu0 %v4970
      %4981 = vmatprep.subr.mxu0 0.0
      %4982 = vmatpush1.msra.mxu0 %v4971
      %4983 = vmatprep.subr.mxu0 0.0
      %4984 = vmatpush1.msra.mxu0 %v4972
      %4985 = vmatprep.subr.mxu0 0.0
      %4986 = vmatpush1.msra.mxu0 %v4975
      %4987 = vmatprep.subr.mxu0 0.0
      %4988 = vmatpush1.msra.mxu0 0.0
      %4989 = vmatprep.subr.mxu0 0.0
      %4990 = vmatpush1.msra.mxu0 0.0
      %4991 = vmatprep.subr.mxu0 0.0
      %4992 = vmatpush1.msra.mxu0 0.0
      %4993 = vmatprep.subr.mxu0 0.0
      %4994 = vmatpush1.msra.mxu0 0.0
      %4995 = vmatprep.subr.mxu0 0.0
      %4996 = vmatpush1.msra.mxu0 0.0
      %4997 = vmatprep.subr.mxu0 0.0
      %4998 = vmatpush1.msra.mxu0 0.0
      %4999 = vmatprep.subr.mxu0 0.0
      %5000 = vmatpush1.msra.mxu0 0.0
      %5001 = vmatprep.subr.mxu0 0.0
      %5002 = vmatpush1.msra.mxu0 0.0
      %5003 = vmatprep.subr.mxu0 0.0
      %5004 = vmatpush1.msra.mxu0 0.0
      %5005 = vmatprep.subr.mxu0 0.0
      %5006 = vmatpush1.msra.mxu0 0.0
      %5007 = vmatprep.subr.mxu0 0.0
      %5008 = vmatpush1.msra.mxu0 0.0
      %5009 = vmatprep.subr.mxu0 0.0
      %5010 = vmatpush1.msra.mxu0 0.0
      %5011 = vmatprep.subr.mxu0 0.0
      %5012 = vmatpush1.msra.mxu0 0.0
      %5013 = vmatprep.subr.mxu0 0.0
      %5014 = vmatpush1.msra.mxu0 0.0
      %5015 = vmatprep.subr.mxu0 0.0
      %5016 = vmatpush1.msra.mxu0 0.0
      %5017 = vmatprep.subr.mxu0 0.0
      %5018 = vmatpush1.msra.mxu0 0.0
      %5019 = vmatprep.subr.mxu0 0.0
      %5020 = vmatpush1.msra.mxu0 0.0
      %5021 = vmatprep.subr.mxu0 0.0
      %5022 = vmatpush1.msra.mxu0 0.0
      %5023 = vmatprep.subr.mxu0 0.0
      %5024 = vmatpush1.msra.mxu0 0.0
      %5025 = vmatprep.subr.mxu0 0.0
      %5026 = vmatpush1.msra.mxu0 0.0
      %5027 = vmatprep.subr.mxu0 0.0
      %5028 = vmatpush1.msra.mxu0 0.0
      %5029 = vmatprep.subr.mxu0 0.0
      %5030 = vmatpush1.msra.mxu0 0.0
      %5031 = vmatprep.subr.mxu0 0.0
      %5032 = vmatpush1.msra.mxu0 0.0
      %5033 = vmatprep.subr.mxu0 0.0
      %5034 = vmatpush1.msra.mxu0 0.0
      %5035 = vmatprep.subr.mxu0 0.0
      %5036 = vmatpush1.msra.mxu0 0.0
      %5037 = vmatprep.subr.mxu0 0.0
      %5038 = vmatpush1.msra.mxu0 0.0
      %5039 = vmatprep.subr.mxu0 0.0
      %5040 = vmatpush1.msra.mxu0 0.0
      %5041 = vmatprep.mubr.f32.mxu0 0.0
      %5042 = vmatmul.mubr.f32.gmra.mrb[0].mxu0 %v4744
      %v5043 = vpop.f32.mrb[0].mxu0
      %v5044 = vadd.f32 0.0, %v5043
      %v5045 = vpop.f32.mrb[0].mxu0
      %5046 = vmatprep.mubr.f32.mxu0 0.0
      %5047 = vmatmul.mubr.f32.gmra.mrb[0].mxu0 %v4747
      %v5048 = vpop.f32.mrb[0].mxu0
      %v5049 = vadd.f32 0.0, %v5048
      %v5050 = vpop.f32.mrb[0].mxu0
      %5051 = vmatprep.mubr.f32.mxu0 0.0
      %5052 = vmatmul.mubr.f32.gmra.mrb[0].mxu0 %v4750
      %v5053 = vpop.f32.mrb[0].mxu0
      %v5054 = vadd.f32 0.0, %v5053
      %v5055 = vpop.f32.mrb[0].mxu0
      %5056 = vmatprep.mubr.f32.mxu0 0.0
      %5057 = vmatmul.mubr.f32.gmra.mrb[0].mxu0 %v4753
      %v5058 = vpop.f32.mrb[0].mxu0
      %v5059 = vadd.f32 0.0, %v5058
      %v5060 = vpop.f32.mrb[0].mxu0
      %5061 = vmatprep.mubr.f32.mxu0 0.0
      %5062 = vmatmul.mubr.f32.gmra.mrb[0].mxu0 %v4756
      %v5063 = vpop.f32.mrb[0].mxu0
      %v5064 = vadd.f32 0.0, %v5063
      %v5065 = vpop.f32.mrb[0].mxu0
      %5066 = vdwg.mxu0
      %s5067 = scalar_lea.vmem %s11, 64
      %v5068 = vld [vmem:[%s5067] sm:$0xff]
      %v5069 = vld [vmem:[%s5067 + $0x8] sm:$0xff]
      %v5070 = vld [vmem:[%s5067 + $0x10] sm:$0xff]
      %v5071 = vld [vmem:[%s5067 + $0x18] sm:$0xff]
      %v5072 = vld [vmem:[%s5067 + $0x20] sm:$0xff]
      %v5073 = vld [vmem:[%s5067 + $0x28] sm:$0xff]
      %v5074 = vld [vmem:[%s5067 + $0x30] sm:$0xff]
      %v5075 = vld [vmem:[%s5067 + $0x38] sm:$0xff]
      %v5076 = vlaneseq
      %v5077 = vshrl.u32 %v5076, 7
      %v5078 = vsub.s32 1, %v5077
      %v5079 = vrot.slane %v2924, %v5078
      %v5081 = vsel %vm2302, %v5044, 0
      %v5084 = vsel %vm2302, %v5049, 0
      %v5087 = vsel %vm2302, %v5054, 0
      %v5090 = vsel %vm2302, %v5059, 0
      %v5093 = vsel %vm2302, %v5064, 0
      %5095 = vmatprep.subr.mxu0 0.0
      %5096 = vmatpush1.msra.mxu0 %v5068
      %5097 = vmatprep.subr.mxu0 0.0
      %5098 = vmatpush1.msra.mxu0 %v5069
      %5099 = vmatprep.subr.mxu0 0.0
      %5100 = vmatpush1.msra.mxu0 %v5070
      %5101 = vmatprep.subr.mxu0 0.0
      %5102 = vmatpush1.msra.mxu0 %v5071
      %5103 = vmatprep.subr.mxu0 0.0
      %5104 = vmatpush1.msra.mxu0 %v5072
      %5105 = vmatprep.subr.mxu0 0.0
      %5106 = vmatpush1.msra.mxu0 %v5073
      %5107 = vmatprep.subr.mxu0 0.0
      %5108 = vmatpush1.msra.mxu0 %v5074
      %5109 = vmatprep.subr.mxu0 0.0
      %5110 = vmatpush1.msra.mxu0 %v5075
      %5111 = vmatprep.subr.mxu0 0.0
      %5112 = vmatpush1.msra.mxu0 0.0
      %5113 = vmatprep.subr.mxu0 0.0
      %5114 = vmatpush1.msra.mxu0 0.0
      %5115 = vmatprep.subr.mxu0 0.0
      %5116 = vmatpush1.msra.mxu0 0.0
      %5117 = vmatprep.subr.mxu0 0.0
      %5118 = vmatpush1.msra.mxu0 0.0
      %5119 = vmatprep.subr.mxu0 0.0
      %5120 = vmatpush1.msra.mxu0 0.0
      %5121 = vmatprep.subr.mxu0 0.0
      %5122 = vmatpush1.msra.mxu0 0.0
      %5123 = vmatprep.subr.mxu0 0.0
      %5124 = vmatpush1.msra.mxu0 0.0
      %5125 = vmatprep.subr.mxu0 0.0
      %5126 = vmatpush1.msra.mxu0 0.0
      %5127 = vmatprep.subr.mxu0 0.0
      %5128 = vmatpush1.msra.mxu0 0.0
      %5129 = vmatprep.subr.mxu0 0.0
      %5130 = vmatpush1.msra.mxu0 0.0
      %5131 = vmatprep.subr.mxu0 0.0
      %5132 = vmatpush1.msra.mxu0 0.0
      %5133 = vmatprep.subr.mxu0 0.0
      %5134 = vmatpush1.msra.mxu0 0.0
      %5135 = vmatprep.subr.mxu0 0.0
      %5136 = vmatpush1.msra.mxu0 0.0
      %5137 = vmatprep.subr.mxu0 0.0
      %5138 = vmatpush1.msra.mxu0 0.0
      %5139 = vmatprep.subr.mxu0 0.0
      %5140 = vmatpush1.msra.mxu0 0.0
      %5141 = vmatprep.subr.mxu0 0.0
      %5142 = vmatpush1.msra.mxu0 0.0
      %5143 = vmatprep.subr.mxu0 0.0
      %5144 = vmatpush1.msra.mxu0 0.0
      %5145 = vmatprep.subr.mxu0 0.0
      %5146 = vmatpush1.msra.mxu0 0.0
      %5147 = vmatprep.subr.mxu0 0.0
      %5148 = vmatpush1.msra.mxu0 0.0
      %5149 = vmatprep.subr.mxu0 0.0
      %5150 = vmatpush1.msra.mxu0 0.0
      %5151 = vmatprep.subr.mxu0 0.0
      %5152 = vmatpush1.msra.mxu0 0.0
      %5153 = vmatprep.subr.mxu0 0.0
      %5154 = vmatpush1.msra.mxu0 0.0
      %5155 = vmatprep.subr.mxu0 0.0
      %5156 = vmatpush1.msra.mxu0 0.0
      %5157 = vmatprep.subr.mxu0 0.0
      %5158 = vmatpush1.msra.mxu0 0.0
      %5159 = vmatprep.mubr.f32.mxu0 0.0
      %5160 = vmatmul.mubr.f32.gmra.mrb[0].mxu0 %v5081
      %v5161 = vpop.f32.mrb[0].mxu0
      %v5162 = vadd.f32 %v5079, %v5161
      %v5163 = vpop.f32.mrb[0].mxu0
      %5164 = vmatprep.mubr.f32.mxu0 0.0
      %5165 = vmatmul.mubr.f32.gmra.mrb[0].mxu0 %v5084
      %v5166 = vpop.f32.mrb[0].mxu0
      %v5167 = vadd.f32 %v5079, %v5166
      %v5168 = vpop.f32.mrb[0].mxu0
      %5169 = vmatprep.mubr.f32.mxu0 0.0
      %5170 = vmatmul.mubr.f32.gmra.mrb[0].mxu0 %v5087
      %v5171 = vpop.f32.mrb[0].mxu0
      %v5172 = vadd.f32 %v5079, %v5171
      %v5173 = vpop.f32.mrb[0].mxu0
      %5174 = vmatprep.mubr.f32.mxu0 0.0
      %5175 = vmatmul.mubr.f32.gmra.mrb[0].mxu0 %v5090
      %v5176 = vpop.f32.mrb[0].mxu0
      %v5177 = vadd.f32 %v5079, %v5176
      %v5178 = vpop.f32.mrb[0].mxu0
      %5179 = vmatprep.mubr.f32.mxu0 0.0
      %5180 = vmatmul.mubr.f32.gmra.mrb[0].mxu0 %v5093
      %v5181 = vpop.f32.mrb[0].mxu0
      %v5182 = vadd.f32 %v5079, %v5181
      %v5183 = vpop.f32.mrb[0].mxu0
      %5184 = vdwg.mxu0
      %v5185 = vadd.f32 %v4614, %v5162
      %v5186 = vadd.f32 %v4615, %v5167
      %v5187 = vadd.f32 %v4616, %v5172
      %v5188 = vadd.f32 %v4617, %v5177
      %v5189 = vadd.f32 %v4618, %v5182
      %s5190 = scalar_lea.vmem %s13, 64
      %v5191 = vld [vmem:[%s5190] sm:$0xff]
      %v5192 = vld [vmem:[%s5190 + $0x8] sm:$0xff]
      %v5193 = vld [vmem:[%s5190 + $0x10] sm:$0xff]
      %v5194 = vld [vmem:[%s5190 + $0x18] sm:$0xff]
      %v5195 = vld [vmem:[%s5190 + $0x20] sm:$0xff]
      %v5196 = vld [vmem:[%s5190 + $0x28] sm:$0xff]
      %v5197 = vld [vmem:[%s5190 + $0x30] sm:$0xff]
      %v5198 = vld [vmem:[%s5190 + $0x38] sm:$0xff]
      %v5200 = vsel %vm62, %v5185, 0
      %v5203 = vsel %vm62, %v5186, 0
      %v5206 = vsel %vm62, %v5187, 0
      %v5209 = vsel %vm62, %v5188, 0
      %v5212 = vsel %vm62, %v5189, 0
      %5214 = vmatprep.subr.mxu0 0.0
      %5215 = vmatpush1.msra.mxu0 %v5191
      %5216 = vmatprep.subr.mxu0 0.0
      %5217 = vmatpush1.msra.mxu0 %v5192
      %5218 = vmatprep.subr.mxu0 0.0
      %5219 = vmatpush1.msra.mxu0 %v5193
      %5220 = vmatprep.subr.mxu0 0.0
      %5221 = vmatpush1.msra.mxu0 %v5194
      %5222 = vmatprep.subr.mxu0 0.0
      %5223 = vmatpush1.msra.mxu0 0.0
      %5224 = vmatprep.subr.mxu0 0.0
      %5225 = vmatpush1.msra.mxu0 0.0
      %5226 = vmatprep.subr.mxu0 0.0
      %5227 = vmatpush1.msra.mxu0 0.0
      %5228 = vmatprep.subr.mxu0 0.0
      %5229 = vmatpush1.msra.mxu0 0.0
      %5230 = vmatprep.subr.mxu0 0.0
      %5231 = vmatpush1.msra.mxu0 0.0
      %5232 = vmatprep.subr.mxu0 0.0
      %5233 = vmatpush1.msra.mxu0 0.0
      %5234 = vmatprep.subr.mxu0 0.0
      %5235 = vmatpush1.msra.mxu0 0.0
      %5236 = vmatprep.subr.mxu0 0.0
      %5237 = vmatpush1.msra.mxu0 0.0
      %5238 = vmatprep.subr.mxu0 0.0
      %5239 = vmatpush1.msra.mxu0 0.0
      %5240 = vmatprep.subr.mxu0 0.0
      %5241 = vmatpush1.msra.mxu0 0.0
      %5242 = vmatprep.subr.mxu0 0.0
      %5243 = vmatpush1.msra.mxu0 0.0
      %5244 = vmatprep.subr.mxu0 0.0
      %5245 = vmatpush1.msra.mxu0 0.0
      %5246 = vmatprep.subr.mxu0 0.0
      %5247 = vmatpush1.msra.mxu0 0.0
      %5248 = vmatprep.subr.mxu0 0.0
      %5249 = vmatpush1.msra.mxu0 0.0
      %5250 = vmatprep.subr.mxu0 0.0
      %5251 = vmatpush1.msra.mxu0 0.0
      %5252 = vmatprep.subr.mxu0 0.0
      %5253 = vmatpush1.msra.mxu0 0.0
      %5254 = vmatprep.subr.mxu0 0.0
      %5255 = vmatpush1.msra.mxu0 0.0
      %5256 = vmatprep.subr.mxu0 0.0
      %5257 = vmatpush1.msra.mxu0 0.0
      %5258 = vmatprep.subr.mxu0 0.0
      %5259 = vmatpush1.msra.mxu0 0.0
      %5260 = vmatprep.subr.mxu0 0.0
      %5261 = vmatpush1.msra.mxu0 0.0
      %5262 = vmatprep.subr.mxu0 0.0
      %5263 = vmatpush1.msra.mxu0 0.0
      %5264 = vmatprep.subr.mxu0 0.0
      %5265 = vmatpush1.msra.mxu0 0.0
      %5266 = vmatprep.subr.mxu0 0.0
      %5267 = vmatpush1.msra.mxu0 0.0
      %5268 = vmatprep.subr.mxu0 0.0
      %5269 = vmatpush1.msra.mxu0 0.0
      %5270 = vmatprep.subr.mxu0 0.0
      %5271 = vmatpush1.msra.mxu0 0.0
      %5272 = vmatprep.subr.mxu0 0.0
      %5273 = vmatpush1.msra.mxu0 0.0
      %5274 = vmatprep.subr.mxu0 0.0
      %5275 = vmatpush1.msra.mxu0 0.0
      %5276 = vmatprep.subr.mxu0 0.0
      %5277 = vmatpush1.msra.mxu0 0.0
      %5278 = vmatprep.mubr.f32.mxu0 0.0
      %5279 = vmatmul.mubr.f32.gmra.mrb[0].mxu0 %v5200
      %v5280 = vpop.f32.mrb[0].mxu0
      %v5281 = vadd.f32 0.0, %v5280
      %v5282 = vpop.f32.mrb[0].mxu0
      %5283 = vmatprep.mubr.f32.mxu0 0.0
      %5284 = vmatmul.mubr.f32.gmra.mrb[0].mxu0 %v5203
      %v5285 = vpop.f32.mrb[0].mxu0
      %v5286 = vadd.f32 0.0, %v5285
      %v5287 = vpop.f32.mrb[0].mxu0
      %5288 = vmatprep.mubr.f32.mxu0 0.0
      %5289 = vmatmul.mubr.f32.gmra.mrb[0].mxu0 %v5206
      %v5290 = vpop.f32.mrb[0].mxu0
      %v5291 = vadd.f32 0.0, %v5290
      %v5292 = vpop.f32.mrb[0].mxu0
      %5293 = vmatprep.mubr.f32.mxu0 0.0
      %5294 = vmatmul.mubr.f32.gmra.mrb[0].mxu0 %v5209
      %v5295 = vpop.f32.mrb[0].mxu0
      %v5296 = vadd.f32 0.0, %v5295
      %v5297 = vpop.f32.mrb[0].mxu0
      %5298 = vmatprep.mubr.f32.mxu0 0.0
      %5299 = vmatmul.mubr.f32.gmra.mrb[0].mxu0 %v5212
      %v5300 = vpop.f32.mrb[0].mxu0
      %v5301 = vadd.f32 0.0, %v5300
      %v5302 = vpop.f32.mrb[0].mxu0
      %5303 = vdwg.mxu0
      %5309 = vrot.lane.b32.xlu0 %v5281, 96
      %v5310 = vpop.permute.xlu0 %5309
      %5311 = vrot.lane.b32.xlu0 %v5286, 96
      %v5312 = vpop.permute.xlu0 %5311
      %5313 = vrot.lane.b32.xlu0 %v5291, 96
      %v5314 = vpop.permute.xlu0 %5313
      %5315 = vrot.lane.b32.xlu0 %v5296, 96
      %v5316 = vpop.permute.xlu0 %5315
      %5317 = vrot.lane.b32.xlu0 %v5301, 96
      %v5318 = vpop.permute.xlu0 %5317
      %v5323 = vsel %vm1189, %v5318, 0
      %5325 = vmatprep.subr.mxu0 0.0
      %5326 = vmatpush1.msra.mxu0 %v5310
      %5327 = vmatprep.subr.mxu0 0.0
      %5328 = vmatpush1.msra.mxu0 %v5312
      %5329 = vmatprep.subr.mxu0 0.0
      %5330 = vmatpush1.msra.mxu0 %v5314
      %5331 = vmatprep.subr.mxu0 0.0
      %5332 = vmatpush1.msra.mxu0 %v5316
      %5333 = vmatprep.subr.mxu0 0.0
      %5334 = vmatpush1.msra.mxu0 %v5323
      %5335 = vmatprep.subr.mxu0 0.0
      %5336 = vmatpush1.msra.mxu0 0.0
      %5337 = vmatprep.subr.mxu0 0.0
      %5338 = vmatpush1.msra.mxu0 0.0
      %5339 = vmatprep.subr.mxu0 0.0
      %5340 = vmatpush1.msra.mxu0 0.0
      %5341 = vmatprep.subr.mxu0 0.0
      %5342 = vmatpush1.msra.mxu0 0.0
      %5343 = vmatprep.subr.mxu0 0.0
      %5344 = vmatpush1.msra.mxu0 0.0
      %5345 = vmatprep.subr.mxu0 0.0
      %5346 = vmatpush1.msra.mxu0 0.0
      %5347 = vmatprep.subr.mxu0 0.0
      %5348 = vmatpush1.msra.mxu0 0.0
      %5349 = vmatprep.subr.mxu0 0.0
      %5350 = vmatpush1.msra.mxu0 0.0
      %5351 = vmatprep.subr.mxu0 0.0
      %5352 = vmatpush1.msra.mxu0 0.0
      %5353 = vmatprep.subr.mxu0 0.0
      %5354 = vmatpush1.msra.mxu0 0.0
      %5355 = vmatprep.subr.mxu0 0.0
      %5356 = vmatpush1.msra.mxu0 0.0
      %5357 = vmatprep.subr.mxu0 0.0
      %5358 = vmatpush1.msra.mxu0 0.0
      %5359 = vmatprep.subr.mxu0 0.0
      %5360 = vmatpush1.msra.mxu0 0.0
      %5361 = vmatprep.subr.mxu0 0.0
      %5362 = vmatpush1.msra.mxu0 0.0
      %5363 = vmatprep.subr.mxu0 0.0
      %5364 = vmatpush1.msra.mxu0 0.0
      %5365 = vmatprep.subr.mxu0 0.0
      %5366 = vmatpush1.msra.mxu0 0.0
      %5367 = vmatprep.subr.mxu0 0.0
      %5368 = vmatpush1.msra.mxu0 0.0
      %5369 = vmatprep.subr.mxu0 0.0
      %5370 = vmatpush1.msra.mxu0 0.0
      %5371 = vmatprep.subr.mxu0 0.0
      %5372 = vmatpush1.msra.mxu0 0.0
      %5373 = vmatprep.subr.mxu0 0.0
      %5374 = vmatpush1.msra.mxu0 0.0
      %5375 = vmatprep.subr.mxu0 0.0
      %5376 = vmatpush1.msra.mxu0 0.0
      %5377 = vmatprep.subr.mxu0 0.0
      %5378 = vmatpush1.msra.mxu0 0.0
      %5379 = vmatprep.subr.mxu0 0.0
      %5380 = vmatpush1.msra.mxu0 0.0
      %5381 = vmatprep.subr.mxu0 0.0
      %5382 = vmatpush1.msra.mxu0 0.0
      %5383 = vmatprep.subr.mxu0 0.0
      %5384 = vmatpush1.msra.mxu0 0.0
      %5385 = vmatprep.subr.mxu0 0.0
      %5386 = vmatpush1.msra.mxu0 0.0
      %5387 = vmatprep.subr.mxu0 0.0
      %5388 = vmatpush1.msra.mxu0 0.0
      %5389 = vmatprep.mubr.f32.mxu0 0.0
      %5390 = vmatmul.mubr.f32.gmra.mrb[0].mxu0 %v2546
      %v5391 = vpop.f32.mrb[0].mxu0
      %v5392 = vadd.f32 0.0, %v5391
      %v5393 = vpop.f32.mrb[0].mxu0
      %5394 = vmatprep.mubr.f32.mxu0 0.0
      %5395 = vmatmul.mubr.f32.gmra.mrb[0].mxu0 %v2549
      %v5396 = vpop.f32.mrb[0].mxu0
      %v5397 = vadd.f32 0.0, %v5396
      %v5398 = vpop.f32.mrb[0].mxu0
      %5399 = vmatprep.mubr.f32.mxu0 0.0
      %5400 = vmatmul.mubr.f32.gmra.mrb[0].mxu0 %v2552
      %v5401 = vpop.f32.mrb[0].mxu0
      %v5402 = vadd.f32 0.0, %v5401
      %v5403 = vpop.f32.mrb[0].mxu0
      %5404 = vmatprep.mubr.f32.mxu0 0.0
      %5405 = vmatmul.mubr.f32.gmra.mrb[0].mxu0 %v2555
      %v5406 = vpop.f32.mrb[0].mxu0
      %v5407 = vadd.f32 0.0, %v5406
      %v5408 = vpop.f32.mrb[0].mxu0
      %5409 = vmatprep.mubr.f32.mxu0 0.0
      %5410 = vmatmul.mubr.f32.gmra.mrb[0].mxu0 %v2558
      %v5411 = vpop.f32.mrb[0].mxu0
      %v5412 = vadd.f32 0.0, %v5411
      %v5413 = vpop.f32.mrb[0].mxu0
      %5414 = vdwg.mxu0
      %v5415 = vadd.f32 %v5281, %v5392
      %v5416 = vadd.f32 %v5286, %v5397
      %v5417 = vadd.f32 %v5291, %v5402
      %v5418 = vadd.f32 %v5296, %v5407
      %v5419 = vadd.f32 %v5301, %v5412
      %v5420 = vlaneseq
      %v5421 = vshrl.u32 %v5420, 7
      %v5422 = vsub.s32 2, %v5421
      %v5423 = vrot.slane %v2924, %v5422
      %v5424 = vadd.f32 %v5415, %v5423
      %v5425 = vadd.f32 %v5416, %v5423
      %v5426 = vadd.f32 %v5417, %v5423
      %v5427 = vadd.f32 %v5418, %v5423
      %v5428 = vadd.f32 %v5419, %v5423
      %v5429 = vmax.f32 %v5424, 0.0
      %v5430 = vmax.f32 %v5425, 0.0
      %v5431 = vmax.f32 %v5426, 0.0
      %v5432 = vmax.f32 %v5427, 0.0
      %v5433 = vmax.f32 %v5428, 0.0
      %s5434 = scalar_lea.vmem %s2, 40
      %v5435 = vld [vmem:[%s5434] sm:$0xff]
      %v5436 = vld [vmem:[%s5434 + $0x8] sm:$0xff]
      %v5437 = vld [vmem:[%s5434 + $0x10] sm:$0xff]
      %v5438 = vld [vmem:[%s5434 + $0x18] sm:$0xff]
      %v5439 = vld [vmem:[%s5434 + $0x20] sm:$0x3]
      %v5440 = vadd.f32 %v5429, %v5435
      %v5441 = vadd.f32 %v5430, %v5436
      %v5442 = vadd.f32 %v5431, %v5437
      %v5443 = vadd.f32 %v5432, %v5438
      %v5444 = vadd.f32 %v5433, %v5439
      %v5446 = vsel %vm62, %v5440, 0
      %v5449 = vsel %vm62, %v5441, 0
      %v5452 = vsel %vm62, %v5442, 0
      %v5455 = vsel %vm62, %v5443, 0
      %v5458 = vsel %vm62, %v5444, 0
      %5460 = vmatprep.subr.mxu0 0.0
      %5461 = vmatpush1.msra.mxu0 %v5195
      %5462 = vmatprep.subr.mxu0 0.0
      %5463 = vmatpush1.msra.mxu0 %v5196
      %5464 = vmatprep.subr.mxu0 0.0
      %5465 = vmatpush1.msra.mxu0 %v5197
      %5466 = vmatprep.subr.mxu0 0.0
      %5467 = vmatpush1.msra.mxu0 %v5198
      %5468 = vmatprep.subr.mxu0 0.0
      %5469 = vmatpush1.msra.mxu0 0.0
      %5470 = vmatprep.subr.mxu0 0.0
      %5471 = vmatpush1.msra.mxu0 0.0
      %5472 = vmatprep.subr.mxu0 0.0
      %5473 = vmatpush1.msra.mxu0 0.0
      %5474 = vmatprep.subr.mxu0 0.0
      %5475 = vmatpush1.msra.mxu0 0.0
      %5476 = vmatprep.subr.mxu0 0.0
      %5477 = vmatpush1.msra.mxu0 0.0
      %5478 = vmatprep.subr.mxu0 0.0
      %5479 = vmatpush1.msra.mxu0 0.0
      %5480 = vmatprep.subr.mxu0 0.0
      %5481 = vmatpush1.msra.mxu0 0.0
      %5482 = vmatprep.subr.mxu0 0.0
      %5483 = vmatpush1.msra.mxu0 0.0
      %5484 = vmatprep.subr.mxu0 0.0
      %5485 = vmatpush1.msra.mxu0 0.0
      %5486 = vmatprep.subr.mxu0 0.0
      %5487 = vmatpush1.msra.mxu0 0.0
      %5488 = vmatprep.subr.mxu0 0.0
      %5489 = vmatpush1.msra.mxu0 0.0
      %5490 = vmatprep.subr.mxu0 0.0
      %5491 = vmatpush1.msra.mxu0 0.0
      %5492 = vmatprep.subr.mxu0 0.0
      %5493 = vmatpush1.msra.mxu0 0.0
      %5494 = vmatprep.subr.mxu0 0.0
      %5495 = vmatpush1.msra.mxu0 0.0
      %5496 = vmatprep.subr.mxu0 0.0
      %5497 = vmatpush1.msra.mxu0 0.0
      %5498 = vmatprep.subr.mxu0 0.0
      %5499 = vmatpush1.msra.mxu0 0.0
      %5500 = vmatprep.subr.mxu0 0.0
      %5501 = vmatpush1.msra.mxu0 0.0
      %5502 = vmatprep.subr.mxu0 0.0
      %5503 = vmatpush1.msra.mxu0 0.0
      %5504 = vmatprep.subr.mxu0 0.0
      %5505 = vmatpush1.msra.mxu0 0.0
      %5506 = vmatprep.subr.mxu0 0.0
      %5507 = vmatpush1.msra.mxu0 0.0
      %5508 = vmatprep.subr.mxu0 0.0
      %5509 = vmatpush1.msra.mxu0 0.0
      %5510 = vmatprep.subr.mxu0 0.0
      %5511 = vmatpush1.msra.mxu0 0.0
      %5512 = vmatprep.subr.mxu0 0.0
      %5513 = vmatpush1.msra.mxu0 0.0
      %5514 = vmatprep.subr.mxu0 0.0
      %5515 = vmatpush1.msra.mxu0 0.0
      %5516 = vmatprep.subr.mxu0 0.0
      %5517 = vmatpush1.msra.mxu0 0.0
      %5518 = vmatprep.subr.mxu0 0.0
      %5519 = vmatpush1.msra.mxu0 0.0
      %5520 = vmatprep.subr.mxu0 0.0
      %5521 = vmatpush1.msra.mxu0 0.0
      %5522 = vmatprep.subr.mxu0 0.0
      %5523 = vmatpush1.msra.mxu0 0.0
      %5524 = vmatprep.mubr.f32.mxu0 0.0
      %5525 = vmatmul.mubr.f32.gmra.mrb[0].mxu0 %v5446
      %v5526 = vpop.f32.mrb[0].mxu0
      %v5527 = vadd.f32 0.0, %v5526
      %v5528 = vpop.f32.mrb[0].mxu0
      %5529 = vmatprep.mubr.f32.mxu0 0.0
      %5530 = vmatmul.mubr.f32.gmra.mrb[0].mxu0 %v5449
      %v5531 = vpop.f32.mrb[0].mxu0
      %v5532 = vadd.f32 0.0, %v5531
      %v5533 = vpop.f32.mrb[0].mxu0
      %5534 = vmatprep.mubr.f32.mxu0 0.0
      %5535 = vmatmul.mubr.f32.gmra.mrb[0].mxu0 %v5452
      %v5536 = vpop.f32.mrb[0].mxu0
      %v5537 = vadd.f32 0.0, %v5536
      %v5538 = vpop.f32.mrb[0].mxu0
      %5539 = vmatprep.mubr.f32.mxu0 0.0
      %5540 = vmatmul.mubr.f32.gmra.mrb[0].mxu0 %v5455
      %v5541 = vpop.f32.mrb[0].mxu0
      %v5542 = vadd.f32 0.0, %v5541
      %v5543 = vpop.f32.mrb[0].mxu0
      %5544 = vmatprep.mubr.f32.mxu0 0.0
      %5545 = vmatmul.mubr.f32.gmra.mrb[0].mxu0 %v5458
      %v5546 = vpop.f32.mrb[0].mxu0
      %v5547 = vadd.f32 0.0, %v5546
      %v5548 = vpop.f32.mrb[0].mxu0
      %5549 = vdwg.mxu0
      %5555 = vrot.lane.b32.xlu0 %v5527, 96
      %v5556 = vpop.permute.xlu0 %5555
      %5557 = vrot.lane.b32.xlu0 %v5532, 96
      %v5558 = vpop.permute.xlu0 %5557
      %5559 = vrot.lane.b32.xlu0 %v5537, 96
      %v5560 = vpop.permute.xlu0 %5559
      %5561 = vrot.lane.b32.xlu0 %v5542, 96
      %v5562 = vpop.permute.xlu0 %5561
      %5563 = vrot.lane.b32.xlu0 %v5547, 96
      %v5564 = vpop.permute.xlu0 %5563
      %v5569 = vsel %vm1189, %v5564, 0
      %5571 = vmatprep.subr.mxu0 0.0
      %5572 = vmatpush1.msra.mxu0 %v5556
      %5573 = vmatprep.subr.mxu0 0.0
      %5574 = vmatpush1.msra.mxu0 %v5558
      %5575 = vmatprep.subr.mxu0 0.0
      %5576 = vmatpush1.msra.mxu0 %v5560
      %5577 = vmatprep.subr.mxu0 0.0
      %5578 = vmatpush1.msra.mxu0 %v5562
      %5579 = vmatprep.subr.mxu0 0.0
      %5580 = vmatpush1.msra.mxu0 %v5569
      %5581 = vmatprep.subr.mxu0 0.0
      %5582 = vmatpush1.msra.mxu0 0.0
      %5583 = vmatprep.subr.mxu0 0.0
      %5584 = vmatpush1.msra.mxu0 0.0
      %5585 = vmatprep.subr.mxu0 0.0
      %5586 = vmatpush1.msra.mxu0 0.0
      %5587 = vmatprep.subr.mxu0 0.0
      %5588 = vmatpush1.msra.mxu0 0.0
      %5589 = vmatprep.subr.mxu0 0.0
      %5590 = vmatpush1.msra.mxu0 0.0
      %5591 = vmatprep.subr.mxu0 0.0
      %5592 = vmatpush1.msra.mxu0 0.0
      %5593 = vmatprep.subr.mxu0 0.0
      %5594 = vmatpush1.msra.mxu0 0.0
      %5595 = vmatprep.subr.mxu0 0.0
      %5596 = vmatpush1.msra.mxu0 0.0
      %5597 = vmatprep.subr.mxu0 0.0
      %5598 = vmatpush1.msra.mxu0 0.0
      %5599 = vmatprep.subr.mxu0 0.0
      %5600 = vmatpush1.msra.mxu0 0.0
      %5601 = vmatprep.subr.mxu0 0.0
      %5602 = vmatpush1.msra.mxu0 0.0
      %5603 = vmatprep.subr.mxu0 0.0
      %5604 = vmatpush1.msra.mxu0 0.0
      %5605 = vmatprep.subr.mxu0 0.0
      %5606 = vmatpush1.msra.mxu0 0.0
      %5607 = vmatprep.subr.mxu0 0.0
      %5608 = vmatpush1.msra.mxu0 0.0
      %5609 = vmatprep.subr.mxu0 0.0
      %5610 = vmatpush1.msra.mxu0 0.0
      %5611 = vmatprep.subr.mxu0 0.0
      %5612 = vmatpush1.msra.mxu0 0.0
      %5613 = vmatprep.subr.mxu0 0.0
      %5614 = vmatpush1.msra.mxu0 0.0
      %5615 = vmatprep.subr.mxu0 0.0
      %5616 = vmatpush1.msra.mxu0 0.0
      %5617 = vmatprep.subr.mxu0 0.0
      %5618 = vmatpush1.msra.mxu0 0.0
      %5619 = vmatprep.subr.mxu0 0.0
      %5620 = vmatpush1.msra.mxu0 0.0
      %5621 = vmatprep.subr.mxu0 0.0
      %5622 = vmatpush1.msra.mxu0 0.0
      %5623 = vmatprep.subr.mxu0 0.0
      %5624 = vmatpush1.msra.mxu0 0.0
      %5625 = vmatprep.subr.mxu0 0.0
      %5626 = vmatpush1.msra.mxu0 0.0
      %5627 = vmatprep.subr.mxu0 0.0
      %5628 = vmatpush1.msra.mxu0 0.0
      %5629 = vmatprep.subr.mxu0 0.0
      %5630 = vmatpush1.msra.mxu0 0.0
      %5631 = vmatprep.subr.mxu0 0.0
      %5632 = vmatpush1.msra.mxu0 0.0
      %5633 = vmatprep.subr.mxu0 0.0
      %5634 = vmatpush1.msra.mxu0 0.0
      %5635 = vmatprep.mubr.f32.mxu0 0.0
      %5636 = vmatmul.mubr.f32.gmra.mrb[0].mxu0 %v2546
      %v5637 = vpop.f32.mrb[0].mxu0
      %v5638 = vadd.f32 0.0, %v5637
      %v5639 = vpop.f32.mrb[0].mxu0
      %5640 = vmatprep.mubr.f32.mxu0 0.0
      %5641 = vmatmul.mubr.f32.gmra.mrb[0].mxu0 %v2549
      %v5642 = vpop.f32.mrb[0].mxu0
      %v5643 = vadd.f32 0.0, %v5642
      %v5644 = vpop.f32.mrb[0].mxu0
      %5645 = vmatprep.mubr.f32.mxu0 0.0
      %5646 = vmatmul.mubr.f32.gmra.mrb[0].mxu0 %v2552
      %v5647 = vpop.f32.mrb[0].mxu0
      %v5648 = vadd.f32 0.0, %v5647
      %v5649 = vpop.f32.mrb[0].mxu0
      %5650 = vmatprep.mubr.f32.mxu0 0.0
      %5651 = vmatmul.mubr.f32.gmra.mrb[0].mxu0 %v2555
      %v5652 = vpop.f32.mrb[0].mxu0
      %v5653 = vadd.f32 0.0, %v5652
      %v5654 = vpop.f32.mrb[0].mxu0
      %5655 = vmatprep.mubr.f32.mxu0 0.0
      %5656 = vmatmul.mubr.f32.gmra.mrb[0].mxu0 %v2558
      %v5657 = vpop.f32.mrb[0].mxu0
      %v5658 = vadd.f32 0.0, %v5657
      %v5659 = vpop.f32.mrb[0].mxu0
      %5660 = vdwg.mxu0
      %v5661 = vadd.f32 %v5527, %v5638
      %v5662 = vadd.f32 %v5532, %v5643
      %v5663 = vadd.f32 %v5537, %v5648
      %v5664 = vadd.f32 %v5542, %v5653
      %v5665 = vadd.f32 %v5547, %v5658
      %v5666 = vlaneseq
      %v5667 = vshrl.u32 %v5666, 7
      %v5668 = vsub.s32 3, %v5667
      %v5669 = vrot.slane %v2924, %v5668
      %v5670 = vadd.f32 %v5661, %v5669
      %v5671 = vadd.f32 %v5662, %v5669
      %v5672 = vadd.f32 %v5663, %v5669
      %v5673 = vadd.f32 %v5664, %v5669
      %v5674 = vadd.f32 %v5665, %v5669
      %v5675 = vmax.f32 %v5670, 0.0
      %v5676 = vmax.f32 %v5671, 0.0
      %v5677 = vmax.f32 %v5672, 0.0
      %v5678 = vmax.f32 %v5673, 0.0
      %v5679 = vmax.f32 %v5674, 0.0
      %v5680 = vadd.f32 %v5185, %v5675
      %v5681 = vadd.f32 %v5186, %v5676
      %v5682 = vadd.f32 %v5187, %v5677
      %v5683 = vadd.f32 %v5188, %v5678
      %v5684 = vadd.f32 %v5189, %v5679
      %v5685 = vsub.f32 %v5680, %v139
      %v5686 = vsub.f32 %v5681, %v140
      %v5687 = vsub.f32 %v5682, %v141
      %v5688 = vsub.f32 %v5683, %v142
      %v5689 = vsub.f32 %v5684, %v143
      %p5690 = scmp.lt.s32.totalorder %s129, 0
      %s5691 = ssub.s32 0, %s129
      %s5692 = scalar_select %p5690, %s5691, %s129
      %s5693 = sdiv.u32.pop %s5692, 5
      %s5694 = srem.u32.pop %s5692, 5
      %s5695 = ssub.s32 0, %s5694
      %s5696 = scalar_select %p5690, %s5695, %s5694
      %p5697 = scmp.ne.s32.totalorder %s5696, 0
      %p5698 = scmp.lt.s32.totalorder %s5696, 0
      %p5699 = pnand %p5698, %p5697
      %p5700 = pneg %p5699
      %s5701 = sadd.s32 %s5696, 5
      %s5702 = scalar_select %p5700, %s5701, %s5696
      %v5703 = vstv %s5702
      %vm5704 = vcmp.eq.s32.totalorder %v5703, 0
      %vm5705 = vcmp.eq.s32.totalorder %v5703, 1
      %vm5706 = vcmp.eq.s32.totalorder %v5703, 2
      %vm5707 = vcmp.eq.s32.totalorder %v5703, 3
      %vm5708 = vcmp.eq.s32.totalorder %v5703, 4
      %v5709 = vld [vmem:[#allocation2] sm:$0xff]
      %v5710 = vld [vmem:[#allocation2 + $0x8] sm:$0xff]
      %v5711 = vld [vmem:[#allocation2 + $0x10] sm:$0xff]
      %v5712 = vld [vmem:[#allocation2 + $0x18] sm:$0xff]
      %v5713 = vld [vmem:[#allocation2 + $0x20] sm:$0x3]
      %v5714 = vld [vmem:[#allocation2 + $0x28] sm:$0xff]
      %v5715 = vld [vmem:[#allocation2 + $0x30] sm:$0xff]
      %v5716 = vld [vmem:[#allocation2 + $0x38] sm:$0xff]
      %v5717 = vld [vmem:[#allocation2 + $0x40] sm:$0xff]
      %v5718 = vld [vmem:[#allocation2 + $0x48] sm:$0x3]
      %v5719 = vld [vmem:[#allocation2 + $0x50] sm:$0xff]
      %v5720 = vld [vmem:[#allocation2 + $0x58] sm:$0xff]
      %v5721 = vld [vmem:[#allocation2 + $0x60] sm:$0xff]
      %v5722 = vld [vmem:[#allocation2 + $0x68] sm:$0xff]
      %v5723 = vld [vmem:[#allocation2 + $0x70] sm:$0x3]
      %v5724 = vld [vmem:[#allocation2 + $0x78] sm:$0xff]
      %v5725 = vld [vmem:[#allocation2 + $0x80] sm:$0xff]
      %v5726 = vld [vmem:[#allocation2 + $0x88] sm:$0xff]
      %v5727 = vld [vmem:[#allocation2 + $0x90] sm:$0xff]
      %v5728 = vld [vmem:[#allocation2 + $0x98] sm:$0x3]
      %v5729 = vld [vmem:[#allocation2 + $0xa0] sm:$0xff]
      %v5730 = vld [vmem:[#allocation2 + $0xa8] sm:$0xff]
      %v5731 = vld [vmem:[#allocation2 + $0xb0] sm:$0xff]
      %v5732 = vld [vmem:[#allocation2 + $0xb8] sm:$0xff]
      %v5733 = vld [vmem:[#allocation2 + $0xc0] sm:$0x3]
      %v5734 = vsel %vm5704, 1, 0
      %v5735 = vsel %vm5705, 1, 0
      %v5736 = vsel %vm5706, 1, 0
      %v5737 = vsel %vm5707, 1, 0
      %v5738 = vsel %vm5708, 1, 0
      %vm5739 = vcmp.eq.s32.totalorder %v5734, 1
      %vm5740 = vcmp.eq.s32.totalorder %v5735, 1
      %vm5741 = vcmp.eq.s32.totalorder %v5736, 1
      %vm5742 = vcmp.eq.s32.totalorder %v5737, 1
      %vm5743 = vcmp.eq.s32.totalorder %v5738, 1
      %v5744 = vsel %vm5739, %v139, %v5709
      %v5745 = vsel %vm5739, %v140, %v5710
      %v5746 = vsel %vm5739, %v141, %v5711
      %v5747 = vsel %vm5739, %v142, %v5712
      %v5748 = vsel %vm5739, %v143, %v5713
      %v5749 = vsel %vm5740, %v139, %v5714
      %v5750 = vsel %vm5740, %v140, %v5715
      %v5751 = vsel %vm5740, %v141, %v5716
      %v5752 = vsel %vm5740, %v142, %v5717
      %v5753 = vsel %vm5740, %v143, %v5718
      %v5754 = vsel %vm5741, %v139, %v5719
      %v5755 = vsel %vm5741, %v140, %v5720
      %v5756 = vsel %vm5741, %v141, %v5721
      %v5757 = vsel %vm5741, %v142, %v5722
      %v5758 = vsel %vm5741, %v143, %v5723
      %v5759 = vsel %vm5742, %v139, %v5724
      %v5760 = vsel %vm5742, %v140, %v5725
      %v5761 = vsel %vm5742, %v141, %v5726
      %v5762 = vsel %vm5742, %v142, %v5727
      %v5763 = vsel %vm5742, %v143, %v5728
      %v5764 = vsel %vm5743, %v139, %v5729
      %v5765 = vsel %vm5743, %v140, %v5730
      %v5766 = vsel %vm5743, %v141, %v5731
      %v5767 = vsel %vm5743, %v142, %v5732
      %v5768 = vsel %vm5743, %v143, %v5733
      %5769 = vst.msk [vmem:[#allocation2] sm:$0xff] %vm62, %v5744
      %5770 = vst.msk [vmem:[#allocation2 + $0x8] sm:$0xff] %vm62, %v5745
      %5771 = vst.msk [vmem:[#allocation2 + $0x10] sm:$0xff] %vm62, %v5746
      %5772 = vst.msk [vmem:[#allocation2 + $0x18] sm:$0xff] %vm62, %v5747
      %5773 = vst.msk [vmem:[#allocation2 + $0x20] sm:$0x3] %vm67, %v5748
      %5774 = vst.msk [vmem:[#allocation2 + $0x28] sm:$0xff] %vm62, %v5749
      %5775 = vst.msk [vmem:[#allocation2 + $0x30] sm:$0xff] %vm62, %v5750
      %5776 = vst.msk [vmem:[#allocation2 + $0x38] sm:$0xff] %vm62, %v5751
      %5777 = vst.msk [vmem:[#allocation2 + $0x40] sm:$0xff] %vm62, %v5752
      %5778 = vst.msk [vmem:[#allocation2 + $0x48] sm:$0x3] %vm67, %v5753
      %5779 = vst.msk [vmem:[#allocation2 + $0x50] sm:$0xff] %vm62, %v5754
      %5780 = vst.msk [vmem:[#allocation2 + $0x58] sm:$0xff] %vm62, %v5755
      %5781 = vst.msk [vmem:[#allocation2 + $0x60] sm:$0xff] %vm62, %v5756
      %5782 = vst.msk [vmem:[#allocation2 + $0x68] sm:$0xff] %vm62, %v5757
      %5783 = vst.msk [vmem:[#allocation2 + $0x70] sm:$0x3] %vm67, %v5758
      %5784 = vst.msk [vmem:[#allocation2 + $0x78] sm:$0xff] %vm62, %v5759
      %5785 = vst.msk [vmem:[#allocation2 + $0x80] sm:$0xff] %vm62, %v5760
      %5786 = vst.msk [vmem:[#allocation2 + $0x88] sm:$0xff] %vm62, %v5761
      %5787 = vst.msk [vmem:[#allocation2 + $0x90] sm:$0xff] %vm62, %v5762
      %5788 = vst.msk [vmem:[#allocation2 + $0x98] sm:$0x3] %vm67, %v5763
      %5789 = vst.msk [vmem:[#allocation2 + $0xa0] sm:$0xff] %vm62, %v5764
      %5790 = vst.msk [vmem:[#allocation2 + $0xa8] sm:$0xff] %vm62, %v5765
      %5791 = vst.msk [vmem:[#allocation2 + $0xb0] sm:$0xff] %vm62, %v5766
      %5792 = vst.msk [vmem:[#allocation2 + $0xb8] sm:$0xff] %vm62, %v5767
      %5793 = vst.msk [vmem:[#allocation2 + $0xc0] sm:$0x3] %vm67, %v5768
      %v5794 = vld [vmem:[#allocation3] sm:$0xff]
      %v5795 = vld [vmem:[#allocation3 + $0x8] sm:$0xff]
      %v5796 = vld [vmem:[#allocation3 + $0x10] sm:$0xff]
      %v5797 = vld [vmem:[#allocation3 + $0x18] sm:$0xff]
      %v5798 = vld [vmem:[#allocation3 + $0x20] sm:$0x3]
      %v5799 = vld [vmem:[#allocation3 + $0x28] sm:$0xff]
      %v5800 = vld [vmem:[#allocation3 + $0x30] sm:$0xff]
      %v5801 = vld [vmem:[#allocation3 + $0x38] sm:$0xff]
      %v5802 = vld [vmem:[#allocation3 + $0x40] sm:$0xff]
      %v5803 = vld [vmem:[#allocation3 + $0x48] sm:$0x3]
      %v5804 = vld [vmem:[#allocation3 + $0x50] sm:$0xff]
      %v5805 = vld [vmem:[#allocation3 + $0x58] sm:$0xff]
      %v5806 = vld [vmem:[#allocation3 + $0x60] sm:$0xff]
      %v5807 = vld [vmem:[#allocation3 + $0x68] sm:$0xff]
      %v5808 = vld [vmem:[#allocation3 + $0x70] sm:$0x3]
      %v5809 = vld [vmem:[#allocation3 + $0x78] sm:$0xff]
      %v5810 = vld [vmem:[#allocation3 + $0x80] sm:$0xff]
      %v5811 = vld [vmem:[#allocation3 + $0x88] sm:$0xff]
      %v5812 = vld [vmem:[#allocation3 + $0x90] sm:$0xff]
      %v5813 = vld [vmem:[#allocation3 + $0x98] sm:$0x3]
      %v5814 = vld [vmem:[#allocation3 + $0xa0] sm:$0xff]
      %v5815 = vld [vmem:[#allocation3 + $0xa8] sm:$0xff]
      %v5816 = vld [vmem:[#allocation3 + $0xb0] sm:$0xff]
      %v5817 = vld [vmem:[#allocation3 + $0xb8] sm:$0xff]
      %v5818 = vld [vmem:[#allocation3 + $0xc0] sm:$0x3]
      %v5819 = vsel %vm5739, %v5685, %v5794
      %v5820 = vsel %vm5739, %v5686, %v5795
      %v5821 = vsel %vm5739, %v5687, %v5796
      %v5822 = vsel %vm5739, %v5688, %v5797
      %v5823 = vsel %vm5739, %v5689, %v5798
      %v5824 = vsel %vm5740, %v5685, %v5799
      %v5825 = vsel %vm5740, %v5686, %v5800
      %v5826 = vsel %vm5740, %v5687, %v5801
      %v5827 = vsel %vm5740, %v5688, %v5802
      %v5828 = vsel %vm5740, %v5689, %v5803
      %v5829 = vsel %vm5741, %v5685, %v5804
      %v5830 = vsel %vm5741, %v5686, %v5805
      %v5831 = vsel %vm5741, %v5687, %v5806
      %v5832 = vsel %vm5741, %v5688, %v5807
      %v5833 = vsel %vm5741, %v5689, %v5808
      %v5834 = vsel %vm5742, %v5685, %v5809
      %v5835 = vsel %vm5742, %v5686, %v5810
      %v5836 = vsel %vm5742, %v5687, %v5811
      %v5837 = vsel %vm5742, %v5688, %v5812
      %v5838 = vsel %vm5742, %v5689, %v5813
      %v5839 = vsel %vm5743, %v5685, %v5814
      %v5840 = vsel %vm5743, %v5686, %v5815
      %v5841 = vsel %vm5743, %v5687, %v5816
      %v5842 = vsel %vm5743, %v5688, %v5817
      %v5843 = vsel %vm5743, %v5689, %v5818
      %5844 = vst.msk [vmem:[#allocation3] sm:$0xff] %vm62, %v5819
      %5845 = vst.msk [vmem:[#allocation3 + $0x8] sm:$0xff] %vm62, %v5820
      %5846 = vst.msk [vmem:[#allocation3 + $0x10] sm:$0xff] %vm62, %v5821
      %5847 = vst.msk [vmem:[#allocation3 + $0x18] sm:$0xff] %vm62, %v5822
      %5848 = vst.msk [vmem:[#allocation3 + $0x20] sm:$0x3] %vm67, %v5823
      %5849 = vst.msk [vmem:[#allocation3 + $0x28] sm:$0xff] %vm62, %v5824
      %5850 = vst.msk [vmem:[#allocation3 + $0x30] sm:$0xff] %vm62, %v5825
      %5851 = vst.msk [vmem:[#allocation3 + $0x38] sm:$0xff] %vm62, %v5826
      %5852 = vst.msk [vmem:[#allocation3 + $0x40] sm:$0xff] %vm62, %v5827
      %5853 = vst.msk [vmem:[#allocation3 + $0x48] sm:$0x3] %vm67, %v5828
      %5854 = vst.msk [vmem:[#allocation3 + $0x50] sm:$0xff] %vm62, %v5829
      %5855 = vst.msk [vmem:[#allocation3 + $0x58] sm:$0xff] %vm62, %v5830
      %5856 = vst.msk [vmem:[#allocation3 + $0x60] sm:$0xff] %vm62, %v5831
      %5857 = vst.msk [vmem:[#allocation3 + $0x68] sm:$0xff] %vm62, %v5832
      %5858 = vst.msk [vmem:[#allocation3 + $0x70] sm:$0x3] %vm67, %v5833
      %5859 = vst.msk [vmem:[#allocation3 + $0x78] sm:$0xff] %vm62, %v5834
      %5860 = vst.msk [vmem:[#allocation3 + $0x80] sm:$0xff] %vm62, %v5835
      %5861 = vst.msk [vmem:[#allocation3 + $0x88] sm:$0xff] %vm62, %v5836
      %5862 = vst.msk [vmem:[#allocation3 + $0x90] sm:$0xff] %vm62, %v5837
      %5863 = vst.msk [vmem:[#allocation3 + $0x98] sm:$0x3] %vm67, %v5838
      %5864 = vst.msk [vmem:[#allocation3 + $0xa0] sm:$0xff] %vm62, %v5839
      %5865 = vst.msk [vmem:[#allocation3 + $0xa8] sm:$0xff] %vm62, %v5840
      %5866 = vst.msk [vmem:[#allocation3 + $0xb0] sm:$0xff] %vm62, %v5841
      %5867 = vst.msk [vmem:[#allocation3 + $0xb8] sm:$0xff] %vm62, %v5842
      %5868 = vst.msk [vmem:[#allocation3 + $0xc0] sm:$0x3] %vm67, %v5843
      %v5869 = vld [vmem:[#allocation2] sm:$0xff]
      %v5870 = vld [vmem:[#allocation2 + $0x8] sm:$0xff]
      %v5871 = vld [vmem:[#allocation2 + $0x10] sm:$0xff]
      %v5872 = vld [vmem:[#allocation2 + $0x18] sm:$0xff]
      %v5873 = vld [vmem:[#allocation2 + $0x20] sm:$0x3]
      %v5874 = vld [vmem:[#allocation2 + $0x28] sm:$0xff]
      %v5875 = vld [vmem:[#allocation2 + $0x30] sm:$0xff]
      %v5876 = vld [vmem:[#allocation2 + $0x38] sm:$0xff]
      %v5877 = vld [vmem:[#allocation2 + $0x40] sm:$0xff]
      %v5878 = vld [vmem:[#allocation2 + $0x48] sm:$0x3]
      %v5879 = vld [vmem:[#allocation2 + $0x50] sm:$0xff]
      %v5880 = vld [vmem:[#allocation2 + $0x58] sm:$0xff]
      %v5881 = vld [vmem:[#allocation2 + $0x60] sm:$0xff]
      %v5882 = vld [vmem:[#allocation2 + $0x68] sm:$0xff]
      %v5883 = vld [vmem:[#allocation2 + $0x70] sm:$0x3]
      %v5884 = vld [vmem:[#allocation2 + $0x78] sm:$0xff]
      %v5885 = vld [vmem:[#allocation2 + $0x80] sm:$0xff]
      %v5886 = vld [vmem:[#allocation2 + $0x88] sm:$0xff]
      %v5887 = vld [vmem:[#allocation2 + $0x90] sm:$0xff]
      %v5888 = vld [vmem:[#allocation2 + $0x98] sm:$0x3]
      %v5889 = vld [vmem:[#allocation2 + $0xa0] sm:$0xff]
      %v5890 = vld [vmem:[#allocation2 + $0xa8] sm:$0xff]
      %v5891 = vld [vmem:[#allocation2 + $0xb0] sm:$0xff]
      %v5892 = vld [vmem:[#allocation2 + $0xb8] sm:$0xff]
      %v5893 = vld [vmem:[#allocation2 + $0xc0] sm:$0x3]
      %v5894 = vld [vmem:[#allocation3] sm:$0xff]
      %v5895 = vld [vmem:[#allocation3 + $0x8] sm:$0xff]
      %v5896 = vld [vmem:[#allocation3 + $0x10] sm:$0xff]
      %v5897 = vld [vmem:[#allocation3 + $0x18] sm:$0xff]
      %v5898 = vld [vmem:[#allocation3 + $0x20] sm:$0x3]
      %v5899 = vld [vmem:[#allocation3 + $0x28] sm:$0xff]
      %v5900 = vld [vmem:[#allocation3 + $0x30] sm:$0xff]
      %v5901 = vld [vmem:[#allocation3 + $0x38] sm:$0xff]
      %v5902 = vld [vmem:[#allocation3 + $0x40] sm:$0xff]
      %v5903 = vld [vmem:[#allocation3 + $0x48] sm:$0x3]
      %v5904 = vld [vmem:[#allocation3 + $0x50] sm:$0xff]
      %v5905 = vld [vmem:[#allocation3 + $0x58] sm:$0xff]
      %v5906 = vld [vmem:[#allocation3 + $0x60] sm:$0xff]
      %v5907 = vld [vmem:[#allocation3 + $0x68] sm:$0xff]
      %v5908 = vld [vmem:[#allocation3 + $0x70] sm:$0x3]
      %v5909 = vld [vmem:[#allocation3 + $0x78] sm:$0xff]
      %v5910 = vld [vmem:[#allocation3 + $0x80] sm:$0xff]
      %v5911 = vld [vmem:[#allocation3 + $0x88] sm:$0xff]
      %v5912 = vld [vmem:[#allocation3 + $0x90] sm:$0xff]
      %v5913 = vld [vmem:[#allocation3 + $0x98] sm:$0x3]
      %v5914 = vld [vmem:[#allocation3 + $0xa0] sm:$0xff]
      %v5915 = vld [vmem:[#allocation3 + $0xa8] sm:$0xff]
      %v5916 = vld [vmem:[#allocation3 + $0xb0] sm:$0xff]
      %v5917 = vld [vmem:[#allocation3 + $0xb8] sm:$0xff]
      %v5918 = vld [vmem:[#allocation3 + $0xc0] sm:$0x3]
      %s5919 = sadd.s32 %s129, 1
      %p5920 = scmp.lt.s32.totalorder %s5919, 5
      %s5921 = scalar_select %p5920, %s5919, 5
      %p5922 = scmp.gt.s32.totalorder %s5921, 0
      %v5923 = vsub.f32 %v5894, %v5685
      %v5924 = vsub.f32 %v5895, %v5686
      %v5925 = vsub.f32 %v5896, %v5687
      %v5926 = vsub.f32 %v5897, %v5688
      %v5927 = vsub.f32 %v5898, %v5689
      %s5928 = scalar_select %p5922, 1, 0
      %v5929 = vstv %s5928
      %vm5930 = vcmp.eq.s32.totalorder %v5929, 1
      %v5931 = vsel %vm5930, %v5923, 0.0
      %v5932 = vsel %vm5930, %v5924, 0.0
      %v5933 = vsel %vm5930, %v5925, 0.0
      %v5934 = vsel %vm5930, %v5926, 0.0
      %v5935 = vsel %vm5930, %v5927, 0.0
      %p5936 = scmp.gt.s32.totalorder %s5921, 1
      %v5937 = vsub.f32 %v5899, %v5685
      %v5938 = vsub.f32 %v5900, %v5686
      %v5939 = vsub.f32 %v5901, %v5687
      %v5940 = vsub.f32 %v5902, %v5688
      %v5941 = vsub.f32 %v5903, %v5689
      %s5942 = scalar_select %p5936, 1, 0
      %v5943 = vstv %s5942
      %vm5944 = vcmp.eq.s32.totalorder %v5943, 1
      %v5945 = vsel %vm5944, %v5937, 0.0
      %v5946 = vsel %vm5944, %v5938, 0.0
      %v5947 = vsel %vm5944, %v5939, 0.0
      %v5948 = vsel %vm5944, %v5940, 0.0
      %v5949 = vsel %vm5944, %v5941, 0.0
      %p5950 = scmp.gt.s32.totalorder %s5921, 2
      %v5951 = vsub.f32 %v5904, %v5685
      %v5952 = vsub.f32 %v5905, %v5686
      %v5953 = vsub.f32 %v5906, %v5687
      %v5954 = vsub.f32 %v5907, %v5688
      %v5955 = vsub.f32 %v5908, %v5689
      %s5956 = scalar_select %p5950, 1, 0
      %v5957 = vstv %s5956
      %vm5958 = vcmp.eq.s32.totalorder %v5957, 1
      %v5959 = vsel %vm5958, %v5951, 0.0
      %v5960 = vsel %vm5958, %v5952, 0.0
      %v5961 = vsel %vm5958, %v5953, 0.0
      %v5962 = vsel %vm5958, %v5954, 0.0
      %v5963 = vsel %vm5958, %v5955, 0.0
      %p5964 = scmp.gt.s32.totalorder %s5921, 3
      %v5965 = vsub.f32 %v5909, %v5685
      %v5966 = vsub.f32 %v5910, %v5686
      %v5967 = vsub.f32 %v5911, %v5687
      %v5968 = vsub.f32 %v5912, %v5688
      %v5969 = vsub.f32 %v5913, %v5689
      %s5970 = scalar_select %p5964, 1, 0
      %v5971 = vstv %s5970
      %vm5972 = vcmp.eq.s32.totalorder %v5971, 1
      %v5973 = vsel %vm5972, %v5965, 0.0
      %v5974 = vsel %vm5972, %v5966, 0.0
      %v5975 = vsel %vm5972, %v5967, 0.0
      %v5976 = vsel %vm5972, %v5968, 0.0
      %v5977 = vsel %vm5972, %v5969, 0.0
      %p5978 = scmp.gt.s32.totalorder %s5921, 4
      %v5979 = vsub.f32 %v5914, %v5685
      %v5980 = vsub.f32 %v5915, %v5686
      %v5981 = vsub.f32 %v5916, %v5687
      %v5982 = vsub.f32 %v5917, %v5688
      %v5983 = vsub.f32 %v5918, %v5689
      %s5984 = scalar_select %p5978, 1, 0
      %v5985 = vstv %s5984
      %vm5986 = vcmp.eq.s32.totalorder %v5985, 1
      %v5987 = vsel %vm5986, %v5979, 0.0
      %v5988 = vsel %vm5986, %v5980, 0.0
      %v5989 = vsel %vm5986, %v5981, 0.0
      %v5990 = vsel %vm5986, %v5982, 0.0
      %v5991 = vsel %vm5986, %v5983, 0.0
      %v5992 = vmul.f32 %v5931, %v5931
      %v5993 = vmul.f32 %v5932, %v5932
      %v5994 = vmul.f32 %v5933, %v5933
      %v5995 = vmul.f32 %v5934, %v5934
      %v5996 = vmul.f32 %v5935, %v5935
      %v5997 = vsel %vm62, %v5992, 0.0
      %v5998 = vsel %vm62, %v5993, 0.0
      %v5999 = vadd.f32 %v5997, %v5998
      %v6000 = vsel %vm62, %v5994, 0.0
      %v6001 = vadd.f32 %v5999, %v6000
      %v6002 = vsel %vm62, %v5995, 0.0
      %v6003 = vadd.f32 %v6001, %v6002
      %v6004 = vsel %vm67, %v5996, 0.0
      %v6005 = vadd.f32 %v6003, %v6004
      %6006 = vadd.xlane.f32.xlu0 %v6005
      %v6007 = vpop.xlane.xlu0 %6006
      %v6008 = vrot.slane %v6007, 4
      %v6009 = vadd.f32 %v6007, %v6008
      %v6010 = vrot.slane %v6009, 2
      %v6011 = vadd.f32 %v6009, %v6010
      %v6012 = vrot.slane %v6011, 1
      %v6013 = vadd.f32 %v6011, %v6012
      %s6014 = vtos %v6013
      %s6015 = sadd.f32 %s6014, 0.0
      %vm6016 = vcmp.eq.s32.totalorder %v122, 0
      %vm6017 = vcmp.eq.s32.totalorder %v124, 0
      %vm6018 = vmand %vm6016, %vm6017
      %v6019 = vsel %vm6018, 1, 0
      %v6020 = vcvt.s32.f32 %v6019
      %v6021 = vstv %s6014
      %v6022 = vmul.f32 %v6021, %v6020
      %v6023 = vadd.f32 %v6022, 0.0
      %v6024 = vmul.f32 %v5931, %v5685
      %v6025 = vmul.f32 %v5932, %v5686
      %v6026 = vmul.f32 %v5933, %v5687
      %v6027 = vmul.f32 %v5934, %v5688
      %v6028 = vmul.f32 %v5935, %v5689
      %v6029 = vsel %vm62, %v6024, 0.0
      %v6030 = vsel %vm62, %v6025, 0.0
      %v6031 = vadd.f32 %v6029, %v6030
      %v6032 = vsel %vm62, %v6026, 0.0
      %v6033 = vadd.f32 %v6031, %v6032
      %v6034 = vsel %vm62, %v6027, 0.0
      %v6035 = vadd.f32 %v6033, %v6034
      %v6036 = vsel %vm67, %v6028, 0.0
      %v6037 = vadd.f32 %v6035, %v6036
      %6038 = vadd.xlane.f32.xlu0 %v6037
      %v6039 = vpop.xlane.xlu0 %6038
      %v6040 = vrot.slane %v6039, 4
      %v6041 = vadd.f32 %v6039, %v6040
      %v6042 = vrot.slane %v6041, 2
      %v6043 = vadd.f32 %v6041, %v6042
      %v6044 = vrot.slane %v6043, 1
      %v6045 = vadd.f32 %v6043, %v6044
      %s6046 = vtos %v6045
      %v6047 = vsel %vm6016, 1, 0
      %v6048 = vcvt.s32.f32 %v6047
      %v6049 = vstv %s6046
      %v6050 = vmul.f32 %v6049, %v6048
      %v6051 = vsub.f32 0.0, %v6050
      %v6052 = vmul.f32 %v5931, %v5945
      %v6053 = vmul.f32 %v5932, %v5946
      %v6054 = vmul.f32 %v5933, %v5947
      %v6055 = vmul.f32 %v5934, %v5948
      %v6056 = vmul.f32 %v5935, %v5949
      %v6057 = vsel %vm62, %v6052, 0.0
      %v6058 = vsel %vm62, %v6053, 0.0
      %v6059 = vadd.f32 %v6057, %v6058
      %v6060 = vsel %vm62, %v6054, 0.0
      %v6061 = vadd.f32 %v6059, %v6060
      %v6062 = vsel %vm62, %v6055, 0.0
      %v6063 = vadd.f32 %v6061, %v6062
      %v6064 = vsel %vm67, %v6056, 0.0
      %v6065 = vadd.f32 %v6063, %v6064
      %6066 = vadd.xlane.f32.xlu0 %v6065
      %v6067 = vpop.xlane.xlu0 %6066
      %v6068 = vrot.slane %v6067, 4
      %v6069 = vadd.f32 %v6067, %v6068
      %v6070 = vrot.slane %v6069, 2
      %v6071 = vadd.f32 %v6069, %v6070
      %v6072 = vrot.slane %v6071, 1
      %v6073 = vadd.f32 %v6071, %v6072
      %s6074 = vtos %v6073
      %vm6075 = vcmp.eq.s32.totalorder %v124, 1
      %vm6076 = vmand %vm6016, %vm6075
      %vm6077 = vcmp.eq.s32.totalorder %v122, 1
      %vm6078 = vmand %vm6077, %vm6017
      %vm6079 = vmor %vm6076, %vm6078
      %v6080 = vsel %vm6079, 1, 0
      %v6081 = vcvt.s32.f32 %v6080
      %v6082 = vstv %s6074
      %v6083 = vmul.f32 %v6082, %v6081
      %v6084 = vadd.f32 %v6023, %v6083
      %v6085 = vmul.f32 %v5931, %v5959
      %v6086 = vmul.f32 %v5932, %v5960
      %v6087 = vmul.f32 %v5933, %v5961
      %v6088 = vmul.f32 %v5934, %v5962
      %v6089 = vmul.f32 %v5935, %v5963
      %v6090 = vsel %vm62, %v6085, 0.0
      %v6091 = vsel %vm62, %v6086, 0.0
      %v6092 = vadd.f32 %v6090, %v6091
      %v6093 = vsel %vm62, %v6087, 0.0
      %v6094 = vadd.f32 %v6092, %v6093
      %v6095 = vsel %vm62, %v6088, 0.0
      %v6096 = vadd.f32 %v6094, %v6095
      %v6097 = vsel %vm67, %v6089, 0.0
      %v6098 = vadd.f32 %v6096, %v6097
      %6099 = vadd.xlane.f32.xlu0 %v6098
      %v6100 = vpop.xlane.xlu0 %6099
      %v6101 = vrot.slane %v6100, 4
      %v6102 = vadd.f32 %v6100, %v6101
      %v6103 = vrot.slane %v6102, 2
      %v6104 = vadd.f32 %v6102, %v6103
      %v6105 = vrot.slane %v6104, 1
      %v6106 = vadd.f32 %v6104, %v6105
      %s6107 = vtos %v6106
      %vm6108 = vcmp.eq.s32.totalorder %v124, 2
      %vm6109 = vmand %vm6016, %vm6108
      %vm6110 = vcmp.eq.s32.totalorder %v122, 2
      %vm6111 = vmand %vm6110, %vm6017
      %vm6112 = vmor %vm6109, %vm6111
      %v6113 = vsel %vm6112, 1, 0
      %v6114 = vcvt.s32.f32 %v6113
      %v6115 = vstv %s6107
      %v6116 = vmul.f32 %v6115, %v6114
      %v6117 = vadd.f32 %v6084, %v6116
      %v6118 = vmul.f32 %v5931, %v5973
      %v6119 = vmul.f32 %v5932, %v5974
      %v6120 = vmul.f32 %v5933, %v5975
      %v6121 = vmul.f32 %v5934, %v5976
      %v6122 = vmul.f32 %v5935, %v5977
      %v6123 = vsel %vm62, %v6118, 0.0
      %v6124 = vsel %vm62, %v6119, 0.0
      %v6125 = vadd.f32 %v6123, %v6124
      %v6126 = vsel %vm62, %v6120, 0.0
      %v6127 = vadd.f32 %v6125, %v6126
      %v6128 = vsel %vm62, %v6121, 0.0
      %v6129 = vadd.f32 %v6127, %v6128
      %v6130 = vsel %vm67, %v6122, 0.0
      %v6131 = vadd.f32 %v6129, %v6130
      %6132 = vadd.xlane.f32.xlu0 %v6131
      %v6133 = vpop.xlane.xlu0 %6132
      %v6134 = vrot.slane %v6133, 4
      %v6135 = vadd.f32 %v6133, %v6134
      %v6136 = vrot.slane %v6135, 2
      %v6137 = vadd.f32 %v6135, %v6136
      %v6138 = vrot.slane %v6137, 1
      %v6139 = vadd.f32 %v6137, %v6138
      %s6140 = vtos %v6139
      %vm6141 = vcmp.eq.s32.totalorder %v124, 3
      %vm6142 = vmand %vm6016, %vm6141
      %vm6143 = vcmp.eq.s32.totalorder %v122, 3
      %vm6144 = vmand %vm6143, %vm6017
      %vm6145 = vmor %vm6142, %vm6144
      %v6146 = vsel %vm6145, 1, 0
      %v6147 = vcvt.s32.f32 %v6146
      %v6148 = vstv %s6140
      %v6149 = vmul.f32 %v6148, %v6147
      %v6150 = vadd.f32 %v6117, %v6149
      %v6151 = vmul.f32 %v5931, %v5987
      %v6152 = vmul.f32 %v5932, %v5988
      %v6153 = vmul.f32 %v5933, %v5989
      %v6154 = vmul.f32 %v5934, %v5990
      %v6155 = vmul.f32 %v5935, %v5991
      %v6156 = vsel %vm62, %v6151, 0.0
      %v6157 = vsel %vm62, %v6152, 0.0
      %v6158 = vadd.f32 %v6156, %v6157
      %v6159 = vsel %vm62, %v6153, 0.0
      %v6160 = vadd.f32 %v6158, %v6159
      %v6161 = vsel %vm62, %v6154, 0.0
      %v6162 = vadd.f32 %v6160, %v6161
      %v6163 = vsel %vm67, %v6155, 0.0
      %v6164 = vadd.f32 %v6162, %v6163
      %6165 = vadd.xlane.f32.xlu0 %v6164
      %v6166 = vpop.xlane.xlu0 %6165
      %v6167 = vrot.slane %v6166, 4
      %v6168 = vadd.f32 %v6166, %v6167
      %v6169 = vrot.slane %v6168, 2
      %v6170 = vadd.f32 %v6168, %v6169
      %v6171 = vrot.slane %v6170, 1
      %v6172 = vadd.f32 %v6170, %v6171
      %s6173 = vtos %v6172
      %vm6174 = vcmp.eq.s32.totalorder %v124, 4
      %vm6175 = vmand %vm6016, %vm6174
      %vm6176 = vcmp.eq.s32.totalorder %v122, 4
      %vm6177 = vmand %vm6176, %vm6017
      %vm6178 = vmor %vm6175, %vm6177
      %v6179 = vsel %vm6178, 1, 0
      %v6180 = vcvt.s32.f32 %v6179
      %v6181 = vstv %s6173
      %v6182 = vmul.f32 %v6181, %v6180
      %v6183 = vadd.f32 %v6150, %v6182
      %v6184 = vmul.f32 %v5945, %v5945
      %v6185 = vmul.f32 %v5946, %v5946
      %v6186 = vmul.f32 %v5947, %v5947
      %v6187 = vmul.f32 %v5948, %v5948
      %v6188 = vmul.f32 %v5949, %v5949
      %v6189 = vsel %vm62, %v6184, 0.0
      %v6190 = vsel %vm62, %v6185, 0.0
      %v6191 = vadd.f32 %v6189, %v6190
      %v6192 = vsel %vm62, %v6186, 0.0
      %v6193 = vadd.f32 %v6191, %v6192
      %v6194 = vsel %vm62, %v6187, 0.0
      %v6195 = vadd.f32 %v6193, %v6194
      %v6196 = vsel %vm67, %v6188, 0.0
      %v6197 = vadd.f32 %v6195, %v6196
      %6198 = vadd.xlane.f32.xlu0 %v6197
      %v6199 = vpop.xlane.xlu0 %6198
      %v6200 = vrot.slane %v6199, 4
      %v6201 = vadd.f32 %v6199, %v6200
      %v6202 = vrot.slane %v6201, 2
      %v6203 = vadd.f32 %v6201, %v6202
      %v6204 = vrot.slane %v6203, 1
      %v6205 = vadd.f32 %v6203, %v6204
      %s6206 = vtos %v6205
      %s6207 = sadd.f32 %s6015, %s6206
      %vm6208 = vmand %vm6077, %vm6075
      %v6209 = vsel %vm6208, 1, 0
      %v6210 = vcvt.s32.f32 %v6209
      %v6211 = vstv %s6206
      %v6212 = vmul.f32 %v6211, %v6210
      %v6213 = vadd.f32 %v6183, %v6212
      %v6214 = vmul.f32 %v5945, %v5685
      %v6215 = vmul.f32 %v5946, %v5686
      %v6216 = vmul.f32 %v5947, %v5687
      %v6217 = vmul.f32 %v5948, %v5688
      %v6218 = vmul.f32 %v5949, %v5689
      %v6219 = vsel %vm62, %v6214, 0.0
      %v6220 = vsel %vm62, %v6215, 0.0
      %v6221 = vadd.f32 %v6219, %v6220
      %v6222 = vsel %vm62, %v6216, 0.0
      %v6223 = vadd.f32 %v6221, %v6222
      %v6224 = vsel %vm62, %v6217, 0.0
      %v6225 = vadd.f32 %v6223, %v6224
      %v6226 = vsel %vm67, %v6218, 0.0
      %v6227 = vadd.f32 %v6225, %v6226
      %6228 = vadd.xlane.f32.xlu0 %v6227
      %v6229 = vpop.xlane.xlu0 %6228
      %v6230 = vrot.slane %v6229, 4
      %v6231 = vadd.f32 %v6229, %v6230
      %v6232 = vrot.slane %v6231, 2
      %v6233 = vadd.f32 %v6231, %v6232
      %v6234 = vrot.slane %v6233, 1
      %v6235 = vadd.f32 %v6233, %v6234
      %s6236 = vtos %v6235
      %v6237 = vsel %vm6077, 1, 0
      %v6238 = vcvt.s32.f32 %v6237
      %v6239 = vstv %s6236
      %v6240 = vmul.f32 %v6239, %v6238
      %v6241 = vsub.f32 %v6051, %v6240
      %v6242 = vmul.f32 %v5945, %v5959
      %v6243 = vmul.f32 %v5946, %v5960
      %v6244 = vmul.f32 %v5947, %v5961
      %v6245 = vmul.f32 %v5948, %v5962
      %v6246 = vmul.f32 %v5949, %v5963
      %v6247 = vsel %vm62, %v6242, 0.0
      %v6248 = vsel %vm62, %v6243, 0.0
      %v6249 = vadd.f32 %v6247, %v6248
      %v6250 = vsel %vm62, %v6244, 0.0
      %v6251 = vadd.f32 %v6249, %v6250
      %v6252 = vsel %vm62, %v6245, 0.0
      %v6253 = vadd.f32 %v6251, %v6252
      %v6254 = vsel %vm67, %v6246, 0.0
      %v6255 = vadd.f32 %v6253, %v6254
      %6256 = vadd.xlane.f32.xlu0 %v6255
      %v6257 = vpop.xlane.xlu0 %6256
      %v6258 = vrot.slane %v6257, 4
      %v6259 = vadd.f32 %v6257, %v6258
      %v6260 = vrot.slane %v6259, 2
      %v6261 = vadd.f32 %v6259, %v6260
      %v6262 = vrot.slane %v6261, 1
      %v6263 = vadd.f32 %v6261, %v6262
      %s6264 = vtos %v6263
      %vm6265 = vmand %vm6077, %vm6108
      %vm6266 = vmand %vm6110, %vm6075
      %vm6267 = vmor %vm6265, %vm6266
      %v6268 = vsel %vm6267, 1, 0
      %v6269 = vcvt.s32.f32 %v6268
      %v6270 = vstv %s6264
      %v6271 = vmul.f32 %v6270, %v6269
      %v6272 = vadd.f32 %v6213, %v6271
      %v6273 = vmul.f32 %v5945, %v5973
      %v6274 = vmul.f32 %v5946, %v5974
      %v6275 = vmul.f32 %v5947, %v5975
      %v6276 = vmul.f32 %v5948, %v5976
      %v6277 = vmul.f32 %v5949, %v5977
      %v6278 = vsel %vm62, %v6273, 0.0
      %v6279 = vsel %vm62, %v6274, 0.0
      %v6280 = vadd.f32 %v6278, %v6279
      %v6281 = vsel %vm62, %v6275, 0.0
      %v6282 = vadd.f32 %v6280, %v6281
      %v6283 = vsel %vm62, %v6276, 0.0
      %v6284 = vadd.f32 %v6282, %v6283
      %v6285 = vsel %vm67, %v6277, 0.0
      %v6286 = vadd.f32 %v6284, %v6285
      %6287 = vadd.xlane.f32.xlu0 %v6286
      %v6288 = vpop.xlane.xlu0 %6287
      %v6289 = vrot.slane %v6288, 4
      %v6290 = vadd.f32 %v6288, %v6289
      %v6291 = vrot.slane %v6290, 2
      %v6292 = vadd.f32 %v6290, %v6291
      %v6293 = vrot.slane %v6292, 1
      %v6294 = vadd.f32 %v6292, %v6293
      %s6295 = vtos %v6294
      %vm6296 = vmand %vm6077, %vm6141
      %vm6297 = vmand %vm6143, %vm6075
      %vm6298 = vmor %vm6296, %vm6297
      %v6299 = vsel %vm6298, 1, 0
      %v6300 = vcvt.s32.f32 %v6299
      %v6301 = vstv %s6295
      %v6302 = vmul.f32 %v6301, %v6300
      %v6303 = vadd.f32 %v6272, %v6302
      %v6304 = vmul.f32 %v5945, %v5987
      %v6305 = vmul.f32 %v5946, %v5988
      %v6306 = vmul.f32 %v5947, %v5989
      %v6307 = vmul.f32 %v5948, %v5990
      %v6308 = vmul.f32 %v5949, %v5991
      %v6309 = vsel %vm62, %v6304, 0.0
      %v6310 = vsel %vm62, %v6305, 0.0
      %v6311 = vadd.f32 %v6309, %v6310
      %v6312 = vsel %vm62, %v6306, 0.0
      %v6313 = vadd.f32 %v6311, %v6312
      %v6314 = vsel %vm62, %v6307, 0.0
      %v6315 = vadd.f32 %v6313, %v6314
      %v6316 = vsel %vm67, %v6308, 0.0
      %v6317 = vadd.f32 %v6315, %v6316
      %6318 = vadd.xlane.f32.xlu0 %v6317
      %v6319 = vpop.xlane.xlu0 %6318
      %v6320 = vrot.slane %v6319, 4
      %v6321 = vadd.f32 %v6319, %v6320
      %v6322 = vrot.slane %v6321, 2
      %v6323 = vadd.f32 %v6321, %v6322
      %v6324 = vrot.slane %v6323, 1
      %v6325 = vadd.f32 %v6323, %v6324
      %s6326 = vtos %v6325
      %vm6327 = vmand %vm6077, %vm6174
      %vm6328 = vmand %vm6176, %vm6075
      %vm6329 = vmor %vm6327, %vm6328
      %v6330 = vsel %vm6329, 1, 0
      %v6331 = vcvt.s32.f32 %v6330
      %v6332 = vstv %s6326
      %v6333 = vmul.f32 %v6332, %v6331
      %v6334 = vadd.f32 %v6303, %v6333
      %v6335 = vmul.f32 %v5959, %v5959
      %v6336 = vmul.f32 %v5960, %v5960
      %v6337 = vmul.f32 %v5961, %v5961
      %v6338 = vmul.f32 %v5962, %v5962
      %v6339 = vmul.f32 %v5963, %v5963
      %v6340 = vsel %vm62, %v6335, 0.0
      %v6341 = vsel %vm62, %v6336, 0.0
      %v6342 = vadd.f32 %v6340, %v6341
      %v6343 = vsel %vm62, %v6337, 0.0
      %v6344 = vadd.f32 %v6342, %v6343
      %v6345 = vsel %vm62, %v6338, 0.0
      %v6346 = vadd.f32 %v6344, %v6345
      %v6347 = vsel %vm67, %v6339, 0.0
      %v6348 = vadd.f32 %v6346, %v6347
      %6349 = vadd.xlane.f32.xlu0 %v6348
      %v6350 = vpop.xlane.xlu0 %6349
      %v6351 = vrot.slane %v6350, 4
      %v6352 = vadd.f32 %v6350, %v6351
      %v6353 = vrot.slane %v6352, 2
      %v6354 = vadd.f32 %v6352, %v6353
      %v6355 = vrot.slane %v6354, 1
      %v6356 = vadd.f32 %v6354, %v6355
      %s6357 = vtos %v6356
      %s6358 = sadd.f32 %s6207, %s6357
      %vm6359 = vmand %vm6110, %vm6108
      %v6360 = vsel %vm6359, 1, 0
      %v6361 = vcvt.s32.f32 %v6360
      %v6362 = vstv %s6357
      %v6363 = vmul.f32 %v6362, %v6361
      %v6364 = vadd.f32 %v6334, %v6363
      %v6365 = vmul.f32 %v5959, %v5685
      %v6366 = vmul.f32 %v5960, %v5686
      %v6367 = vmul.f32 %v5961, %v5687
      %v6368 = vmul.f32 %v5962, %v5688
      %v6369 = vmul.f32 %v5963, %v5689
      %v6370 = vsel %vm62, %v6365, 0.0
      %v6371 = vsel %vm62, %v6366, 0.0
      %v6372 = vadd.f32 %v6370, %v6371
      %v6373 = vsel %vm62, %v6367, 0.0
      %v6374 = vadd.f32 %v6372, %v6373
      %v6375 = vsel %vm62, %v6368, 0.0
      %v6376 = vadd.f32 %v6374, %v6375
      %v6377 = vsel %vm67, %v6369, 0.0
      %v6378 = vadd.f32 %v6376, %v6377
      %6379 = vadd.xlane.f32.xlu0 %v6378
      %v6380 = vpop.xlane.xlu0 %6379
      %v6381 = vrot.slane %v6380, 4
      %v6382 = vadd.f32 %v6380, %v6381
      %v6383 = vrot.slane %v6382, 2
      %v6384 = vadd.f32 %v6382, %v6383
      %v6385 = vrot.slane %v6384, 1
      %v6386 = vadd.f32 %v6384, %v6385
      %s6387 = vtos %v6386
      %v6388 = vsel %vm6110, 1, 0
      %v6389 = vcvt.s32.f32 %v6388
      %v6390 = vstv %s6387
      %v6391 = vmul.f32 %v6390, %v6389
      %v6392 = vsub.f32 %v6241, %v6391
      %v6393 = vmul.f32 %v5959, %v5973
      %v6394 = vmul.f32 %v5960, %v5974
      %v6395 = vmul.f32 %v5961, %v5975
      %v6396 = vmul.f32 %v5962, %v5976
      %v6397 = vmul.f32 %v5963, %v5977
      %v6398 = vsel %vm62, %v6393, 0.0
      %v6399 = vsel %vm62, %v6394, 0.0
      %v6400 = vadd.f32 %v6398, %v6399
      %v6401 = vsel %vm62, %v6395, 0.0
      %v6402 = vadd.f32 %v6400, %v6401
      %v6403 = vsel %vm62, %v6396, 0.0
      %v6404 = vadd.f32 %v6402, %v6403
      %v6405 = vsel %vm67, %v6397, 0.0
      %v6406 = vadd.f32 %v6404, %v6405
      %6407 = vadd.xlane.f32.xlu0 %v6406
      %v6408 = vpop.xlane.xlu0 %6407
      %v6409 = vrot.slane %v6408, 4
      %v6410 = vadd.f32 %v6408, %v6409
      %v6411 = vrot.slane %v6410, 2
      %v6412 = vadd.f32 %v6410, %v6411
      %v6413 = vrot.slane %v6412, 1
      %v6414 = vadd.f32 %v6412, %v6413
      %s6415 = vtos %v6414
      %vm6416 = vmand %vm6110, %vm6141
      %vm6417 = vmand %vm6143, %vm6108
      %vm6418 = vmor %vm6416, %vm6417
      %v6419 = vsel %vm6418, 1, 0
      %v6420 = vcvt.s32.f32 %v6419
      %v6421 = vstv %s6415
      %v6422 = vmul.f32 %v6421, %v6420
      %v6423 = vadd.f32 %v6364, %v6422
      %v6424 = vmul.f32 %v5959, %v5987
      %v6425 = vmul.f32 %v5960, %v5988
      %v6426 = vmul.f32 %v5961, %v5989
      %v6427 = vmul.f32 %v5962, %v5990
      %v6428 = vmul.f32 %v5963, %v5991
      %v6429 = vsel %vm62, %v6424, 0.0
      %v6430 = vsel %vm62, %v6425, 0.0
      %v6431 = vadd.f32 %v6429, %v6430
      %v6432 = vsel %vm62, %v6426, 0.0
      %v6433 = vadd.f32 %v6431, %v6432
      %v6434 = vsel %vm62, %v6427, 0.0
      %v6435 = vadd.f32 %v6433, %v6434
      %v6436 = vsel %vm67, %v6428, 0.0
      %v6437 = vadd.f32 %v6435, %v6436
      %6438 = vadd.xlane.f32.xlu0 %v6437
      %v6439 = vpop.xlane.xlu0 %6438
      %v6440 = vrot.slane %v6439, 4
      %v6441 = vadd.f32 %v6439, %v6440
      %v6442 = vrot.slane %v6441, 2
      %v6443 = vadd.f32 %v6441, %v6442
      %v6444 = vrot.slane %v6443, 1
      %v6445 = vadd.f32 %v6443, %v6444
      %s6446 = vtos %v6445
      %vm6447 = vmand %vm6110, %vm6174
      %vm6448 = vmand %vm6176, %vm6108
      %vm6449 = vmor %vm6447, %vm6448
      %v6450 = vsel %vm6449, 1, 0
      %v6451 = vcvt.s32.f32 %v6450
      %v6452 = vstv %s6446
      %v6453 = vmul.f32 %v6452, %v6451
      %v6454 = vadd.f32 %v6423, %v6453
      %v6455 = vmul.f32 %v5973, %v5973
      %v6456 = vmul.f32 %v5974, %v5974
      %v6457 = vmul.f32 %v5975, %v5975
      %v6458 = vmul.f32 %v5976, %v5976
      %v6459 = vmul.f32 %v5977, %v5977
      %v6460 = vsel %vm62, %v6455, 0.0
      %v6461 = vsel %vm62, %v6456, 0.0
      %v6462 = vadd.f32 %v6460, %v6461
      %v6463 = vsel %vm62, %v6457, 0.0
      %v6464 = vadd.f32 %v6462, %v6463
      %v6465 = vsel %vm62, %v6458, 0.0
      %v6466 = vadd.f32 %v6464, %v6465
      %v6467 = vsel %vm67, %v6459, 0.0
      %v6468 = vadd.f32 %v6466, %v6467
      %6469 = vadd.xlane.f32.xlu0 %v6468
      %v6470 = vpop.xlane.xlu0 %6469
      %v6471 = vrot.slane %v6470, 4
      %v6472 = vadd.f32 %v6470, %v6471
      %v6473 = vrot.slane %v6472, 2
      %v6474 = vadd.f32 %v6472, %v6473
      %v6475 = vrot.slane %v6474, 1
      %v6476 = vadd.f32 %v6474, %v6475
      %s6477 = vtos %v6476
      %s6478 = sadd.f32 %s6358, %s6477
      %vm6479 = vmand %vm6143, %vm6141
      %v6480 = vsel %vm6479, 1, 0
      %v6481 = vcvt.s32.f32 %v6480
      %v6482 = vstv %s6477
      %v6483 = vmul.f32 %v6482, %v6481
      %v6484 = vadd.f32 %v6454, %v6483
      %v6485 = vmul.f32 %v5973, %v5685
      %v6486 = vmul.f32 %v5974, %v5686
      %v6487 = vmul.f32 %v5975, %v5687
      %v6488 = vmul.f32 %v5976, %v5688
      %v6489 = vmul.f32 %v5977, %v5689
      %v6490 = vsel %vm62, %v6485, 0.0
      %v6491 = vsel %vm62, %v6486, 0.0
      %v6492 = vadd.f32 %v6490, %v6491
      %v6493 = vsel %vm62, %v6487, 0.0
      %v6494 = vadd.f32 %v6492, %v6493
      %v6495 = vsel %vm62, %v6488, 0.0
      %v6496 = vadd.f32 %v6494, %v6495
      %v6497 = vsel %vm67, %v6489, 0.0
      %v6498 = vadd.f32 %v6496, %v6497
      %6499 = vadd.xlane.f32.xlu0 %v6498
      %v6500 = vpop.xlane.xlu0 %6499
      %v6501 = vrot.slane %v6500, 4
      %v6502 = vadd.f32 %v6500, %v6501
      %v6503 = vrot.slane %v6502, 2
      %v6504 = vadd.f32 %v6502, %v6503
      %v6505 = vrot.slane %v6504, 1
      %v6506 = vadd.f32 %v6504, %v6505
      %s6507 = vtos %v6506
      %v6508 = vsel %vm6143, 1, 0
      %v6509 = vcvt.s32.f32 %v6508
      %v6510 = vstv %s6507
      %v6511 = vmul.f32 %v6510, %v6509
      %v6512 = vsub.f32 %v6392, %v6511
      %v6513 = vmul.f32 %v5973, %v5987
      %v6514 = vmul.f32 %v5974, %v5988
      %v6515 = vmul.f32 %v5975, %v5989
      %v6516 = vmul.f32 %v5976, %v5990
      %v6517 = vmul.f32 %v5977, %v5991
      %v6518 = vsel %vm62, %v6513, 0.0
      %v6519 = vsel %vm62, %v6514, 0.0
      %v6520 = vadd.f32 %v6518, %v6519
      %v6521 = vsel %vm62, %v6515, 0.0
      %v6522 = vadd.f32 %v6520, %v6521
      %v6523 = vsel %vm62, %v6516, 0.0
      %v6524 = vadd.f32 %v6522, %v6523
      %v6525 = vsel %vm67, %v6517, 0.0
      %v6526 = vadd.f32 %v6524, %v6525
      %6527 = vadd.xlane.f32.xlu0 %v6526
      %v6528 = vpop.xlane.xlu0 %6527
      %v6529 = vrot.slane %v6528, 4
      %v6530 = vadd.f32 %v6528, %v6529
      %v6531 = vrot.slane %v6530, 2
      %v6532 = vadd.f32 %v6530, %v6531
      %v6533 = vrot.slane %v6532, 1
      %v6534 = vadd.f32 %v6532, %v6533
      %s6535 = vtos %v6534
      %vm6536 = vmand %vm6143, %vm6174
      %vm6537 = vmand %vm6176, %vm6141
      %vm6538 = vmor %vm6536, %vm6537
      %v6539 = vsel %vm6538, 1, 0
      %v6540 = vcvt.s32.f32 %v6539
      %v6541 = vstv %s6535
      %v6542 = vmul.f32 %v6541, %v6540
      %v6543 = vadd.f32 %v6484, %v6542
      %v6544 = vmul.f32 %v5987, %v5987
      %v6545 = vmul.f32 %v5988, %v5988
      %v6546 = vmul.f32 %v5989, %v5989
      %v6547 = vmul.f32 %v5990, %v5990
      %v6548 = vmul.f32 %v5991, %v5991
      %v6549 = vsel %vm62, %v6544, 0.0
      %v6550 = vsel %vm62, %v6545, 0.0
      %v6551 = vadd.f32 %v6549, %v6550
      %v6552 = vsel %vm62, %v6546, 0.0
      %v6553 = vadd.f32 %v6551, %v6552
      %v6554 = vsel %vm62, %v6547, 0.0
      %v6555 = vadd.f32 %v6553, %v6554
      %v6556 = vsel %vm67, %v6548, 0.0
      %v6557 = vadd.f32 %v6555, %v6556
      %6558 = vadd.xlane.f32.xlu0 %v6557
      %v6559 = vpop.xlane.xlu0 %6558
      %v6560 = vrot.slane %v6559, 4
      %v6561 = vadd.f32 %v6559, %v6560
      %v6562 = vrot.slane %v6561, 2
      %v6563 = vadd.f32 %v6561, %v6562
      %v6564 = vrot.slane %v6563, 1
      %v6565 = vadd.f32 %v6563, %v6564
      %s6566 = vtos %v6565
      %s6567 = sadd.f32 %s6478, %s6566
      %vm6568 = vmand %vm6176, %vm6174
      %v6569 = vsel %vm6568, 1, 0
      %v6570 = vcvt.s32.f32 %v6569
      %v6571 = vstv %s6566
      %v6572 = vmul.f32 %v6571, %v6570
      %v6573 = vadd.f32 %v6543, %v6572
      %v6574 = vmul.f32 %v5987, %v5685
      %v6575 = vmul.f32 %v5988, %v5686
      %v6576 = vmul.f32 %v5989, %v5687
      %v6577 = vmul.f32 %v5990, %v5688
      %v6578 = vmul.f32 %v5991, %v5689
      %v6579 = vsel %vm62, %v6574, 0.0
      %v6580 = vsel %vm62, %v6575, 0.0
      %v6581 = vadd.f32 %v6579, %v6580
      %v6582 = vsel %vm62, %v6576, 0.0
      %v6583 = vadd.f32 %v6581, %v6582
      %v6584 = vsel %vm62, %v6577, 0.0
      %v6585 = vadd.f32 %v6583, %v6584
      %v6586 = vsel %vm67, %v6578, 0.0
      %v6587 = vadd.f32 %v6585, %v6586
      %6588 = vadd.xlane.f32.xlu0 %v6587
      %v6589 = vpop.xlane.xlu0 %6588
      %v6590 = vrot.slane %v6589, 4
      %v6591 = vadd.f32 %v6589, %v6590
      %v6592 = vrot.slane %v6591, 2
      %v6593 = vadd.f32 %v6591, %v6592
      %v6594 = vrot.slane %v6593, 1
      %v6595 = vadd.f32 %v6593, %v6594
      %s6596 = vtos %v6595
      %v6597 = vsel %vm6176, 1, 0
      %v6598 = vcvt.s32.f32 %v6597
      %v6599 = vstv %s6596
      %v6600 = vmul.f32 %v6599, %v6598
      %v6601 = vsub.f32 %v6512, %v6600
      %v6602 = vmul.f32 %v127, 0.0001
      %v6603 = vadd.f32 %v6573, %v6602
      %vm6604 = vcmask 39936
      %v6605 = vsel %vm6604, %v6603, %v6601
      %6607 = vset.pattern.permute.xlu0 0
      %6608 = vperm.xlu0 %6607, %v6605
      %v6609 = vpop.permute.xlu0 %6608
      %v6611 = vrcp.pop %v6609
      %v6612 = vmul.f32 %v6605, %v6611
      %v6613 = vsel %vm6016, 0.0, %v6605
      %6615 = vset.pattern.permute.xlu0 0
      %6616 = vperm.xlu0 %6615, %v6613
      %v6617 = vpop.permute.xlu0 %6616
      %v6619 = vlaneseq
      %v6620 = vshrl.u32 %v6619, 7
      %v6621 = vsub.s32 0, %v6620
      %v6622 = vrot.slane %v6612, %v6621
      %v6623 = vmul.f32 %v6617, %v6622
      %v6624 = vsub.f32 %v6605, %v6623
      %vm6625 = vcmp.eq.s32.totalorder %v6047, 1
      %v6626 = vsel %vm6625, %v6622, %v6624
      %6628 = vset.pattern.permute.xlu0 1
      %6629 = vperm.xlu0 %6628, %v6626
      %v6630 = vpop.permute.xlu0 %6629
      %v6632 = vrcp.pop %v6630
      %v6633 = vmul.f32 %v6626, %v6632
      %v6634 = vsel %vm6077, 0.0, %v6626
      %6636 = vset.pattern.permute.xlu0 1
      %6637 = vperm.xlu0 %6636, %v6634
      %v6638 = vpop.permute.xlu0 %6637
      %v6640 = vlaneseq
      %v6641 = vshrl.u32 %v6640, 7
      %v6642 = vsub.s32 1, %v6641
      %v6643 = vrot.slane %v6633, %v6642
      %v6644 = vmul.f32 %v6638, %v6643
      %v6645 = vsub.f32 %v6626, %v6644
      %vm6646 = vcmp.eq.s32.totalorder %v6237, 1
      %v6647 = vsel %vm6646, %v6643, %v6645
      %6649 = vset.pattern.permute.xlu0 2
      %6650 = vperm.xlu0 %6649, %v6647
      %v6651 = vpop.permute.xlu0 %6650
      %v6653 = vrcp.pop %v6651
      %v6654 = vmul.f32 %v6647, %v6653
      %v6655 = vsel %vm6110, 0.0, %v6647
      %6657 = vset.pattern.permute.xlu0 2
      %6658 = vperm.xlu0 %6657, %v6655
      %v6659 = vpop.permute.xlu0 %6658
      %v6661 = vlaneseq
      %v6662 = vshrl.u32 %v6661, 7
      %v6663 = vsub.s32 2, %v6662
      %v6664 = vrot.slane %v6654, %v6663
      %v6665 = vmul.f32 %v6659, %v6664
      %v6666 = vsub.f32 %v6647, %v6665
      %vm6667 = vcmp.eq.s32.totalorder %v6388, 1
      %v6668 = vsel %vm6667, %v6664, %v6666
      %6670 = vset.pattern.permute.xlu0 3
      %6671 = vperm.xlu0 %6670, %v6668
      %v6672 = vpop.permute.xlu0 %6671
      %v6674 = vrcp.pop %v6672
      %v6675 = vmul.f32 %v6668, %v6674
      %v6676 = vsel %vm6143, 0.0, %v6668
      %6678 = vset.pattern.permute.xlu0 3
      %6679 = vperm.xlu0 %6678, %v6676
      %v6680 = vpop.permute.xlu0 %6679
      %v6682 = vlaneseq
      %v6683 = vshrl.u32 %v6682, 7
      %v6684 = vsub.s32 3, %v6683
      %v6685 = vrot.slane %v6675, %v6684
      %v6686 = vmul.f32 %v6680, %v6685
      %v6687 = vsub.f32 %v6668, %v6686
      %vm6688 = vcmp.eq.s32.totalorder %v6508, 1
      %v6689 = vsel %vm6688, %v6685, %v6687
      %6691 = vset.pattern.permute.xlu0 4
      %6692 = vperm.xlu0 %6691, %v6689
      %v6693 = vpop.permute.xlu0 %6692
      %v6695 = vrcp.pop %v6693
      %v6696 = vmul.f32 %v6689, %v6695
      %v6697 = vsel %vm6176, 0.0, %v6689
      %6699 = vset.pattern.permute.xlu0 4
      %6700 = vperm.xlu0 %6699, %v6697
      %v6701 = vpop.permute.xlu0 %6700
      %v6703 = vlaneseq
      %v6704 = vshrl.u32 %v6703, 7
      %v6705 = vsub.s32 4, %v6704
      %v6706 = vrot.slane %v6696, %v6705
      %v6707 = vmul.f32 %v6701, %v6706
      %v6708 = vsub.f32 %v6689, %v6707
      %vm6709 = vcmp.eq.s32.totalorder %v6597, 1
      %v6710 = vsel %vm6709, %v6706, %v6708
      %6712 = vrot.lane.b32.xlu0 %v6710, 123
      %v6713 = vpop.permute.xlu0 %6712
      %vm6715 = vcmask 4096
      %v6716 = vsel %vm6715, %v6713, 0.0
      %6717 = vadd.xlane.f32.xlu0 %v6716
      %v6718 = vpop.xlane.xlu0 %6717
      %v6719 = vrot.slane %v6718, 4
      %v6720 = vadd.f32 %v6718, %v6719
      %v6721 = vrot.slane %v6720, 2
      %v6722 = vadd.f32 %v6720, %v6721
      %v6723 = vrot.slane %v6722, 1
      %v6724 = vadd.f32 %v6722, %v6723
      %s6725 = vtos %v6724
      %v6726 = vstv %s6725
      %v6727 = vrcp.pop %v6726
      %v6728 = vmul.f32 %v6710, %v6727
      %6730 = vrot.lane.b32.xlu0 %v6728, 123
      %v6731 = vpop.permute.xlu0 %6730
      %s6732 = vtos %v6731
      %v6733 = vstv %s6732
      %v6735 = vmul.f32 %v6733, %v5869
      %v6736 = vmul.f32 %v6733, %v5870
      %v6737 = vmul.f32 %v6733, %v5871
      %v6738 = vmul.f32 %v6733, %v5872
      %v6739 = vmul.f32 %v6733, %v5873
      %v6740 = vadd.f32 %v6735, 0.0
      %v6741 = vadd.f32 %v6736, 0.0
      %v6742 = vadd.f32 %v6737, 0.0
      %v6743 = vadd.f32 %v6738, 0.0
      %v6744 = vadd.f32 %v6739, 0.0
      %v6745 = vmul.f32 %v6733, %v5894
      %v6746 = vmul.f32 %v6733, %v5895
      %v6747 = vmul.f32 %v6733, %v5896
      %v6748 = vmul.f32 %v6733, %v5897
      %v6749 = vmul.f32 %v6733, %v5898
      %v6750 = vadd.f32 %v6745, 0.0
      %v6751 = vadd.f32 %v6746, 0.0
      %v6752 = vadd.f32 %v6747, 0.0
      %v6753 = vadd.f32 %v6748, 0.0
      %v6754 = vadd.f32 %v6749, 0.0
      %v6755 = vrot.slane %v6728, 1
      %6756 = vrot.lane.b32.xlu0 %v6755, 123
      %v6757 = vpop.permute.xlu0 %6756
      %s6758 = vtos %v6757
      %v6759 = vstv %s6758
      %v6761 = vmul.f32 %v6759, %v5874
      %v6762 = vmul.f32 %v6759, %v5875
      %v6763 = vmul.f32 %v6759, %v5876
      %v6764 = vmul.f32 %v6759, %v5877
      %v6765 = vmul.f32 %v6759, %v5878
      %v6766 = vadd.f32 %v6740, %v6761
      %v6767 = vadd.f32 %v6741, %v6762
      %v6768 = vadd.f32 %v6742, %v6763
      %v6769 = vadd.f32 %v6743, %v6764
      %v6770 = vadd.f32 %v6744, %v6765
      %v6771 = vmul.f32 %v6759, %v5899
      %v6772 = vmul.f32 %v6759, %v5900
      %v6773 = vmul.f32 %v6759, %v5901
      %v6774 = vmul.f32 %v6759, %v5902
      %v6775 = vmul.f32 %v6759, %v5903
      %v6776 = vadd.f32 %v6750, %v6771
      %v6777 = vadd.f32 %v6751, %v6772
      %v6778 = vadd.f32 %v6752, %v6773
      %v6779 = vadd.f32 %v6753, %v6774
      %v6780 = vadd.f32 %v6754, %v6775
      %v6781 = vrot.slane %v6728, 2
      %6782 = vrot.lane.b32.xlu0 %v6781, 123
      %v6783 = vpop.permute.xlu0 %6782
      %s6784 = vtos %v6783
      %v6785 = vstv %s6784
      %v6787 = vmul.f32 %v6785, %v5879
      %v6788 = vmul.f32 %v6785, %v5880
      %v6789 = vmul.f32 %v6785, %v5881
      %v6790 = vmul.f32 %v6785, %v5882
      %v6791 = vmul.f32 %v6785, %v5883
      %v6792 = vadd.f32 %v6766, %v6787
      %v6793 = vadd.f32 %v6767, %v6788
      %v6794 = vadd.f32 %v6768, %v6789
      %v6795 = vadd.f32 %v6769, %v6790
      %v6796 = vadd.f32 %v6770, %v6791
      %v6797 = vmul.f32 %v6785, %v5904
      %v6798 = vmul.f32 %v6785, %v5905
      %v6799 = vmul.f32 %v6785, %v5906
      %v6800 = vmul.f32 %v6785, %v5907
      %v6801 = vmul.f32 %v6785, %v5908
      %v6802 = vadd.f32 %v6776, %v6797
      %v6803 = vadd.f32 %v6777, %v6798
      %v6804 = vadd.f32 %v6778, %v6799
      %v6805 = vadd.f32 %v6779, %v6800
      %v6806 = vadd.f32 %v6780, %v6801
      %v6807 = vrot.slane %v6728, 3
      %6808 = vrot.lane.b32.xlu0 %v6807, 123
      %v6809 = vpop.permute.xlu0 %6808
      %s6810 = vtos %v6809
      %v6811 = vstv %s6810
      %v6813 = vmul.f32 %v6811, %v5884
      %v6814 = vmul.f32 %v6811, %v5885
      %v6815 = vmul.f32 %v6811, %v5886
      %v6816 = vmul.f32 %v6811, %v5887
      %v6817 = vmul.f32 %v6811, %v5888
      %v6818 = vadd.f32 %v6792, %v6813
      %v6819 = vadd.f32 %v6793, %v6814
      %v6820 = vadd.f32 %v6794, %v6815
      %v6821 = vadd.f32 %v6795, %v6816
      %v6822 = vadd.f32 %v6796, %v6817
      %v6823 = vmul.f32 %v6811, %v5909
      %v6824 = vmul.f32 %v6811, %v5910
      %v6825 = vmul.f32 %v6811, %v5911
      %v6826 = vmul.f32 %v6811, %v5912
      %v6827 = vmul.f32 %v6811, %v5913
      %v6828 = vadd.f32 %v6802, %v6823
      %v6829 = vadd.f32 %v6803, %v6824
      %v6830 = vadd.f32 %v6804, %v6825
      %v6831 = vadd.f32 %v6805, %v6826
      %v6832 = vadd.f32 %v6806, %v6827
      %v6833 = vrot.slane %v6728, 4
      %6834 = vrot.lane.b32.xlu0 %v6833, 123
      %v6835 = vpop.permute.xlu0 %6834
      %s6836 = vtos %v6835
      %v6837 = vstv %s6836
      %v6839 = vmul.f32 %v6837, %v5889
      %v6840 = vmul.f32 %v6837, %v5890
      %v6841 = vmul.f32 %v6837, %v5891
      %v6842 = vmul.f32 %v6837, %v5892
      %v6843 = vmul.f32 %v6837, %v5893
      %v6844 = vadd.f32 %v6818, %v6839
      %v6845 = vadd.f32 %v6819, %v6840
      %v6846 = vadd.f32 %v6820, %v6841
      %v6847 = vadd.f32 %v6821, %v6842
      %v6848 = vadd.f32 %v6822, %v6843
      %v6849 = vmul.f32 %v6837, %v5914
      %v6850 = vmul.f32 %v6837, %v5915
      %v6851 = vmul.f32 %v6837, %v5916
      %v6852 = vmul.f32 %v6837, %v5917
      %v6853 = vmul.f32 %v6837, %v5918
      %v6854 = vadd.f32 %v6828, %v6849
      %v6855 = vadd.f32 %v6829, %v6850
      %v6856 = vadd.f32 %v6830, %v6851
      %v6857 = vadd.f32 %v6831, %v6852
      %v6858 = vadd.f32 %v6832, %v6853
      %v6859 = vadd.f32 %v6844, %v6854
      %v6860 = vadd.f32 %v6845, %v6855
      %v6861 = vadd.f32 %v6846, %v6856
      %v6862 = vadd.f32 %v6847, %v6857
      %v6863 = vadd.f32 %v6848, %v6858
      %v6864 = vadd.f32 %v139, %v5685
      %v6865 = vadd.f32 %v140, %v5686
      %v6866 = vadd.f32 %v141, %v5687
      %v6867 = vadd.f32 %v142, %v5688
      %v6868 = vadd.f32 %v143, %v5689
      %p6869 = scmp.lt.f32.partialorder %s6567, 1e-20
      %p6870 = scmp.lt.s32.totalorder %s129, 1
      %p6871 = por %p6870, %p6869
      %s6872 = scalar_select %p6871, 1, 0
      %v6873 = vstv %s6872
      %vm6874 = vcmp.eq.s32.totalorder %v6873, 1
      %v6875 = vsel %vm6874, %v6864, %v6859
      %v6876 = vsel %vm6874, %v6865, %v6860
      %v6877 = vsel %vm6874, %v6866, %v6861
      %v6878 = vsel %vm6874, %v6867, %v6862
      %v6879 = vsel %vm6874, %v6868, %v6863
      %6880 = vst.msk [vmem:[#allocation4] sm:$0xff] %vm62, %v6875
      %6881 = vst.msk [vmem:[#allocation4 + $0x8] sm:$0xff] %vm62, %v6876
      %6882 = vst.msk [vmem:[#allocation4 + $0x10] sm:$0xff] %vm62, %v6877
      %6883 = vst.msk [vmem:[#allocation4 + $0x18] sm:$0xff] %vm62, %v6878
      %6884 = vst.msk [vmem:[#allocation4 + $0x20] sm:$0x3] %vm67, %v6879
      %v6885 = vsub.f32 %v6875, %v139
      %v6886 = vsub.f32 %v6876, %v140
      %v6887 = vsub.f32 %v6877, %v141
      %v6888 = vsub.f32 %v6878, %v142
      %v6889 = vsub.f32 %v6879, %v143
      %v6890 = vmul.f32 %v6885, %v6885
      %v6891 = vmul.f32 %v6886, %v6886
      %v6892 = vmul.f32 %v6887, %v6887
      %v6893 = vmul.f32 %v6888, %v6888
      %v6894 = vmul.f32 %v6889, %v6889
      %v6895 = vsel %vm62, %v6890, 0.0
      %v6896 = vsel %vm62, %v6891, 0.0
      %v6897 = vadd.f32 %v6895, %v6896
      %v6898 = vsel %vm62, %v6892, 0.0
      %v6899 = vadd.f32 %v6897, %v6898
      %v6900 = vsel %vm62, %v6893, 0.0
      %v6901 = vadd.f32 %v6899, %v6900
      %v6902 = vsel %vm67, %v6894, 0.0
      %v6903 = vadd.f32 %v6901, %v6902
      %6904 = vadd.xlane.f32.xlu0 %v6903
      %v6905 = vpop.xlane.xlu0 %6904
      %v6906 = vrot.slane %v6905, 4
      %v6907 = vadd.f32 %v6905, %v6906
      %v6908 = vrot.slane %v6907, 2
      %v6909 = vadd.f32 %v6907, %v6908
      %v6910 = vrot.slane %v6909, 1
      %v6911 = vadd.f32 %v6909, %v6910
      %s6912 = vtos %v6911
      %v6913 = vstv %s6912
      %v6914 = vrsqrt.pop %v6913
      %v6915 = vmul.f32 %v6913, %v6914
      %vm6916 = vcmp.eq.f32.partialorder %v6913, inf
      %v6917 = vsel %vm6916, %v6913, %v6915
      %vm6918 = vcmp.eq.f32.partialorder %v6913, 0.0
      %v6919 = vand.u32 %v6913, 2147483648
      %v6920 = vsel %vm6918, %v6919, %v6917
      %s6921 = vtos %v6920
      %v6922 = vmul.f32 %v139, %v139
      %v6923 = vmul.f32 %v140, %v140
      %v6924 = vmul.f32 %v141, %v141
      %v6925 = vmul.f32 %v142, %v142
      %v6926 = vmul.f32 %v143, %v143
      %v6927 = vsel %vm62, %v6922, 0.0
      %v6928 = vsel %vm62, %v6923, 0.0
      %v6929 = vadd.f32 %v6927, %v6928
      %v6930 = vsel %vm62, %v6924, 0.0
      %v6931 = vadd.f32 %v6929, %v6930
      %v6932 = vsel %vm62, %v6925, 0.0
      %v6933 = vadd.f32 %v6931, %v6932
      %v6934 = vsel %vm67, %v6926, 0.0
      %v6935 = vadd.f32 %v6933, %v6934
      %6936 = vadd.xlane.f32.xlu0 %v6935
      %v6937 = vpop.xlane.xlu0 %6936
      %v6938 = vrot.slane %v6937, 4
      %v6939 = vadd.f32 %v6937, %v6938
      %v6940 = vrot.slane %v6939, 2
      %v6941 = vadd.f32 %v6939, %v6940
      %v6942 = vrot.slane %v6941, 1
      %v6943 = vadd.f32 %v6941, %v6942
      %s6944 = vtos %v6943
      %v6945 = vstv %s6944
      %v6946 = vrsqrt.pop %v6945
      %v6947 = vmul.f32 %v6945, %v6946
      %vm6948 = vcmp.eq.f32.partialorder %v6945, inf
      %v6949 = vsel %vm6948, %v6945, %v6947
      %vm6950 = vcmp.eq.f32.partialorder %v6945, 0.0
      %v6951 = vand.u32 %v6945, 2147483648
      %v6952 = vsel %vm6950, %v6951, %v6949
      %s6953 = vtos %v6952
      %s6954 = sadd.f32 %s6953, 1e-08
      %s6955 = smul.f32 %s6954, 0.000999802
      %p6956 = scmp.lt.f32.partialorder %s6921, %s6955
      %p6957 = scmp.ge.s32.totalorder %s129, 1
      %p6958 = pnand %p6957, %p6869
      %p6959 = pneg %p6958
      %p6960 = pneg %p6959
      %p6961 = pnand %p6956, %p6960
      %p6962 = pneg %p6961
      %s6963 = scalar_select %p6962, 1, 0
      %6964 = sst [smem:[%s119]] %s6963
    $region68: #{adaptive_gcn_diff_forward.1} parent=61 // pred_fallthru
      _
  $region62: #{adaptive_gcn_diff_forward.1} parent=0 // loop_footer
    %s133 = sadd.s32 1, %s129
  $region63: #{adaptive_gcn_diff_forward.1} parent=0 // loop_footer_branch
    %128 = sbr.rel target = $region59
  $region64: #{adaptive_gcn_diff_forward.1} parent=0 // loop_exit
    _
  %v6965 = vld [vmem:[#allocation4] sm:$0xff]
  %v6966 = vld [vmem:[#allocation4 + $0x8] sm:$0xff]
  %v6967 = vld [vmem:[#allocation4 + $0x10] sm:$0xff]
  %v6968 = vld [vmem:[#allocation4 + $0x18] sm:$0xff]
  %v6969 = vld [vmem:[#allocation4 + $0x20] sm:$0x3]
  %6970 = vst.msk [vmem:[%s14] sm:$0xff] %vm62, %v6965
  %6971 = vst.msk [vmem:[%s14 + $0x8] sm:$0xff] %vm62, %v6966
  %6972 = vst.msk [vmem:[%s14 + $0x10] sm:$0xff] %vm62, %v6967
  %6973 = vst.msk [vmem:[%s14 + $0x18] sm:$0xff] %vm62, %v6968
  %6974 = vst.msk [vmem:[%s14 + $0x20] sm:$0x3] %vm67, %v6969
  // Predicated region
  $region69: #{adaptive_gcn_diff_forward.1} parent=0 // pred_check
    _
  $region70: #{adaptive_gcn_diff_forward.1} parent=0 // pred_check_branch
    %6976 = sbr.rel (0) target = $region72
  $region71: #{adaptive_gcn_diff_forward.1} parent=0 // pred_region
    _
  $region72: #{adaptive_gcn_diff_forward.1} parent=0 // pred_fallthru
    _
  // Predicated region
  $region73: #{adaptive_gcn_diff_forward.1} parent=0 // pred_check
    _
  $region74: #{adaptive_gcn_diff_forward.1} parent=0 // pred_check_branch
    %6978 = sbr.rel (0) target = $region76
  $region75: #{adaptive_gcn_diff_forward.1} parent=0 // pred_region
    _
  $region76: #{adaptive_gcn_diff_forward.1} parent=0 // pred_fallthru
    _

</llo_original>
